<compile_context>
chip_gen: v6e
topology: v6e:2x2x1
jax: 0.10.0
libtpu: 0.0.40
codegen_flags: <defaults>
</compile_context>

<pallas_src>
import functools

import jax
import jax.numpy as jnp
from jax.experimental import pallas as pl
from jax.experimental.pallas import tpu as pltpu


def resblock_kernel(xb_ref, xh_ref, w1_ref, b1_ref, w2_ref, b2_ref, out_ref,
                    pad_ref, pk_ref, *, res_scale):
    # xb_ref : (1, tile_h, W, Cp)   bf16  body rows of x (channel-padded)
    # xh_ref : (1, 4p, W, Cp)       bf16  row halo: 2p rows above + 2p below
    # w1/w2  : (k, k*Cp, Cp)        bf16  kw packed into the contraction dim
    # b1/b2  : (1, Cp)              f32
    # out_ref: (1, tile_h, W, Cp)   bf16
    # pad_ref: VMEM (tile_h+4p, 8+W+8, Cp) bf16  W-haloed operand (both convs)
    # pk_ref : VMEM (tile_h+4p, W, k*Cp)   bf16  kw-packed patches
    _, tile_h, W, Cp = out_ref.shape
    k = w1_ref.shape[0]
    p = k // 2
    LEFT = 8                                   # sublane-aligned interior start
    RIGHT = pad_ref.shape[1] - LEFT - W
    rows1_out = tile_h + 2 * p                 # conv1 rows (incl. conv2 halo)
    rows1_in = tile_h + 4 * p                  # x rows consumed by conv1
    t_idx = pl.program_id(1)
    n_tiles = pl.num_programs(1)

    # -- zero W column halos (aligned 8-wide strips; interior never touches them)
    pad_ref[:, 0:LEFT, :] = jnp.zeros((rows1_in, LEFT, Cp), pad_ref.dtype)
    pad_ref[:, LEFT + W:LEFT + W + RIGHT, :] = jnp.zeros(
        (rows1_in, RIGHT, Cp), pad_ref.dtype)

    # -- assemble conv1 input rows: top halo | body | bottom halo (aligned interior)
    pad_ref[0:2 * p, LEFT:LEFT + W, :] = xh_ref[0, 0:2 * p, :, :]
    pad_ref[2 * p + tile_h:rows1_in, LEFT:LEFT + W, :] = xh_ref[0, 2 * p:4 * p, :, :]
    pad_ref[2 * p:2 * p + tile_h, LEFT:LEFT + W, :] = xb_ref[0]

    def conv(rows_out, w_ref, b_ref):
        # "same" conv as k matmuls: kw taps packed into K = k*Cp (fills the
        # 256-deep MXU on v6e/v7x); kh rides the free leading dim.
        rows_in = rows_out + 2 * p
        for kw in range(k):
            c0 = LEFT - p + kw                 # sublane-shifted read of the tap
            pk_ref[0:rows_in, :, kw * Cp:(kw + 1) * Cp] = (
                pad_ref[0:rows_in, c0:c0 + W, :])   # lane-aligned 128-mult store
        acc = None
        for kh in range(k):
            patch = pk_ref[kh:kh + rows_out, :, :].reshape(rows_out * W, k * Cp)
            d = jnp.dot(patch, w_ref[kh], preferred_element_type=jnp.float32)
            acc = d if acc is None else acc + d
        return acc + b_ref[...]                # (rows_out*W, Cp) f32

    # ---- conv1 + bias + ReLU over tile_h + 2p rows ---------------------------
    t1 = jnp.maximum(conv(rows1_out, w1_ref, b1_ref), 0.0)
    pad_ref[0:rows1_out, LEFT:LEFT + W, :] = (
        t1.reshape(rows1_out, W, Cp).astype(pad_ref.dtype))

    # conv1 halo rows that fall outside the image must be zero for conv2
    # (the reference zero-pads conv2's input).  Keyed on the tile index, so it
    # is correct under "parallel" megacore sharding.
    if p > 0:
        zhalo = jnp.zeros((p, W, Cp), pad_ref.dtype)

        @pl.when(t_idx == 0)
        def _():
            pad_ref[0:p, LEFT:LEFT + W, :] = zhalo

        @pl.when(t_idx == n_tiles - 1)
        def _():
            pad_ref[tile_h + p:rows1_out, LEFT:LEFT + W, :] = zhalo

    # ---- conv2 + bias, res_scale, residual add (f32), bf16 store -------------
    res = conv(tile_h, w2_ref, b2_ref) * res_scale
    out_ref[0] = (res.reshape(tile_h, W, Cp)
                  + xb_ref[0].astype(jnp.float32)).astype(out_ref.dtype)


def resblock_forward(x_nchw, w1_oihw, b1, w2_oihw, b2, res_scale=1.0):
    N, C, H, W = x_nchw.shape
    k = w1_oihw.shape[-1]
    assert k % 2 == 1 and k >= 3, "Pallas ResBlock path expects odd kernel_size >= 3"
    p = k // 2
    Cp = ((C + 127) // 128) * 128              # lane-dense channel width
    LEFT, RIGHT = 8, 8                         # sublane-aligned W halos in scratch

    # H tile: largest "nice" divisor (bounded per-step VMEM, pipelining, work
    # for both v7x TensorCores); fall back to the full height.
    tile_h = H
    for cand in (32, 16, 8):
        if H % cand == 0:
            tile_h = cand
            break
    T = H // tile_h

    # --- glue (fuses under jit): NCHW -> NHWC, channel pad to Cp, bf16 --------
    # TODO(synk): for n_feat << 128 the contraction still runs over Cp lanes of
    # zeros; a native-C contraction path would cut MXU work further.
    x_nhwc = jnp.transpose(x_nchw, (0, 2, 3, 1))
    xb = jnp.pad(x_nhwc, ((0, 0), (0, 0), (0, 0), (0, Cp - C))).astype(jnp.bfloat16)

    # Per-tile row halos: 2p rows above + 2p rows below each tile (zeros at the
    # image borders).  Small (4p rows/tile), so no full-image operand in VMEM.
    xp = jnp.pad(xb, ((0, 0), (2 * p, 2 * p), (0, 0), (0, 0)))
    base = jnp.arange(T) * tile_h
    top = base[:, None] + jnp.arange(2 * p)[None, :]
    bot = base[:, None] + (tile_h + 2 * p) + jnp.arange(2 * p)[None, :]
    halo_rows = jnp.concatenate([top, bot], axis=1)            # (T, 4p)
    xh = xp[:, halo_rows].reshape(N * T, 4 * p, W, Cp)

    def prep_w(w_oihw):
        w_hwio = jnp.transpose(w_oihw, (2, 3, 1, 0))           # (kh, kw, Cin, Cout)
        w_pad = jnp.pad(w_hwio, ((0, 0), (0, 0), (0, Cp - C), (0, Cp - C)))
        return w_pad.reshape(k, k * Cp, Cp).astype(jnp.bfloat16)   # kw packed into K

    w1p, w2p = prep_w(w1_oihw), prep_w(w2_oihw)
    b1p = jnp.pad(b1, (0, Cp - C)).reshape(1, Cp).astype(jnp.float32)
    b2p = jnp.pad(b2, (0, Cp - C)).reshape(1, Cp).astype(jnp.float32)

    kernel = functools.partial(resblock_kernel, res_scale=float(res_scale))

    flops = 2 * 2 * N * H * W * k * k * Cp * Cp                # 2 convs, 2*M*K*N each
    bytes_accessed = (xb.size * 2 + xh.size * 2 + w1p.size * 2 + w2p.size * 2
                      + (b1p.size + b2p.size) * 4 + N * H * W * Cp * 2)

    out_p = pl.pallas_call(
        kernel,
        out_shape=jax.ShapeDtypeStruct((N, H, W, Cp), jnp.bfloat16),
        grid_spec=pltpu.PrefetchScalarGridSpec(
            num_scalar_prefetch=0,
            grid=(N, T),
            in_specs=[
                pl.BlockSpec((1, tile_h, W, Cp), lambda n, t: (n, t, 0, 0)),
                pl.BlockSpec((1, 4 * p, W, Cp), lambda n, t: (n * T + t, 0, 0, 0)),
                pl.BlockSpec((k, k * Cp, Cp), lambda n, t: (0, 0, 0)),
                pl.BlockSpec((1, Cp), lambda n, t: (0, 0)),
                pl.BlockSpec((k, k * Cp, Cp), lambda n, t: (0, 0, 0)),
                pl.BlockSpec((1, Cp), lambda n, t: (0, 0)),
            ],
            out_specs=pl.BlockSpec((1, tile_h, W, Cp), lambda n, t: (n, t, 0, 0)),
            scratch_shapes=[
                pltpu.VMEM((tile_h + 4 * p, LEFT + W + RIGHT, Cp), jnp.bfloat16),
                pltpu.VMEM((tile_h + 4 * p, W, k * Cp), jnp.bfloat16),
            ],
        ),
        compiler_params=pltpu.CompilerParams(
            dimension_semantics=("parallel", "parallel"),
            vmem_limit_bytes=64 * 1024 * 1024),
        cost_estimate=pl.CostEstimate(
            flops=flops, transcendentals=0, bytes_accessed=bytes_accessed),
    )(xb, xh, w1p, b1p, w2p, b2p)

    # channel slice + NHWC->NCHW + cast fuse into a single XLA pass under jit
    return jnp.transpose(out_p[..., :C], (0, 3, 1, 2)).astype(x_nchw.dtype)


def _ref_resblock(x, w1, b1, w2, b2, res_scale=1.0):
    # pure-JAX f32 reference in NCHW / OIHW (matches PyTorch semantics)
    def conv(xx, ww, bb):
        y = jax.lax.conv_general_dilated(
            xx, ww, window_strides=(1, 1), padding="SAME",
            dimension_numbers=("NCHW", "OIHW", "NCHW"))
        return y + bb.reshape(1, -1, 1, 1)
    return conv(jax.nn.relu(conv(x, w1, b1)), w2, b2) * res_scale + x


if __name__ == "__main__":
    N, C, H, W, ksz = 2, 4, 16, 16, 3     # n_feat = 4, kernel_size = 3
    res_scale = 1.0

    key = jax.random.PRNGKey(0)
    kx, kw1, kb1, kw2, kb2 = jax.random.split(key, 5)

    x = jax.random.normal(kx, (N, C, H, W), jnp.float32)
    # PyTorch conv2d weight layout: OIHW
    w1 = jax.random.normal(kw1, (C, C, ksz, ksz), jnp.float32) * 0.1
    b1 = jax.random.normal(kb1, (C,), jnp.float32) * 0.1
    w2 = jax.random.normal(kw2, (C, C, ksz, ksz), jnp.float32) * 0.1
    b2 = jax.random.normal(kb2, (C,), jnp.float32) * 0.1

    fwd = jax.jit(resblock_forward, static_argnames=("res_scale",))
    out = jax.block_until_ready(fwd(x, w1, b1, w2, b2, res_scale=res_scale))

    ref = _ref_resblock(x, w1, b1, w2, b2, res_scale=res_scale)
    assert out.shape == (N, C, H, W)
    # bf16 MXU inputs / bf16 output with f32 accumulation -> loosened tolerance.
    err = float(jnp.max(jnp.abs(out - ref)))
    assert jnp.allclose(out, ref, atol=5e-2, rtol=5e-2), "max abs err: %g" % err

    print("KERNEL_OK")
</pallas_src>

<mosaic_0001>
module attributes {stable_mosaic.version = 11 : i64} {
  func.func @resblock_kernel(%arg0: i32, %arg1: i32, %arg2: memref<1x16x16x128xbf16, #tpu.memory_space<vmem>>, %arg3: memref<1x4x16x128xbf16, #tpu.memory_space<vmem>>, %arg4: memref<3x384x128xbf16, #tpu.memory_space<vmem>>, %arg5: memref<1x128xf32, #tpu.memory_space<vmem>>, %arg6: memref<3x384x128xbf16, #tpu.memory_space<vmem>>, %arg7: memref<1x128xf32, #tpu.memory_space<vmem>>, %arg8: memref<1x16x16x128xbf16, #tpu.memory_space<vmem>>, %arg9: memref<20x32x128xbf16, #tpu.memory_space<vmem>>, %arg10: memref<20x16x384xbf16, #tpu.memory_space<vmem>>) attributes {dimension_semantics = [#tpu.dimension_semantics<parallel>, #tpu.dimension_semantics<parallel>], iteration_bounds = array<i64: 2, 1>, scalar_prefetch = 0 : i64, scratch_operands = 2 : i64, tpu.core_type = #tpu.core_type<tc>, window_params = [{transform_indices = @transform_0, window_bounds = array<i64: 1, 16, 16, 128>}, {transform_indices = @transform_1, window_bounds = array<i64: 1, 4, 16, 128>}, {pipeline_mode = #tpu.pipeline_mode<synchronous>, transform_indices = @transform_2, window_bounds = array<i64: 3, 384, 128>}, {pipeline_mode = #tpu.pipeline_mode<synchronous>, transform_indices = @transform_3, window_bounds = array<i64: 1, 128>}, {pipeline_mode = #tpu.pipeline_mode<synchronous>, transform_indices = @transform_4, window_bounds = array<i64: 3, 384, 128>}, {pipeline_mode = #tpu.pipeline_mode<synchronous>, transform_indices = @transform_5, window_bounds = array<i64: 1, 128>}, {transform_indices = @transform_6, window_bounds = array<i64: 1, 16, 16, 128>}]} {
    %cst = arith.constant 0.000000e+00 : bf16
    %0 = vector.broadcast %cst : bf16 to vector<20x8x128xbf16>
    %c0 = arith.constant 0 : index
    %c0_0 = arith.constant 0 : index
    %c0_1 = arith.constant 0 : index
    %1 = vector.load %arg9[%c0, %c0_0, %c0_1] : memref<20x32x128xbf16, #tpu.memory_space<vmem>>, vector<20x8x128xbf16>
    tpu.vector_store %arg9[%c0, %c0_0, %c0_1], %0 {strides = array<i32>} : memref<20x32x128xbf16, #tpu.memory_space<vmem>>, vector<20x8x128xbf16>,
    %cst_2 = arith.constant 0.000000e+00 : bf16
    %2 = vector.broadcast %cst_2 : bf16 to vector<20x8x128xbf16>
    %c0_3 = arith.constant 0 : index
    %c24 = arith.constant 24 : index
    %c0_4 = arith.constant 0 : index
    %3 = vector.load %arg9[%c0_3, %c24, %c0_4] : memref<20x32x128xbf16, #tpu.memory_space<vmem>>, vector<20x8x128xbf16>
    tpu.vector_store %arg9[%c0_3, %c24, %c0_4], %2 {strides = array<i32>} : memref<20x32x128xbf16, #tpu.memory_space<vmem>>, vector<20x8x128xbf16>,
    %c0_5 = arith.constant 0 : index
    %c0_6 = arith.constant 0 : index
    %c0_7 = arith.constant 0 : index
    %c0_8 = arith.constant 0 : index
    %4 = vector.load %arg3[%c0_5, %c0_6, %c0_7, %c0_8] : memref<1x4x16x128xbf16, #tpu.memory_space<vmem>>, vector<1x2x16x128xbf16>
    %5 = vector.shape_cast %4 : vector<1x2x16x128xbf16> to vector<2x16x128xbf16>
    %c0_9 = arith.constant 0 : index
    %c8 = arith.constant 8 : index
    %c0_10 = arith.constant 0 : index
    %6 = vector.load %arg9[%c0_9, %c8, %c0_10] : memref<20x32x128xbf16, #tpu.memory_space<vmem>>, vector<2x16x128xbf16>
    tpu.vector_store %arg9[%c0_9, %c8, %c0_10], %5 {strides = array<i32>} : memref<20x32x128xbf16, #tpu.memory_space<vmem>>, vector<2x16x128xbf16>,
    %c0_11 = arith.constant 0 : index
    %c2 = arith.constant 2 : index
    %c0_12 = arith.constant 0 : index
    %c0_13 = arith.constant 0 : index
    %7 = vector.load %arg3[%c0_11, %c2, %c0_12, %c0_13] : memref<1x4x16x128xbf16, #tpu.memory_space<vmem>>, vector<1x2x16x128xbf16>
    %8 = vector.shape_cast %7 : vector<1x2x16x128xbf16> to vector<2x16x128xbf16>
    %c18 = arith.constant 18 : index
    %c8_14 = arith.constant 8 : index
    %c0_15 = arith.constant 0 : index
    %9 = vector.load %arg9[%c18, %c8_14, %c0_15] : memref<20x32x128xbf16, #tpu.memory_space<vmem>>, vector<2x16x128xbf16>
    tpu.vector_store %arg9[%c18, %c8_14, %c0_15], %8 {strides = array<i32>} : memref<20x32x128xbf16, #tpu.memory_space<vmem>>, vector<2x16x128xbf16>,
    %c0_16 = arith.constant 0 : index
    %c0_17 = arith.constant 0 : index
    %c0_18 = arith.constant 0 : index
    %c0_19 = arith.constant 0 : index
    %10 = vector.load %arg2[%c0_16, %c0_17, %c0_18, %c0_19] : memref<1x16x16x128xbf16, #tpu.memory_space<vmem>>, vector<1x16x16x128xbf16>
    %11 = vector.shape_cast %10 : vector<1x16x16x128xbf16> to vector<16x16x128xbf16>
    %c2_20 = arith.constant 2 : index
    %c8_21 = arith.constant 8 : index
    %c0_22 = arith.constant 0 : index
    %12 = vector.load %arg9[%c2_20, %c8_21, %c0_22] : memref<20x32x128xbf16, #tpu.memory_space<vmem>>, vector<16x16x128xbf16>
    tpu.vector_store %arg9[%c2_20, %c8_21, %c0_22], %11 {strides = array<i32>} : memref<20x32x128xbf16, #tpu.memory_space<vmem>>, vector<16x16x128xbf16>,
    %c0_23 = arith.constant 0 : index
    %c7 = arith.constant 7 : index
    %c0_24 = arith.constant 0 : index
    %13 = vector.load %arg9[%c0_23, %c7, %c0_24] : memref<20x32x128xbf16, #tpu.memory_space<vmem>>, vector<20x16x128xbf16>
    %c0_25 = arith.constant 0 : index
    %c0_26 = arith.constant 0 : index
    %c0_27 = arith.constant 0 : index
    %14 = vector.load %arg10[%c0_25, %c0_26, %c0_27] : memref<20x16x384xbf16, #tpu.memory_space<vmem>>, vector<20x16x128xbf16>
    tpu.vector_store %arg10[%c0_25, %c0_26, %c0_27], %13 {strides = array<i32>} : memref<20x16x384xbf16, #tpu.memory_space<vmem>>, vector<20x16x128xbf16>,
    %c0_28 = arith.constant 0 : index
    %c8_29 = arith.constant 8 : index
    %c0_30 = arith.constant 0 : index
    %15 = vector.load %arg9[%c0_28, %c8_29, %c0_30] : memref<20x32x128xbf16, #tpu.memory_space<vmem>>, vector<20x16x128xbf16>
    %c0_31 = arith.constant 0 : index
    %c0_32 = arith.constant 0 : index
    %c128 = arith.constant 128 : index
    %16 = vector.load %arg10[%c0_31, %c0_32, %c128] : memref<20x16x384xbf16, #tpu.memory_space<vmem>>, vector<20x16x128xbf16>
    tpu.vector_store %arg10[%c0_31, %c0_32, %c128], %15 {strides = array<i32>} : memref<20x16x384xbf16, #tpu.memory_space<vmem>>, vector<20x16x128xbf16>,
    %c0_33 = arith.constant 0 : index
    %c9 = arith.constant 9 : index
    %c0_34 = arith.constant 0 : index
    %17 = vector.load %arg9[%c0_33, %c9, %c0_34] : memref<20x32x128xbf16, #tpu.memory_space<vmem>>, vector<20x16x128xbf16>
    %c0_35 = arith.constant 0 : index
    %c0_36 = arith.constant 0 : index
    %c256 = arith.constant 256 : index
    %18 = vector.load %arg10[%c0_35, %c0_36, %c256] : memref<20x16x384xbf16, #tpu.memory_space<vmem>>, vector<20x16x128xbf16>
    tpu.vector_store %arg10[%c0_35, %c0_36, %c256], %17 {strides = array<i32>} : memref<20x16x384xbf16, #tpu.memory_space<vmem>>, vector<20x16x128xbf16>,
    %c0_37 = arith.constant 0 : index
    %c0_38 = arith.constant 0 : index
    %c0_39 = arith.constant 0 : index
    %19 = vector.load %arg10[%c0_37, %c0_38, %c0_39] : memref<20x16x384xbf16, #tpu.memory_space<vmem>>, vector<18x16x384xbf16>
    %20 = vector.shape_cast %19 : vector<18x16x384xbf16> to vector<288x384xbf16>
    %c0_40 = arith.constant 0 : index
    %c0_41 = arith.constant 0 : index
    %c0_42 = arith.constant 0 : index
    %21 = vector.load %arg4[%c0_40, %c0_41, %c0_42] : memref<3x384x128xbf16, #tpu.memory_space<vmem>>, vector<1x384x128xbf16>
    %22 = vector.shape_cast %21 : vector<1x384x128xbf16> to vector<384x128xbf16>
    %cst_43 = arith.constant dense<0.000000e+00> : vector<288x128xf32>
    %23 = tpu.matmul %20, %22, %cst_43 {dimension_numbers = #tpu.dot_dimension_numbers<[1], [0], [0], [1], [0, 0, 1, 1], [], []>} : vector<288x384xbf16>, vector<384x128xbf16>, vector<288x128xf32> -> vector<288x128xf32>
    %c1 = arith.constant 1 : index
    %c0_44 = arith.constant 0 : index
    %c0_45 = arith.constant 0 : index
    %24 = vector.load %arg10[%c1, %c0_44, %c0_45] : memref<20x16x384xbf16, #tpu.memory_space<vmem>>, vector<18x16x384xbf16>
    %25 = vector.shape_cast %24 : vector<18x16x384xbf16> to vector<288x384xbf16>
    %c1_46 = arith.constant 1 : index
    %c0_47 = arith.constant 0 : index
    %c0_48 = arith.constant 0 : index
    %26 = vector.load %arg4[%c1_46, %c0_47, %c0_48] : memref<3x384x128xbf16, #tpu.memory_space<vmem>>, vector<1x384x128xbf16>
    %27 = vector.shape_cast %26 : vector<1x384x128xbf16> to vector<384x128xbf16>
    %cst_49 = arith.constant dense<0.000000e+00> : vector<288x128xf32>
    %28 = tpu.matmul %25, %27, %cst_49 {dimension_numbers = #tpu.dot_dimension_numbers<[1], [0], [0], [1], [0, 0, 1, 1], [], []>} : vector<288x384xbf16>, vector<384x128xbf16>, vector<288x128xf32> -> vector<288x128xf32>
    %29 = arith.addf %23, %28 : vector<288x128xf32>
    %c2_50 = arith.constant 2 : index
    %c0_51 = arith.constant 0 : index
    %c0_52 = arith.constant 0 : index
    %30 = vector.load %arg10[%c2_50, %c0_51, %c0_52] : memref<20x16x384xbf16, #tpu.memory_space<vmem>>, vector<18x16x384xbf16>
    %31 = vector.shape_cast %30 : vector<18x16x384xbf16> to vector<288x384xbf16>
    %c2_53 = arith.constant 2 : index
    %c0_54 = arith.constant 0 : index
    %c0_55 = arith.constant 0 : index
    %32 = vector.load %arg4[%c2_53, %c0_54, %c0_55] : memref<3x384x128xbf16, #tpu.memory_space<vmem>>, vector<1x384x128xbf16>
    %33 = vector.shape_cast %32 : vector<1x384x128xbf16> to vector<384x128xbf16>
    %cst_56 = arith.constant dense<0.000000e+00> : vector<288x128xf32>
    %34 = tpu.matmul %31, %33, %cst_56 {dimension_numbers = #tpu.dot_dimension_numbers<[1], [0], [0], [1], [0, 0, 1, 1], [], []>} : vector<288x384xbf16>, vector<384x128xbf16>, vector<288x128xf32> -> vector<288x128xf32>
    %35 = arith.addf %29, %34 : vector<288x128xf32>
    %c0_57 = arith.constant 0 : index
    %c0_58 = arith.constant 0 : index
    %36 = vector.load %arg5[%c0_57, %c0_58] : memref<1x128xf32, #tpu.memory_space<vmem>>, vector<1x128xf32>
    %37 = vector.broadcast %36 : vector<1x128xf32> to vector<288x128xf32>
    %38 = arith.addf %35, %37 : vector<288x128xf32>
    %cst_59 = arith.constant 0.000000e+00 : f32
    %39 = vector.broadcast %cst_59 : f32 to vector<288x128xf32>
    %40 = arith.maximumf %38, %39 : vector<288x128xf32>
    %41 = vector.shape_cast %40 : vector<288x128xf32> to vector<18x16x128xf32>
    %42 = arith.truncf %41 : vector<18x16x128xf32> to vector<18x16x128xbf16>
    %c0_60 = arith.constant 0 : index
    %c8_61 = arith.constant 8 : index
    %c0_62 = arith.constant 0 : index
    %43 = vector.load %arg9[%c0_60, %c8_61, %c0_62] : memref<20x32x128xbf16, #tpu.memory_space<vmem>>, vector<18x16x128xbf16>
    tpu.vector_store %arg9[%c0_60, %c8_61, %c0_62], %42 {strides = array<i32>} : memref<20x32x128xbf16, #tpu.memory_space<vmem>>, vector<18x16x128xbf16>,
    %cst_63 = arith.constant 0.000000e+00 : bf16
    %44 = vector.broadcast %cst_63 : bf16 to vector<1x16x128xbf16>
    %c0_i32 = arith.constant 0 : i32
    %45 = arith.cmpi eq, %arg1, %c0_i32 : i32
    %46 = arith.extui %45 : i1 to i32
    %c0_i32_64 = arith.constant 0 : i32
    %47 = arith.cmpi ne, %46, %c0_i32_64 : i32
    scf.if %47 {
      %c0_117 = arith.constant 0 : index
      %c8_118 = arith.constant 8 : index
      %c0_119 = arith.constant 0 : index
      %88 = vector.load %arg9[%c0_117, %c8_118, %c0_119] : memref<20x32x128xbf16, #tpu.memory_space<vmem>>, vector<1x16x128xbf16>
      tpu.vector_store %arg9[%c0_117, %c8_118, %c0_119], %44 {strides = array<i32>} : memref<20x32x128xbf16, #tpu.memory_space<vmem>>, vector<1x16x128xbf16>,
    } else {
    }
    %c0_i32_65 = arith.constant 0 : i32
    %48 = arith.cmpi eq, %arg1, %c0_i32_65 : i32
    %49 = arith.extui %48 : i1 to i32
    %c0_i32_66 = arith.constant 0 : i32
    %50 = arith.cmpi ne, %49, %c0_i32_66 : i32
    scf.if %50 {
      %c17 = arith.constant 17 : index
      %c8_117 = arith.constant 8 : index
      %c0_118 = arith.constant 0 : index
      %88 = vector.load %arg9[%c17, %c8_117, %c0_118] : memref<20x32x128xbf16, #tpu.memory_space<vmem>>, vector<1x16x128xbf16>
      tpu.vector_store %arg9[%c17, %c8_117, %c0_118], %44 {strides = array<i32>} : memref<20x32x128xbf16, #tpu.memory_space<vmem>>, vector<1x16x128xbf16>,
    } else {
    }
    %c0_67 = arith.constant 0 : index
    %c7_68 = arith.constant 7 : index
    %c0_69 = arith.constant 0 : index
    %51 = vector.load %arg9[%c0_67, %c7_68, %c0_69] : memref<20x32x128xbf16, #tpu.memory_space<vmem>>, vector<18x16x128xbf16>
    %c0_70 = arith.constant 0 : index
    %c0_71 = arith.constant 0 : index
    %c0_72 = arith.constant 0 : index
    %52 = vector.load %arg10[%c0_70, %c0_71, %c0_72] : memref<20x16x384xbf16, #tpu.memory_space<vmem>>, vector<18x16x128xbf16>
    tpu.vector_store %arg10[%c0_70, %c0_71, %c0_72], %51 {strides = array<i32>} : memref<20x16x384xbf16, #tpu.memory_space<vmem>>, vector<18x16x128xbf16>,
    %c0_73 = arith.constant 0 : index
    %c8_74 = arith.constant 8 : index
    %c0_75 = arith.constant 0 : index
    %53 = vector.load %arg9[%c0_73, %c8_74, %c0_75] : memref<20x32x128xbf16, #tpu.memory_space<vmem>>, vector<18x16x128xbf16>
    %c0_76 = arith.constant 0 : index
    %c0_77 = arith.constant 0 : index
    %c128_78 = arith.constant 128 : index
    %54 = vector.load %arg10[%c0_76, %c0_77, %c128_78] : memref<20x16x384xbf16, #tpu.memory_space<vmem>>, vector<18x16x128xbf16>
    tpu.vector_store %arg10[%c0_76, %c0_77, %c128_78], %53 {strides = array<i32>} : memref<20x16x384xbf16, #tpu.memory_space<vmem>>, vector<18x16x128xbf16>,
    %c0_79 = arith.constant 0 : index
    %c9_80 = arith.constant 9 : index
    %c0_81 = arith.constant 0 : index
    %55 = vector.load %arg9[%c0_79, %c9_80, %c0_81] : memref<20x32x128xbf16, #tpu.memory_space<vmem>>, vector<18x16x128xbf16>
    %c0_82 = arith.constant 0 : index
    %c0_83 = arith.constant 0 : index
    %c256_84 = arith.constant 256 : index
    %56 = vector.load %arg10[%c0_82, %c0_83, %c256_84] : memref<20x16x384xbf16, #tpu.memory_space<vmem>>, vector<18x16x128xbf16>
    tpu.vector_store %arg10[%c0_82, %c0_83, %c256_84], %55 {strides = array<i32>} : memref<20x16x384xbf16, #tpu.memory_space<vmem>>, vector<18x16x128xbf16>,
    %c0_85 = arith.constant 0 : index
    %c0_86 = arith.constant 0 : index
    %c0_87 = arith.constant 0 : index
    %57 = vector.load %arg10[%c0_85, %c0_86, %c0_87] : memref<20x16x384xbf16, #tpu.memory_space<vmem>>, vector<16x16x384xbf16>
    %58 = vector.shape_cast %57 : vector<16x16x384xbf16> to vector<256x384xbf16>
    %c0_88 = arith.constant 0 : index
    %c0_89 = arith.constant 0 : index
    %c0_90 = arith.constant 0 : index
    %59 = vector.load %arg6[%c0_88, %c0_89, %c0_90] : memref<3x384x128xbf16, #tpu.memory_space<vmem>>, vector<1x384x128xbf16>
    %60 = vector.shape_cast %59 : vector<1x384x128xbf16> to vector<384x128xbf16>
    %cst_91 = arith.constant dense<0.000000e+00> : vector<256x128xf32>
    %61 = tpu.matmul %58, %60, %cst_91 {dimension_numbers = #tpu.dot_dimension_numbers<[1], [0], [0], [1], [0, 0, 1, 1], [], []>} : vector<256x384xbf16>, vector<384x128xbf16>, vector<256x128xf32> -> vector<256x128xf32>
    %c1_92 = arith.constant 1 : index
    %c0_93 = arith.constant 0 : index
    %c0_94 = arith.constant 0 : index
    %62 = vector.load %arg10[%c1_92, %c0_93, %c0_94] : memref<20x16x384xbf16, #tpu.memory_space<vmem>>, vector<16x16x384xbf16>
    %63 = vector.shape_cast %62 : vector<16x16x384xbf16> to vector<256x384xbf16>
    %c1_95 = arith.constant 1 : index
    %c0_96 = arith.constant 0 : index
    %c0_97 = arith.constant 0 : index
    %64 = vector.load %arg6[%c1_95, %c0_96, %c0_97] : memref<3x384x128xbf16, #tpu.memory_space<vmem>>, vector<1x384x128xbf16>
    %65 = vector.shape_cast %64 : vector<1x384x128xbf16> to vector<384x128xbf16>
    %cst_98 = arith.constant dense<0.000000e+00> : vector<256x128xf32>
    %66 = tpu.matmul %63, %65, %cst_98 {dimension_numbers = #tpu.dot_dimension_numbers<[1], [0], [0], [1], [0, 0, 1, 1], [], []>} : vector<256x384xbf16>, vector<384x128xbf16>, vector<256x128xf32> -> vector<256x128xf32>
    %67 = arith.addf %61, %66 : vector<256x128xf32>
    %c2_99 = arith.constant 2 : index
    %c0_100 = arith.constant 0 : index
    %c0_101 = arith.constant 0 : index
    %68 = vector.load %arg10[%c2_99, %c0_100, %c0_101] : memref<20x16x384xbf16, #tpu.memory_space<vmem>>, vector<16x16x384xbf16>
    %69 = vector.shape_cast %68 : vector<16x16x384xbf16> to vector<256x384xbf16>
    %c2_102 = arith.constant 2 : index
    %c0_103 = arith.constant 0 : index
    %c0_104 = arith.constant 0 : index
    %70 = vector.load %arg6[%c2_102, %c0_103, %c0_104] : memref<3x384x128xbf16, #tpu.memory_space<vmem>>, vector<1x384x128xbf16>
    %71 = vector.shape_cast %70 : vector<1x384x128xbf16> to vector<384x128xbf16>
    %cst_105 = arith.constant dense<0.000000e+00> : vector<256x128xf32>
    %72 = tpu.matmul %69, %71, %cst_105 {dimension_numbers = #tpu.dot_dimension_numbers<[1], [0], [0], [1], [0, 0, 1, 1], [], []>} : vector<256x384xbf16>, vector<384x128xbf16>, vector<256x128xf32> -> vector<256x128xf32>
    %73 = arith.addf %67, %72 : vector<256x128xf32>
    %c0_106 = arith.constant 0 : index
    %c0_107 = arith.constant 0 : index
    %74 = vector.load %arg7[%c0_106, %c0_107] : memref<1x128xf32, #tpu.memory_space<vmem>>, vector<1x128xf32>
    %75 = vector.broadcast %74 : vector<1x128xf32> to vector<256x128xf32>
    %76 = arith.addf %73, %75 : vector<256x128xf32>
    %cst_108 = arith.constant 1.000000e+00 : f32
    %77 = vector.broadcast %cst_108 : f32 to vector<256x128xf32>
    %78 = arith.mulf %76, %77 : vector<256x128xf32>
    %79 = vector.shape_cast %78 : vector<256x128xf32> to vector<16x16x128xf32>
    %c0_109 = arith.constant 0 : index
    %c0_110 = arith.constant 0 : index
    %c0_111 = arith.constant 0 : index
    %c0_112 = arith.constant 0 : index
    %80 = vector.load %arg2[%c0_109, %c0_110, %c0_111, %c0_112] : memref<1x16x16x128xbf16, #tpu.memory_space<vmem>>, vector<1x16x16x128xbf16>
    %81 = vector.shape_cast %80 : vector<1x16x16x128xbf16> to vector<16x16x128xbf16>
    %82 = arith.extf %81 : vector<16x16x128xbf16> to vector<16x16x128xf32>
    %83 = arith.addf %79, %82 : vector<16x16x128xf32>
    %84 = arith.truncf %83 : vector<16x16x128xf32> to vector<16x16x128xbf16>
    %c0_113 = arith.constant 0 : index
    %c0_114 = arith.constant 0 : index
    %c0_115 = arith.constant 0 : index
    %c0_116 = arith.constant 0 : index
    %85 = vector.load %arg8[%c0_113, %c0_114, %c0_115, %c0_116] : memref<1x16x16x128xbf16, #tpu.memory_space<vmem>>, vector<1x16x16x128xbf16>
    %86 = vector.shape_cast %85 : vector<1x16x16x128xbf16> to vector<16x16x128xbf16>
    %87 = vector.shape_cast %84 : vector<16x16x128xbf16> to vector<1x16x16x128xbf16>
    tpu.vector_store %arg8[%c0_113, %c0_114, %c0_115, %c0_116], %87 {strides = array<i32>} : memref<1x16x16x128xbf16, #tpu.memory_space<vmem>>, vector<1x16x16x128xbf16>,
    return
  }
  func.func @transform_0(%arg0: i32, %arg1: i32) -> (i32, i32, i32, i32) {
    %c0_i32 = arith.constant 0 : i32
    %c0_i32_0 = arith.constant 0 : i32
    %c0_i32_1 = arith.constant 0 : i32
    return %arg0, %arg1, %c0_i32, %c0_i32_0 : i32, i32, i32, i32
  }
  func.func @transform_1(%arg0: i32, %arg1: i32) -> (i32, i32, i32, i32) {
    %c1_i32 = arith.constant 1 : i32
    %0 = arith.muli %arg0, %c1_i32 : i32
    %1 = arith.addi %0, %arg1 : i32
    %c0_i32 = arith.constant 0 : i32
    %c0_i32_0 = arith.constant 0 : i32
    %c0_i32_1 = arith.constant 0 : i32
    %c0_i32_2 = arith.constant 0 : i32
    return %1, %c0_i32, %c0_i32_0, %c0_i32_1 : i32, i32, i32, i32
  }
  func.func @transform_2(%arg0: i32, %arg1: i32) -> (i32, i32, i32) {
    %c0_i32 = arith.constant 0 : i32
    %c0_i32_0 = arith.constant 0 : i32
    %c0_i32_1 = arith.constant 0 : i32
    %c0_i32_2 = arith.constant 0 : i32
    return %c0_i32, %c0_i32_0, %c0_i32_1 : i32, i32, i32
  }
  func.func @transform_3(%arg0: i32, %arg1: i32) -> (i32, i32) {
    %c0_i32 = arith.constant 0 : i32
    %c0_i32_0 = arith.constant 0 : i32
    %c0_i32_1 = arith.constant 0 : i32
    return %c0_i32, %c0_i32_0 : i32, i32
  }
  func.func @transform_4(%arg0: i32, %arg1: i32) -> (i32, i32, i32) {
    %c0_i32 = arith.constant 0 : i32
    %c0_i32_0 = arith.constant 0 : i32
    %c0_i32_1 = arith.constant 0 : i32
    %c0_i32_2 = arith.constant 0 : i32
    return %c0_i32, %c0_i32_0, %c0_i32_1 : i32, i32, i32
  }
  func.func @transform_5(%arg0: i32, %arg1: i32) -> (i32, i32) {
    %c0_i32 = arith.constant 0 : i32
    %c0_i32_0 = arith.constant 0 : i32
    %c0_i32_1 = arith.constant 0 : i32
    return %c0_i32, %c0_i32_0 : i32, i32
  }
  func.func @transform_6(%arg0: i32, %arg1: i32) -> (i32, i32, i32, i32) {
    %c0_i32 = arith.constant 0 : i32
    %c0_i32_0 = arith.constant 0 : i32
    %c0_i32_1 = arith.constant 0 : i32
    return %arg0, %arg1, %c0_i32, %c0_i32_0 : i32, i32, i32, i32
  }
}

</mosaic_0001>

<llo_original>
// kernel: resblock_forward.1
$region0: #{resblock_forward.1}
  #allocation0 [shape = 'u32[]', space=smem, size = 0x4, offset = 0x4, fixed_abs, tag = 'smem constant byte address 0x4 - core index']
  #allocation1 [shape = 'u32[144,128]{1,0:T(1,128)}', space=vmem, size = 0x12000, scoped, tag = 'internal scratch']
  #allocation2 [shape = 'bf16[20,32,128]{2,1,0:T(8,128)(2,1)}', space=vmem, size = 0x28000, scoped, tag = 'scratch operand']
  #allocation3 [shape = 'bf16[20,16,384]{2,1,0:T(8,128)(2,1)}', space=vmem, size = 0x3c000, scoped, tag = 'scratch operand']
  %s0 = inlined_call_operand.vmem [shape: bf16[2,16,16,128], index: 0, kind: input, shape index: {}]
  %s1 = inlined_call_operand.vmem [shape: bf16[2,4,16,128], index: 1, kind: input, shape index: {}]
  %s2 = inlined_call_operand.vmem [shape: bf16[3,384,128], index: 2, kind: input, shape index: {}]
  %s3 = inlined_call_operand.vmem [shape: f32[1,128], index: 3, kind: input, shape index: {}]
  %s4 = inlined_call_operand.vmem [shape: bf16[3,384,128], index: 4, kind: input, shape index: {}]
  %s5 = inlined_call_operand.vmem [shape: f32[1,128], index: 5, kind: input, shape index: {}]
  %s6 = inlined_call_operand.vmem [shape: bf16[2,16,16,128], index: 6, kind: output, shape index: {}]
  %s7 = sld [smem:[#allocation0]]
  $region61: #{resblock_forward.1} parent=0
    _
  %s9 = ssub.s32 1, %s7
  %s10 = scalar_select 0, %s9, %s7
  loop: start=0, step=1, limit=4
  $region2: #{resblock_forward.1} parent=0 // loop_pre_header
    _
  $region3: #{resblock_forward.1} parent=0 // loop_header
    %s12 = sphi 0, %s16
    %p13 = scmp.ge.s32.totalorder %s12, 4
    %s19 = sphi 0, %s31
    %s20 = sphi 0, %s27
    %s21 = sphi 0, %s19
    %s22 = sphi 0, %s20
    %s23 = sphi 0, %s21
    %s24 = sphi 0, %s22
    %s36 = sphi 0, %s38
    %s39 = sphi 0, %s36
    %s40 = sphi 0, %s39
    %s56 = sphi 0, %s40
    %s64 = sphi 0, %s66
    %s67 = sphi 0, %s64
    %s68 = sphi 0, %s67
    %s84 = sphi 0, %s68
    %s88 = sphi 0, %s88
    %s90 = sphi 0, %s88
    %s91 = sphi 0, %s90
    %s105 = sphi 0, %s91
    %s109 = sphi 0, %s109
    %s111 = sphi 0, %s109
    %s112 = sphi 0, %s111
    %s126 = sphi 0, %s112
    %s130 = sphi 0, %s130
    %s132 = sphi 0, %s130
    %s133 = sphi 0, %s132
    %s147 = sphi 0, %s133
    %s151 = sphi 0, %s151
    %s153 = sphi 0, %s151
    %s154 = sphi 0, %s153
    %s168 = sphi 0, %s154
    %s176 = sphi 0, %s178
    %s179 = sphi 0, %s176
    %s180 = sphi 0, %s179
    %s196 = sphi 0, %s180
  $region4: #{resblock_forward.1} parent=0 // loop_header_branch
    %15 = sbr.rel (%p13) target = $region8
  $region5: #{resblock_forward.1} parent=0 // loop_body
    %s17 = ssub.s32 %s12, 1
    %s18 = ssub.s32 %s12, 2
    %s25 = sadd.s32 1, %s20
    %p26 = scmp.ge.s32.totalorder %s25, 1
    %s27 = scalar_select %p26, 0, %s25
    %s28 = sadd.s32 1, %s19
    %s29 = scalar_select %p26, %s28, %s19
    %p30 = scmp.ge.s32.totalorder %s29, 2
    %s31 = scalar_select %p30, 0, %s29
    %s32 = ssub.s32 %s19, %s31
    %s33 = ssub.s32 %s20, %s27
    %s34 = sor.u32 %s32, %s33
    %p35 = scmp.eq.s32.totalorder %s34, 0
    %s37 = sadd.s32 %s36, 1
    %s38 = scalar_select %p35, %s36, %s37
    %p41 = pneg %p35
    %p42 = scmp.eq.s32.totalorder %s12, 1
    %p43 = por %p41, %p42
    %p44 = scmp.ne.s32.totalorder %s36, %s39
    %p45 = scmp.eq.s32.totalorder %s12, 0
    %p46 = por %p44, %p45
    %p47 = scmp.ne.s32.totalorder %s36, %s39
    %p48 = scmp.eq.s32.totalorder %s17, 1
    %p49 = por %p47, %p48
    %p50 = scmp.ne.s32.totalorder %s39, %s40
    %p51 = scmp.eq.s32.totalorder %s17, 0
    %p52 = por %p50, %p51
    %p53 = scmp.ne.s32.totalorder %s39, %s40
    %p54 = scmp.eq.s32.totalorder %s18, 1
    %p55 = por %p53, %p54
    %p57 = scmp.ne.s32.totalorder %s40, %s56
    %p58 = scmp.eq.s32.totalorder %s18, 0
    %p59 = por %p57, %p58
    %s60 = sadd.s32 %s19, %s20
    %s61 = sadd.s32 %s31, %s27
    %s62 = ssub.s32 %s60, %s61
    %p63 = scmp.eq.s32.totalorder %s62, 0
    %s65 = sadd.s32 %s64, 1
    %s66 = scalar_select %p63, %s64, %s65
    %p69 = pneg %p63
    %p70 = scmp.eq.s32.totalorder %s12, 1
    %p71 = por %p69, %p70
    %p72 = scmp.ne.s32.totalorder %s64, %s67
    %p73 = scmp.eq.s32.totalorder %s12, 0
    %p74 = por %p72, %p73
    %p75 = scmp.ne.s32.totalorder %s64, %s67
    %p76 = scmp.eq.s32.totalorder %s17, 1
    %p77 = por %p75, %p76
    %p78 = scmp.ne.s32.totalorder %s67, %s68
    %p79 = scmp.eq.s32.totalorder %s17, 0
    %p80 = por %p78, %p79
    %p81 = scmp.ne.s32.totalorder %s67, %s68
    %p82 = scmp.eq.s32.totalorder %s18, 1
    %p83 = por %p81, %p82
    %p85 = scmp.ne.s32.totalorder %s68, %s84
    %p86 = scmp.eq.s32.totalorder %s18, 0
    %p87 = por %p85, %p86
    %s89 = sadd.s32 %s88, 1
    %p92 = scmp.eq.s32.totalorder %s12, 1
    %p93 = scmp.ne.s32.totalorder %s88, %s90
    %p94 = scmp.eq.s32.totalorder %s12, 0
    %p95 = por %p93, %p94
    %p96 = scmp.ne.s32.totalorder %s88, %s90
    %p97 = scmp.eq.s32.totalorder %s17, 1
    %p98 = por %p96, %p97
    %p99 = scmp.ne.s32.totalorder %s90, %s91
    %p100 = scmp.eq.s32.totalorder %s17, 0
    %p101 = por %p99, %p100
    %p102 = scmp.ne.s32.totalorder %s90, %s91
    %p103 = scmp.eq.s32.totalorder %s18, 1
    %p104 = por %p102, %p103
    %p106 = scmp.ne.s32.totalorder %s91, %s105
    %p107 = scmp.eq.s32.totalorder %s18, 0
    %p108 = por %p106, %p107
    %s110 = sadd.s32 %s109, 1
    %p113 = scmp.eq.s32.totalorder %s12, 1
    %p114 = scmp.ne.s32.totalorder %s109, %s111
    %p115 = scmp.eq.s32.totalorder %s12, 0
    %p116 = por %p114, %p115
    %p117 = scmp.ne.s32.totalorder %s109, %s111
    %p118 = scmp.eq.s32.totalorder %s17, 1
    %p119 = por %p117, %p118
    %p120 = scmp.ne.s32.totalorder %s111, %s112
    %p121 = scmp.eq.s32.totalorder %s17, 0
    %p122 = por %p120, %p121
    %p123 = scmp.ne.s32.totalorder %s111, %s112
    %p124 = scmp.eq.s32.totalorder %s18, 1
    %p125 = por %p123, %p124
    %p127 = scmp.ne.s32.totalorder %s112, %s126
    %p128 = scmp.eq.s32.totalorder %s18, 0
    %p129 = por %p127, %p128
    %s131 = sadd.s32 %s130, 1
    %p134 = scmp.eq.s32.totalorder %s12, 1
    %p135 = scmp.ne.s32.totalorder %s130, %s132
    %p136 = scmp.eq.s32.totalorder %s12, 0
    %p137 = por %p135, %p136
    %p138 = scmp.ne.s32.totalorder %s130, %s132
    %p139 = scmp.eq.s32.totalorder %s17, 1
    %p140 = por %p138, %p139
    %p141 = scmp.ne.s32.totalorder %s132, %s133
    %p142 = scmp.eq.s32.totalorder %s17, 0
    %p143 = por %p141, %p142
    %p144 = scmp.ne.s32.totalorder %s132, %s133
    %p145 = scmp.eq.s32.totalorder %s18, 1
    %p146 = por %p144, %p145
    %p148 = scmp.ne.s32.totalorder %s133, %s147
    %p149 = scmp.eq.s32.totalorder %s18, 0
    %p150 = por %p148, %p149
    %s152 = sadd.s32 %s151, 1
    %p155 = scmp.eq.s32.totalorder %s12, 1
    %p156 = scmp.ne.s32.totalorder %s151, %s153
    %p157 = scmp.eq.s32.totalorder %s12, 0
    %p158 = por %p156, %p157
    %p159 = scmp.ne.s32.totalorder %s151, %s153
    %p160 = scmp.eq.s32.totalorder %s17, 1
    %p161 = por %p159, %p160
    %p162 = scmp.ne.s32.totalorder %s153, %s154
    %p163 = scmp.eq.s32.totalorder %s17, 0
    %p164 = por %p162, %p163
    %p165 = scmp.ne.s32.totalorder %s153, %s154
    %p166 = scmp.eq.s32.totalorder %s18, 1
    %p167 = por %p165, %p166
    %p169 = scmp.ne.s32.totalorder %s154, %s168
    %p170 = scmp.eq.s32.totalorder %s18, 0
    %p171 = por %p169, %p170
    %s172 = ssub.s32 %s19, %s31
    %s173 = ssub.s32 %s20, %s27
    %s174 = sor.u32 %s172, %s173
    %p175 = scmp.eq.s32.totalorder %s174, 0
    %s177 = sadd.s32 %s176, 1
    %s178 = scalar_select %p175, %s176, %s177
    %p181 = pneg %p175
    %p182 = scmp.eq.s32.totalorder %s12, 1
    %p183 = por %p181, %p182
    %p184 = scmp.ne.s32.totalorder %s176, %s179
    %p185 = scmp.eq.s32.totalorder %s12, 0
    %p186 = por %p184, %p185
    %p187 = scmp.ne.s32.totalorder %s176, %s179
    %p188 = scmp.eq.s32.totalorder %s17, 1
    %p189 = por %p187, %p188
    %p190 = scmp.ne.s32.totalorder %s179, %s180
    %p191 = scmp.eq.s32.totalorder %s17, 0
    %p192 = por %p190, %p191
    %p193 = scmp.ne.s32.totalorder %s179, %s180
    %p194 = scmp.eq.s32.totalorder %s18, 1
    %p195 = por %p193, %p194
    %p197 = scmp.ne.s32.totalorder %s180, %s196
    %p198 = scmp.eq.s32.totalorder %s18, 0
    %p199 = por %p197, %p198
    %p200 = scmp.le.s32.totalorder 1, %s12
    %p201 = scmp.lt.s32.totalorder %s12, 3
    %p202 = pnand %p200, %p201
    %p203 = pneg %p202
    // Predicated region
    $region9: #{resblock_forward.1} parent=5 // pred_check
      _
    $region10: #{resblock_forward.1} parent=5 // pred_check_branch
      %205 = sbr.rel (%p202) target = $region12
    $region11: #{resblock_forward.1} parent=5 // pred_region
      %s206 = ssub.s32 %s12, 1
      // Predicated region
      $region13: #{resblock_forward.1} parent=11 // pred_check
        %p207 = pneg %p101
      $region14: #{resblock_forward.1} parent=11 // pred_check_branch
        %209 = sbr.rel (%p207) target = $region16
      $region15: #{resblock_forward.1} parent=11 // pred_region
        _
      $region16: #{resblock_forward.1} parent=11 // pred_fallthru
        _
      // Predicated region
      $region17: #{resblock_forward.1} parent=11 // pred_check
        %p210 = pneg %p122
      $region18: #{resblock_forward.1} parent=11 // pred_check_branch
        %212 = sbr.rel (%p210) target = $region20
      $region19: #{resblock_forward.1} parent=11 // pred_region
        _
      $region20: #{resblock_forward.1} parent=11 // pred_fallthru
        _
      // Predicated region
      $region21: #{resblock_forward.1} parent=11 // pred_check
        %p213 = pneg %p143
      $region22: #{resblock_forward.1} parent=11 // pred_check_branch
        %215 = sbr.rel (%p213) target = $region24
      $region23: #{resblock_forward.1} parent=11 // pred_region
        _
      $region24: #{resblock_forward.1} parent=11 // pred_fallthru
        _
      // Predicated region
      $region25: #{resblock_forward.1} parent=11 // pred_check
        %p216 = pneg %p164
      $region26: #{resblock_forward.1} parent=11 // pred_check_branch
        %218 = sbr.rel (%p216) target = $region28
      $region27: #{resblock_forward.1} parent=11 // pred_region
        _
      $region28: #{resblock_forward.1} parent=11 // pred_fallthru
        _
    $region12: #{resblock_forward.1} parent=5 // pred_fallthru
      _
    %p219 = scmp.lt.s32.totalorder %s12, 2
    // Predicated region
    $region29: #{resblock_forward.1} parent=5 // pred_check
      %p220 = pneg %p219
    $region30: #{resblock_forward.1} parent=5 // pred_check_branch
      %222 = sbr.rel (%p220) target = $region32
    $region31: #{resblock_forward.1} parent=5 // pred_region
      // Predicated region
      $region33: #{resblock_forward.1} parent=31 // pred_check
        %p223 = pneg %p46
      $region34: #{resblock_forward.1} parent=31 // pred_check_branch
        %225 = sbr.rel (%p223) target = $region36
      $region35: #{resblock_forward.1} parent=31 // pred_region
        %s226 = smul.u32 16, %s20
        %p227 = scmp.lt.s32.totalorder %s19, 1
        %s228 = scalar_select %p227, %s19, 1
        %p229 = scmp.lt.s32.totalorder %s226, 15
        %s230 = scalar_select %p229, %s226, 15
        %s231 = smul.addr %s230, 2
        %s232 = smul.addr %s228, 32
        %s233 = sadd.s32 %s231, %s232
        %s234 = smul.addr %s233, 4
        %s235 = scalar_lea.vmem %s0, %s234
        %s236 = smul.u32 16, %s20
      $region36: #{resblock_forward.1} parent=31 // pred_fallthru
        _
      // Predicated region
      $region37: #{resblock_forward.1} parent=31 // pred_check
        %p237 = pneg %p74
      $region38: #{resblock_forward.1} parent=31 // pred_check_branch
        %239 = sbr.rel (%p237) target = $region40
      $region39: #{resblock_forward.1} parent=31 // pred_region
        %s240 = sadd.s32 %s19, %s20
        %p241 = scmp.lt.s32.totalorder %s240, 1
        %s242 = scalar_select %p241, %s240, 1
        %s243 = smul.addr %s242, 8
        %s244 = smul.addr %s243, 4
        %s245 = scalar_lea.vmem %s1, %s244
        %s246 = sadd.s32 %s19, %s20
      $region40: #{resblock_forward.1} parent=31 // pred_fallthru
        _
    $region32: #{resblock_forward.1} parent=5 // pred_fallthru
      _
    %p247 = scmp.le.s32.totalorder 1, %s12
    %p248 = scmp.lt.s32.totalorder %s12, 3
    %p249 = pnand %p247, %p248
    %p250 = pneg %p249
    // Predicated region
    $region41: #{resblock_forward.1} parent=5 // pred_check
      _
    $region42: #{resblock_forward.1} parent=5 // pred_check_branch
      %252 = sbr.rel (%p249) target = $region44
    $region43: #{resblock_forward.1} parent=5 // pred_region
      %s253 = ssub.s32 %s12, 1
      %s254 = smul.u32 16, %s22
      %p255 = scmp.lt.s32.totalorder %s21, 1
      %s256 = scalar_select %p255, %s21, 1
      %p257 = scmp.lt.s32.totalorder %s254, 15
      %s258 = scalar_select %p257, %s254, 15
      %s259 = smul.addr %s258, 2
      %s260 = smul.addr %s256, 32
      %s261 = sadd.s32 %s259, %s260
      %s262 = smul.addr %s261, 4
      %s263 = scalar_lea.vmem %s0, %s262
      %p264 = pneg %p52
      %p265 = pneg %p49
      %s266 = sadd.s32 %s21, %s22
      %p267 = scmp.lt.s32.totalorder %s266, 1
      %s268 = scalar_select %p267, %s266, 1
      %s269 = smul.addr %s268, 8
      %s270 = smul.addr %s269, 4
      %s271 = scalar_lea.vmem %s1, %s270
      %p272 = pneg %p80
      %p273 = pneg %p77
      %p274 = pneg %p101
      %p275 = pneg %p98
      %p276 = pneg %p122
      %p277 = pneg %p119
      %p278 = pneg %p143
      %p279 = pneg %p140
      %p280 = pneg %p164
      %p281 = pneg %p161
      %p282 = pneg %p192
      %p283 = pneg %p189
      %s284 = smul.u32 16, %s22
      %p285 = scmp.lt.s32.totalorder %s21, 1
      %s286 = scalar_select %p285, %s21, 1
      %p287 = scmp.lt.s32.totalorder %s284, 15
      %s288 = scalar_select %p287, %s284, 15
      %s289 = smul.addr %s288, 2
      %s290 = smul.addr %s286, 32
      %s291 = sadd.s32 %s289, %s290
      %s292 = smul.addr %s291, 4
      %s293 = scalar_lea.vmem %s6, %s292
      %s294 = smul.u32 16, %s22
      %p295 = scmp.lt.s32.totalorder %s21, 1
      %s296 = scalar_select %p295, %s21, 1
      %p297 = scmp.lt.s32.totalorder %s294, 15
      %s298 = scalar_select %p297, %s294, 15
      %s299 = smul.addr %s298, 2
      %s300 = smul.addr %s296, 32
      %s301 = sadd.s32 %s299, %s300
      %s302 = smul.addr %s301, 4
      %s303 = scalar_lea.vmem %s0, %s302
      %s304 = smul.u32 16, %s22
      %s305 = sadd.s32 %s21, %s22
      %p306 = scmp.lt.s32.totalorder %s305, 1
      %s307 = scalar_select %p306, %s305, 1
      %s308 = smul.addr %s307, 8
      %s309 = smul.addr %s308, 4
      %s310 = scalar_lea.vmem %s1, %s309
      %s311 = sadd.s32 %s21, %s22
      %s312 = smul.u32 16, %s22
      %p313 = scmp.lt.s32.totalorder %s21, 1
      %s314 = scalar_select %p313, %s21, 1
      %p315 = scmp.lt.s32.totalorder %s312, 15
      %s316 = scalar_select %p315, %s312, 15
      %s317 = smul.addr %s316, 2
      %s318 = smul.addr %s314, 32
      %s319 = sadd.s32 %s317, %s318
      %s320 = smul.addr %s319, 4
      %s321 = scalar_lea.vmem %s6, %s320
      %s322 = smul.u32 16, %s22
      %324 = vst [vmem:[#allocation2] sm:$0xf] 0
      %325 = vst [vmem:[#allocation2 + $0x10] sm:$0xf] 0
      %326 = vst [vmem:[#allocation2 + $0x20] sm:$0xf] 0
      %327 = vst [vmem:[#allocation2 + $0x30] sm:$0xf] 0
      %328 = vst [vmem:[#allocation2 + $0x40] sm:$0xf] 0
      %329 = vst [vmem:[#allocation2 + $0x50] sm:$0xf] 0
      %330 = vst [vmem:[#allocation2 + $0x60] sm:$0xf] 0
      %331 = vst [vmem:[#allocation2 + $0x70] sm:$0xf] 0
      %332 = vst [vmem:[#allocation2 + $0x80] sm:$0xf] 0
      %333 = vst [vmem:[#allocation2 + $0x90] sm:$0xf] 0
      %334 = vst [vmem:[#allocation2 + $0xa0] sm:$0xf] 0
      %335 = vst [vmem:[#allocation2 + $0xb0] sm:$0xf] 0
      %336 = vst [vmem:[#allocation2 + $0xc0] sm:$0xf] 0
      %337 = vst [vmem:[#allocation2 + $0xd0] sm:$0xf] 0
      %338 = vst [vmem:[#allocation2 + $0xe0] sm:$0xf] 0
      %339 = vst [vmem:[#allocation2 + $0xf0] sm:$0xf] 0
      %340 = vst [vmem:[#allocation2 + $0x100] sm:$0xf] 0
      %341 = vst [vmem:[#allocation2 + $0x110] sm:$0xf] 0
      %342 = vst [vmem:[#allocation2 + $0x120] sm:$0xf] 0
      %343 = vst [vmem:[#allocation2 + $0x130] sm:$0xf] 0
      %344 = vst [vmem:[#allocation2 + $0xc] sm:$0xf] 0
      %345 = vst [vmem:[#allocation2 + $0x1c] sm:$0xf] 0
      %346 = vst [vmem:[#allocation2 + $0x2c] sm:$0xf] 0
      %347 = vst [vmem:[#allocation2 + $0x3c] sm:$0xf] 0
      %348 = vst [vmem:[#allocation2 + $0x4c] sm:$0xf] 0
      %349 = vst [vmem:[#allocation2 + $0x5c] sm:$0xf] 0
      %350 = vst [vmem:[#allocation2 + $0x6c] sm:$0xf] 0
      %351 = vst [vmem:[#allocation2 + $0x7c] sm:$0xf] 0
      %352 = vst [vmem:[#allocation2 + $0x8c] sm:$0xf] 0
      %353 = vst [vmem:[#allocation2 + $0x9c] sm:$0xf] 0
      %354 = vst [vmem:[#allocation2 + $0xac] sm:$0xf] 0
      %355 = vst [vmem:[#allocation2 + $0xbc] sm:$0xf] 0
      %356 = vst [vmem:[#allocation2 + $0xcc] sm:$0xf] 0
      %357 = vst [vmem:[#allocation2 + $0xdc] sm:$0xf] 0
      %358 = vst [vmem:[#allocation2 + $0xec] sm:$0xf] 0
      %359 = vst [vmem:[#allocation2 + $0xfc] sm:$0xf] 0
      %360 = vst [vmem:[#allocation2 + $0x10c] sm:$0xf] 0
      %361 = vst [vmem:[#allocation2 + $0x11c] sm:$0xf] 0
      %362 = vst [vmem:[#allocation2 + $0x12c] sm:$0xf] 0
      %363 = vst [vmem:[#allocation2 + $0x13c] sm:$0xf] 0
      %v364 = vld [vmem:[%s310] sm:$0xf]
      %v365 = vld [vmem:[%s310 + $0x4] sm:$0xf]
      %v366 = vld [vmem:[%s310 + $0x8] sm:$0xf]
      %v367 = vld [vmem:[%s310 + $0xc] sm:$0xf]
      %368 = vst [vmem:[#allocation2 + $0x4] sm:$0xf] %v364
      %369 = vst [vmem:[#allocation2 + $0x8] sm:$0xf] %v365
      %370 = vst [vmem:[#allocation2 + $0x14] sm:$0xf] %v366
      %371 = vst [vmem:[#allocation2 + $0x18] sm:$0xf] %v367
      %s372 = scalar_lea.vmem %s310, 16
      %v373 = vld [vmem:[%s372] sm:$0xf]
      %v374 = vld [vmem:[%s372 + $0x4] sm:$0xf]
      %v375 = vld [vmem:[%s372 + $0x8] sm:$0xf]
      %v376 = vld [vmem:[%s372 + $0xc] sm:$0xf]
      %s377 = scalar_lea.vmem [#allocation2], 288
      %378 = vst [vmem:[%s377 + $0x4] sm:$0xf] %v373
      %379 = vst [vmem:[%s377 + $0x8] sm:$0xf] %v374
      %380 = vst [vmem:[%s377 + $0x14] sm:$0xf] %v375
      %381 = vst [vmem:[%s377 + $0x18] sm:$0xf] %v376
      %v382 = vld [vmem:[%s303] sm:$0xf]
      %v383 = vld [vmem:[%s303 + $0x4] sm:$0xf]
      %v384 = vld [vmem:[%s303 + $0x8] sm:$0xf]
      %v385 = vld [vmem:[%s303 + $0xc] sm:$0xf]
      %v386 = vld [vmem:[%s303 + $0x10] sm:$0xf]
      %v387 = vld [vmem:[%s303 + $0x14] sm:$0xf]
      %v388 = vld [vmem:[%s303 + $0x18] sm:$0xf]
      %v389 = vld [vmem:[%s303 + $0x1c] sm:$0xf]
      %v390 = vld [vmem:[%s303 + $0x20] sm:$0xf]
      %v391 = vld [vmem:[%s303 + $0x24] sm:$0xf]
      %v392 = vld [vmem:[%s303 + $0x28] sm:$0xf]
      %v393 = vld [vmem:[%s303 + $0x2c] sm:$0xf]
      %v394 = vld [vmem:[%s303 + $0x30] sm:$0xf]
      %v395 = vld [vmem:[%s303 + $0x34] sm:$0xf]
      %v396 = vld [vmem:[%s303 + $0x38] sm:$0xf]
      %v397 = vld [vmem:[%s303 + $0x3c] sm:$0xf]
      %v398 = vld [vmem:[%s303 + $0x40] sm:$0xf]
      %v399 = vld [vmem:[%s303 + $0x44] sm:$0xf]
      %v400 = vld [vmem:[%s303 + $0x48] sm:$0xf]
      %v401 = vld [vmem:[%s303 + $0x4c] sm:$0xf]
      %v402 = vld [vmem:[%s303 + $0x50] sm:$0xf]
      %v403 = vld [vmem:[%s303 + $0x54] sm:$0xf]
      %v404 = vld [vmem:[%s303 + $0x58] sm:$0xf]
      %v405 = vld [vmem:[%s303 + $0x5c] sm:$0xf]
      %v406 = vld [vmem:[%s303 + $0x60] sm:$0xf]
      %v407 = vld [vmem:[%s303 + $0x64] sm:$0xf]
      %v408 = vld [vmem:[%s303 + $0x68] sm:$0xf]
      %v409 = vld [vmem:[%s303 + $0x6c] sm:$0xf]
      %v410 = vld [vmem:[%s303 + $0x70] sm:$0xf]
      %v411 = vld [vmem:[%s303 + $0x74] sm:$0xf]
      %v412 = vld [vmem:[%s303 + $0x78] sm:$0xf]
      %v413 = vld [vmem:[%s303 + $0x7c] sm:$0xf]
      %s414 = scalar_lea.vmem [#allocation2], 32
      %415 = vst [vmem:[%s414 + $0x4] sm:$0xf] %v382
      %416 = vst [vmem:[%s414 + $0x8] sm:$0xf] %v383
      %417 = vst [vmem:[%s414 + $0x14] sm:$0xf] %v384
      %418 = vst [vmem:[%s414 + $0x18] sm:$0xf] %v385
      %419 = vst [vmem:[%s414 + $0x24] sm:$0xf] %v386
      %420 = vst [vmem:[%s414 + $0x28] sm:$0xf] %v387
      %421 = vst [vmem:[%s414 + $0x34] sm:$0xf] %v388
      %422 = vst [vmem:[%s414 + $0x38] sm:$0xf] %v389
      %423 = vst [vmem:[%s414 + $0x44] sm:$0xf] %v390
      %424 = vst [vmem:[%s414 + $0x48] sm:$0xf] %v391
      %425 = vst [vmem:[%s414 + $0x54] sm:$0xf] %v392
      %426 = vst [vmem:[%s414 + $0x58] sm:$0xf] %v393
      %427 = vst [vmem:[%s414 + $0x64] sm:$0xf] %v394
      %428 = vst [vmem:[%s414 + $0x68] sm:$0xf] %v395
      %429 = vst [vmem:[%s414 + $0x74] sm:$0xf] %v396
      %430 = vst [vmem:[%s414 + $0x78] sm:$0xf] %v397
      %431 = vst [vmem:[%s414 + $0x84] sm:$0xf] %v398
      %432 = vst [vmem:[%s414 + $0x88] sm:$0xf] %v399
      %433 = vst [vmem:[%s414 + $0x94] sm:$0xf] %v400
      %434 = vst [vmem:[%s414 + $0x98] sm:$0xf] %v401
      %435 = vst [vmem:[%s414 + $0xa4] sm:$0xf] %v402
      %436 = vst [vmem:[%s414 + $0xa8] sm:$0xf] %v403
      %437 = vst [vmem:[%s414 + $0xb4] sm:$0xf] %v404
      %438 = vst [vmem:[%s414 + $0xb8] sm:$0xf] %v405
      %439 = vst [vmem:[%s414 + $0xc4] sm:$0xf] %v406
      %440 = vst [vmem:[%s414 + $0xc8] sm:$0xf] %v407
      %441 = vst [vmem:[%s414 + $0xd4] sm:$0xf] %v408
      %442 = vst [vmem:[%s414 + $0xd8] sm:$0xf] %v409
      %443 = vst [vmem:[%s414 + $0xe4] sm:$0xf] %v410
      %444 = vst [vmem:[%s414 + $0xe8] sm:$0xf] %v411
      %445 = vst [vmem:[%s414 + $0xf4] sm:$0xf] %v412
      %446 = vst [vmem:[%s414 + $0xf8] sm:$0xf] %v413
      %v447 = vld [vmem:[#allocation2] sm:$0x8]
      %v448 = vld [vmem:[#allocation2 + $0x4] sm:$0xf]
      %v449 = vld [vmem:[#allocation2 + $0x8] sm:$0xf]
      %v450 = vld [vmem:[#allocation2 + $0x10] sm:$0x8]
      %v451 = vld [vmem:[#allocation2 + $0x14] sm:$0xf]
      %v452 = vld [vmem:[#allocation2 + $0x18] sm:$0xf]
      %v453 = vld [vmem:[#allocation2 + $0x20] sm:$0x8]
      %v454 = vld [vmem:[#allocation2 + $0x24] sm:$0xf]
      %v455 = vld [vmem:[#allocation2 + $0x28] sm:$0xf]
      %v456 = vld [vmem:[#allocation2 + $0x30] sm:$0x8]
      %v457 = vld [vmem:[#allocation2 + $0x34] sm:$0xf]
      %v458 = vld [vmem:[#allocation2 + $0x38] sm:$0xf]
      %v459 = vld [vmem:[#allocation2 + $0x40] sm:$0x8]
      %v460 = vld [vmem:[#allocation2 + $0x44] sm:$0xf]
      %v461 = vld [vmem:[#allocation2 + $0x48] sm:$0xf]
      %v462 = vld [vmem:[#allocation2 + $0x50] sm:$0x8]
      %v463 = vld [vmem:[#allocation2 + $0x54] sm:$0xf]
      %v464 = vld [vmem:[#allocation2 + $0x58] sm:$0xf]
      %v465 = vld [vmem:[#allocation2 + $0x60] sm:$0x8]
      %v466 = vld [vmem:[#allocation2 + $0x64] sm:$0xf]
      %v467 = vld [vmem:[#allocation2 + $0x68] sm:$0xf]
      %v468 = vld [vmem:[#allocation2 + $0x70] sm:$0x8]
      %v469 = vld [vmem:[#allocation2 + $0x74] sm:$0xf]
      %v470 = vld [vmem:[#allocation2 + $0x78] sm:$0xf]
      %v471 = vld [vmem:[#allocation2 + $0x80] sm:$0x8]
      %v472 = vld [vmem:[#allocation2 + $0x84] sm:$0xf]
      %v473 = vld [vmem:[#allocation2 + $0x88] sm:$0xf]
      %v474 = vld [vmem:[#allocation2 + $0x90] sm:$0x8]
      %v475 = vld [vmem:[#allocation2 + $0x94] sm:$0xf]
      %v476 = vld [vmem:[#allocation2 + $0x98] sm:$0xf]
      %v477 = vld [vmem:[#allocation2 + $0xa0] sm:$0x8]
      %v478 = vld [vmem:[#allocation2 + $0xa4] sm:$0xf]
      %v479 = vld [vmem:[#allocation2 + $0xa8] sm:$0xf]
      %v480 = vld [vmem:[#allocation2 + $0xb0] sm:$0x8]
      %v481 = vld [vmem:[#allocation2 + $0xb4] sm:$0xf]
      %v482 = vld [vmem:[#allocation2 + $0xb8] sm:$0xf]
      %v483 = vld [vmem:[#allocation2 + $0xc0] sm:$0x8]
      %v484 = vld [vmem:[#allocation2 + $0xc4] sm:$0xf]
      %v485 = vld [vmem:[#allocation2 + $0xc8] sm:$0xf]
      %v486 = vld [vmem:[#allocation2 + $0xd0] sm:$0x8]
      %v487 = vld [vmem:[#allocation2 + $0xd4] sm:$0xf]
      %v488 = vld [vmem:[#allocation2 + $0xd8] sm:$0xf]
      %v489 = vld [vmem:[#allocation2 + $0xe0] sm:$0x8]
      %v490 = vld [vmem:[#allocation2 + $0xe4] sm:$0xf]
      %v491 = vld [vmem:[#allocation2 + $0xe8] sm:$0xf]
      %v492 = vld [vmem:[#allocation2 + $0xf0] sm:$0x8]
      %v493 = vld [vmem:[#allocation2 + $0xf4] sm:$0xf]
      %v494 = vld [vmem:[#allocation2 + $0xf8] sm:$0xf]
      %v495 = vld [vmem:[#allocation2 + $0x100] sm:$0x8]
      %v496 = vld [vmem:[#allocation2 + $0x104] sm:$0xf]
      %v497 = vld [vmem:[#allocation2 + $0x108] sm:$0xf]
      %v498 = vld [vmem:[#allocation2 + $0x110] sm:$0x8]
      %v499 = vld [vmem:[#allocation2 + $0x114] sm:$0xf]
      %v500 = vld [vmem:[#allocation2 + $0x118] sm:$0xf]
      %v501 = vld [vmem:[#allocation2 + $0x120] sm:$0x8]
      %v502 = vld [vmem:[#allocation2 + $0x124] sm:$0xf]
      %v503 = vld [vmem:[#allocation2 + $0x128] sm:$0xf]
      %v504 = vld [vmem:[#allocation2 + $0x130] sm:$0x8]
      %v505 = vld [vmem:[#allocation2 + $0x134] sm:$0xf]
      %v506 = vld [vmem:[#allocation2 + $0x138] sm:$0xf]
      %vm507 = vsmask.f32 256
      %vm508 = vsmask.f32 4368
      %vm509 = vmor %vm507, %vm508
      %v511 = vshrl.u32 %v447, 16
      %v513 = vrot.slane %v511, 7
      %v514 = vrot.slane %v513, 4
      %v516 = vshrl.u32 %v448, 16
      %v518 = vrot.slane %v516, 7
      %v519 = vshll.u32 %v448, 16
      %v521 = vor.u32 %v518, %v519
      %v522 = vsel %vm509, %v514, %v521
      %v523 = vrot.slane %v518, 4
      %v525 = vshrl.u32 %v449, 16
      %v527 = vrot.slane %v525, 7
      %v528 = vshll.u32 %v449, 16
      %v530 = vor.u32 %v527, %v528
      %v531 = vsel %vm509, %v523, %v530
      %v533 = vshrl.u32 %v450, 16
      %v535 = vrot.slane %v533, 7
      %v536 = vrot.slane %v535, 4
      %v538 = vshrl.u32 %v451, 16
      %v540 = vrot.slane %v538, 7
      %v541 = vshll.u32 %v451, 16
      %v543 = vor.u32 %v540, %v541
      %v544 = vsel %vm509, %v536, %v543
      %v545 = vrot.slane %v540, 4
      %v547 = vshrl.u32 %v452, 16
      %v549 = vrot.slane %v547, 7
      %v550 = vshll.u32 %v452, 16
      %v552 = vor.u32 %v549, %v550
      %v553 = vsel %vm509, %v545, %v552
      %v555 = vshrl.u32 %v453, 16
      %v557 = vrot.slane %v555, 7
      %v558 = vrot.slane %v557, 4
      %v560 = vshrl.u32 %v454, 16
      %v562 = vrot.slane %v560, 7
      %v563 = vshll.u32 %v454, 16
      %v565 = vor.u32 %v562, %v563
      %v566 = vsel %vm509, %v558, %v565
      %v567 = vrot.slane %v562, 4
      %v569 = vshrl.u32 %v455, 16
      %v571 = vrot.slane %v569, 7
      %v572 = vshll.u32 %v455, 16
      %v574 = vor.u32 %v571, %v572
      %v575 = vsel %vm509, %v567, %v574
      %v577 = vshrl.u32 %v456, 16
      %v579 = vrot.slane %v577, 7
      %v580 = vrot.slane %v579, 4
      %v582 = vshrl.u32 %v457, 16
      %v584 = vrot.slane %v582, 7
      %v585 = vshll.u32 %v457, 16
      %v587 = vor.u32 %v584, %v585
      %v588 = vsel %vm509, %v580, %v587
      %v589 = vrot.slane %v584, 4
      %v591 = vshrl.u32 %v458, 16
      %v593 = vrot.slane %v591, 7
      %v594 = vshll.u32 %v458, 16
      %v596 = vor.u32 %v593, %v594
      %v597 = vsel %vm509, %v589, %v596
      %v599 = vshrl.u32 %v459, 16
      %v601 = vrot.slane %v599, 7
      %v602 = vrot.slane %v601, 4
      %v604 = vshrl.u32 %v460, 16
      %v606 = vrot.slane %v604, 7
      %v607 = vshll.u32 %v460, 16
      %v609 = vor.u32 %v606, %v607
      %v610 = vsel %vm509, %v602, %v609
      %v611 = vrot.slane %v606, 4
      %v613 = vshrl.u32 %v461, 16
      %v615 = vrot.slane %v613, 7
      %v616 = vshll.u32 %v461, 16
      %v618 = vor.u32 %v615, %v616
      %v619 = vsel %vm509, %v611, %v618
      %v621 = vshrl.u32 %v462, 16
      %v623 = vrot.slane %v621, 7
      %v624 = vrot.slane %v623, 4
      %v626 = vshrl.u32 %v463, 16
      %v628 = vrot.slane %v626, 7
      %v629 = vshll.u32 %v463, 16
      %v631 = vor.u32 %v628, %v629
      %v632 = vsel %vm509, %v624, %v631
      %v633 = vrot.slane %v628, 4
      %v635 = vshrl.u32 %v464, 16
      %v637 = vrot.slane %v635, 7
      %v638 = vshll.u32 %v464, 16
      %v640 = vor.u32 %v637, %v638
      %v641 = vsel %vm509, %v633, %v640
      %v643 = vshrl.u32 %v465, 16
      %v645 = vrot.slane %v643, 7
      %v646 = vrot.slane %v645, 4
      %v648 = vshrl.u32 %v466, 16
      %v650 = vrot.slane %v648, 7
      %v651 = vshll.u32 %v466, 16
      %v653 = vor.u32 %v650, %v651
      %v654 = vsel %vm509, %v646, %v653
      %v655 = vrot.slane %v650, 4
      %v657 = vshrl.u32 %v467, 16
      %v659 = vrot.slane %v657, 7
      %v660 = vshll.u32 %v467, 16
      %v662 = vor.u32 %v659, %v660
      %v663 = vsel %vm509, %v655, %v662
      %v665 = vshrl.u32 %v468, 16
      %v667 = vrot.slane %v665, 7
      %v668 = vrot.slane %v667, 4
      %v670 = vshrl.u32 %v469, 16
      %v672 = vrot.slane %v670, 7
      %v673 = vshll.u32 %v469, 16
      %v675 = vor.u32 %v672, %v673
      %v676 = vsel %vm509, %v668, %v675
      %v677 = vrot.slane %v672, 4
      %v679 = vshrl.u32 %v470, 16
      %v681 = vrot.slane %v679, 7
      %v682 = vshll.u32 %v470, 16
      %v684 = vor.u32 %v681, %v682
      %v685 = vsel %vm509, %v677, %v684
      %v687 = vshrl.u32 %v471, 16
      %v689 = vrot.slane %v687, 7
      %v690 = vrot.slane %v689, 4
      %v692 = vshrl.u32 %v472, 16
      %v694 = vrot.slane %v692, 7
      %v695 = vshll.u32 %v472, 16
      %v697 = vor.u32 %v694, %v695
      %v698 = vsel %vm509, %v690, %v697
      %v699 = vrot.slane %v694, 4
      %v701 = vshrl.u32 %v473, 16
      %v703 = vrot.slane %v701, 7
      %v704 = vshll.u32 %v473, 16
      %v706 = vor.u32 %v703, %v704
      %v707 = vsel %vm509, %v699, %v706
      %v709 = vshrl.u32 %v474, 16
      %v711 = vrot.slane %v709, 7
      %v712 = vrot.slane %v711, 4
      %v714 = vshrl.u32 %v475, 16
      %v716 = vrot.slane %v714, 7
      %v717 = vshll.u32 %v475, 16
      %v719 = vor.u32 %v716, %v717
      %v720 = vsel %vm509, %v712, %v719
      %v721 = vrot.slane %v716, 4
      %v723 = vshrl.u32 %v476, 16
      %v725 = vrot.slane %v723, 7
      %v726 = vshll.u32 %v476, 16
      %v728 = vor.u32 %v725, %v726
      %v729 = vsel %vm509, %v721, %v728
      %v731 = vshrl.u32 %v477, 16
      %v733 = vrot.slane %v731, 7
      %v734 = vrot.slane %v733, 4
      %v736 = vshrl.u32 %v478, 16
      %v738 = vrot.slane %v736, 7
      %v739 = vshll.u32 %v478, 16
      %v741 = vor.u32 %v738, %v739
      %v742 = vsel %vm509, %v734, %v741
      %v743 = vrot.slane %v738, 4
      %v745 = vshrl.u32 %v479, 16
      %v747 = vrot.slane %v745, 7
      %v748 = vshll.u32 %v479, 16
      %v750 = vor.u32 %v747, %v748
      %v751 = vsel %vm509, %v743, %v750
      %v753 = vshrl.u32 %v480, 16
      %v755 = vrot.slane %v753, 7
      %v756 = vrot.slane %v755, 4
      %v758 = vshrl.u32 %v481, 16
      %v760 = vrot.slane %v758, 7
      %v761 = vshll.u32 %v481, 16
      %v763 = vor.u32 %v760, %v761
      %v764 = vsel %vm509, %v756, %v763
      %v765 = vrot.slane %v760, 4
      %v767 = vshrl.u32 %v482, 16
      %v769 = vrot.slane %v767, 7
      %v770 = vshll.u32 %v482, 16
      %v772 = vor.u32 %v769, %v770
      %v773 = vsel %vm509, %v765, %v772
      %v775 = vshrl.u32 %v483, 16
      %v777 = vrot.slane %v775, 7
      %v778 = vrot.slane %v777, 4
      %v780 = vshrl.u32 %v484, 16
      %v782 = vrot.slane %v780, 7
      %v783 = vshll.u32 %v484, 16
      %v785 = vor.u32 %v782, %v783
      %v786 = vsel %vm509, %v778, %v785
      %v787 = vrot.slane %v782, 4
      %v789 = vshrl.u32 %v485, 16
      %v791 = vrot.slane %v789, 7
      %v792 = vshll.u32 %v485, 16
      %v794 = vor.u32 %v791, %v792
      %v795 = vsel %vm509, %v787, %v794
      %v797 = vshrl.u32 %v486, 16
      %v799 = vrot.slane %v797, 7
      %v800 = vrot.slane %v799, 4
      %v802 = vshrl.u32 %v487, 16
      %v804 = vrot.slane %v802, 7
      %v805 = vshll.u32 %v487, 16
      %v807 = vor.u32 %v804, %v805
      %v808 = vsel %vm509, %v800, %v807
      %v809 = vrot.slane %v804, 4
      %v811 = vshrl.u32 %v488, 16
      %v813 = vrot.slane %v811, 7
      %v814 = vshll.u32 %v488, 16
      %v816 = vor.u32 %v813, %v814
      %v817 = vsel %vm509, %v809, %v816
      %v819 = vshrl.u32 %v489, 16
      %v821 = vrot.slane %v819, 7
      %v822 = vrot.slane %v821, 4
      %v824 = vshrl.u32 %v490, 16
      %v826 = vrot.slane %v824, 7
      %v827 = vshll.u32 %v490, 16
      %v829 = vor.u32 %v826, %v827
      %v830 = vsel %vm509, %v822, %v829
      %v831 = vrot.slane %v826, 4
      %v833 = vshrl.u32 %v491, 16
      %v835 = vrot.slane %v833, 7
      %v836 = vshll.u32 %v491, 16
      %v838 = vor.u32 %v835, %v836
      %v839 = vsel %vm509, %v831, %v838
      %v841 = vshrl.u32 %v492, 16
      %v843 = vrot.slane %v841, 7
      %v844 = vrot.slane %v843, 4
      %v846 = vshrl.u32 %v493, 16
      %v848 = vrot.slane %v846, 7
      %v849 = vshll.u32 %v493, 16
      %v851 = vor.u32 %v848, %v849
      %v852 = vsel %vm509, %v844, %v851
      %v853 = vrot.slane %v848, 4
      %v855 = vshrl.u32 %v494, 16
      %v857 = vrot.slane %v855, 7
      %v858 = vshll.u32 %v494, 16
      %v860 = vor.u32 %v857, %v858
      %v861 = vsel %vm509, %v853, %v860
      %v863 = vshrl.u32 %v495, 16
      %v865 = vrot.slane %v863, 7
      %v866 = vrot.slane %v865, 4
      %v868 = vshrl.u32 %v496, 16
      %v870 = vrot.slane %v868, 7
      %v871 = vshll.u32 %v496, 16
      %v873 = vor.u32 %v870, %v871
      %v874 = vsel %vm509, %v866, %v873
      %v875 = vrot.slane %v870, 4
      %v877 = vshrl.u32 %v497, 16
      %v879 = vrot.slane %v877, 7
      %v880 = vshll.u32 %v497, 16
      %v882 = vor.u32 %v879, %v880
      %v883 = vsel %vm509, %v875, %v882
      %v885 = vshrl.u32 %v498, 16
      %v887 = vrot.slane %v885, 7
      %v888 = vrot.slane %v887, 4
      %v890 = vshrl.u32 %v499, 16
      %v892 = vrot.slane %v890, 7
      %v893 = vshll.u32 %v499, 16
      %v895 = vor.u32 %v892, %v893
      %v896 = vsel %vm509, %v888, %v895
      %v897 = vrot.slane %v892, 4
      %v899 = vshrl.u32 %v500, 16
      %v901 = vrot.slane %v899, 7
      %v902 = vshll.u32 %v500, 16
      %v904 = vor.u32 %v901, %v902
      %v905 = vsel %vm509, %v897, %v904
      %v907 = vshrl.u32 %v501, 16
      %v909 = vrot.slane %v907, 7
      %v910 = vrot.slane %v909, 4
      %v912 = vshrl.u32 %v502, 16
      %v914 = vrot.slane %v912, 7
      %v915 = vshll.u32 %v502, 16
      %v917 = vor.u32 %v914, %v915
      %v918 = vsel %vm509, %v910, %v917
      %v919 = vrot.slane %v914, 4
      %v921 = vshrl.u32 %v503, 16
      %v923 = vrot.slane %v921, 7
      %v924 = vshll.u32 %v503, 16
      %v926 = vor.u32 %v923, %v924
      %v927 = vsel %vm509, %v919, %v926
      %v929 = vshrl.u32 %v504, 16
      %v931 = vrot.slane %v929, 7
      %v932 = vrot.slane %v931, 4
      %v934 = vshrl.u32 %v505, 16
      %v936 = vrot.slane %v934, 7
      %v937 = vshll.u32 %v505, 16
      %v939 = vor.u32 %v936, %v937
      %v940 = vsel %vm509, %v932, %v939
      %v941 = vrot.slane %v936, 4
      %v943 = vshrl.u32 %v506, 16
      %v945 = vrot.slane %v943, 7
      %v946 = vshll.u32 %v506, 16
      %v948 = vor.u32 %v945, %v946
      %v949 = vsel %vm509, %v941, %v948
      %990 = vst [vmem:[#allocation3] sm:$0xf] %v522
      %991 = vst [vmem:[#allocation3 + $0xc] sm:$0xf] %v531
      %992 = vst [vmem:[#allocation3 + $0x18] sm:$0xf] %v544
      %993 = vst [vmem:[#allocation3 + $0x24] sm:$0xf] %v553
      %994 = vst [vmem:[#allocation3 + $0x30] sm:$0xf] %v566
      %995 = vst [vmem:[#allocation3 + $0x3c] sm:$0xf] %v575
      %996 = vst [vmem:[#allocation3 + $0x48] sm:$0xf] %v588
      %997 = vst [vmem:[#allocation3 + $0x54] sm:$0xf] %v597
      %998 = vst [vmem:[#allocation3 + $0x60] sm:$0xf] %v610
      %999 = vst [vmem:[#allocation3 + $0x6c] sm:$0xf] %v619
      %1000 = vst [vmem:[#allocation3 + $0x78] sm:$0xf] %v632
      %1001 = vst [vmem:[#allocation3 + $0x84] sm:$0xf] %v641
      %1002 = vst [vmem:[#allocation3 + $0x90] sm:$0xf] %v654
      %1003 = vst [vmem:[#allocation3 + $0x9c] sm:$0xf] %v663
      %1004 = vst [vmem:[#allocation3 + $0xa8] sm:$0xf] %v676
      %1005 = vst [vmem:[#allocation3 + $0xb4] sm:$0xf] %v685
      %1006 = vst [vmem:[#allocation3 + $0xc0] sm:$0xf] %v698
      %1007 = vst [vmem:[#allocation3 + $0xcc] sm:$0xf] %v707
      %1008 = vst [vmem:[#allocation3 + $0xd8] sm:$0xf] %v720
      %1009 = vst [vmem:[#allocation3 + $0xe4] sm:$0xf] %v729
      %1010 = vst [vmem:[#allocation3 + $0xf0] sm:$0xf] %v742
      %1011 = vst [vmem:[#allocation3 + $0xfc] sm:$0xf] %v751
      %1012 = vst [vmem:[#allocation3 + $0x108] sm:$0xf] %v764
      %1013 = vst [vmem:[#allocation3 + $0x114] sm:$0xf] %v773
      %1014 = vst [vmem:[#allocation3 + $0x120] sm:$0xf] %v786
      %1015 = vst [vmem:[#allocation3 + $0x12c] sm:$0xf] %v795
      %1016 = vst [vmem:[#allocation3 + $0x138] sm:$0xf] %v808
      %1017 = vst [vmem:[#allocation3 + $0x144] sm:$0xf] %v817
      %1018 = vst [vmem:[#allocation3 + $0x150] sm:$0xf] %v830
      %1019 = vst [vmem:[#allocation3 + $0x15c] sm:$0xf] %v839
      %1020 = vst [vmem:[#allocation3 + $0x168] sm:$0xf] %v852
      %1021 = vst [vmem:[#allocation3 + $0x174] sm:$0xf] %v861
      %1022 = vst [vmem:[#allocation3 + $0x180] sm:$0xf] %v874
      %1023 = vst [vmem:[#allocation3 + $0x18c] sm:$0xf] %v883
      %1024 = vst [vmem:[#allocation3 + $0x198] sm:$0xf] %v896
      %1025 = vst [vmem:[#allocation3 + $0x1a4] sm:$0xf] %v905
      %1026 = vst [vmem:[#allocation3 + $0x1b0] sm:$0xf] %v918
      %1027 = vst [vmem:[#allocation3 + $0x1bc] sm:$0xf] %v927
      %1028 = vst [vmem:[#allocation3 + $0x1c8] sm:$0xf] %v940
      %1029 = vst [vmem:[#allocation3 + $0x1d4] sm:$0xf] %v949
      %v1030 = vld [vmem:[#allocation2 + $0x4] sm:$0xf]
      %v1031 = vld [vmem:[#allocation2 + $0x8] sm:$0xf]
      %v1032 = vld [vmem:[#allocation2 + $0x14] sm:$0xf]
      %v1033 = vld [vmem:[#allocation2 + $0x18] sm:$0xf]
      %v1034 = vld [vmem:[#allocation2 + $0x24] sm:$0xf]
      %v1035 = vld [vmem:[#allocation2 + $0x28] sm:$0xf]
      %v1036 = vld [vmem:[#allocation2 + $0x34] sm:$0xf]
      %v1037 = vld [vmem:[#allocation2 + $0x38] sm:$0xf]
      %v1038 = vld [vmem:[#allocation2 + $0x44] sm:$0xf]
      %v1039 = vld [vmem:[#allocation2 + $0x48] sm:$0xf]
      %v1040 = vld [vmem:[#allocation2 + $0x54] sm:$0xf]
      %v1041 = vld [vmem:[#allocation2 + $0x58] sm:$0xf]
      %v1042 = vld [vmem:[#allocation2 + $0x64] sm:$0xf]
      %v1043 = vld [vmem:[#allocation2 + $0x68] sm:$0xf]
      %v1044 = vld [vmem:[#allocation2 + $0x74] sm:$0xf]
      %v1045 = vld [vmem:[#allocation2 + $0x78] sm:$0xf]
      %v1046 = vld [vmem:[#allocation2 + $0x84] sm:$0xf]
      %v1047 = vld [vmem:[#allocation2 + $0x88] sm:$0xf]
      %v1048 = vld [vmem:[#allocation2 + $0x94] sm:$0xf]
      %v1049 = vld [vmem:[#allocation2 + $0x98] sm:$0xf]
      %v1050 = vld [vmem:[#allocation2 + $0xa4] sm:$0xf]
      %v1051 = vld [vmem:[#allocation2 + $0xa8] sm:$0xf]
      %v1052 = vld [vmem:[#allocation2 + $0xb4] sm:$0xf]
      %v1053 = vld [vmem:[#allocation2 + $0xb8] sm:$0xf]
      %v1054 = vld [vmem:[#allocation2 + $0xc4] sm:$0xf]
      %v1055 = vld [vmem:[#allocation2 + $0xc8] sm:$0xf]
      %v1056 = vld [vmem:[#allocation2 + $0xd4] sm:$0xf]
      %v1057 = vld [vmem:[#allocation2 + $0xd8] sm:$0xf]
      %v1058 = vld [vmem:[#allocation2 + $0xe4] sm:$0xf]
      %v1059 = vld [vmem:[#allocation2 + $0xe8] sm:$0xf]
      %v1060 = vld [vmem:[#allocation2 + $0xf4] sm:$0xf]
      %v1061 = vld [vmem:[#allocation2 + $0xf8] sm:$0xf]
      %v1062 = vld [vmem:[#allocation2 + $0x104] sm:$0xf]
      %v1063 = vld [vmem:[#allocation2 + $0x108] sm:$0xf]
      %v1064 = vld [vmem:[#allocation2 + $0x114] sm:$0xf]
      %v1065 = vld [vmem:[#allocation2 + $0x118] sm:$0xf]
      %v1066 = vld [vmem:[#allocation2 + $0x124] sm:$0xf]
      %v1067 = vld [vmem:[#allocation2 + $0x128] sm:$0xf]
      %v1068 = vld [vmem:[#allocation2 + $0x134] sm:$0xf]
      %v1069 = vld [vmem:[#allocation2 + $0x138] sm:$0xf]
      %1070 = vst [vmem:[#allocation3 + $0x4] sm:$0xf] %v1030
      %1071 = vst [vmem:[#allocation3 + $0x10] sm:$0xf] %v1031
      %1072 = vst [vmem:[#allocation3 + $0x1c] sm:$0xf] %v1032
      %1073 = vst [vmem:[#allocation3 + $0x28] sm:$0xf] %v1033
      %1074 = vst [vmem:[#allocation3 + $0x34] sm:$0xf] %v1034
      %1075 = vst [vmem:[#allocation3 + $0x40] sm:$0xf] %v1035
      %1076 = vst [vmem:[#allocation3 + $0x4c] sm:$0xf] %v1036
      %1077 = vst [vmem:[#allocation3 + $0x58] sm:$0xf] %v1037
      %1078 = vst [vmem:[#allocation3 + $0x64] sm:$0xf] %v1038
      %1079 = vst [vmem:[#allocation3 + $0x70] sm:$0xf] %v1039
      %1080 = vst [vmem:[#allocation3 + $0x7c] sm:$0xf] %v1040
      %1081 = vst [vmem:[#allocation3 + $0x88] sm:$0xf] %v1041
      %1082 = vst [vmem:[#allocation3 + $0x94] sm:$0xf] %v1042
      %1083 = vst [vmem:[#allocation3 + $0xa0] sm:$0xf] %v1043
      %1084 = vst [vmem:[#allocation3 + $0xac] sm:$0xf] %v1044
      %1085 = vst [vmem:[#allocation3 + $0xb8] sm:$0xf] %v1045
      %1086 = vst [vmem:[#allocation3 + $0xc4] sm:$0xf] %v1046
      %1087 = vst [vmem:[#allocation3 + $0xd0] sm:$0xf] %v1047
      %1088 = vst [vmem:[#allocation3 + $0xdc] sm:$0xf] %v1048
      %1089 = vst [vmem:[#allocation3 + $0xe8] sm:$0xf] %v1049
      %1090 = vst [vmem:[#allocation3 + $0xf4] sm:$0xf] %v1050
      %1091 = vst [vmem:[#allocation3 + $0x100] sm:$0xf] %v1051
      %1092 = vst [vmem:[#allocation3 + $0x10c] sm:$0xf] %v1052
      %1093 = vst [vmem:[#allocation3 + $0x118] sm:$0xf] %v1053
      %1094 = vst [vmem:[#allocation3 + $0x124] sm:$0xf] %v1054
      %1095 = vst [vmem:[#allocation3 + $0x130] sm:$0xf] %v1055
      %1096 = vst [vmem:[#allocation3 + $0x13c] sm:$0xf] %v1056
      %1097 = vst [vmem:[#allocation3 + $0x148] sm:$0xf] %v1057
      %1098 = vst [vmem:[#allocation3 + $0x154] sm:$0xf] %v1058
      %1099 = vst [vmem:[#allocation3 + $0x160] sm:$0xf] %v1059
      %1100 = vst [vmem:[#allocation3 + $0x16c] sm:$0xf] %v1060
      %1101 = vst [vmem:[#allocation3 + $0x178] sm:$0xf] %v1061
      %1102 = vst [vmem:[#allocation3 + $0x184] sm:$0xf] %v1062
      %1103 = vst [vmem:[#allocation3 + $0x190] sm:$0xf] %v1063
      %1104 = vst [vmem:[#allocation3 + $0x19c] sm:$0xf] %v1064
      %1105 = vst [vmem:[#allocation3 + $0x1a8] sm:$0xf] %v1065
      %1106 = vst [vmem:[#allocation3 + $0x1b4] sm:$0xf] %v1066
      %1107 = vst [vmem:[#allocation3 + $0x1c0] sm:$0xf] %v1067
      %1108 = vst [vmem:[#allocation3 + $0x1cc] sm:$0xf] %v1068
      %1109 = vst [vmem:[#allocation3 + $0x1d8] sm:$0xf] %v1069
      %v1110 = vld [vmem:[#allocation2 + $0x4] sm:$0xf]
      %v1111 = vld [vmem:[#allocation2 + $0x8] sm:$0xf]
      %v1112 = vld [vmem:[#allocation2 + $0xc] sm:$0x1]
      %v1113 = vld [vmem:[#allocation2 + $0x14] sm:$0xf]
      %v1114 = vld [vmem:[#allocation2 + $0x18] sm:$0xf]
      %v1115 = vld [vmem:[#allocation2 + $0x1c] sm:$0x1]
      %v1116 = vld [vmem:[#allocation2 + $0x24] sm:$0xf]
      %v1117 = vld [vmem:[#allocation2 + $0x28] sm:$0xf]
      %v1118 = vld [vmem:[#allocation2 + $0x2c] sm:$0x1]
      %v1119 = vld [vmem:[#allocation2 + $0x34] sm:$0xf]
      %v1120 = vld [vmem:[#allocation2 + $0x38] sm:$0xf]
      %v1121 = vld [vmem:[#allocation2 + $0x3c] sm:$0x1]
      %v1122 = vld [vmem:[#allocation2 + $0x44] sm:$0xf]
      %v1123 = vld [vmem:[#allocation2 + $0x48] sm:$0xf]
      %v1124 = vld [vmem:[#allocation2 + $0x4c] sm:$0x1]
      %v1125 = vld [vmem:[#allocation2 + $0x54] sm:$0xf]
      %v1126 = vld [vmem:[#allocation2 + $0x58] sm:$0xf]
      %v1127 = vld [vmem:[#allocation2 + $0x5c] sm:$0x1]
      %v1128 = vld [vmem:[#allocation2 + $0x64] sm:$0xf]
      %v1129 = vld [vmem:[#allocation2 + $0x68] sm:$0xf]
      %v1130 = vld [vmem:[#allocation2 + $0x6c] sm:$0x1]
      %v1131 = vld [vmem:[#allocation2 + $0x74] sm:$0xf]
      %v1132 = vld [vmem:[#allocation2 + $0x78] sm:$0xf]
      %v1133 = vld [vmem:[#allocation2 + $0x7c] sm:$0x1]
      %v1134 = vld [vmem:[#allocation2 + $0x84] sm:$0xf]
      %v1135 = vld [vmem:[#allocation2 + $0x88] sm:$0xf]
      %v1136 = vld [vmem:[#allocation2 + $0x8c] sm:$0x1]
      %v1137 = vld [vmem:[#allocation2 + $0x94] sm:$0xf]
      %v1138 = vld [vmem:[#allocation2 + $0x98] sm:$0xf]
      %v1139 = vld [vmem:[#allocation2 + $0x9c] sm:$0x1]
      %v1140 = vld [vmem:[#allocation2 + $0xa4] sm:$0xf]
      %v1141 = vld [vmem:[#allocation2 + $0xa8] sm:$0xf]
      %v1142 = vld [vmem:[#allocation2 + $0xac] sm:$0x1]
      %v1143 = vld [vmem:[#allocation2 + $0xb4] sm:$0xf]
      %v1144 = vld [vmem:[#allocation2 + $0xb8] sm:$0xf]
      %v1145 = vld [vmem:[#allocation2 + $0xbc] sm:$0x1]
      %v1146 = vld [vmem:[#allocation2 + $0xc4] sm:$0xf]
      %v1147 = vld [vmem:[#allocation2 + $0xc8] sm:$0xf]
      %v1148 = vld [vmem:[#allocation2 + $0xcc] sm:$0x1]
      %v1149 = vld [vmem:[#allocation2 + $0xd4] sm:$0xf]
      %v1150 = vld [vmem:[#allocation2 + $0xd8] sm:$0xf]
      %v1151 = vld [vmem:[#allocation2 + $0xdc] sm:$0x1]
      %v1152 = vld [vmem:[#allocation2 + $0xe4] sm:$0xf]
      %v1153 = vld [vmem:[#allocation2 + $0xe8] sm:$0xf]
      %v1154 = vld [vmem:[#allocation2 + $0xec] sm:$0x1]
      %v1155 = vld [vmem:[#allocation2 + $0xf4] sm:$0xf]
      %v1156 = vld [vmem:[#allocation2 + $0xf8] sm:$0xf]
      %v1157 = vld [vmem:[#allocation2 + $0xfc] sm:$0x1]
      %v1158 = vld [vmem:[#allocation2 + $0x104] sm:$0xf]
      %v1159 = vld [vmem:[#allocation2 + $0x108] sm:$0xf]
      %v1160 = vld [vmem:[#allocation2 + $0x10c] sm:$0x1]
      %v1161 = vld [vmem:[#allocation2 + $0x114] sm:$0xf]
      %v1162 = vld [vmem:[#allocation2 + $0x118] sm:$0xf]
      %v1163 = vld [vmem:[#allocation2 + $0x11c] sm:$0x1]
      %v1164 = vld [vmem:[#allocation2 + $0x124] sm:$0xf]
      %v1165 = vld [vmem:[#allocation2 + $0x128] sm:$0xf]
      %v1166 = vld [vmem:[#allocation2 + $0x12c] sm:$0x1]
      %v1167 = vld [vmem:[#allocation2 + $0x134] sm:$0xf]
      %v1168 = vld [vmem:[#allocation2 + $0x138] sm:$0xf]
      %v1169 = vld [vmem:[#allocation2 + $0x13c] sm:$0x1]
      %vm1170 = vsmask.f32 3328
      %vm1171 = vsmask.f32 7440
      %vm1172 = vmor %vm1170, %vm1171
      %v1174 = vshrl.u32 %v1110, 16
      %v1176 = vrot.slane %v1174, 4
      %v1177 = vshll.u32 %v1110, 16
      %v1179 = vrot.slane %v1177, 5
      %v1180 = vor.u32 %v1176, %v1179
      %v1181 = vrot.slane %v1180, 4
      %v1183 = vshll.u32 %v1111, 16
      %v1185 = vrot.slane %v1183, 5
      %v1186 = vsel %vm1172, %v1181, %v1185
      %v1187 = vshrl.u32 %v1111, 16
      %v1189 = vrot.slane %v1187, 4
      %v1190 = vor.u32 %v1189, %v1185
      %v1191 = vrot.slane %v1190, 4
      %v1193 = vshll.u32 %v1112, 16
      %v1195 = vrot.slane %v1193, 5
      %v1196 = vsel %vm1172, %v1191, %v1195
      %v1198 = vshrl.u32 %v1113, 16
      %v1200 = vrot.slane %v1198, 4
      %v1201 = vshll.u32 %v1113, 16
      %v1203 = vrot.slane %v1201, 5
      %v1204 = vor.u32 %v1200, %v1203
      %v1205 = vrot.slane %v1204, 4
      %v1207 = vshll.u32 %v1114, 16
      %v1209 = vrot.slane %v1207, 5
      %v1210 = vsel %vm1172, %v1205, %v1209
      %v1211 = vshrl.u32 %v1114, 16
      %v1213 = vrot.slane %v1211, 4
      %v1214 = vor.u32 %v1213, %v1209
      %v1215 = vrot.slane %v1214, 4
      %v1217 = vshll.u32 %v1115, 16
      %v1219 = vrot.slane %v1217, 5
      %v1220 = vsel %vm1172, %v1215, %v1219
      %v1222 = vshrl.u32 %v1116, 16
      %v1224 = vrot.slane %v1222, 4
      %v1225 = vshll.u32 %v1116, 16
      %v1227 = vrot.slane %v1225, 5
      %v1228 = vor.u32 %v1224, %v1227
      %v1229 = vrot.slane %v1228, 4
      %v1231 = vshll.u32 %v1117, 16
      %v1233 = vrot.slane %v1231, 5
      %v1234 = vsel %vm1172, %v1229, %v1233
      %v1235 = vshrl.u32 %v1117, 16
      %v1237 = vrot.slane %v1235, 4
      %v1238 = vor.u32 %v1237, %v1233
      %v1239 = vrot.slane %v1238, 4
      %v1241 = vshll.u32 %v1118, 16
      %v1243 = vrot.slane %v1241, 5
      %v1244 = vsel %vm1172, %v1239, %v1243
      %v1246 = vshrl.u32 %v1119, 16
      %v1248 = vrot.slane %v1246, 4
      %v1249 = vshll.u32 %v1119, 16
      %v1251 = vrot.slane %v1249, 5
      %v1252 = vor.u32 %v1248, %v1251
      %v1253 = vrot.slane %v1252, 4
      %v1255 = vshll.u32 %v1120, 16
      %v1257 = vrot.slane %v1255, 5
      %v1258 = vsel %vm1172, %v1253, %v1257
      %v1259 = vshrl.u32 %v1120, 16
      %v1261 = vrot.slane %v1259, 4
      %v1262 = vor.u32 %v1261, %v1257
      %v1263 = vrot.slane %v1262, 4
      %v1265 = vshll.u32 %v1121, 16
      %v1267 = vrot.slane %v1265, 5
      %v1268 = vsel %vm1172, %v1263, %v1267
      %v1270 = vshrl.u32 %v1122, 16
      %v1272 = vrot.slane %v1270, 4
      %v1273 = vshll.u32 %v1122, 16
      %v1275 = vrot.slane %v1273, 5
      %v1276 = vor.u32 %v1272, %v1275
      %v1277 = vrot.slane %v1276, 4
      %v1279 = vshll.u32 %v1123, 16
      %v1281 = vrot.slane %v1279, 5
      %v1282 = vsel %vm1172, %v1277, %v1281
      %v1283 = vshrl.u32 %v1123, 16
      %v1285 = vrot.slane %v1283, 4
      %v1286 = vor.u32 %v1285, %v1281
      %v1287 = vrot.slane %v1286, 4
      %v1289 = vshll.u32 %v1124, 16
      %v1291 = vrot.slane %v1289, 5
      %v1292 = vsel %vm1172, %v1287, %v1291
      %v1294 = vshrl.u32 %v1125, 16
      %v1296 = vrot.slane %v1294, 4
      %v1297 = vshll.u32 %v1125, 16
      %v1299 = vrot.slane %v1297, 5
      %v1300 = vor.u32 %v1296, %v1299
      %v1301 = vrot.slane %v1300, 4
      %v1303 = vshll.u32 %v1126, 16
      %v1305 = vrot.slane %v1303, 5
      %v1306 = vsel %vm1172, %v1301, %v1305
      %v1307 = vshrl.u32 %v1126, 16
      %v1309 = vrot.slane %v1307, 4
      %v1310 = vor.u32 %v1309, %v1305
      %v1311 = vrot.slane %v1310, 4
      %v1313 = vshll.u32 %v1127, 16
      %v1315 = vrot.slane %v1313, 5
      %v1316 = vsel %vm1172, %v1311, %v1315
      %v1318 = vshrl.u32 %v1128, 16
      %v1320 = vrot.slane %v1318, 4
      %v1321 = vshll.u32 %v1128, 16
      %v1323 = vrot.slane %v1321, 5
      %v1324 = vor.u32 %v1320, %v1323
      %v1325 = vrot.slane %v1324, 4
      %v1327 = vshll.u32 %v1129, 16
      %v1329 = vrot.slane %v1327, 5
      %v1330 = vsel %vm1172, %v1325, %v1329
      %v1331 = vshrl.u32 %v1129, 16
      %v1333 = vrot.slane %v1331, 4
      %v1334 = vor.u32 %v1333, %v1329
      %v1335 = vrot.slane %v1334, 4
      %v1337 = vshll.u32 %v1130, 16
      %v1339 = vrot.slane %v1337, 5
      %v1340 = vsel %vm1172, %v1335, %v1339
      %v1342 = vshrl.u32 %v1131, 16
      %v1344 = vrot.slane %v1342, 4
      %v1345 = vshll.u32 %v1131, 16
      %v1347 = vrot.slane %v1345, 5
      %v1348 = vor.u32 %v1344, %v1347
      %v1349 = vrot.slane %v1348, 4
      %v1351 = vshll.u32 %v1132, 16
      %v1353 = vrot.slane %v1351, 5
      %v1354 = vsel %vm1172, %v1349, %v1353
      %v1355 = vshrl.u32 %v1132, 16
      %v1357 = vrot.slane %v1355, 4
      %v1358 = vor.u32 %v1357, %v1353
      %v1359 = vrot.slane %v1358, 4
      %v1361 = vshll.u32 %v1133, 16
      %v1363 = vrot.slane %v1361, 5
      %v1364 = vsel %vm1172, %v1359, %v1363
      %v1366 = vshrl.u32 %v1134, 16
      %v1368 = vrot.slane %v1366, 4
      %v1369 = vshll.u32 %v1134, 16
      %v1371 = vrot.slane %v1369, 5
      %v1372 = vor.u32 %v1368, %v1371
      %v1373 = vrot.slane %v1372, 4
      %v1375 = vshll.u32 %v1135, 16
      %v1377 = vrot.slane %v1375, 5
      %v1378 = vsel %vm1172, %v1373, %v1377
      %v1379 = vshrl.u32 %v1135, 16
      %v1381 = vrot.slane %v1379, 4
      %v1382 = vor.u32 %v1381, %v1377
      %v1383 = vrot.slane %v1382, 4
      %v1385 = vshll.u32 %v1136, 16
      %v1387 = vrot.slane %v1385, 5
      %v1388 = vsel %vm1172, %v1383, %v1387
      %v1390 = vshrl.u32 %v1137, 16
      %v1392 = vrot.slane %v1390, 4
      %v1393 = vshll.u32 %v1137, 16
      %v1395 = vrot.slane %v1393, 5
      %v1396 = vor.u32 %v1392, %v1395
      %v1397 = vrot.slane %v1396, 4
      %v1399 = vshll.u32 %v1138, 16
      %v1401 = vrot.slane %v1399, 5
      %v1402 = vsel %vm1172, %v1397, %v1401
      %v1403 = vshrl.u32 %v1138, 16
      %v1405 = vrot.slane %v1403, 4
      %v1406 = vor.u32 %v1405, %v1401
      %v1407 = vrot.slane %v1406, 4
      %v1409 = vshll.u32 %v1139, 16
      %v1411 = vrot.slane %v1409, 5
      %v1412 = vsel %vm1172, %v1407, %v1411
      %v1414 = vshrl.u32 %v1140, 16
      %v1416 = vrot.slane %v1414, 4
      %v1417 = vshll.u32 %v1140, 16
      %v1419 = vrot.slane %v1417, 5
      %v1420 = vor.u32 %v1416, %v1419
      %v1421 = vrot.slane %v1420, 4
      %v1423 = vshll.u32 %v1141, 16
      %v1425 = vrot.slane %v1423, 5
      %v1426 = vsel %vm1172, %v1421, %v1425
      %v1427 = vshrl.u32 %v1141, 16
      %v1429 = vrot.slane %v1427, 4
      %v1430 = vor.u32 %v1429, %v1425
      %v1431 = vrot.slane %v1430, 4
      %v1433 = vshll.u32 %v1142, 16
      %v1435 = vrot.slane %v1433, 5
      %v1436 = vsel %vm1172, %v1431, %v1435
      %v1438 = vshrl.u32 %v1143, 16
      %v1440 = vrot.slane %v1438, 4
      %v1441 = vshll.u32 %v1143, 16
      %v1443 = vrot.slane %v1441, 5
      %v1444 = vor.u32 %v1440, %v1443
      %v1445 = vrot.slane %v1444, 4
      %v1447 = vshll.u32 %v1144, 16
      %v1449 = vrot.slane %v1447, 5
      %v1450 = vsel %vm1172, %v1445, %v1449
      %v1451 = vshrl.u32 %v1144, 16
      %v1453 = vrot.slane %v1451, 4
      %v1454 = vor.u32 %v1453, %v1449
      %v1455 = vrot.slane %v1454, 4
      %v1457 = vshll.u32 %v1145, 16
      %v1459 = vrot.slane %v1457, 5
      %v1460 = vsel %vm1172, %v1455, %v1459
      %v1462 = vshrl.u32 %v1146, 16
      %v1464 = vrot.slane %v1462, 4
      %v1465 = vshll.u32 %v1146, 16
      %v1467 = vrot.slane %v1465, 5
      %v1468 = vor.u32 %v1464, %v1467
      %v1469 = vrot.slane %v1468, 4
      %v1471 = vshll.u32 %v1147, 16
      %v1473 = vrot.slane %v1471, 5
      %v1474 = vsel %vm1172, %v1469, %v1473
      %v1475 = vshrl.u32 %v1147, 16
      %v1477 = vrot.slane %v1475, 4
      %v1478 = vor.u32 %v1477, %v1473
      %v1479 = vrot.slane %v1478, 4
      %v1481 = vshll.u32 %v1148, 16
      %v1483 = vrot.slane %v1481, 5
      %v1484 = vsel %vm1172, %v1479, %v1483
      %v1486 = vshrl.u32 %v1149, 16
      %v1488 = vrot.slane %v1486, 4
      %v1489 = vshll.u32 %v1149, 16
      %v1491 = vrot.slane %v1489, 5
      %v1492 = vor.u32 %v1488, %v1491
      %v1493 = vrot.slane %v1492, 4
      %v1495 = vshll.u32 %v1150, 16
      %v1497 = vrot.slane %v1495, 5
      %v1498 = vsel %vm1172, %v1493, %v1497
      %v1499 = vshrl.u32 %v1150, 16
      %v1501 = vrot.slane %v1499, 4
      %v1502 = vor.u32 %v1501, %v1497
      %v1503 = vrot.slane %v1502, 4
      %v1505 = vshll.u32 %v1151, 16
      %v1507 = vrot.slane %v1505, 5
      %v1508 = vsel %vm1172, %v1503, %v1507
      %v1510 = vshrl.u32 %v1152, 16
      %v1512 = vrot.slane %v1510, 4
      %v1513 = vshll.u32 %v1152, 16
      %v1515 = vrot.slane %v1513, 5
      %v1516 = vor.u32 %v1512, %v1515
      %v1517 = vrot.slane %v1516, 4
      %v1519 = vshll.u32 %v1153, 16
      %v1521 = vrot.slane %v1519, 5
      %v1522 = vsel %vm1172, %v1517, %v1521
      %v1523 = vshrl.u32 %v1153, 16
      %v1525 = vrot.slane %v1523, 4
      %v1526 = vor.u32 %v1525, %v1521
      %v1527 = vrot.slane %v1526, 4
      %v1529 = vshll.u32 %v1154, 16
      %v1531 = vrot.slane %v1529, 5
      %v1532 = vsel %vm1172, %v1527, %v1531
      %v1534 = vshrl.u32 %v1155, 16
      %v1536 = vrot.slane %v1534, 4
      %v1537 = vshll.u32 %v1155, 16
      %v1539 = vrot.slane %v1537, 5
      %v1540 = vor.u32 %v1536, %v1539
      %v1541 = vrot.slane %v1540, 4
      %v1543 = vshll.u32 %v1156, 16
      %v1545 = vrot.slane %v1543, 5
      %v1546 = vsel %vm1172, %v1541, %v1545
      %v1547 = vshrl.u32 %v1156, 16
      %v1549 = vrot.slane %v1547, 4
      %v1550 = vor.u32 %v1549, %v1545
      %v1551 = vrot.slane %v1550, 4
      %v1553 = vshll.u32 %v1157, 16
      %v1555 = vrot.slane %v1553, 5
      %v1556 = vsel %vm1172, %v1551, %v1555
      %v1558 = vshrl.u32 %v1158, 16
      %v1560 = vrot.slane %v1558, 4
      %v1561 = vshll.u32 %v1158, 16
      %v1563 = vrot.slane %v1561, 5
      %v1564 = vor.u32 %v1560, %v1563
      %v1565 = vrot.slane %v1564, 4
      %v1567 = vshll.u32 %v1159, 16
      %v1569 = vrot.slane %v1567, 5
      %v1570 = vsel %vm1172, %v1565, %v1569
      %v1571 = vshrl.u32 %v1159, 16
      %v1573 = vrot.slane %v1571, 4
      %v1574 = vor.u32 %v1573, %v1569
      %v1575 = vrot.slane %v1574, 4
      %v1577 = vshll.u32 %v1160, 16
      %v1579 = vrot.slane %v1577, 5
      %v1580 = vsel %vm1172, %v1575, %v1579
      %v1582 = vshrl.u32 %v1161, 16
      %v1584 = vrot.slane %v1582, 4
      %v1585 = vshll.u32 %v1161, 16
      %v1587 = vrot.slane %v1585, 5
      %v1588 = vor.u32 %v1584, %v1587
      %v1589 = vrot.slane %v1588, 4
      %v1591 = vshll.u32 %v1162, 16
      %v1593 = vrot.slane %v1591, 5
      %v1594 = vsel %vm1172, %v1589, %v1593
      %v1595 = vshrl.u32 %v1162, 16
      %v1597 = vrot.slane %v1595, 4
      %v1598 = vor.u32 %v1597, %v1593
      %v1599 = vrot.slane %v1598, 4
      %v1601 = vshll.u32 %v1163, 16
      %v1603 = vrot.slane %v1601, 5
      %v1604 = vsel %vm1172, %v1599, %v1603
      %v1606 = vshrl.u32 %v1164, 16
      %v1608 = vrot.slane %v1606, 4
      %v1609 = vshll.u32 %v1164, 16
      %v1611 = vrot.slane %v1609, 5
      %v1612 = vor.u32 %v1608, %v1611
      %v1613 = vrot.slane %v1612, 4
      %v1615 = vshll.u32 %v1165, 16
      %v1617 = vrot.slane %v1615, 5
      %v1618 = vsel %vm1172, %v1613, %v1617
      %v1619 = vshrl.u32 %v1165, 16
      %v1621 = vrot.slane %v1619, 4
      %v1622 = vor.u32 %v1621, %v1617
      %v1623 = vrot.slane %v1622, 4
      %v1625 = vshll.u32 %v1166, 16
      %v1627 = vrot.slane %v1625, 5
      %v1628 = vsel %vm1172, %v1623, %v1627
      %v1630 = vshrl.u32 %v1167, 16
      %v1632 = vrot.slane %v1630, 4
      %v1633 = vshll.u32 %v1167, 16
      %v1635 = vrot.slane %v1633, 5
      %v1636 = vor.u32 %v1632, %v1635
      %v1637 = vrot.slane %v1636, 4
      %v1639 = vshll.u32 %v1168, 16
      %v1641 = vrot.slane %v1639, 5
      %v1642 = vsel %vm1172, %v1637, %v1641
      %v1643 = vshrl.u32 %v1168, 16
      %v1645 = vrot.slane %v1643, 4
      %v1646 = vor.u32 %v1645, %v1641
      %v1647 = vrot.slane %v1646, 4
      %v1649 = vshll.u32 %v1169, 16
      %v1651 = vrot.slane %v1649, 5
      %v1652 = vsel %vm1172, %v1647, %v1651
      %1693 = vst [vmem:[#allocation3 + $0x8] sm:$0xf] %v1186
      %1694 = vst [vmem:[#allocation3 + $0x14] sm:$0xf] %v1196
      %1695 = vst [vmem:[#allocation3 + $0x20] sm:$0xf] %v1210
      %1696 = vst [vmem:[#allocation3 + $0x2c] sm:$0xf] %v1220
      %1697 = vst [vmem:[#allocation3 + $0x38] sm:$0xf] %v1234
      %1698 = vst [vmem:[#allocation3 + $0x44] sm:$0xf] %v1244
      %1699 = vst [vmem:[#allocation3 + $0x50] sm:$0xf] %v1258
      %1700 = vst [vmem:[#allocation3 + $0x5c] sm:$0xf] %v1268
      %1701 = vst [vmem:[#allocation3 + $0x68] sm:$0xf] %v1282
      %1702 = vst [vmem:[#allocation3 + $0x74] sm:$0xf] %v1292
      %1703 = vst [vmem:[#allocation3 + $0x80] sm:$0xf] %v1306
      %1704 = vst [vmem:[#allocation3 + $0x8c] sm:$0xf] %v1316
      %1705 = vst [vmem:[#allocation3 + $0x98] sm:$0xf] %v1330
      %1706 = vst [vmem:[#allocation3 + $0xa4] sm:$0xf] %v1340
      %1707 = vst [vmem:[#allocation3 + $0xb0] sm:$0xf] %v1354
      %1708 = vst [vmem:[#allocation3 + $0xbc] sm:$0xf] %v1364
      %1709 = vst [vmem:[#allocation3 + $0xc8] sm:$0xf] %v1378
      %1710 = vst [vmem:[#allocation3 + $0xd4] sm:$0xf] %v1388
      %1711 = vst [vmem:[#allocation3 + $0xe0] sm:$0xf] %v1402
      %1712 = vst [vmem:[#allocation3 + $0xec] sm:$0xf] %v1412
      %1713 = vst [vmem:[#allocation3 + $0xf8] sm:$0xf] %v1426
      %1714 = vst [vmem:[#allocation3 + $0x104] sm:$0xf] %v1436
      %1715 = vst [vmem:[#allocation3 + $0x110] sm:$0xf] %v1450
      %1716 = vst [vmem:[#allocation3 + $0x11c] sm:$0xf] %v1460
      %1717 = vst [vmem:[#allocation3 + $0x128] sm:$0xf] %v1474
      %1718 = vst [vmem:[#allocation3 + $0x134] sm:$0xf] %v1484
      %1719 = vst [vmem:[#allocation3 + $0x140] sm:$0xf] %v1498
      %1720 = vst [vmem:[#allocation3 + $0x14c] sm:$0xf] %v1508
      %1721 = vst [vmem:[#allocation3 + $0x158] sm:$0xf] %v1522
      %1722 = vst [vmem:[#allocation3 + $0x164] sm:$0xf] %v1532
      %1723 = vst [vmem:[#allocation3 + $0x170] sm:$0xf] %v1546
      %1724 = vst [vmem:[#allocation3 + $0x17c] sm:$0xf] %v1556
      %1725 = vst [vmem:[#allocation3 + $0x188] sm:$0xf] %v1570
      %1726 = vst [vmem:[#allocation3 + $0x194] sm:$0xf] %v1580
      %1727 = vst [vmem:[#allocation3 + $0x1a0] sm:$0xf] %v1594
      %1728 = vst [vmem:[#allocation3 + $0x1ac] sm:$0xf] %v1604
      %1729 = vst [vmem:[#allocation3 + $0x1b8] sm:$0xf] %v1618
      %1730 = vst [vmem:[#allocation3 + $0x1c4] sm:$0xf] %v1628
      %1731 = vst [vmem:[#allocation3 + $0x1d0] sm:$0xf] %v1642
      %1732 = vst [vmem:[#allocation3 + $0x1dc] sm:$0xf] %v1652
      %v1733 = vld [vmem:[#allocation3] sm:$0xff]
      %v1734 = vld [vmem:[#allocation3 + $0x8] sm:$0xf]
      %v1735 = vld [vmem:[#allocation3 + $0xc] sm:$0xff]
      %v1736 = vld [vmem:[#allocation3 + $0x14] sm:$0xf]
      %v1737 = vld [vmem:[#allocation3 + $0x18] sm:$0xff]
      %v1738 = vld [vmem:[#allocation3 + $0x20] sm:$0xf]
      %v1739 = vld [vmem:[#allocation3 + $0x24] sm:$0xff]
      %v1740 = vld [vmem:[#allocation3 + $0x2c] sm:$0xf]
      %v1741 = vld [vmem:[#allocation3 + $0x30] sm:$0xff]
      %v1742 = vld [vmem:[#allocation3 + $0x38] sm:$0xf]
      %v1743 = vld [vmem:[#allocation3 + $0x3c] sm:$0xff]
      %v1744 = vld [vmem:[#allocation3 + $0x44] sm:$0xf]
      %v1745 = vld [vmem:[#allocation3 + $0x48] sm:$0xff]
      %v1746 = vld [vmem:[#allocation3 + $0x50] sm:$0xf]
      %v1747 = vld [vmem:[#allocation3 + $0x54] sm:$0xff]
      %v1748 = vld [vmem:[#allocation3 + $0x5c] sm:$0xf]
      %v1749 = vld [vmem:[#allocation3 + $0x60] sm:$0xff]
      %v1750 = vld [vmem:[#allocation3 + $0x68] sm:$0xf]
      %v1751 = vld [vmem:[#allocation3 + $0x6c] sm:$0xff]
      %v1752 = vld [vmem:[#allocation3 + $0x74] sm:$0xf]
      %v1753 = vld [vmem:[#allocation3 + $0x78] sm:$0xff]
      %v1754 = vld [vmem:[#allocation3 + $0x80] sm:$0xf]
      %v1755 = vld [vmem:[#allocation3 + $0x84] sm:$0xff]
      %v1756 = vld [vmem:[#allocation3 + $0x8c] sm:$0xf]
      %v1757 = vld [vmem:[#allocation3 + $0x90] sm:$0xff]
      %v1758 = vld [vmem:[#allocation3 + $0x98] sm:$0xf]
      %v1759 = vld [vmem:[#allocation3 + $0x9c] sm:$0xff]
      %v1760 = vld [vmem:[#allocation3 + $0xa4] sm:$0xf]
      %v1761 = vld [vmem:[#allocation3 + $0xa8] sm:$0xff]
      %v1762 = vld [vmem:[#allocation3 + $0xb0] sm:$0xf]
      %v1763 = vld [vmem:[#allocation3 + $0xb4] sm:$0xff]
      %v1764 = vld [vmem:[#allocation3 + $0xbc] sm:$0xf]
      %v1765 = vld [vmem:[#allocation3 + $0xc0] sm:$0xff]
      %v1766 = vld [vmem:[#allocation3 + $0xc8] sm:$0xf]
      %v1767 = vld [vmem:[#allocation3 + $0xcc] sm:$0xff]
      %v1768 = vld [vmem:[#allocation3 + $0xd4] sm:$0xf]
      %v1769 = vld [vmem:[#allocation3 + $0xd8] sm:$0xff]
      %v1770 = vld [vmem:[#allocation3 + $0xe0] sm:$0xf]
      %v1771 = vld [vmem:[#allocation3 + $0xe4] sm:$0xff]
      %v1772 = vld [vmem:[#allocation3 + $0xec] sm:$0xf]
      %v1773 = vld [vmem:[#allocation3 + $0xf0] sm:$0xff]
      %v1774 = vld [vmem:[#allocation3 + $0xf8] sm:$0xf]
      %v1775 = vld [vmem:[#allocation3 + $0xfc] sm:$0xff]
      %v1776 = vld [vmem:[#allocation3 + $0x104] sm:$0xf]
      %v1777 = vld [vmem:[#allocation3 + $0x108] sm:$0xff]
      %v1778 = vld [vmem:[#allocation3 + $0x110] sm:$0xf]
      %v1779 = vld [vmem:[#allocation3 + $0x114] sm:$0xff]
      %v1780 = vld [vmem:[#allocation3 + $0x11c] sm:$0xf]
      %v1781 = vld [vmem:[#allocation3 + $0x120] sm:$0xff]
      %v1782 = vld [vmem:[#allocation3 + $0x128] sm:$0xf]
      %v1783 = vld [vmem:[#allocation3 + $0x12c] sm:$0xff]
      %v1784 = vld [vmem:[#allocation3 + $0x134] sm:$0xf]
      %v1785 = vld [vmem:[#allocation3 + $0x138] sm:$0xff]
      %v1786 = vld [vmem:[#allocation3 + $0x140] sm:$0xf]
      %v1787 = vld [vmem:[#allocation3 + $0x144] sm:$0xff]
      %v1788 = vld [vmem:[#allocation3 + $0x14c] sm:$0xf]
      %v1789 = vld [vmem:[#allocation3 + $0x150] sm:$0xff]
      %v1790 = vld [vmem:[#allocation3 + $0x158] sm:$0xf]
      %v1791 = vld [vmem:[#allocation3 + $0x15c] sm:$0xff]
      %v1792 = vld [vmem:[#allocation3 + $0x164] sm:$0xf]
      %v1793 = vld [vmem:[#allocation3 + $0x168] sm:$0xff]
      %v1794 = vld [vmem:[#allocation3 + $0x170] sm:$0xf]
      %v1795 = vld [vmem:[#allocation3 + $0x174] sm:$0xff]
      %v1796 = vld [vmem:[#allocation3 + $0x17c] sm:$0xf]
      %v1797 = vld [vmem:[#allocation3 + $0x180] sm:$0xff]
      %v1798 = vld [vmem:[#allocation3 + $0x188] sm:$0xf]
      %v1799 = vld [vmem:[#allocation3 + $0x18c] sm:$0xff]
      %v1800 = vld [vmem:[#allocation3 + $0x194] sm:$0xf]
      %v1801 = vld [vmem:[#allocation3 + $0x198] sm:$0xff]
      %v1802 = vld [vmem:[#allocation3 + $0x1a0] sm:$0xf]
      %v1803 = vld [vmem:[#allocation3 + $0x1a4] sm:$0xff]
      %v1804 = vld [vmem:[#allocation3 + $0x1ac] sm:$0xf]
      %v1805 = vld [vmem:[%s2] sm:$0xf]
      %v1806 = vld [vmem:[%s2 + $0x4] sm:$0xf]
      %v1807 = vld [vmem:[%s2 + $0x8] sm:$0xf]
      %v1808 = vld [vmem:[%s2 + $0xc] sm:$0xf]
      %v1809 = vld [vmem:[%s2 + $0x10] sm:$0xf]
      %v1810 = vld [vmem:[%s2 + $0x14] sm:$0xf]
      %v1811 = vld [vmem:[%s2 + $0x18] sm:$0xf]
      %v1812 = vld [vmem:[%s2 + $0x1c] sm:$0xf]
      %v1813 = vld [vmem:[%s2 + $0x20] sm:$0xf]
      %v1814 = vld [vmem:[%s2 + $0x24] sm:$0xf]
      %v1815 = vld [vmem:[%s2 + $0x28] sm:$0xf]
      %v1816 = vld [vmem:[%s2 + $0x2c] sm:$0xf]
      %v1817 = vld [vmem:[%s2 + $0x30] sm:$0xf]
      %v1818 = vld [vmem:[%s2 + $0x34] sm:$0xf]
      %v1819 = vld [vmem:[%s2 + $0x38] sm:$0xf]
      %v1820 = vld [vmem:[%s2 + $0x3c] sm:$0xf]
      %v1821 = vld [vmem:[%s2 + $0x40] sm:$0xf]
      %v1822 = vld [vmem:[%s2 + $0x44] sm:$0xf]
      %v1823 = vld [vmem:[%s2 + $0x48] sm:$0xf]
      %v1824 = vld [vmem:[%s2 + $0x4c] sm:$0xf]
      %v1825 = vld [vmem:[%s2 + $0x50] sm:$0xf]
      %v1826 = vld [vmem:[%s2 + $0x54] sm:$0xf]
      %v1827 = vld [vmem:[%s2 + $0x58] sm:$0xf]
      %v1828 = vld [vmem:[%s2 + $0x5c] sm:$0xf]
      %v1829 = vld [vmem:[%s2 + $0x60] sm:$0xf]
      %v1830 = vld [vmem:[%s2 + $0x64] sm:$0xf]
      %v1831 = vld [vmem:[%s2 + $0x68] sm:$0xf]
      %v1832 = vld [vmem:[%s2 + $0x6c] sm:$0xf]
      %v1833 = vld [vmem:[%s2 + $0x70] sm:$0xf]
      %v1834 = vld [vmem:[%s2 + $0x74] sm:$0xf]
      %v1835 = vld [vmem:[%s2 + $0x78] sm:$0xf]
      %v1836 = vld [vmem:[%s2 + $0x7c] sm:$0xf]
      %v1837 = vld [vmem:[%s2 + $0x80] sm:$0xf]
      %v1838 = vld [vmem:[%s2 + $0x84] sm:$0xf]
      %v1839 = vld [vmem:[%s2 + $0x88] sm:$0xf]
      %v1840 = vld [vmem:[%s2 + $0x8c] sm:$0xf]
      %v1841 = vld [vmem:[%s2 + $0x90] sm:$0xf]
      %v1842 = vld [vmem:[%s2 + $0x94] sm:$0xf]
      %v1843 = vld [vmem:[%s2 + $0x98] sm:$0xf]
      %v1844 = vld [vmem:[%s2 + $0x9c] sm:$0xf]
      %v1845 = vld [vmem:[%s2 + $0xa0] sm:$0xf]
      %v1846 = vld [vmem:[%s2 + $0xa4] sm:$0xf]
      %v1847 = vld [vmem:[%s2 + $0xa8] sm:$0xf]
      %v1848 = vld [vmem:[%s2 + $0xac] sm:$0xf]
      %v1849 = vld [vmem:[%s2 + $0xb0] sm:$0xf]
      %v1850 = vld [vmem:[%s2 + $0xb4] sm:$0xf]
      %v1851 = vld [vmem:[%s2 + $0xb8] sm:$0xf]
      %v1852 = vld [vmem:[%s2 + $0xbc] sm:$0xf]
      %s1853 = scalar_lea.vmem [#allocation3], 24
      %v1854 = vld [vmem:[%s1853] sm:$0xff]
      %v1855 = vld [vmem:[%s1853 + $0x8] sm:$0xf]
      %v1856 = vld [vmem:[%s1853 + $0xc] sm:$0xff]
      %v1857 = vld [vmem:[%s1853 + $0x14] sm:$0xf]
      %v1858 = vld [vmem:[%s1853 + $0x18] sm:$0xff]
      %v1859 = vld [vmem:[%s1853 + $0x20] sm:$0xf]
      %v1860 = vld [vmem:[%s1853 + $0x24] sm:$0xff]
      %v1861 = vld [vmem:[%s1853 + $0x2c] sm:$0xf]
      %v1862 = vld [vmem:[%s1853 + $0x30] sm:$0xff]
      %v1863 = vld [vmem:[%s1853 + $0x38] sm:$0xf]
      %v1864 = vld [vmem:[%s1853 + $0x3c] sm:$0xff]
      %v1865 = vld [vmem:[%s1853 + $0x44] sm:$0xf]
      %v1866 = vld [vmem:[%s1853 + $0x48] sm:$0xff]
      %v1867 = vld [vmem:[%s1853 + $0x50] sm:$0xf]
      %v1868 = vld [vmem:[%s1853 + $0x54] sm:$0xff]
      %v1869 = vld [vmem:[%s1853 + $0x5c] sm:$0xf]
      %v1870 = vld [vmem:[%s1853 + $0x60] sm:$0xff]
      %v1871 = vld [vmem:[%s1853 + $0x68] sm:$0xf]
      %v1872 = vld [vmem:[%s1853 + $0x6c] sm:$0xff]
      %v1873 = vld [vmem:[%s1853 + $0x74] sm:$0xf]
      %v1874 = vld [vmem:[%s1853 + $0x78] sm:$0xff]
      %v1875 = vld [vmem:[%s1853 + $0x80] sm:$0xf]
      %v1876 = vld [vmem:[%s1853 + $0x84] sm:$0xff]
      %v1877 = vld [vmem:[%s1853 + $0x8c] sm:$0xf]
      %v1878 = vld [vmem:[%s1853 + $0x90] sm:$0xff]
      %v1879 = vld [vmem:[%s1853 + $0x98] sm:$0xf]
      %v1880 = vld [vmem:[%s1853 + $0x9c] sm:$0xff]
      %v1881 = vld [vmem:[%s1853 + $0xa4] sm:$0xf]
      %v1882 = vld [vmem:[%s1853 + $0xa8] sm:$0xff]
      %v1883 = vld [vmem:[%s1853 + $0xb0] sm:$0xf]
      %v1884 = vld [vmem:[%s1853 + $0xb4] sm:$0xff]
      %v1885 = vld [vmem:[%s1853 + $0xbc] sm:$0xf]
      %v1886 = vld [vmem:[%s1853 + $0xc0] sm:$0xff]
      %v1887 = vld [vmem:[%s1853 + $0xc8] sm:$0xf]
      %v1888 = vld [vmem:[%s1853 + $0xcc] sm:$0xff]
      %v1889 = vld [vmem:[%s1853 + $0xd4] sm:$0xf]
      %v1890 = vld [vmem:[%s1853 + $0xd8] sm:$0xff]
      %v1891 = vld [vmem:[%s1853 + $0xe0] sm:$0xf]
      %v1892 = vld [vmem:[%s1853 + $0xe4] sm:$0xff]
      %v1893 = vld [vmem:[%s1853 + $0xec] sm:$0xf]
      %v1894 = vld [vmem:[%s1853 + $0xf0] sm:$0xff]
      %v1895 = vld [vmem:[%s1853 + $0xf8] sm:$0xf]
      %v1896 = vld [vmem:[%s1853 + $0xfc] sm:$0xff]
      %v1897 = vld [vmem:[%s1853 + $0x104] sm:$0xf]
      %v1898 = vld [vmem:[%s1853 + $0x108] sm:$0xff]
      %v1899 = vld [vmem:[%s1853 + $0x110] sm:$0xf]
      %v1900 = vld [vmem:[%s1853 + $0x114] sm:$0xff]
      %v1901 = vld [vmem:[%s1853 + $0x11c] sm:$0xf]
      %v1902 = vld [vmem:[%s1853 + $0x120] sm:$0xff]
      %v1903 = vld [vmem:[%s1853 + $0x128] sm:$0xf]
      %v1904 = vld [vmem:[%s1853 + $0x12c] sm:$0xff]
      %v1905 = vld [vmem:[%s1853 + $0x134] sm:$0xf]
      %v1906 = vld [vmem:[%s1853 + $0x138] sm:$0xff]
      %v1907 = vld [vmem:[%s1853 + $0x140] sm:$0xf]
      %v1908 = vld [vmem:[%s1853 + $0x144] sm:$0xff]
      %v1909 = vld [vmem:[%s1853 + $0x14c] sm:$0xf]
      %v1910 = vld [vmem:[%s1853 + $0x150] sm:$0xff]
      %v1911 = vld [vmem:[%s1853 + $0x158] sm:$0xf]
      %v1912 = vld [vmem:[%s1853 + $0x15c] sm:$0xff]
      %v1913 = vld [vmem:[%s1853 + $0x164] sm:$0xf]
      %v1914 = vld [vmem:[%s1853 + $0x168] sm:$0xff]
      %v1915 = vld [vmem:[%s1853 + $0x170] sm:$0xf]
      %v1916 = vld [vmem:[%s1853 + $0x174] sm:$0xff]
      %v1917 = vld [vmem:[%s1853 + $0x17c] sm:$0xf]
      %v1918 = vld [vmem:[%s1853 + $0x180] sm:$0xff]
      %v1919 = vld [vmem:[%s1853 + $0x188] sm:$0xf]
      %v1920 = vld [vmem:[%s1853 + $0x18c] sm:$0xff]
      %v1921 = vld [vmem:[%s1853 + $0x194] sm:$0xf]
      %v1922 = vld [vmem:[%s1853 + $0x198] sm:$0xff]
      %v1923 = vld [vmem:[%s1853 + $0x1a0] sm:$0xf]
      %v1924 = vld [vmem:[%s1853 + $0x1a4] sm:$0xff]
      %v1925 = vld [vmem:[%s1853 + $0x1ac] sm:$0xf]
      %s1926 = scalar_lea.vmem %s2, 192
      %v1927 = vld [vmem:[%s1926] sm:$0xf]
      %v1928 = vld [vmem:[%s1926 + $0x4] sm:$0xf]
      %v1929 = vld [vmem:[%s1926 + $0x8] sm:$0xf]
      %v1930 = vld [vmem:[%s1926 + $0xc] sm:$0xf]
      %v1931 = vld [vmem:[%s1926 + $0x10] sm:$0xf]
      %v1932 = vld [vmem:[%s1926 + $0x14] sm:$0xf]
      %v1933 = vld [vmem:[%s1926 + $0x18] sm:$0xf]
      %v1934 = vld [vmem:[%s1926 + $0x1c] sm:$0xf]
      %v1935 = vld [vmem:[%s1926 + $0x20] sm:$0xf]
      %v1936 = vld [vmem:[%s1926 + $0x24] sm:$0xf]
      %v1937 = vld [vmem:[%s1926 + $0x28] sm:$0xf]
      %v1938 = vld [vmem:[%s1926 + $0x2c] sm:$0xf]
      %v1939 = vld [vmem:[%s1926 + $0x30] sm:$0xf]
      %v1940 = vld [vmem:[%s1926 + $0x34] sm:$0xf]
      %v1941 = vld [vmem:[%s1926 + $0x38] sm:$0xf]
      %v1942 = vld [vmem:[%s1926 + $0x3c] sm:$0xf]
      %v1943 = vld [vmem:[%s1926 + $0x40] sm:$0xf]
      %v1944 = vld [vmem:[%s1926 + $0x44] sm:$0xf]
      %v1945 = vld [vmem:[%s1926 + $0x48] sm:$0xf]
      %v1946 = vld [vmem:[%s1926 + $0x4c] sm:$0xf]
      %v1947 = vld [vmem:[%s1926 + $0x50] sm:$0xf]
      %v1948 = vld [vmem:[%s1926 + $0x54] sm:$0xf]
      %v1949 = vld [vmem:[%s1926 + $0x58] sm:$0xf]
      %v1950 = vld [vmem:[%s1926 + $0x5c] sm:$0xf]
      %v1951 = vld [vmem:[%s1926 + $0x60] sm:$0xf]
      %v1952 = vld [vmem:[%s1926 + $0x64] sm:$0xf]
      %v1953 = vld [vmem:[%s1926 + $0x68] sm:$0xf]
      %v1954 = vld [vmem:[%s1926 + $0x6c] sm:$0xf]
      %v1955 = vld [vmem:[%s1926 + $0x70] sm:$0xf]
      %v1956 = vld [vmem:[%s1926 + $0x74] sm:$0xf]
      %v1957 = vld [vmem:[%s1926 + $0x78] sm:$0xf]
      %v1958 = vld [vmem:[%s1926 + $0x7c] sm:$0xf]
      %v1959 = vld [vmem:[%s1926 + $0x80] sm:$0xf]
      %v1960 = vld [vmem:[%s1926 + $0x84] sm:$0xf]
      %v1961 = vld [vmem:[%s1926 + $0x88] sm:$0xf]
      %v1962 = vld [vmem:[%s1926 + $0x8c] sm:$0xf]
      %v1963 = vld [vmem:[%s1926 + $0x90] sm:$0xf]
      %v1964 = vld [vmem:[%s1926 + $0x94] sm:$0xf]
      %v1965 = vld [vmem:[%s1926 + $0x98] sm:$0xf]
      %v1966 = vld [vmem:[%s1926 + $0x9c] sm:$0xf]
      %v1967 = vld [vmem:[%s1926 + $0xa0] sm:$0xf]
      %v1968 = vld [vmem:[%s1926 + $0xa4] sm:$0xf]
      %v1969 = vld [vmem:[%s1926 + $0xa8] sm:$0xf]
      %v1970 = vld [vmem:[%s1926 + $0xac] sm:$0xf]
      %v1971 = vld [vmem:[%s1926 + $0xb0] sm:$0xf]
      %v1972 = vld [vmem:[%s1926 + $0xb4] sm:$0xf]
      %v1973 = vld [vmem:[%s1926 + $0xb8] sm:$0xf]
      %v1974 = vld [vmem:[%s1926 + $0xbc] sm:$0xf]
      %v2047 = vunpack.c.l.b16 %v1854
      %v2048 = vunpack.c.h.b16 %v1854
      %v2049 = vunpack.c.l.b16 %v1855
      %v2050 = vunpack.c.l.b16 %v1856
      %v2051 = vunpack.c.h.b16 %v1856
      %v2052 = vunpack.c.l.b16 %v1857
      %v2053 = vunpack.c.l.b16 %v1858
      %v2054 = vunpack.c.h.b16 %v1858
      %v2055 = vunpack.c.l.b16 %v1859
      %v2056 = vunpack.c.l.b16 %v1860
      %v2057 = vunpack.c.h.b16 %v1860
      %v2058 = vunpack.c.l.b16 %v1861
      %v2059 = vunpack.c.l.b16 %v1862
      %v2060 = vunpack.c.h.b16 %v1862
      %v2061 = vunpack.c.l.b16 %v1863
      %v2062 = vunpack.c.l.b16 %v1864
      %v2063 = vunpack.c.h.b16 %v1864
      %v2064 = vunpack.c.l.b16 %v1865
      %v2065 = vunpack.c.l.b16 %v1866
      %v2066 = vunpack.c.h.b16 %v1866
      %v2067 = vunpack.c.l.b16 %v1867
      %v2068 = vunpack.c.l.b16 %v1868
      %v2069 = vunpack.c.h.b16 %v1868
      %v2070 = vunpack.c.l.b16 %v1869
      %v2071 = vunpack.c.l.b16 %v1870
      %v2072 = vunpack.c.h.b16 %v1870
      %v2073 = vunpack.c.l.b16 %v1871
      %v2074 = vunpack.c.l.b16 %v1872
      %v2075 = vunpack.c.h.b16 %v1872
      %v2076 = vunpack.c.l.b16 %v1873
      %v2077 = vunpack.c.l.b16 %v1874
      %v2078 = vunpack.c.h.b16 %v1874
      %v2079 = vunpack.c.l.b16 %v1875
      %v2080 = vunpack.c.l.b16 %v1876
      %v2081 = vunpack.c.h.b16 %v1876
      %v2082 = vunpack.c.l.b16 %v1877
      %v2083 = vunpack.c.l.b16 %v1878
      %v2084 = vunpack.c.h.b16 %v1878
      %v2085 = vunpack.c.l.b16 %v1879
      %v2086 = vunpack.c.l.b16 %v1880
      %v2087 = vunpack.c.h.b16 %v1880
      %v2088 = vunpack.c.l.b16 %v1881
      %v2089 = vunpack.c.l.b16 %v1882
      %v2090 = vunpack.c.h.b16 %v1882
      %v2091 = vunpack.c.l.b16 %v1883
      %v2092 = vunpack.c.l.b16 %v1884
      %v2093 = vunpack.c.h.b16 %v1884
      %v2094 = vunpack.c.l.b16 %v1885
      %v2095 = vunpack.c.l.b16 %v1886
      %v2096 = vunpack.c.h.b16 %v1886
      %v2097 = vunpack.c.l.b16 %v1887
      %v2098 = vunpack.c.l.b16 %v1888
      %v2099 = vunpack.c.h.b16 %v1888
      %v2100 = vunpack.c.l.b16 %v1889
      %v2101 = vunpack.c.l.b16 %v1890
      %v2102 = vunpack.c.h.b16 %v1890
      %v2103 = vunpack.c.l.b16 %v1891
      %v2104 = vunpack.c.l.b16 %v1892
      %v2105 = vunpack.c.h.b16 %v1892
      %v2106 = vunpack.c.l.b16 %v1893
      %v2107 = vunpack.c.l.b16 %v1894
      %v2108 = vunpack.c.h.b16 %v1894
      %v2109 = vunpack.c.l.b16 %v1895
      %v2110 = vunpack.c.l.b16 %v1896
      %v2111 = vunpack.c.h.b16 %v1896
      %v2112 = vunpack.c.l.b16 %v1897
      %v2113 = vunpack.c.l.b16 %v1898
      %v2114 = vunpack.c.h.b16 %v1898
      %v2115 = vunpack.c.l.b16 %v1899
      %v2116 = vunpack.c.l.b16 %v1900
      %v2117 = vunpack.c.h.b16 %v1900
      %v2118 = vunpack.c.l.b16 %v1901
      %v2119 = vunpack.c.l.b16 %v1902
      %v2120 = vunpack.c.h.b16 %v1902
      %v2121 = vunpack.c.l.b16 %v1903
      %v2122 = vunpack.c.l.b16 %v1904
      %v2123 = vunpack.c.h.b16 %v1904
      %v2124 = vunpack.c.l.b16 %v1905
      %v2125 = vunpack.c.l.b16 %v1906
      %v2126 = vunpack.c.h.b16 %v1906
      %v2127 = vunpack.c.l.b16 %v1907
      %v2128 = vunpack.c.l.b16 %v1908
      %v2129 = vunpack.c.h.b16 %v1908
      %v2130 = vunpack.c.l.b16 %v1909
      %v2131 = vunpack.c.l.b16 %v1910
      %v2132 = vunpack.c.h.b16 %v1910
      %v2133 = vunpack.c.l.b16 %v1911
      %v2134 = vunpack.c.l.b16 %v1912
      %v2135 = vunpack.c.h.b16 %v1912
      %v2136 = vunpack.c.l.b16 %v1913
      %v2137 = vunpack.c.l.b16 %v1914
      %v2138 = vunpack.c.h.b16 %v1914
      %v2139 = vunpack.c.l.b16 %v1915
      %v2140 = vunpack.c.l.b16 %v1916
      %v2141 = vunpack.c.h.b16 %v1916
      %v2142 = vunpack.c.l.b16 %v1917
      %v2143 = vunpack.c.l.b16 %v1918
      %v2144 = vunpack.c.h.b16 %v1918
      %v2145 = vunpack.c.l.b16 %v1919
      %v2146 = vunpack.c.l.b16 %v1920
      %v2147 = vunpack.c.h.b16 %v1920
      %v2148 = vunpack.c.l.b16 %v1921
      %v2149 = vunpack.c.l.b16 %v1922
      %v2150 = vunpack.c.h.b16 %v1922
      %v2151 = vunpack.c.l.b16 %v1923
      %v2152 = vunpack.c.l.b16 %v1924
      %v2153 = vunpack.c.h.b16 %v1924
      %v2154 = vunpack.c.l.b16 %v1925
      %v2155 = vpack.c.b16 %v2050, %v2047
      %v2156 = vpack.c.b16 %v2051, %v2048
      %v2157 = vpack.c.b16 %v2052, %v2049
      %v2158 = vpack.c.b16 %v2056, %v2053
      %v2159 = vpack.c.b16 %v2057, %v2054
      %v2160 = vpack.c.b16 %v2058, %v2055
      %v2161 = vpack.c.b16 %v2062, %v2059
      %v2162 = vpack.c.b16 %v2063, %v2060
      %v2163 = vpack.c.b16 %v2064, %v2061
      %v2164 = vpack.c.b16 %v2068, %v2065
      %v2165 = vpack.c.b16 %v2069, %v2066
      %v2166 = vpack.c.b16 %v2070, %v2067
      %v2167 = vpack.c.b16 %v2074, %v2071
      %v2168 = vpack.c.b16 %v2075, %v2072
      %v2169 = vpack.c.b16 %v2076, %v2073
      %v2170 = vpack.c.b16 %v2080, %v2077
      %v2171 = vpack.c.b16 %v2081, %v2078
      %v2172 = vpack.c.b16 %v2082, %v2079
      %v2173 = vpack.c.b16 %v2086, %v2083
      %v2174 = vpack.c.b16 %v2087, %v2084
      %v2175 = vpack.c.b16 %v2088, %v2085
      %v2176 = vpack.c.b16 %v2092, %v2089
      %v2177 = vpack.c.b16 %v2093, %v2090
      %v2178 = vpack.c.b16 %v2094, %v2091
      %v2179 = vpack.c.b16 %v2098, %v2095
      %v2180 = vpack.c.b16 %v2099, %v2096
      %v2181 = vpack.c.b16 %v2100, %v2097
      %v2182 = vpack.c.b16 %v2104, %v2101
      %v2183 = vpack.c.b16 %v2105, %v2102
      %v2184 = vpack.c.b16 %v2106, %v2103
      %v2185 = vpack.c.b16 %v2110, %v2107
      %v2186 = vpack.c.b16 %v2111, %v2108
      %v2187 = vpack.c.b16 %v2112, %v2109
      %v2188 = vpack.c.b16 %v2116, %v2113
      %v2189 = vpack.c.b16 %v2117, %v2114
      %v2190 = vpack.c.b16 %v2118, %v2115
      %v2191 = vpack.c.b16 %v2122, %v2119
      %v2192 = vpack.c.b16 %v2123, %v2120
      %v2193 = vpack.c.b16 %v2124, %v2121
      %v2194 = vpack.c.b16 %v2128, %v2125
      %v2195 = vpack.c.b16 %v2129, %v2126
      %v2196 = vpack.c.b16 %v2130, %v2127
      %v2197 = vpack.c.b16 %v2134, %v2131
      %v2198 = vpack.c.b16 %v2135, %v2132
      %v2199 = vpack.c.b16 %v2136, %v2133
      %v2200 = vpack.c.b16 %v2140, %v2137
      %v2201 = vpack.c.b16 %v2141, %v2138
      %v2202 = vpack.c.b16 %v2142, %v2139
      %v2203 = vpack.c.b16 %v2146, %v2143
      %v2204 = vpack.c.b16 %v2147, %v2144
      %v2205 = vpack.c.b16 %v2148, %v2145
      %v2206 = vpack.c.b16 %v2152, %v2149
      %v2207 = vpack.c.b16 %v2153, %v2150
      %v2208 = vpack.c.b16 %v2154, %v2151
      %v2311 = vunpack.c.l.b16 %v1927
      %v2312 = vunpack.c.l.b16 %v1928
      %v2313 = vunpack.c.l.b16 %v1929
      %v2314 = vunpack.c.l.b16 %v1930
      %v2315 = vunpack.c.l.b16 %v1931
      %v2316 = vunpack.c.l.b16 %v1932
      %v2317 = vunpack.c.l.b16 %v1933
      %v2318 = vunpack.c.l.b16 %v1934
      %v2319 = vunpack.c.l.b16 %v1935
      %v2320 = vunpack.c.l.b16 %v1936
      %v2321 = vunpack.c.l.b16 %v1937
      %v2322 = vunpack.c.l.b16 %v1938
      %v2323 = vunpack.c.l.b16 %v1939
      %v2324 = vunpack.c.l.b16 %v1940
      %v2325 = vunpack.c.l.b16 %v1941
      %v2326 = vunpack.c.l.b16 %v1942
      %v2327 = vunpack.c.l.b16 %v1943
      %v2328 = vunpack.c.l.b16 %v1944
      %v2329 = vunpack.c.l.b16 %v1945
      %v2330 = vunpack.c.l.b16 %v1946
      %v2331 = vunpack.c.l.b16 %v1947
      %v2332 = vunpack.c.l.b16 %v1948
      %v2333 = vunpack.c.l.b16 %v1949
      %v2334 = vunpack.c.l.b16 %v1950
      %v2335 = vunpack.c.l.b16 %v1951
      %v2336 = vunpack.c.l.b16 %v1952
      %v2337 = vunpack.c.l.b16 %v1953
      %v2338 = vunpack.c.l.b16 %v1954
      %v2339 = vunpack.c.l.b16 %v1955
      %v2340 = vunpack.c.l.b16 %v1956
      %v2341 = vunpack.c.l.b16 %v1957
      %v2342 = vunpack.c.l.b16 %v1958
      %v2343 = vunpack.c.l.b16 %v1959
      %v2344 = vunpack.c.l.b16 %v1960
      %v2345 = vunpack.c.l.b16 %v1961
      %v2346 = vunpack.c.l.b16 %v1962
      %v2347 = vunpack.c.l.b16 %v1963
      %v2348 = vunpack.c.l.b16 %v1964
      %v2349 = vunpack.c.l.b16 %v1965
      %v2350 = vunpack.c.l.b16 %v1966
      %v2351 = vunpack.c.l.b16 %v1967
      %v2352 = vunpack.c.l.b16 %v1968
      %v2353 = vunpack.c.l.b16 %v1969
      %v2354 = vunpack.c.l.b16 %v1970
      %v2355 = vunpack.c.l.b16 %v1971
      %v2356 = vunpack.c.l.b16 %v1972
      %v2357 = vunpack.c.l.b16 %v1973
      %v2358 = vunpack.c.l.b16 %v1974
      %v2359 = vpack.c.b16 %v2312, %v2311
      %v2360 = vpack.c.b16 %v2314, %v2313
      %v2361 = vpack.c.b16 %v2316, %v2315
      %v2362 = vpack.c.b16 %v2318, %v2317
      %v2363 = vpack.c.b16 %v2320, %v2319
      %v2364 = vpack.c.b16 %v2322, %v2321
      %v2365 = vpack.c.b16 %v2324, %v2323
      %v2366 = vpack.c.b16 %v2326, %v2325
      %v2367 = vpack.c.b16 %v2328, %v2327
      %v2368 = vpack.c.b16 %v2330, %v2329
      %v2369 = vpack.c.b16 %v2332, %v2331
      %v2370 = vpack.c.b16 %v2334, %v2333
      %v2371 = vpack.c.b16 %v2336, %v2335
      %v2372 = vpack.c.b16 %v2338, %v2337
      %v2373 = vpack.c.b16 %v2340, %v2339
      %v2374 = vpack.c.b16 %v2342, %v2341
      %v2375 = vpack.c.b16 %v2344, %v2343
      %v2376 = vpack.c.b16 %v2346, %v2345
      %v2377 = vpack.c.b16 %v2348, %v2347
      %v2378 = vpack.c.b16 %v2350, %v2349
      %v2379 = vpack.c.b16 %v2352, %v2351
      %v2380 = vpack.c.b16 %v2354, %v2353
      %v2381 = vpack.c.b16 %v2356, %v2355
      %v2382 = vpack.c.b16 %v2358, %v2357
      %2407 = vmatprep.subr.bf16.mxu0 0
      %2408 = vmatpush1.bf16.msra.mxu0 %v2366
      %2409 = vmatprep.subr.bf16.mxu0 0
      %2410 = vmatpush1.bf16.msra.mxu0 %v2365
      %2411 = vmatprep.subr.bf16.mxu0 0
      %2412 = vmatpush1.bf16.msra.mxu0 %v2364
      %2413 = vmatprep.subr.bf16.mxu0 0
      %2414 = vmatpush1.bf16.msra.mxu0 %v2363
      %2415 = vmatprep.subr.bf16.mxu0 0
      %2416 = vmatpush1.bf16.msra.mxu0 %v2362
      %2417 = vmatprep.subr.bf16.mxu0 0
      %2418 = vmatpush1.bf16.msra.mxu0 %v2361
      %2419 = vmatprep.subr.bf16.mxu0 0
      %2420 = vmatpush1.bf16.msra.mxu0 %v2360
      %2421 = vmatprep.subr.bf16.mxu0 0
      %2422 = vmatpush1.bf16.msra.mxu0 %v2359
      %2423 = vmatprep.subr.bf16.mxu0 0
      %2424 = vmatpush2.bf16.msra.mxu0 %v2374
      %2425 = vmatprep.subr.bf16.mxu0 0
      %2426 = vmatpush2.bf16.msra.mxu0 %v2373
      %2427 = vmatprep.subr.bf16.mxu0 0
      %2428 = vmatpush2.bf16.msra.mxu0 %v2372
      %2429 = vmatprep.subr.bf16.mxu0 0
      %2430 = vmatpush2.bf16.msra.mxu0 %v2371
      %2431 = vmatprep.subr.bf16.mxu0 0
      %2432 = vmatpush2.bf16.msra.mxu0 %v2370
      %2433 = vmatprep.subr.bf16.mxu0 0
      %2434 = vmatpush2.bf16.msra.mxu0 %v2369
      %2435 = vmatprep.subr.bf16.mxu0 0
      %2436 = vmatpush2.bf16.msra.mxu0 %v2368
      %2437 = vmatprep.subr.bf16.mxu0 0
      %2438 = vmatpush2.bf16.msra.mxu0 %v2367
      %2439 = vmatprep.mubr.bf16.mxu0 %v2156
      %2440 = vmatmul.mubr.bf16.gmra.mxu0 %v2155
      %v2441 = vpop.f32.mrf.mxu0
      %v2442 = vadd.f32 0.0, %v2441
      %v2443 = vpop.f32.mrf.mxu0
      %v2444 = vpop.f32.mrf.mxu0
      %v2445 = vadd.f32 0.0, %v2444
      %v2446 = vpop.f32.mrf.mxu0
      %2447 = vmatprep.mubr.bf16.mxu0 %v2159
      %2448 = vmatmul.mubr.bf16.gmra.mxu0 %v2158
      %v2449 = vpop.f32.mrf.mxu0
      %v2450 = vadd.f32 0.0, %v2449
      %v2451 = vpop.f32.mrf.mxu0
      %v2452 = vpop.f32.mrf.mxu0
      %v2453 = vadd.f32 0.0, %v2452
      %v2454 = vpop.f32.mrf.mxu0
      %2455 = vmatprep.mubr.bf16.mxu0 %v2162
      %2456 = vmatmul.mubr.bf16.gmra.mxu0 %v2161
      %v2457 = vpop.f32.mrf.mxu0
      %v2458 = vadd.f32 0.0, %v2457
      %v2459 = vpop.f32.mrf.mxu0
      %v2460 = vpop.f32.mrf.mxu0
      %v2461 = vadd.f32 0.0, %v2460
      %v2462 = vpop.f32.mrf.mxu0
      %2463 = vmatprep.mubr.bf16.mxu0 %v2165
      %2464 = vmatmul.mubr.bf16.gmra.mxu0 %v2164
      %v2465 = vpop.f32.mrf.mxu0
      %v2466 = vadd.f32 0.0, %v2465
      %v2467 = vpop.f32.mrf.mxu0
      %v2468 = vpop.f32.mrf.mxu0
      %v2469 = vadd.f32 0.0, %v2468
      %v2470 = vpop.f32.mrf.mxu0
      %2471 = vmatprep.mubr.bf16.mxu0 %v2168
      %2472 = vmatmul.mubr.bf16.gmra.mxu0 %v2167
      %v2473 = vpop.f32.mrf.mxu0
      %v2474 = vadd.f32 0.0, %v2473
      %v2475 = vpop.f32.mrf.mxu0
      %v2476 = vpop.f32.mrf.mxu0
      %v2477 = vadd.f32 0.0, %v2476
      %v2478 = vpop.f32.mrf.mxu0
      %2479 = vmatprep.mubr.bf16.mxu0 %v2171
      %2480 = vmatmul.mubr.bf16.gmra.mxu0 %v2170
      %v2481 = vpop.f32.mrf.mxu0
      %v2482 = vadd.f32 0.0, %v2481
      %v2483 = vpop.f32.mrf.mxu0
      %v2484 = vpop.f32.mrf.mxu0
      %v2485 = vadd.f32 0.0, %v2484
      %v2486 = vpop.f32.mrf.mxu0
      %2487 = vmatprep.mubr.bf16.mxu0 %v2174
      %2488 = vmatmul.mubr.bf16.gmra.mxu0 %v2173
      %v2489 = vpop.f32.mrf.mxu0
      %v2490 = vadd.f32 0.0, %v2489
      %v2491 = vpop.f32.mrf.mxu0
      %v2492 = vpop.f32.mrf.mxu0
      %v2493 = vadd.f32 0.0, %v2492
      %v2494 = vpop.f32.mrf.mxu0
      %2495 = vmatprep.mubr.bf16.mxu0 %v2177
      %2496 = vmatmul.mubr.bf16.gmra.mxu0 %v2176
      %v2497 = vpop.f32.mrf.mxu0
      %v2498 = vadd.f32 0.0, %v2497
      %v2499 = vpop.f32.mrf.mxu0
      %v2500 = vpop.f32.mrf.mxu0
      %v2501 = vadd.f32 0.0, %v2500
      %v2502 = vpop.f32.mrf.mxu0
      %2503 = vmatprep.mubr.bf16.mxu0 %v2180
      %2504 = vmatmul.mubr.bf16.gmra.mxu0 %v2179
      %v2505 = vpop.f32.mrf.mxu0
      %v2506 = vadd.f32 0.0, %v2505
      %v2507 = vpop.f32.mrf.mxu0
      %v2508 = vpop.f32.mrf.mxu0
      %v2509 = vadd.f32 0.0, %v2508
      %v2510 = vpop.f32.mrf.mxu0
      %2511 = vmatprep.mubr.bf16.mxu0 %v2183
      %2512 = vmatmul.mubr.bf16.gmra.mxu0 %v2182
      %v2513 = vpop.f32.mrf.mxu0
      %v2514 = vadd.f32 0.0, %v2513
      %v2515 = vpop.f32.mrf.mxu0
      %v2516 = vpop.f32.mrf.mxu0
      %v2517 = vadd.f32 0.0, %v2516
      %v2518 = vpop.f32.mrf.mxu0
      %2519 = vmatprep.mubr.bf16.mxu0 %v2186
      %2520 = vmatmul.mubr.bf16.gmra.mxu0 %v2185
      %v2521 = vpop.f32.mrf.mxu0
      %v2522 = vadd.f32 0.0, %v2521
      %v2523 = vpop.f32.mrf.mxu0
      %v2524 = vpop.f32.mrf.mxu0
      %v2525 = vadd.f32 0.0, %v2524
      %v2526 = vpop.f32.mrf.mxu0
      %2527 = vmatprep.mubr.bf16.mxu0 %v2189
      %2528 = vmatmul.mubr.bf16.gmra.mxu0 %v2188
      %v2529 = vpop.f32.mrf.mxu0
      %v2530 = vadd.f32 0.0, %v2529
      %v2531 = vpop.f32.mrf.mxu0
      %v2532 = vpop.f32.mrf.mxu0
      %v2533 = vadd.f32 0.0, %v2532
      %v2534 = vpop.f32.mrf.mxu0
      %2535 = vmatprep.mubr.bf16.mxu0 %v2192
      %2536 = vmatmul.mubr.bf16.gmra.mxu0 %v2191
      %v2537 = vpop.f32.mrf.mxu0
      %v2538 = vadd.f32 0.0, %v2537
      %v2539 = vpop.f32.mrf.mxu0
      %v2540 = vpop.f32.mrf.mxu0
      %v2541 = vadd.f32 0.0, %v2540
      %v2542 = vpop.f32.mrf.mxu0
      %2543 = vmatprep.mubr.bf16.mxu0 %v2195
      %2544 = vmatmul.mubr.bf16.gmra.mxu0 %v2194
      %v2545 = vpop.f32.mrf.mxu0
      %v2546 = vadd.f32 0.0, %v2545
      %v2547 = vpop.f32.mrf.mxu0
      %v2548 = vpop.f32.mrf.mxu0
      %v2549 = vadd.f32 0.0, %v2548
      %v2550 = vpop.f32.mrf.mxu0
      %2551 = vmatprep.mubr.bf16.mxu0 %v2198
      %2552 = vmatmul.mubr.bf16.gmra.mxu0 %v2197
      %v2553 = vpop.f32.mrf.mxu0
      %v2554 = vadd.f32 0.0, %v2553
      %v2555 = vpop.f32.mrf.mxu0
      %v2556 = vpop.f32.mrf.mxu0
      %v2557 = vadd.f32 0.0, %v2556
      %v2558 = vpop.f32.mrf.mxu0
      %2559 = vmatprep.mubr.bf16.mxu0 %v2201
      %2560 = vmatmul.mubr.bf16.gmra.mxu0 %v2200
      %v2561 = vpop.f32.mrf.mxu0
      %v2562 = vadd.f32 0.0, %v2561
      %v2563 = vpop.f32.mrf.mxu0
      %v2564 = vpop.f32.mrf.mxu0
      %v2565 = vadd.f32 0.0, %v2564
      %v2566 = vpop.f32.mrf.mxu0
      %2567 = vmatprep.mubr.bf16.mxu0 %v2204
      %2568 = vmatmul.mubr.bf16.gmra.mxu0 %v2203
      %v2569 = vpop.f32.mrf.mxu0
      %v2570 = vadd.f32 0.0, %v2569
      %v2571 = vpop.f32.mrf.mxu0
      %v2572 = vpop.f32.mrf.mxu0
      %v2573 = vadd.f32 0.0, %v2572
      %v2574 = vpop.f32.mrf.mxu0
      %2575 = vmatprep.mubr.bf16.mxu0 %v2207
      %2576 = vmatmul.mubr.bf16.gmra.mxu0 %v2206
      %v2577 = vpop.f32.mrf.mxu0
      %v2578 = vadd.f32 0.0, %v2577
      %v2579 = vpop.f32.mrf.mxu0
      %v2580 = vpop.f32.mrf.mxu0
      %v2581 = vadd.f32 0.0, %v2580
      %v2582 = vpop.f32.mrf.mxu0
      %2583 = vdwg.mxu0
      %2584 = vmatprep.subr.bf16.mxu0 0
      %2585 = vmatpush1.bf16.msra.mxu0 %v2382
      %2586 = vmatprep.subr.bf16.mxu0 0
      %2587 = vmatpush1.bf16.msra.mxu0 %v2381
      %2588 = vmatprep.subr.bf16.mxu0 0
      %2589 = vmatpush1.bf16.msra.mxu0 %v2380
      %2590 = vmatprep.subr.bf16.mxu0 0
      %2591 = vmatpush1.bf16.msra.mxu0 %v2379
      %2592 = vmatprep.subr.bf16.mxu0 0
      %2593 = vmatpush1.bf16.msra.mxu0 %v2378
      %2594 = vmatprep.subr.bf16.mxu0 0
      %2595 = vmatpush1.bf16.msra.mxu0 %v2377
      %2596 = vmatprep.subr.bf16.mxu0 0
      %2597 = vmatpush1.bf16.msra.mxu0 %v2376
      %2598 = vmatprep.subr.bf16.mxu0 0
      %2599 = vmatpush1.bf16.msra.mxu0 %v2375
      %2600 = vmatprep.subr.bf16.mxu0 0
      %2601 = vmatpush2.bf16.msra.mxu0 0
      %2602 = vmatprep.subr.bf16.mxu0 0
      %2603 = vmatpush2.bf16.msra.mxu0 0
      %2604 = vmatprep.subr.bf16.mxu0 0
      %2605 = vmatpush2.bf16.msra.mxu0 0
      %2606 = vmatprep.subr.bf16.mxu0 0
      %2607 = vmatpush2.bf16.msra.mxu0 0
      %2608 = vmatprep.subr.bf16.mxu0 0
      %2609 = vmatpush2.bf16.msra.mxu0 0
      %2610 = vmatprep.subr.bf16.mxu0 0
      %2611 = vmatpush2.bf16.msra.mxu0 0
      %2612 = vmatprep.subr.bf16.mxu0 0
      %2613 = vmatpush2.bf16.msra.mxu0 0
      %2614 = vmatprep.subr.bf16.mxu0 0
      %2615 = vmatpush2.bf16.msra.mxu0 0
      %2616 = vmatprep.mubr.bf16.mxu0 0
      %2617 = vmatmul.mubr.bf16.gmra.mxu0 %v2157
      %v2618 = vpop.f32.mrf.mxu0
      %v2619 = vadd.f32 %v2442, %v2618
      %v2620 = vpop.f32.mrf.mxu0
      %v2621 = vpop.f32.mrf.mxu0
      %v2622 = vadd.f32 %v2445, %v2621
      %v2623 = vpop.f32.mrf.mxu0
      %2624 = vmatprep.mubr.bf16.mxu0 0
      %2625 = vmatmul.mubr.bf16.gmra.mxu0 %v2160
      %v2626 = vpop.f32.mrf.mxu0
      %v2627 = vadd.f32 %v2450, %v2626
      %v2628 = vpop.f32.mrf.mxu0
      %v2629 = vpop.f32.mrf.mxu0
      %v2630 = vadd.f32 %v2453, %v2629
      %v2631 = vpop.f32.mrf.mxu0
      %2632 = vmatprep.mubr.bf16.mxu0 0
      %2633 = vmatmul.mubr.bf16.gmra.mxu0 %v2163
      %v2634 = vpop.f32.mrf.mxu0
      %v2635 = vadd.f32 %v2458, %v2634
      %v2636 = vpop.f32.mrf.mxu0
      %v2637 = vpop.f32.mrf.mxu0
      %v2638 = vadd.f32 %v2461, %v2637
      %v2639 = vpop.f32.mrf.mxu0
      %2640 = vmatprep.mubr.bf16.mxu0 0
      %2641 = vmatmul.mubr.bf16.gmra.mxu0 %v2166
      %v2642 = vpop.f32.mrf.mxu0
      %v2643 = vadd.f32 %v2466, %v2642
      %v2644 = vpop.f32.mrf.mxu0
      %v2645 = vpop.f32.mrf.mxu0
      %v2646 = vadd.f32 %v2469, %v2645
      %v2647 = vpop.f32.mrf.mxu0
      %2648 = vmatprep.mubr.bf16.mxu0 0
      %2649 = vmatmul.mubr.bf16.gmra.mxu0 %v2169
      %v2650 = vpop.f32.mrf.mxu0
      %v2651 = vadd.f32 %v2474, %v2650
      %v2652 = vpop.f32.mrf.mxu0
      %v2653 = vpop.f32.mrf.mxu0
      %v2654 = vadd.f32 %v2477, %v2653
      %v2655 = vpop.f32.mrf.mxu0
      %2656 = vmatprep.mubr.bf16.mxu0 0
      %2657 = vmatmul.mubr.bf16.gmra.mxu0 %v2172
      %v2658 = vpop.f32.mrf.mxu0
      %v2659 = vadd.f32 %v2482, %v2658
      %v2660 = vpop.f32.mrf.mxu0
      %v2661 = vpop.f32.mrf.mxu0
      %v2662 = vadd.f32 %v2485, %v2661
      %v2663 = vpop.f32.mrf.mxu0
      %2664 = vmatprep.mubr.bf16.mxu0 0
      %2665 = vmatmul.mubr.bf16.gmra.mxu0 %v2175
      %v2666 = vpop.f32.mrf.mxu0
      %v2667 = vadd.f32 %v2490, %v2666
      %v2668 = vpop.f32.mrf.mxu0
      %v2669 = vpop.f32.mrf.mxu0
      %v2670 = vadd.f32 %v2493, %v2669
      %v2671 = vpop.f32.mrf.mxu0
      %2672 = vmatprep.mubr.bf16.mxu0 0
      %2673 = vmatmul.mubr.bf16.gmra.mxu0 %v2178
      %v2674 = vpop.f32.mrf.mxu0
      %v2675 = vadd.f32 %v2498, %v2674
      %v2676 = vpop.f32.mrf.mxu0
      %v2677 = vpop.f32.mrf.mxu0
      %v2678 = vadd.f32 %v2501, %v2677
      %v2679 = vpop.f32.mrf.mxu0
      %2680 = vmatprep.mubr.bf16.mxu0 0
      %2681 = vmatmul.mubr.bf16.gmra.mxu0 %v2181
      %v2682 = vpop.f32.mrf.mxu0
      %v2683 = vadd.f32 %v2506, %v2682
      %v2684 = vpop.f32.mrf.mxu0
      %v2685 = vpop.f32.mrf.mxu0
      %v2686 = vadd.f32 %v2509, %v2685
      %v2687 = vpop.f32.mrf.mxu0
      %2688 = vmatprep.mubr.bf16.mxu0 0
      %2689 = vmatmul.mubr.bf16.gmra.mxu0 %v2184
      %v2690 = vpop.f32.mrf.mxu0
      %v2691 = vadd.f32 %v2514, %v2690
      %v2692 = vpop.f32.mrf.mxu0
      %v2693 = vpop.f32.mrf.mxu0
      %v2694 = vadd.f32 %v2517, %v2693
      %v2695 = vpop.f32.mrf.mxu0
      %2696 = vmatprep.mubr.bf16.mxu0 0
      %2697 = vmatmul.mubr.bf16.gmra.mxu0 %v2187
      %v2698 = vpop.f32.mrf.mxu0
      %v2699 = vadd.f32 %v2522, %v2698
      %v2700 = vpop.f32.mrf.mxu0
      %v2701 = vpop.f32.mrf.mxu0
      %v2702 = vadd.f32 %v2525, %v2701
      %v2703 = vpop.f32.mrf.mxu0
      %2704 = vmatprep.mubr.bf16.mxu0 0
      %2705 = vmatmul.mubr.bf16.gmra.mxu0 %v2190
      %v2706 = vpop.f32.mrf.mxu0
      %v2707 = vadd.f32 %v2530, %v2706
      %v2708 = vpop.f32.mrf.mxu0
      %v2709 = vpop.f32.mrf.mxu0
      %v2710 = vadd.f32 %v2533, %v2709
      %v2711 = vpop.f32.mrf.mxu0
      %2712 = vmatprep.mubr.bf16.mxu0 0
      %2713 = vmatmul.mubr.bf16.gmra.mxu0 %v2193
      %v2714 = vpop.f32.mrf.mxu0
      %v2715 = vadd.f32 %v2538, %v2714
      %v2716 = vpop.f32.mrf.mxu0
      %v2717 = vpop.f32.mrf.mxu0
      %v2718 = vadd.f32 %v2541, %v2717
      %v2719 = vpop.f32.mrf.mxu0
      %2720 = vmatprep.mubr.bf16.mxu0 0
      %2721 = vmatmul.mubr.bf16.gmra.mxu0 %v2196
      %v2722 = vpop.f32.mrf.mxu0
      %v2723 = vadd.f32 %v2546, %v2722
      %v2724 = vpop.f32.mrf.mxu0
      %v2725 = vpop.f32.mrf.mxu0
      %v2726 = vadd.f32 %v2549, %v2725
      %v2727 = vpop.f32.mrf.mxu0
      %2728 = vmatprep.mubr.bf16.mxu0 0
      %2729 = vmatmul.mubr.bf16.gmra.mxu0 %v2199
      %v2730 = vpop.f32.mrf.mxu0
      %v2731 = vadd.f32 %v2554, %v2730
      %v2732 = vpop.f32.mrf.mxu0
      %v2733 = vpop.f32.mrf.mxu0
      %v2734 = vadd.f32 %v2557, %v2733
      %v2735 = vpop.f32.mrf.mxu0
      %2736 = vmatprep.mubr.bf16.mxu0 0
      %2737 = vmatmul.mubr.bf16.gmra.mxu0 %v2202
      %v2738 = vpop.f32.mrf.mxu0
      %v2739 = vadd.f32 %v2562, %v2738
      %v2740 = vpop.f32.mrf.mxu0
      %v2741 = vpop.f32.mrf.mxu0
      %v2742 = vadd.f32 %v2565, %v2741
      %v2743 = vpop.f32.mrf.mxu0
      %2744 = vmatprep.mubr.bf16.mxu0 0
      %2745 = vmatmul.mubr.bf16.gmra.mxu0 %v2205
      %v2746 = vpop.f32.mrf.mxu0
      %v2747 = vadd.f32 %v2570, %v2746
      %v2748 = vpop.f32.mrf.mxu0
      %v2749 = vpop.f32.mrf.mxu0
      %v2750 = vadd.f32 %v2573, %v2749
      %v2751 = vpop.f32.mrf.mxu0
      %2752 = vmatprep.mubr.bf16.mxu0 0
      %2753 = vmatmul.mubr.bf16.gmra.mxu0 %v2208
      %v2754 = vpop.f32.mrf.mxu0
      %v2755 = vadd.f32 %v2578, %v2754
      %v2756 = vpop.f32.mrf.mxu0
      %v2757 = vpop.f32.mrf.mxu0
      %v2758 = vadd.f32 %v2581, %v2757
      %v2759 = vpop.f32.mrf.mxu0
      %2760 = vdwg.mxu0
      %v2833 = vunpack.c.l.b16 %v1733
      %v2834 = vunpack.c.h.b16 %v1733
      %v2835 = vunpack.c.l.b16 %v1734
      %v2836 = vunpack.c.l.b16 %v1735
      %v2837 = vunpack.c.h.b16 %v1735
      %v2838 = vunpack.c.l.b16 %v1736
      %v2839 = vunpack.c.l.b16 %v1737
      %v2840 = vunpack.c.h.b16 %v1737
      %v2841 = vunpack.c.l.b16 %v1738
      %v2842 = vunpack.c.l.b16 %v1739
      %v2843 = vunpack.c.h.b16 %v1739
      %v2844 = vunpack.c.l.b16 %v1740
      %v2845 = vunpack.c.l.b16 %v1741
      %v2846 = vunpack.c.h.b16 %v1741
      %v2847 = vunpack.c.l.b16 %v1742
      %v2848 = vunpack.c.l.b16 %v1743
      %v2849 = vunpack.c.h.b16 %v1743
      %v2850 = vunpack.c.l.b16 %v1744
      %v2851 = vunpack.c.l.b16 %v1745
      %v2852 = vunpack.c.h.b16 %v1745
      %v2853 = vunpack.c.l.b16 %v1746
      %v2854 = vunpack.c.l.b16 %v1747
      %v2855 = vunpack.c.h.b16 %v1747
      %v2856 = vunpack.c.l.b16 %v1748
      %v2857 = vunpack.c.l.b16 %v1749
      %v2858 = vunpack.c.h.b16 %v1749
      %v2859 = vunpack.c.l.b16 %v1750
      %v2860 = vunpack.c.l.b16 %v1751
      %v2861 = vunpack.c.h.b16 %v1751
      %v2862 = vunpack.c.l.b16 %v1752
      %v2863 = vunpack.c.l.b16 %v1753
      %v2864 = vunpack.c.h.b16 %v1753
      %v2865 = vunpack.c.l.b16 %v1754
      %v2866 = vunpack.c.l.b16 %v1755
      %v2867 = vunpack.c.h.b16 %v1755
      %v2868 = vunpack.c.l.b16 %v1756
      %v2869 = vunpack.c.l.b16 %v1757
      %v2870 = vunpack.c.h.b16 %v1757
      %v2871 = vunpack.c.l.b16 %v1758
      %v2872 = vunpack.c.l.b16 %v1759
      %v2873 = vunpack.c.h.b16 %v1759
      %v2874 = vunpack.c.l.b16 %v1760
      %v2875 = vunpack.c.l.b16 %v1761
      %v2876 = vunpack.c.h.b16 %v1761
      %v2877 = vunpack.c.l.b16 %v1762
      %v2878 = vunpack.c.l.b16 %v1763
      %v2879 = vunpack.c.h.b16 %v1763
      %v2880 = vunpack.c.l.b16 %v1764
      %v2881 = vunpack.c.l.b16 %v1765
      %v2882 = vunpack.c.h.b16 %v1765
      %v2883 = vunpack.c.l.b16 %v1766
      %v2884 = vunpack.c.l.b16 %v1767
      %v2885 = vunpack.c.h.b16 %v1767
      %v2886 = vunpack.c.l.b16 %v1768
      %v2887 = vunpack.c.l.b16 %v1769
      %v2888 = vunpack.c.h.b16 %v1769
      %v2889 = vunpack.c.l.b16 %v1770
      %v2890 = vunpack.c.l.b16 %v1771
      %v2891 = vunpack.c.h.b16 %v1771
      %v2892 = vunpack.c.l.b16 %v1772
      %v2893 = vunpack.c.l.b16 %v1773
      %v2894 = vunpack.c.h.b16 %v1773
      %v2895 = vunpack.c.l.b16 %v1774
      %v2896 = vunpack.c.l.b16 %v1775
      %v2897 = vunpack.c.h.b16 %v1775
      %v2898 = vunpack.c.l.b16 %v1776
      %v2899 = vunpack.c.l.b16 %v1777
      %v2900 = vunpack.c.h.b16 %v1777
      %v2901 = vunpack.c.l.b16 %v1778
      %v2902 = vunpack.c.l.b16 %v1779
      %v2903 = vunpack.c.h.b16 %v1779
      %v2904 = vunpack.c.l.b16 %v1780
      %v2905 = vunpack.c.l.b16 %v1781
      %v2906 = vunpack.c.h.b16 %v1781
      %v2907 = vunpack.c.l.b16 %v1782
      %v2908 = vunpack.c.l.b16 %v1783
      %v2909 = vunpack.c.h.b16 %v1783
      %v2910 = vunpack.c.l.b16 %v1784
      %v2911 = vunpack.c.l.b16 %v1785
      %v2912 = vunpack.c.h.b16 %v1785
      %v2913 = vunpack.c.l.b16 %v1786
      %v2914 = vunpack.c.l.b16 %v1787
      %v2915 = vunpack.c.h.b16 %v1787
      %v2916 = vunpack.c.l.b16 %v1788
      %v2917 = vunpack.c.l.b16 %v1789
      %v2918 = vunpack.c.h.b16 %v1789
      %v2919 = vunpack.c.l.b16 %v1790
      %v2920 = vunpack.c.l.b16 %v1791
      %v2921 = vunpack.c.h.b16 %v1791
      %v2922 = vunpack.c.l.b16 %v1792
      %v2923 = vunpack.c.l.b16 %v1793
      %v2924 = vunpack.c.h.b16 %v1793
      %v2925 = vunpack.c.l.b16 %v1794
      %v2926 = vunpack.c.l.b16 %v1795
      %v2927 = vunpack.c.h.b16 %v1795
      %v2928 = vunpack.c.l.b16 %v1796
      %v2929 = vunpack.c.l.b16 %v1797
      %v2930 = vunpack.c.h.b16 %v1797
      %v2931 = vunpack.c.l.b16 %v1798
      %v2932 = vunpack.c.l.b16 %v1799
      %v2933 = vunpack.c.h.b16 %v1799
      %v2934 = vunpack.c.l.b16 %v1800
      %v2935 = vunpack.c.l.b16 %v1801
      %v2936 = vunpack.c.h.b16 %v1801
      %v2937 = vunpack.c.l.b16 %v1802
      %v2938 = vunpack.c.l.b16 %v1803
      %v2939 = vunpack.c.h.b16 %v1803
      %v2940 = vunpack.c.l.b16 %v1804
      %v2941 = vpack.c.b16 %v2836, %v2833
      %v2942 = vpack.c.b16 %v2837, %v2834
      %v2943 = vpack.c.b16 %v2838, %v2835
      %v2944 = vpack.c.b16 %v2842, %v2839
      %v2945 = vpack.c.b16 %v2843, %v2840
      %v2946 = vpack.c.b16 %v2844, %v2841
      %v2947 = vpack.c.b16 %v2848, %v2845
      %v2948 = vpack.c.b16 %v2849, %v2846
      %v2949 = vpack.c.b16 %v2850, %v2847
      %v2950 = vpack.c.b16 %v2854, %v2851
      %v2951 = vpack.c.b16 %v2855, %v2852
      %v2952 = vpack.c.b16 %v2856, %v2853
      %v2953 = vpack.c.b16 %v2860, %v2857
      %v2954 = vpack.c.b16 %v2861, %v2858
      %v2955 = vpack.c.b16 %v2862, %v2859
      %v2956 = vpack.c.b16 %v2866, %v2863
      %v2957 = vpack.c.b16 %v2867, %v2864
      %v2958 = vpack.c.b16 %v2868, %v2865
      %v2959 = vpack.c.b16 %v2872, %v2869
      %v2960 = vpack.c.b16 %v2873, %v2870
      %v2961 = vpack.c.b16 %v2874, %v2871
      %v2962 = vpack.c.b16 %v2878, %v2875
      %v2963 = vpack.c.b16 %v2879, %v2876
      %v2964 = vpack.c.b16 %v2880, %v2877
      %v2965 = vpack.c.b16 %v2884, %v2881
      %v2966 = vpack.c.b16 %v2885, %v2882
      %v2967 = vpack.c.b16 %v2886, %v2883
      %v2968 = vpack.c.b16 %v2890, %v2887
      %v2969 = vpack.c.b16 %v2891, %v2888
      %v2970 = vpack.c.b16 %v2892, %v2889
      %v2971 = vpack.c.b16 %v2896, %v2893
      %v2972 = vpack.c.b16 %v2897, %v2894
      %v2973 = vpack.c.b16 %v2898, %v2895
      %v2974 = vpack.c.b16 %v2902, %v2899
      %v2975 = vpack.c.b16 %v2903, %v2900
      %v2976 = vpack.c.b16 %v2904, %v2901
      %v2977 = vpack.c.b16 %v2908, %v2905
      %v2978 = vpack.c.b16 %v2909, %v2906
      %v2979 = vpack.c.b16 %v2910, %v2907
      %v2980 = vpack.c.b16 %v2914, %v2911
      %v2981 = vpack.c.b16 %v2915, %v2912
      %v2982 = vpack.c.b16 %v2916, %v2913
      %v2983 = vpack.c.b16 %v2920, %v2917
      %v2984 = vpack.c.b16 %v2921, %v2918
      %v2985 = vpack.c.b16 %v2922, %v2919
      %v2986 = vpack.c.b16 %v2926, %v2923
      %v2987 = vpack.c.b16 %v2927, %v2924
      %v2988 = vpack.c.b16 %v2928, %v2925
      %v2989 = vpack.c.b16 %v2932, %v2929
      %v2990 = vpack.c.b16 %v2933, %v2930
      %v2991 = vpack.c.b16 %v2934, %v2931
      %v2992 = vpack.c.b16 %v2938, %v2935
      %v2993 = vpack.c.b16 %v2939, %v2936
      %v2994 = vpack.c.b16 %v2940, %v2937
      %v3097 = vunpack.c.l.b16 %v1805
      %v3098 = vunpack.c.l.b16 %v1806
      %v3099 = vunpack.c.l.b16 %v1807
      %v3100 = vunpack.c.l.b16 %v1808
      %v3101 = vunpack.c.l.b16 %v1809
      %v3102 = vunpack.c.l.b16 %v1810
      %v3103 = vunpack.c.l.b16 %v1811
      %v3104 = vunpack.c.l.b16 %v1812
      %v3105 = vunpack.c.l.b16 %v1813
      %v3106 = vunpack.c.l.b16 %v1814
      %v3107 = vunpack.c.l.b16 %v1815
      %v3108 = vunpack.c.l.b16 %v1816
      %v3109 = vunpack.c.l.b16 %v1817
      %v3110 = vunpack.c.l.b16 %v1818
      %v3111 = vunpack.c.l.b16 %v1819
      %v3112 = vunpack.c.l.b16 %v1820
      %v3113 = vunpack.c.l.b16 %v1821
      %v3114 = vunpack.c.l.b16 %v1822
      %v3115 = vunpack.c.l.b16 %v1823
      %v3116 = vunpack.c.l.b16 %v1824
      %v3117 = vunpack.c.l.b16 %v1825
      %v3118 = vunpack.c.l.b16 %v1826
      %v3119 = vunpack.c.l.b16 %v1827
      %v3120 = vunpack.c.l.b16 %v1828
      %v3121 = vunpack.c.l.b16 %v1829
      %v3122 = vunpack.c.l.b16 %v1830
      %v3123 = vunpack.c.l.b16 %v1831
      %v3124 = vunpack.c.l.b16 %v1832
      %v3125 = vunpack.c.l.b16 %v1833
      %v3126 = vunpack.c.l.b16 %v1834
      %v3127 = vunpack.c.l.b16 %v1835
      %v3128 = vunpack.c.l.b16 %v1836
      %v3129 = vunpack.c.l.b16 %v1837
      %v3130 = vunpack.c.l.b16 %v1838
      %v3131 = vunpack.c.l.b16 %v1839
      %v3132 = vunpack.c.l.b16 %v1840
      %v3133 = vunpack.c.l.b16 %v1841
      %v3134 = vunpack.c.l.b16 %v1842
      %v3135 = vunpack.c.l.b16 %v1843
      %v3136 = vunpack.c.l.b16 %v1844
      %v3137 = vunpack.c.l.b16 %v1845
      %v3138 = vunpack.c.l.b16 %v1846
      %v3139 = vunpack.c.l.b16 %v1847
      %v3140 = vunpack.c.l.b16 %v1848
      %v3141 = vunpack.c.l.b16 %v1849
      %v3142 = vunpack.c.l.b16 %v1850
      %v3143 = vunpack.c.l.b16 %v1851
      %v3144 = vunpack.c.l.b16 %v1852
      %v3145 = vpack.c.b16 %v3098, %v3097
      %v3146 = vpack.c.b16 %v3100, %v3099
      %v3147 = vpack.c.b16 %v3102, %v3101
      %v3148 = vpack.c.b16 %v3104, %v3103
      %v3149 = vpack.c.b16 %v3106, %v3105
      %v3150 = vpack.c.b16 %v3108, %v3107
      %v3151 = vpack.c.b16 %v3110, %v3109
      %v3152 = vpack.c.b16 %v3112, %v3111
      %v3153 = vpack.c.b16 %v3114, %v3113
      %v3154 = vpack.c.b16 %v3116, %v3115
      %v3155 = vpack.c.b16 %v3118, %v3117
      %v3156 = vpack.c.b16 %v3120, %v3119
      %v3157 = vpack.c.b16 %v3122, %v3121
      %v3158 = vpack.c.b16 %v3124, %v3123
      %v3159 = vpack.c.b16 %v3126, %v3125
      %v3160 = vpack.c.b16 %v3128, %v3127
      %v3161 = vpack.c.b16 %v3130, %v3129
      %v3162 = vpack.c.b16 %v3132, %v3131
      %v3163 = vpack.c.b16 %v3134, %v3133
      %v3164 = vpack.c.b16 %v3136, %v3135
      %v3165 = vpack.c.b16 %v3138, %v3137
      %v3166 = vpack.c.b16 %v3140, %v3139
      %v3167 = vpack.c.b16 %v3142, %v3141
      %v3168 = vpack.c.b16 %v3144, %v3143
      %3193 = vmatprep.subr.bf16.mxu0 0
      %3194 = vmatpush1.bf16.msra.mxu0 %v3152
      %3195 = vmatprep.subr.bf16.mxu0 0
      %3196 = vmatpush1.bf16.msra.mxu0 %v3151
      %3197 = vmatprep.subr.bf16.mxu0 0
      %3198 = vmatpush1.bf16.msra.mxu0 %v3150
      %3199 = vmatprep.subr.bf16.mxu0 0
      %3200 = vmatpush1.bf16.msra.mxu0 %v3149
      %3201 = vmatprep.subr.bf16.mxu0 0
      %3202 = vmatpush1.bf16.msra.mxu0 %v3148
      %3203 = vmatprep.subr.bf16.mxu0 0
      %3204 = vmatpush1.bf16.msra.mxu0 %v3147
      %3205 = vmatprep.subr.bf16.mxu0 0
      %3206 = vmatpush1.bf16.msra.mxu0 %v3146
      %3207 = vmatprep.subr.bf16.mxu0 0
      %3208 = vmatpush1.bf16.msra.mxu0 %v3145
      %3209 = vmatprep.subr.bf16.mxu0 0
      %3210 = vmatpush2.bf16.msra.mxu0 %v3160
      %3211 = vmatprep.subr.bf16.mxu0 0
      %3212 = vmatpush2.bf16.msra.mxu0 %v3159
      %3213 = vmatprep.subr.bf16.mxu0 0
      %3214 = vmatpush2.bf16.msra.mxu0 %v3158
      %3215 = vmatprep.subr.bf16.mxu0 0
      %3216 = vmatpush2.bf16.msra.mxu0 %v3157
      %3217 = vmatprep.subr.bf16.mxu0 0
      %3218 = vmatpush2.bf16.msra.mxu0 %v3156
      %3219 = vmatprep.subr.bf16.mxu0 0
      %3220 = vmatpush2.bf16.msra.mxu0 %v3155
      %3221 = vmatprep.subr.bf16.mxu0 0
      %3222 = vmatpush2.bf16.msra.mxu0 %v3154
      %3223 = vmatprep.subr.bf16.mxu0 0
      %3224 = vmatpush2.bf16.msra.mxu0 %v3153
      %3225 = vmatprep.mubr.bf16.mxu0 %v2942
      %3226 = vmatmul.mubr.bf16.gmra.mxu0 %v2941
      %v3227 = vpop.f32.mrf.mxu0
      %v3228 = vadd.f32 %v2619, %v3227
      %v3229 = vpop.f32.mrf.mxu0
      %v3230 = vpop.f32.mrf.mxu0
      %v3231 = vadd.f32 %v2622, %v3230
      %v3232 = vpop.f32.mrf.mxu0
      %3233 = vmatprep.mubr.bf16.mxu0 %v2945
      %3234 = vmatmul.mubr.bf16.gmra.mxu0 %v2944
      %v3235 = vpop.f32.mrf.mxu0
      %v3236 = vadd.f32 %v2627, %v3235
      %v3237 = vpop.f32.mrf.mxu0
      %v3238 = vpop.f32.mrf.mxu0
      %v3239 = vadd.f32 %v2630, %v3238
      %v3240 = vpop.f32.mrf.mxu0
      %3241 = vmatprep.mubr.bf16.mxu0 %v2948
      %3242 = vmatmul.mubr.bf16.gmra.mxu0 %v2947
      %v3243 = vpop.f32.mrf.mxu0
      %v3244 = vadd.f32 %v2635, %v3243
      %v3245 = vpop.f32.mrf.mxu0
      %v3246 = vpop.f32.mrf.mxu0
      %v3247 = vadd.f32 %v2638, %v3246
      %v3248 = vpop.f32.mrf.mxu0
      %3249 = vmatprep.mubr.bf16.mxu0 %v2951
      %3250 = vmatmul.mubr.bf16.gmra.mxu0 %v2950
      %v3251 = vpop.f32.mrf.mxu0
      %v3252 = vadd.f32 %v2643, %v3251
      %v3253 = vpop.f32.mrf.mxu0
      %v3254 = vpop.f32.mrf.mxu0
      %v3255 = vadd.f32 %v2646, %v3254
      %v3256 = vpop.f32.mrf.mxu0
      %3257 = vmatprep.mubr.bf16.mxu0 %v2954
      %3258 = vmatmul.mubr.bf16.gmra.mxu0 %v2953
      %v3259 = vpop.f32.mrf.mxu0
      %v3260 = vadd.f32 %v2651, %v3259
      %v3261 = vpop.f32.mrf.mxu0
      %v3262 = vpop.f32.mrf.mxu0
      %v3263 = vadd.f32 %v2654, %v3262
      %v3264 = vpop.f32.mrf.mxu0
      %3265 = vmatprep.mubr.bf16.mxu0 %v2957
      %3266 = vmatmul.mubr.bf16.gmra.mxu0 %v2956
      %v3267 = vpop.f32.mrf.mxu0
      %v3268 = vadd.f32 %v2659, %v3267
      %v3269 = vpop.f32.mrf.mxu0
      %v3270 = vpop.f32.mrf.mxu0
      %v3271 = vadd.f32 %v2662, %v3270
      %v3272 = vpop.f32.mrf.mxu0
      %3273 = vmatprep.mubr.bf16.mxu0 %v2960
      %3274 = vmatmul.mubr.bf16.gmra.mxu0 %v2959
      %v3275 = vpop.f32.mrf.mxu0
      %v3276 = vadd.f32 %v2667, %v3275
      %v3277 = vpop.f32.mrf.mxu0
      %v3278 = vpop.f32.mrf.mxu0
      %v3279 = vadd.f32 %v2670, %v3278
      %v3280 = vpop.f32.mrf.mxu0
      %3281 = vmatprep.mubr.bf16.mxu0 %v2963
      %3282 = vmatmul.mubr.bf16.gmra.mxu0 %v2962
      %v3283 = vpop.f32.mrf.mxu0
      %v3284 = vadd.f32 %v2675, %v3283
      %v3285 = vpop.f32.mrf.mxu0
      %v3286 = vpop.f32.mrf.mxu0
      %v3287 = vadd.f32 %v2678, %v3286
      %v3288 = vpop.f32.mrf.mxu0
      %3289 = vmatprep.mubr.bf16.mxu0 %v2966
      %3290 = vmatmul.mubr.bf16.gmra.mxu0 %v2965
      %v3291 = vpop.f32.mrf.mxu0
      %v3292 = vadd.f32 %v2683, %v3291
      %v3293 = vpop.f32.mrf.mxu0
      %v3294 = vpop.f32.mrf.mxu0
      %v3295 = vadd.f32 %v2686, %v3294
      %v3296 = vpop.f32.mrf.mxu0
      %3297 = vmatprep.mubr.bf16.mxu0 %v2969
      %3298 = vmatmul.mubr.bf16.gmra.mxu0 %v2968
      %v3299 = vpop.f32.mrf.mxu0
      %v3300 = vadd.f32 %v2691, %v3299
      %v3301 = vpop.f32.mrf.mxu0
      %v3302 = vpop.f32.mrf.mxu0
      %v3303 = vadd.f32 %v2694, %v3302
      %v3304 = vpop.f32.mrf.mxu0
      %3305 = vmatprep.mubr.bf16.mxu0 %v2972
      %3306 = vmatmul.mubr.bf16.gmra.mxu0 %v2971
      %v3307 = vpop.f32.mrf.mxu0
      %v3308 = vadd.f32 %v2699, %v3307
      %v3309 = vpop.f32.mrf.mxu0
      %v3310 = vpop.f32.mrf.mxu0
      %v3311 = vadd.f32 %v2702, %v3310
      %v3312 = vpop.f32.mrf.mxu0
      %3313 = vmatprep.mubr.bf16.mxu0 %v2975
      %3314 = vmatmul.mubr.bf16.gmra.mxu0 %v2974
      %v3315 = vpop.f32.mrf.mxu0
      %v3316 = vadd.f32 %v2707, %v3315
      %v3317 = vpop.f32.mrf.mxu0
      %v3318 = vpop.f32.mrf.mxu0
      %v3319 = vadd.f32 %v2710, %v3318
      %v3320 = vpop.f32.mrf.mxu0
      %3321 = vmatprep.mubr.bf16.mxu0 %v2978
      %3322 = vmatmul.mubr.bf16.gmra.mxu0 %v2977
      %v3323 = vpop.f32.mrf.mxu0
      %v3324 = vadd.f32 %v2715, %v3323
      %v3325 = vpop.f32.mrf.mxu0
      %v3326 = vpop.f32.mrf.mxu0
      %v3327 = vadd.f32 %v2718, %v3326
      %v3328 = vpop.f32.mrf.mxu0
      %3329 = vmatprep.mubr.bf16.mxu0 %v2981
      %3330 = vmatmul.mubr.bf16.gmra.mxu0 %v2980
      %v3331 = vpop.f32.mrf.mxu0
      %v3332 = vadd.f32 %v2723, %v3331
      %v3333 = vpop.f32.mrf.mxu0
      %v3334 = vpop.f32.mrf.mxu0
      %v3335 = vadd.f32 %v2726, %v3334
      %v3336 = vpop.f32.mrf.mxu0
      %3337 = vmatprep.mubr.bf16.mxu0 %v2984
      %3338 = vmatmul.mubr.bf16.gmra.mxu0 %v2983
      %v3339 = vpop.f32.mrf.mxu0
      %v3340 = vadd.f32 %v2731, %v3339
      %v3341 = vpop.f32.mrf.mxu0
      %v3342 = vpop.f32.mrf.mxu0
      %v3343 = vadd.f32 %v2734, %v3342
      %v3344 = vpop.f32.mrf.mxu0
      %3345 = vmatprep.mubr.bf16.mxu0 %v2987
      %3346 = vmatmul.mubr.bf16.gmra.mxu0 %v2986
      %v3347 = vpop.f32.mrf.mxu0
      %v3348 = vadd.f32 %v2739, %v3347
      %v3349 = vpop.f32.mrf.mxu0
      %v3350 = vpop.f32.mrf.mxu0
      %v3351 = vadd.f32 %v2742, %v3350
      %v3352 = vpop.f32.mrf.mxu0
      %3353 = vmatprep.mubr.bf16.mxu0 %v2990
      %3354 = vmatmul.mubr.bf16.gmra.mxu0 %v2989
      %v3355 = vpop.f32.mrf.mxu0
      %v3356 = vadd.f32 %v2747, %v3355
      %v3357 = vpop.f32.mrf.mxu0
      %v3358 = vpop.f32.mrf.mxu0
      %v3359 = vadd.f32 %v2750, %v3358
      %v3360 = vpop.f32.mrf.mxu0
      %3361 = vmatprep.mubr.bf16.mxu0 %v2993
      %3362 = vmatmul.mubr.bf16.gmra.mxu0 %v2992
      %v3363 = vpop.f32.mrf.mxu0
      %v3364 = vadd.f32 %v2755, %v3363
      %v3365 = vpop.f32.mrf.mxu0
      %v3366 = vpop.f32.mrf.mxu0
      %v3367 = vadd.f32 %v2758, %v3366
      %v3368 = vpop.f32.mrf.mxu0
      %3369 = vdwg.mxu0
      %3370 = vmatprep.subr.bf16.mxu0 0
      %3371 = vmatpush1.bf16.msra.mxu0 %v3168
      %3372 = vmatprep.subr.bf16.mxu0 0
      %3373 = vmatpush1.bf16.msra.mxu0 %v3167
      %3374 = vmatprep.subr.bf16.mxu0 0
      %3375 = vmatpush1.bf16.msra.mxu0 %v3166
      %3376 = vmatprep.subr.bf16.mxu0 0
      %3377 = vmatpush1.bf16.msra.mxu0 %v3165
      %3378 = vmatprep.subr.bf16.mxu0 0
      %3379 = vmatpush1.bf16.msra.mxu0 %v3164
      %3380 = vmatprep.subr.bf16.mxu0 0
      %3381 = vmatpush1.bf16.msra.mxu0 %v3163
      %3382 = vmatprep.subr.bf16.mxu0 0
      %3383 = vmatpush1.bf16.msra.mxu0 %v3162
      %3384 = vmatprep.subr.bf16.mxu0 0
      %3385 = vmatpush1.bf16.msra.mxu0 %v3161
      %3386 = vmatprep.subr.bf16.mxu0 0
      %3387 = vmatpush2.bf16.msra.mxu0 0
      %3388 = vmatprep.subr.bf16.mxu0 0
      %3389 = vmatpush2.bf16.msra.mxu0 0
      %3390 = vmatprep.subr.bf16.mxu0 0
      %3391 = vmatpush2.bf16.msra.mxu0 0
      %3392 = vmatprep.subr.bf16.mxu0 0
      %3393 = vmatpush2.bf16.msra.mxu0 0
      %3394 = vmatprep.subr.bf16.mxu0 0
      %3395 = vmatpush2.bf16.msra.mxu0 0
      %3396 = vmatprep.subr.bf16.mxu0 0
      %3397 = vmatpush2.bf16.msra.mxu0 0
      %3398 = vmatprep.subr.bf16.mxu0 0
      %3399 = vmatpush2.bf16.msra.mxu0 0
      %3400 = vmatprep.subr.bf16.mxu0 0
      %3401 = vmatpush2.bf16.msra.mxu0 0
      %3402 = vmatprep.mubr.bf16.mxu0 0
      %3403 = vmatmul.mubr.bf16.gmra.mxu0 %v2943
      %v3404 = vpop.f32.mrf.mxu0
      %v3405 = vadd.f32 %v3228, %v3404
      %v3406 = vpop.f32.mrf.mxu0
      %v3407 = vpop.f32.mrf.mxu0
      %v3408 = vadd.f32 %v3231, %v3407
      %v3409 = vpop.f32.mrf.mxu0
      %3410 = vmatprep.mubr.bf16.mxu0 0
      %3411 = vmatmul.mubr.bf16.gmra.mxu0 %v2946
      %v3412 = vpop.f32.mrf.mxu0
      %v3413 = vadd.f32 %v3236, %v3412
      %v3414 = vpop.f32.mrf.mxu0
      %v3415 = vpop.f32.mrf.mxu0
      %v3416 = vadd.f32 %v3239, %v3415
      %v3417 = vpop.f32.mrf.mxu0
      %3418 = vmatprep.mubr.bf16.mxu0 0
      %3419 = vmatmul.mubr.bf16.gmra.mxu0 %v2949
      %v3420 = vpop.f32.mrf.mxu0
      %v3421 = vadd.f32 %v3244, %v3420
      %v3422 = vpop.f32.mrf.mxu0
      %v3423 = vpop.f32.mrf.mxu0
      %v3424 = vadd.f32 %v3247, %v3423
      %v3425 = vpop.f32.mrf.mxu0
      %3426 = vmatprep.mubr.bf16.mxu0 0
      %3427 = vmatmul.mubr.bf16.gmra.mxu0 %v2952
      %v3428 = vpop.f32.mrf.mxu0
      %v3429 = vadd.f32 %v3252, %v3428
      %v3430 = vpop.f32.mrf.mxu0
      %v3431 = vpop.f32.mrf.mxu0
      %v3432 = vadd.f32 %v3255, %v3431
      %v3433 = vpop.f32.mrf.mxu0
      %3434 = vmatprep.mubr.bf16.mxu0 0
      %3435 = vmatmul.mubr.bf16.gmra.mxu0 %v2955
      %v3436 = vpop.f32.mrf.mxu0
      %v3437 = vadd.f32 %v3260, %v3436
      %v3438 = vpop.f32.mrf.mxu0
      %v3439 = vpop.f32.mrf.mxu0
      %v3440 = vadd.f32 %v3263, %v3439
      %v3441 = vpop.f32.mrf.mxu0
      %3442 = vmatprep.mubr.bf16.mxu0 0
      %3443 = vmatmul.mubr.bf16.gmra.mxu0 %v2958
      %v3444 = vpop.f32.mrf.mxu0
      %v3445 = vadd.f32 %v3268, %v3444
      %v3446 = vpop.f32.mrf.mxu0
      %v3447 = vpop.f32.mrf.mxu0
      %v3448 = vadd.f32 %v3271, %v3447
      %v3449 = vpop.f32.mrf.mxu0
      %3450 = vmatprep.mubr.bf16.mxu0 0
      %3451 = vmatmul.mubr.bf16.gmra.mxu0 %v2961
      %v3452 = vpop.f32.mrf.mxu0
      %v3453 = vadd.f32 %v3276, %v3452
      %v3454 = vpop.f32.mrf.mxu0
      %v3455 = vpop.f32.mrf.mxu0
      %v3456 = vadd.f32 %v3279, %v3455
      %v3457 = vpop.f32.mrf.mxu0
      %3458 = vmatprep.mubr.bf16.mxu0 0
      %3459 = vmatmul.mubr.bf16.gmra.mxu0 %v2964
      %v3460 = vpop.f32.mrf.mxu0
      %v3461 = vadd.f32 %v3284, %v3460
      %v3462 = vpop.f32.mrf.mxu0
      %v3463 = vpop.f32.mrf.mxu0
      %v3464 = vadd.f32 %v3287, %v3463
      %v3465 = vpop.f32.mrf.mxu0
      %3466 = vmatprep.mubr.bf16.mxu0 0
      %3467 = vmatmul.mubr.bf16.gmra.mxu0 %v2967
      %v3468 = vpop.f32.mrf.mxu0
      %v3469 = vadd.f32 %v3292, %v3468
      %v3470 = vpop.f32.mrf.mxu0
      %v3471 = vpop.f32.mrf.mxu0
      %v3472 = vadd.f32 %v3295, %v3471
      %v3473 = vpop.f32.mrf.mxu0
      %3474 = vmatprep.mubr.bf16.mxu0 0
      %3475 = vmatmul.mubr.bf16.gmra.mxu0 %v2970
      %v3476 = vpop.f32.mrf.mxu0
      %v3477 = vadd.f32 %v3300, %v3476
      %v3478 = vpop.f32.mrf.mxu0
      %v3479 = vpop.f32.mrf.mxu0
      %v3480 = vadd.f32 %v3303, %v3479
      %v3481 = vpop.f32.mrf.mxu0
      %3482 = vmatprep.mubr.bf16.mxu0 0
      %3483 = vmatmul.mubr.bf16.gmra.mxu0 %v2973
      %v3484 = vpop.f32.mrf.mxu0
      %v3485 = vadd.f32 %v3308, %v3484
      %v3486 = vpop.f32.mrf.mxu0
      %v3487 = vpop.f32.mrf.mxu0
      %v3488 = vadd.f32 %v3311, %v3487
      %v3489 = vpop.f32.mrf.mxu0
      %3490 = vmatprep.mubr.bf16.mxu0 0
      %3491 = vmatmul.mubr.bf16.gmra.mxu0 %v2976
      %v3492 = vpop.f32.mrf.mxu0
      %v3493 = vadd.f32 %v3316, %v3492
      %v3494 = vpop.f32.mrf.mxu0
      %v3495 = vpop.f32.mrf.mxu0
      %v3496 = vadd.f32 %v3319, %v3495
      %v3497 = vpop.f32.mrf.mxu0
      %3498 = vmatprep.mubr.bf16.mxu0 0
      %3499 = vmatmul.mubr.bf16.gmra.mxu0 %v2979
      %v3500 = vpop.f32.mrf.mxu0
      %v3501 = vadd.f32 %v3324, %v3500
      %v3502 = vpop.f32.mrf.mxu0
      %v3503 = vpop.f32.mrf.mxu0
      %v3504 = vadd.f32 %v3327, %v3503
      %v3505 = vpop.f32.mrf.mxu0
      %3506 = vmatprep.mubr.bf16.mxu0 0
      %3507 = vmatmul.mubr.bf16.gmra.mxu0 %v2982
      %v3508 = vpop.f32.mrf.mxu0
      %v3509 = vadd.f32 %v3332, %v3508
      %v3510 = vpop.f32.mrf.mxu0
      %v3511 = vpop.f32.mrf.mxu0
      %v3512 = vadd.f32 %v3335, %v3511
      %v3513 = vpop.f32.mrf.mxu0
      %3514 = vmatprep.mubr.bf16.mxu0 0
      %3515 = vmatmul.mubr.bf16.gmra.mxu0 %v2985
      %v3516 = vpop.f32.mrf.mxu0
      %v3517 = vadd.f32 %v3340, %v3516
      %v3518 = vpop.f32.mrf.mxu0
      %v3519 = vpop.f32.mrf.mxu0
      %v3520 = vadd.f32 %v3343, %v3519
      %v3521 = vpop.f32.mrf.mxu0
      %3522 = vmatprep.mubr.bf16.mxu0 0
      %3523 = vmatmul.mubr.bf16.gmra.mxu0 %v2988
      %v3524 = vpop.f32.mrf.mxu0
      %v3525 = vadd.f32 %v3348, %v3524
      %v3526 = vpop.f32.mrf.mxu0
      %v3527 = vpop.f32.mrf.mxu0
      %v3528 = vadd.f32 %v3351, %v3527
      %v3529 = vpop.f32.mrf.mxu0
      %3530 = vmatprep.mubr.bf16.mxu0 0
      %3531 = vmatmul.mubr.bf16.gmra.mxu0 %v2991
      %v3532 = vpop.f32.mrf.mxu0
      %v3533 = vadd.f32 %v3356, %v3532
      %v3534 = vpop.f32.mrf.mxu0
      %v3535 = vpop.f32.mrf.mxu0
      %v3536 = vadd.f32 %v3359, %v3535
      %v3537 = vpop.f32.mrf.mxu0
      %3538 = vmatprep.mubr.bf16.mxu0 0
      %3539 = vmatmul.mubr.bf16.gmra.mxu0 %v2994
      %v3540 = vpop.f32.mrf.mxu0
      %v3541 = vadd.f32 %v3364, %v3540
      %v3542 = vpop.f32.mrf.mxu0
      %v3543 = vpop.f32.mrf.mxu0
      %v3544 = vadd.f32 %v3367, %v3543
      %v3545 = vpop.f32.mrf.mxu0
      %3546 = vdwg.mxu0
      %s3547 = scalar_lea.vmem [#allocation3], 48
      %v3548 = vld [vmem:[%s3547] sm:$0xff]
      %v3549 = vld [vmem:[%s3547 + $0x8] sm:$0xf]
      %v3550 = vld [vmem:[%s3547 + $0xc] sm:$0xff]
      %v3551 = vld [vmem:[%s3547 + $0x14] sm:$0xf]
      %v3552 = vld [vmem:[%s3547 + $0x18] sm:$0xff]
      %v3553 = vld [vmem:[%s3547 + $0x20] sm:$0xf]
      %v3554 = vld [vmem:[%s3547 + $0x24] sm:$0xff]
      %v3555 = vld [vmem:[%s3547 + $0x2c] sm:$0xf]
      %v3556 = vld [vmem:[%s3547 + $0x30] sm:$0xff]
      %v3557 = vld [vmem:[%s3547 + $0x38] sm:$0xf]
      %v3558 = vld [vmem:[%s3547 + $0x3c] sm:$0xff]
      %v3559 = vld [vmem:[%s3547 + $0x44] sm:$0xf]
      %v3560 = vld [vmem:[%s3547 + $0x48] sm:$0xff]
      %v3561 = vld [vmem:[%s3547 + $0x50] sm:$0xf]
      %v3562 = vld [vmem:[%s3547 + $0x54] sm:$0xff]
      %v3563 = vld [vmem:[%s3547 + $0x5c] sm:$0xf]
      %v3564 = vld [vmem:[%s3547 + $0x60] sm:$0xff]
      %v3565 = vld [vmem:[%s3547 + $0x68] sm:$0xf]
      %v3566 = vld [vmem:[%s3547 + $0x6c] sm:$0xff]
      %v3567 = vld [vmem:[%s3547 + $0x74] sm:$0xf]
      %v3568 = vld [vmem:[%s3547 + $0x78] sm:$0xff]
      %v3569 = vld [vmem:[%s3547 + $0x80] sm:$0xf]
      %v3570 = vld [vmem:[%s3547 + $0x84] sm:$0xff]
      %v3571 = vld [vmem:[%s3547 + $0x8c] sm:$0xf]
      %v3572 = vld [vmem:[%s3547 + $0x90] sm:$0xff]
      %v3573 = vld [vmem:[%s3547 + $0x98] sm:$0xf]
      %v3574 = vld [vmem:[%s3547 + $0x9c] sm:$0xff]
      %v3575 = vld [vmem:[%s3547 + $0xa4] sm:$0xf]
      %v3576 = vld [vmem:[%s3547 + $0xa8] sm:$0xff]
      %v3577 = vld [vmem:[%s3547 + $0xb0] sm:$0xf]
      %v3578 = vld [vmem:[%s3547 + $0xb4] sm:$0xff]
      %v3579 = vld [vmem:[%s3547 + $0xbc] sm:$0xf]
      %v3580 = vld [vmem:[%s3547 + $0xc0] sm:$0xff]
      %v3581 = vld [vmem:[%s3547 + $0xc8] sm:$0xf]
      %v3582 = vld [vmem:[%s3547 + $0xcc] sm:$0xff]
      %v3583 = vld [vmem:[%s3547 + $0xd4] sm:$0xf]
      %v3584 = vld [vmem:[%s3547 + $0xd8] sm:$0xff]
      %v3585 = vld [vmem:[%s3547 + $0xe0] sm:$0xf]
      %v3586 = vld [vmem:[%s3547 + $0xe4] sm:$0xff]
      %v3587 = vld [vmem:[%s3547 + $0xec] sm:$0xf]
      %v3588 = vld [vmem:[%s3547 + $0xf0] sm:$0xff]
      %v3589 = vld [vmem:[%s3547 + $0xf8] sm:$0xf]
      %v3590 = vld [vmem:[%s3547 + $0xfc] sm:$0xff]
      %v3591 = vld [vmem:[%s3547 + $0x104] sm:$0xf]
      %v3592 = vld [vmem:[%s3547 + $0x108] sm:$0xff]
      %v3593 = vld [vmem:[%s3547 + $0x110] sm:$0xf]
      %v3594 = vld [vmem:[%s3547 + $0x114] sm:$0xff]
      %v3595 = vld [vmem:[%s3547 + $0x11c] sm:$0xf]
      %v3596 = vld [vmem:[%s3547 + $0x120] sm:$0xff]
      %v3597 = vld [vmem:[%s3547 + $0x128] sm:$0xf]
      %v3598 = vld [vmem:[%s3547 + $0x12c] sm:$0xff]
      %v3599 = vld [vmem:[%s3547 + $0x134] sm:$0xf]
      %v3600 = vld [vmem:[%s3547 + $0x138] sm:$0xff]
      %v3601 = vld [vmem:[%s3547 + $0x140] sm:$0xf]
      %v3602 = vld [vmem:[%s3547 + $0x144] sm:$0xff]
      %v3603 = vld [vmem:[%s3547 + $0x14c] sm:$0xf]
      %v3604 = vld [vmem:[%s3547 + $0x150] sm:$0xff]
      %v3605 = vld [vmem:[%s3547 + $0x158] sm:$0xf]
      %v3606 = vld [vmem:[%s3547 + $0x15c] sm:$0xff]
      %v3607 = vld [vmem:[%s3547 + $0x164] sm:$0xf]
      %v3608 = vld [vmem:[%s3547 + $0x168] sm:$0xff]
      %v3609 = vld [vmem:[%s3547 + $0x170] sm:$0xf]
      %v3610 = vld [vmem:[%s3547 + $0x174] sm:$0xff]
      %v3611 = vld [vmem:[%s3547 + $0x17c] sm:$0xf]
      %v3612 = vld [vmem:[%s3547 + $0x180] sm:$0xff]
      %v3613 = vld [vmem:[%s3547 + $0x188] sm:$0xf]
      %v3614 = vld [vmem:[%s3547 + $0x18c] sm:$0xff]
      %v3615 = vld [vmem:[%s3547 + $0x194] sm:$0xf]
      %v3616 = vld [vmem:[%s3547 + $0x198] sm:$0xff]
      %v3617 = vld [vmem:[%s3547 + $0x1a0] sm:$0xf]
      %v3618 = vld [vmem:[%s3547 + $0x1a4] sm:$0xff]
      %v3619 = vld [vmem:[%s3547 + $0x1ac] sm:$0xf]
      %s3620 = scalar_lea.vmem %s2, 384
      %v3621 = vld [vmem:[%s3620] sm:$0xf]
      %v3622 = vld [vmem:[%s3620 + $0x4] sm:$0xf]
      %v3623 = vld [vmem:[%s3620 + $0x8] sm:$0xf]
      %v3624 = vld [vmem:[%s3620 + $0xc] sm:$0xf]
      %v3625 = vld [vmem:[%s3620 + $0x10] sm:$0xf]
      %v3626 = vld [vmem:[%s3620 + $0x14] sm:$0xf]
      %v3627 = vld [vmem:[%s3620 + $0x18] sm:$0xf]
      %v3628 = vld [vmem:[%s3620 + $0x1c] sm:$0xf]
      %v3629 = vld [vmem:[%s3620 + $0x20] sm:$0xf]
      %v3630 = vld [vmem:[%s3620 + $0x24] sm:$0xf]
      %v3631 = vld [vmem:[%s3620 + $0x28] sm:$0xf]
      %v3632 = vld [vmem:[%s3620 + $0x2c] sm:$0xf]
      %v3633 = vld [vmem:[%s3620 + $0x30] sm:$0xf]
      %v3634 = vld [vmem:[%s3620 + $0x34] sm:$0xf]
      %v3635 = vld [vmem:[%s3620 + $0x38] sm:$0xf]
      %v3636 = vld [vmem:[%s3620 + $0x3c] sm:$0xf]
      %v3637 = vld [vmem:[%s3620 + $0x40] sm:$0xf]
      %v3638 = vld [vmem:[%s3620 + $0x44] sm:$0xf]
      %v3639 = vld [vmem:[%s3620 + $0x48] sm:$0xf]
      %v3640 = vld [vmem:[%s3620 + $0x4c] sm:$0xf]
      %v3641 = vld [vmem:[%s3620 + $0x50] sm:$0xf]
      %v3642 = vld [vmem:[%s3620 + $0x54] sm:$0xf]
      %v3643 = vld [vmem:[%s3620 + $0x58] sm:$0xf]
      %v3644 = vld [vmem:[%s3620 + $0x5c] sm:$0xf]
      %v3645 = vld [vmem:[%s3620 + $0x60] sm:$0xf]
      %v3646 = vld [vmem:[%s3620 + $0x64] sm:$0xf]
      %v3647 = vld [vmem:[%s3620 + $0x68] sm:$0xf]
      %v3648 = vld [vmem:[%s3620 + $0x6c] sm:$0xf]
      %v3649 = vld [vmem:[%s3620 + $0x70] sm:$0xf]
      %v3650 = vld [vmem:[%s3620 + $0x74] sm:$0xf]
      %v3651 = vld [vmem:[%s3620 + $0x78] sm:$0xf]
      %v3652 = vld [vmem:[%s3620 + $0x7c] sm:$0xf]
      %v3653 = vld [vmem:[%s3620 + $0x80] sm:$0xf]
      %v3654 = vld [vmem:[%s3620 + $0x84] sm:$0xf]
      %v3655 = vld [vmem:[%s3620 + $0x88] sm:$0xf]
      %v3656 = vld [vmem:[%s3620 + $0x8c] sm:$0xf]
      %v3657 = vld [vmem:[%s3620 + $0x90] sm:$0xf]
      %v3658 = vld [vmem:[%s3620 + $0x94] sm:$0xf]
      %v3659 = vld [vmem:[%s3620 + $0x98] sm:$0xf]
      %v3660 = vld [vmem:[%s3620 + $0x9c] sm:$0xf]
      %v3661 = vld [vmem:[%s3620 + $0xa0] sm:$0xf]
      %v3662 = vld [vmem:[%s3620 + $0xa4] sm:$0xf]
      %v3663 = vld [vmem:[%s3620 + $0xa8] sm:$0xf]
      %v3664 = vld [vmem:[%s3620 + $0xac] sm:$0xf]
      %v3665 = vld [vmem:[%s3620 + $0xb0] sm:$0xf]
      %v3666 = vld [vmem:[%s3620 + $0xb4] sm:$0xf]
      %v3667 = vld [vmem:[%s3620 + $0xb8] sm:$0xf]
      %v3668 = vld [vmem:[%s3620 + $0xbc] sm:$0xf]
      %v3741 = vunpack.c.l.b16 %v3548
      %v3742 = vunpack.c.h.b16 %v3548
      %v3743 = vunpack.c.l.b16 %v3549
      %v3744 = vunpack.c.l.b16 %v3550
      %v3745 = vunpack.c.h.b16 %v3550
      %v3746 = vunpack.c.l.b16 %v3551
      %v3747 = vunpack.c.l.b16 %v3552
      %v3748 = vunpack.c.h.b16 %v3552
      %v3749 = vunpack.c.l.b16 %v3553
      %v3750 = vunpack.c.l.b16 %v3554
      %v3751 = vunpack.c.h.b16 %v3554
      %v3752 = vunpack.c.l.b16 %v3555
      %v3753 = vunpack.c.l.b16 %v3556
      %v3754 = vunpack.c.h.b16 %v3556
      %v3755 = vunpack.c.l.b16 %v3557
      %v3756 = vunpack.c.l.b16 %v3558
      %v3757 = vunpack.c.h.b16 %v3558
      %v3758 = vunpack.c.l.b16 %v3559
      %v3759 = vunpack.c.l.b16 %v3560
      %v3760 = vunpack.c.h.b16 %v3560
      %v3761 = vunpack.c.l.b16 %v3561
      %v3762 = vunpack.c.l.b16 %v3562
      %v3763 = vunpack.c.h.b16 %v3562
      %v3764 = vunpack.c.l.b16 %v3563
      %v3765 = vunpack.c.l.b16 %v3564
      %v3766 = vunpack.c.h.b16 %v3564
      %v3767 = vunpack.c.l.b16 %v3565
      %v3768 = vunpack.c.l.b16 %v3566
      %v3769 = vunpack.c.h.b16 %v3566
      %v3770 = vunpack.c.l.b16 %v3567
      %v3771 = vunpack.c.l.b16 %v3568
      %v3772 = vunpack.c.h.b16 %v3568
      %v3773 = vunpack.c.l.b16 %v3569
      %v3774 = vunpack.c.l.b16 %v3570
      %v3775 = vunpack.c.h.b16 %v3570
      %v3776 = vunpack.c.l.b16 %v3571
      %v3777 = vunpack.c.l.b16 %v3572
      %v3778 = vunpack.c.h.b16 %v3572
      %v3779 = vunpack.c.l.b16 %v3573
      %v3780 = vunpack.c.l.b16 %v3574
      %v3781 = vunpack.c.h.b16 %v3574
      %v3782 = vunpack.c.l.b16 %v3575
      %v3783 = vunpack.c.l.b16 %v3576
      %v3784 = vunpack.c.h.b16 %v3576
      %v3785 = vunpack.c.l.b16 %v3577
      %v3786 = vunpack.c.l.b16 %v3578
      %v3787 = vunpack.c.h.b16 %v3578
      %v3788 = vunpack.c.l.b16 %v3579
      %v3789 = vunpack.c.l.b16 %v3580
      %v3790 = vunpack.c.h.b16 %v3580
      %v3791 = vunpack.c.l.b16 %v3581
      %v3792 = vunpack.c.l.b16 %v3582
      %v3793 = vunpack.c.h.b16 %v3582
      %v3794 = vunpack.c.l.b16 %v3583
      %v3795 = vunpack.c.l.b16 %v3584
      %v3796 = vunpack.c.h.b16 %v3584
      %v3797 = vunpack.c.l.b16 %v3585
      %v3798 = vunpack.c.l.b16 %v3586
      %v3799 = vunpack.c.h.b16 %v3586
      %v3800 = vunpack.c.l.b16 %v3587
      %v3801 = vunpack.c.l.b16 %v3588
      %v3802 = vunpack.c.h.b16 %v3588
      %v3803 = vunpack.c.l.b16 %v3589
      %v3804 = vunpack.c.l.b16 %v3590
      %v3805 = vunpack.c.h.b16 %v3590
      %v3806 = vunpack.c.l.b16 %v3591
      %v3807 = vunpack.c.l.b16 %v3592
      %v3808 = vunpack.c.h.b16 %v3592
      %v3809 = vunpack.c.l.b16 %v3593
      %v3810 = vunpack.c.l.b16 %v3594
      %v3811 = vunpack.c.h.b16 %v3594
      %v3812 = vunpack.c.l.b16 %v3595
      %v3813 = vunpack.c.l.b16 %v3596
      %v3814 = vunpack.c.h.b16 %v3596
      %v3815 = vunpack.c.l.b16 %v3597
      %v3816 = vunpack.c.l.b16 %v3598
      %v3817 = vunpack.c.h.b16 %v3598
      %v3818 = vunpack.c.l.b16 %v3599
      %v3819 = vunpack.c.l.b16 %v3600
      %v3820 = vunpack.c.h.b16 %v3600
      %v3821 = vunpack.c.l.b16 %v3601
      %v3822 = vunpack.c.l.b16 %v3602
      %v3823 = vunpack.c.h.b16 %v3602
      %v3824 = vunpack.c.l.b16 %v3603
      %v3825 = vunpack.c.l.b16 %v3604
      %v3826 = vunpack.c.h.b16 %v3604
      %v3827 = vunpack.c.l.b16 %v3605
      %v3828 = vunpack.c.l.b16 %v3606
      %v3829 = vunpack.c.h.b16 %v3606
      %v3830 = vunpack.c.l.b16 %v3607
      %v3831 = vunpack.c.l.b16 %v3608
      %v3832 = vunpack.c.h.b16 %v3608
      %v3833 = vunpack.c.l.b16 %v3609
      %v3834 = vunpack.c.l.b16 %v3610
      %v3835 = vunpack.c.h.b16 %v3610
      %v3836 = vunpack.c.l.b16 %v3611
      %v3837 = vunpack.c.l.b16 %v3612
      %v3838 = vunpack.c.h.b16 %v3612
      %v3839 = vunpack.c.l.b16 %v3613
      %v3840 = vunpack.c.l.b16 %v3614
      %v3841 = vunpack.c.h.b16 %v3614
      %v3842 = vunpack.c.l.b16 %v3615
      %v3843 = vunpack.c.l.b16 %v3616
      %v3844 = vunpack.c.h.b16 %v3616
      %v3845 = vunpack.c.l.b16 %v3617
      %v3846 = vunpack.c.l.b16 %v3618
      %v3847 = vunpack.c.h.b16 %v3618
      %v3848 = vunpack.c.l.b16 %v3619
      %v3849 = vpack.c.b16 %v3744, %v3741
      %v3850 = vpack.c.b16 %v3745, %v3742
      %v3851 = vpack.c.b16 %v3746, %v3743
      %v3852 = vpack.c.b16 %v3750, %v3747
      %v3853 = vpack.c.b16 %v3751, %v3748
      %v3854 = vpack.c.b16 %v3752, %v3749
      %v3855 = vpack.c.b16 %v3756, %v3753
      %v3856 = vpack.c.b16 %v3757, %v3754
      %v3857 = vpack.c.b16 %v3758, %v3755
      %v3858 = vpack.c.b16 %v3762, %v3759
      %v3859 = vpack.c.b16 %v3763, %v3760
      %v3860 = vpack.c.b16 %v3764, %v3761
      %v3861 = vpack.c.b16 %v3768, %v3765
      %v3862 = vpack.c.b16 %v3769, %v3766
      %v3863 = vpack.c.b16 %v3770, %v3767
      %v3864 = vpack.c.b16 %v3774, %v3771
      %v3865 = vpack.c.b16 %v3775, %v3772
      %v3866 = vpack.c.b16 %v3776, %v3773
      %v3867 = vpack.c.b16 %v3780, %v3777
      %v3868 = vpack.c.b16 %v3781, %v3778
      %v3869 = vpack.c.b16 %v3782, %v3779
      %v3870 = vpack.c.b16 %v3786, %v3783
      %v3871 = vpack.c.b16 %v3787, %v3784
      %v3872 = vpack.c.b16 %v3788, %v3785
      %v3873 = vpack.c.b16 %v3792, %v3789
      %v3874 = vpack.c.b16 %v3793, %v3790
      %v3875 = vpack.c.b16 %v3794, %v3791
      %v3876 = vpack.c.b16 %v3798, %v3795
      %v3877 = vpack.c.b16 %v3799, %v3796
      %v3878 = vpack.c.b16 %v3800, %v3797
      %v3879 = vpack.c.b16 %v3804, %v3801
      %v3880 = vpack.c.b16 %v3805, %v3802
      %v3881 = vpack.c.b16 %v3806, %v3803
      %v3882 = vpack.c.b16 %v3810, %v3807
      %v3883 = vpack.c.b16 %v3811, %v3808
      %v3884 = vpack.c.b16 %v3812, %v3809
      %v3885 = vpack.c.b16 %v3816, %v3813
      %v3886 = vpack.c.b16 %v3817, %v3814
      %v3887 = vpack.c.b16 %v3818, %v3815
      %v3888 = vpack.c.b16 %v3822, %v3819
      %v3889 = vpack.c.b16 %v3823, %v3820
      %v3890 = vpack.c.b16 %v3824, %v3821
      %v3891 = vpack.c.b16 %v3828, %v3825
      %v3892 = vpack.c.b16 %v3829, %v3826
      %v3893 = vpack.c.b16 %v3830, %v3827
      %v3894 = vpack.c.b16 %v3834, %v3831
      %v3895 = vpack.c.b16 %v3835, %v3832
      %v3896 = vpack.c.b16 %v3836, %v3833
      %v3897 = vpack.c.b16 %v3840, %v3837
      %v3898 = vpack.c.b16 %v3841, %v3838
      %v3899 = vpack.c.b16 %v3842, %v3839
      %v3900 = vpack.c.b16 %v3846, %v3843
      %v3901 = vpack.c.b16 %v3847, %v3844
      %v3902 = vpack.c.b16 %v3848, %v3845
      %v4005 = vunpack.c.l.b16 %v3621
      %v4006 = vunpack.c.l.b16 %v3622
      %v4007 = vunpack.c.l.b16 %v3623
      %v4008 = vunpack.c.l.b16 %v3624
      %v4009 = vunpack.c.l.b16 %v3625
      %v4010 = vunpack.c.l.b16 %v3626
      %v4011 = vunpack.c.l.b16 %v3627
      %v4012 = vunpack.c.l.b16 %v3628
      %v4013 = vunpack.c.l.b16 %v3629
      %v4014 = vunpack.c.l.b16 %v3630
      %v4015 = vunpack.c.l.b16 %v3631
      %v4016 = vunpack.c.l.b16 %v3632
      %v4017 = vunpack.c.l.b16 %v3633
      %v4018 = vunpack.c.l.b16 %v3634
      %v4019 = vunpack.c.l.b16 %v3635
      %v4020 = vunpack.c.l.b16 %v3636
      %v4021 = vunpack.c.l.b16 %v3637
      %v4022 = vunpack.c.l.b16 %v3638
      %v4023 = vunpack.c.l.b16 %v3639
      %v4024 = vunpack.c.l.b16 %v3640
      %v4025 = vunpack.c.l.b16 %v3641
      %v4026 = vunpack.c.l.b16 %v3642
      %v4027 = vunpack.c.l.b16 %v3643
      %v4028 = vunpack.c.l.b16 %v3644
      %v4029 = vunpack.c.l.b16 %v3645
      %v4030 = vunpack.c.l.b16 %v3646
      %v4031 = vunpack.c.l.b16 %v3647
      %v4032 = vunpack.c.l.b16 %v3648
      %v4033 = vunpack.c.l.b16 %v3649
      %v4034 = vunpack.c.l.b16 %v3650
      %v4035 = vunpack.c.l.b16 %v3651
      %v4036 = vunpack.c.l.b16 %v3652
      %v4037 = vunpack.c.l.b16 %v3653
      %v4038 = vunpack.c.l.b16 %v3654
      %v4039 = vunpack.c.l.b16 %v3655
      %v4040 = vunpack.c.l.b16 %v3656
      %v4041 = vunpack.c.l.b16 %v3657
      %v4042 = vunpack.c.l.b16 %v3658
      %v4043 = vunpack.c.l.b16 %v3659
      %v4044 = vunpack.c.l.b16 %v3660
      %v4045 = vunpack.c.l.b16 %v3661
      %v4046 = vunpack.c.l.b16 %v3662
      %v4047 = vunpack.c.l.b16 %v3663
      %v4048 = vunpack.c.l.b16 %v3664
      %v4049 = vunpack.c.l.b16 %v3665
      %v4050 = vunpack.c.l.b16 %v3666
      %v4051 = vunpack.c.l.b16 %v3667
      %v4052 = vunpack.c.l.b16 %v3668
      %v4053 = vpack.c.b16 %v4006, %v4005
      %v4054 = vpack.c.b16 %v4008, %v4007
      %v4055 = vpack.c.b16 %v4010, %v4009
      %v4056 = vpack.c.b16 %v4012, %v4011
      %v4057 = vpack.c.b16 %v4014, %v4013
      %v4058 = vpack.c.b16 %v4016, %v4015
      %v4059 = vpack.c.b16 %v4018, %v4017
      %v4060 = vpack.c.b16 %v4020, %v4019
      %v4061 = vpack.c.b16 %v4022, %v4021
      %v4062 = vpack.c.b16 %v4024, %v4023
      %v4063 = vpack.c.b16 %v4026, %v4025
      %v4064 = vpack.c.b16 %v4028, %v4027
      %v4065 = vpack.c.b16 %v4030, %v4029
      %v4066 = vpack.c.b16 %v4032, %v4031
      %v4067 = vpack.c.b16 %v4034, %v4033
      %v4068 = vpack.c.b16 %v4036, %v4035
      %v4069 = vpack.c.b16 %v4038, %v4037
      %v4070 = vpack.c.b16 %v4040, %v4039
      %v4071 = vpack.c.b16 %v4042, %v4041
      %v4072 = vpack.c.b16 %v4044, %v4043
      %v4073 = vpack.c.b16 %v4046, %v4045
      %v4074 = vpack.c.b16 %v4048, %v4047
      %v4075 = vpack.c.b16 %v4050, %v4049
      %v4076 = vpack.c.b16 %v4052, %v4051
      %4101 = vmatprep.subr.bf16.mxu0 0
      %4102 = vmatpush1.bf16.msra.mxu0 %v4060
      %4103 = vmatprep.subr.bf16.mxu0 0
      %4104 = vmatpush1.bf16.msra.mxu0 %v4059
      %4105 = vmatprep.subr.bf16.mxu0 0
      %4106 = vmatpush1.bf16.msra.mxu0 %v4058
      %4107 = vmatprep.subr.bf16.mxu0 0
      %4108 = vmatpush1.bf16.msra.mxu0 %v4057
      %4109 = vmatprep.subr.bf16.mxu0 0
      %4110 = vmatpush1.bf16.msra.mxu0 %v4056
      %4111 = vmatprep.subr.bf16.mxu0 0
      %4112 = vmatpush1.bf16.msra.mxu0 %v4055
      %4113 = vmatprep.subr.bf16.mxu0 0
      %4114 = vmatpush1.bf16.msra.mxu0 %v4054
      %4115 = vmatprep.subr.bf16.mxu0 0
      %4116 = vmatpush1.bf16.msra.mxu0 %v4053
      %4117 = vmatprep.subr.bf16.mxu0 0
      %4118 = vmatpush2.bf16.msra.mxu0 %v4068
      %4119 = vmatprep.subr.bf16.mxu0 0
      %4120 = vmatpush2.bf16.msra.mxu0 %v4067
      %4121 = vmatprep.subr.bf16.mxu0 0
      %4122 = vmatpush2.bf16.msra.mxu0 %v4066
      %4123 = vmatprep.subr.bf16.mxu0 0
      %4124 = vmatpush2.bf16.msra.mxu0 %v4065
      %4125 = vmatprep.subr.bf16.mxu0 0
      %4126 = vmatpush2.bf16.msra.mxu0 %v4064
      %4127 = vmatprep.subr.bf16.mxu0 0
      %4128 = vmatpush2.bf16.msra.mxu0 %v4063
      %4129 = vmatprep.subr.bf16.mxu0 0
      %4130 = vmatpush2.bf16.msra.mxu0 %v4062
      %4131 = vmatprep.subr.bf16.mxu0 0
      %4132 = vmatpush2.bf16.msra.mxu0 %v4061
      %4133 = vmatprep.mubr.bf16.mxu0 %v3850
      %4134 = vmatmul.mubr.bf16.gmra.mxu0 %v3849
      %v4135 = vpop.f32.mrf.mxu0
      %v4136 = vadd.f32 0.0, %v4135
      %v4137 = vpop.f32.mrf.mxu0
      %v4138 = vpop.f32.mrf.mxu0
      %v4139 = vadd.f32 0.0, %v4138
      %v4140 = vpop.f32.mrf.mxu0
      %4141 = vmatprep.mubr.bf16.mxu0 %v3853
      %4142 = vmatmul.mubr.bf16.gmra.mxu0 %v3852
      %v4143 = vpop.f32.mrf.mxu0
      %v4144 = vadd.f32 0.0, %v4143
      %v4145 = vpop.f32.mrf.mxu0
      %v4146 = vpop.f32.mrf.mxu0
      %v4147 = vadd.f32 0.0, %v4146
      %v4148 = vpop.f32.mrf.mxu0
      %4149 = vmatprep.mubr.bf16.mxu0 %v3856
      %4150 = vmatmul.mubr.bf16.gmra.mxu0 %v3855
      %v4151 = vpop.f32.mrf.mxu0
      %v4152 = vadd.f32 0.0, %v4151
      %v4153 = vpop.f32.mrf.mxu0
      %v4154 = vpop.f32.mrf.mxu0
      %v4155 = vadd.f32 0.0, %v4154
      %v4156 = vpop.f32.mrf.mxu0
      %4157 = vmatprep.mubr.bf16.mxu0 %v3859
      %4158 = vmatmul.mubr.bf16.gmra.mxu0 %v3858
      %v4159 = vpop.f32.mrf.mxu0
      %v4160 = vadd.f32 0.0, %v4159
      %v4161 = vpop.f32.mrf.mxu0
      %v4162 = vpop.f32.mrf.mxu0
      %v4163 = vadd.f32 0.0, %v4162
      %v4164 = vpop.f32.mrf.mxu0
      %4165 = vmatprep.mubr.bf16.mxu0 %v3862
      %4166 = vmatmul.mubr.bf16.gmra.mxu0 %v3861
      %v4167 = vpop.f32.mrf.mxu0
      %v4168 = vadd.f32 0.0, %v4167
      %v4169 = vpop.f32.mrf.mxu0
      %v4170 = vpop.f32.mrf.mxu0
      %v4171 = vadd.f32 0.0, %v4170
      %v4172 = vpop.f32.mrf.mxu0
      %4173 = vmatprep.mubr.bf16.mxu0 %v3865
      %4174 = vmatmul.mubr.bf16.gmra.mxu0 %v3864
      %v4175 = vpop.f32.mrf.mxu0
      %v4176 = vadd.f32 0.0, %v4175
      %v4177 = vpop.f32.mrf.mxu0
      %v4178 = vpop.f32.mrf.mxu0
      %v4179 = vadd.f32 0.0, %v4178
      %v4180 = vpop.f32.mrf.mxu0
      %4181 = vmatprep.mubr.bf16.mxu0 %v3868
      %4182 = vmatmul.mubr.bf16.gmra.mxu0 %v3867
      %v4183 = vpop.f32.mrf.mxu0
      %v4184 = vadd.f32 0.0, %v4183
      %v4185 = vpop.f32.mrf.mxu0
      %v4186 = vpop.f32.mrf.mxu0
      %v4187 = vadd.f32 0.0, %v4186
      %v4188 = vpop.f32.mrf.mxu0
      %4189 = vmatprep.mubr.bf16.mxu0 %v3871
      %4190 = vmatmul.mubr.bf16.gmra.mxu0 %v3870
      %v4191 = vpop.f32.mrf.mxu0
      %v4192 = vadd.f32 0.0, %v4191
      %v4193 = vpop.f32.mrf.mxu0
      %v4194 = vpop.f32.mrf.mxu0
      %v4195 = vadd.f32 0.0, %v4194
      %v4196 = vpop.f32.mrf.mxu0
      %4197 = vmatprep.mubr.bf16.mxu0 %v3874
      %4198 = vmatmul.mubr.bf16.gmra.mxu0 %v3873
      %v4199 = vpop.f32.mrf.mxu0
      %v4200 = vadd.f32 0.0, %v4199
      %v4201 = vpop.f32.mrf.mxu0
      %v4202 = vpop.f32.mrf.mxu0
      %v4203 = vadd.f32 0.0, %v4202
      %v4204 = vpop.f32.mrf.mxu0
      %4205 = vmatprep.mubr.bf16.mxu0 %v3877
      %4206 = vmatmul.mubr.bf16.gmra.mxu0 %v3876
      %v4207 = vpop.f32.mrf.mxu0
      %v4208 = vadd.f32 0.0, %v4207
      %v4209 = vpop.f32.mrf.mxu0
      %v4210 = vpop.f32.mrf.mxu0
      %v4211 = vadd.f32 0.0, %v4210
      %v4212 = vpop.f32.mrf.mxu0
      %4213 = vmatprep.mubr.bf16.mxu0 %v3880
      %4214 = vmatmul.mubr.bf16.gmra.mxu0 %v3879
      %v4215 = vpop.f32.mrf.mxu0
      %v4216 = vadd.f32 0.0, %v4215
      %v4217 = vpop.f32.mrf.mxu0
      %v4218 = vpop.f32.mrf.mxu0
      %v4219 = vadd.f32 0.0, %v4218
      %v4220 = vpop.f32.mrf.mxu0
      %4221 = vmatprep.mubr.bf16.mxu0 %v3883
      %4222 = vmatmul.mubr.bf16.gmra.mxu0 %v3882
      %v4223 = vpop.f32.mrf.mxu0
      %v4224 = vadd.f32 0.0, %v4223
      %v4225 = vpop.f32.mrf.mxu0
      %v4226 = vpop.f32.mrf.mxu0
      %v4227 = vadd.f32 0.0, %v4226
      %v4228 = vpop.f32.mrf.mxu0
      %4229 = vmatprep.mubr.bf16.mxu0 %v3886
      %4230 = vmatmul.mubr.bf16.gmra.mxu0 %v3885
      %v4231 = vpop.f32.mrf.mxu0
      %v4232 = vadd.f32 0.0, %v4231
      %v4233 = vpop.f32.mrf.mxu0
      %v4234 = vpop.f32.mrf.mxu0
      %v4235 = vadd.f32 0.0, %v4234
      %v4236 = vpop.f32.mrf.mxu0
      %4237 = vmatprep.mubr.bf16.mxu0 %v3889
      %4238 = vmatmul.mubr.bf16.gmra.mxu0 %v3888
      %v4239 = vpop.f32.mrf.mxu0
      %v4240 = vadd.f32 0.0, %v4239
      %v4241 = vpop.f32.mrf.mxu0
      %v4242 = vpop.f32.mrf.mxu0
      %v4243 = vadd.f32 0.0, %v4242
      %v4244 = vpop.f32.mrf.mxu0
      %4245 = vmatprep.mubr.bf16.mxu0 %v3892
      %4246 = vmatmul.mubr.bf16.gmra.mxu0 %v3891
      %v4247 = vpop.f32.mrf.mxu0
      %v4248 = vadd.f32 0.0, %v4247
      %v4249 = vpop.f32.mrf.mxu0
      %v4250 = vpop.f32.mrf.mxu0
      %v4251 = vadd.f32 0.0, %v4250
      %v4252 = vpop.f32.mrf.mxu0
      %4253 = vmatprep.mubr.bf16.mxu0 %v3895
      %4254 = vmatmul.mubr.bf16.gmra.mxu0 %v3894
      %v4255 = vpop.f32.mrf.mxu0
      %v4256 = vadd.f32 0.0, %v4255
      %v4257 = vpop.f32.mrf.mxu0
      %v4258 = vpop.f32.mrf.mxu0
      %v4259 = vadd.f32 0.0, %v4258
      %v4260 = vpop.f32.mrf.mxu0
      %4261 = vmatprep.mubr.bf16.mxu0 %v3898
      %4262 = vmatmul.mubr.bf16.gmra.mxu0 %v3897
      %v4263 = vpop.f32.mrf.mxu0
      %v4264 = vadd.f32 0.0, %v4263
      %v4265 = vpop.f32.mrf.mxu0
      %v4266 = vpop.f32.mrf.mxu0
      %v4267 = vadd.f32 0.0, %v4266
      %v4268 = vpop.f32.mrf.mxu0
      %4269 = vmatprep.mubr.bf16.mxu0 %v3901
      %4270 = vmatmul.mubr.bf16.gmra.mxu0 %v3900
      %v4271 = vpop.f32.mrf.mxu0
      %v4272 = vadd.f32 0.0, %v4271
      %v4273 = vpop.f32.mrf.mxu0
      %v4274 = vpop.f32.mrf.mxu0
      %v4275 = vadd.f32 0.0, %v4274
      %v4276 = vpop.f32.mrf.mxu0
      %4277 = vdwg.mxu0
      %4278 = vmatprep.subr.bf16.mxu0 0
      %4279 = vmatpush1.bf16.msra.mxu0 %v4076
      %4280 = vmatprep.subr.bf16.mxu0 0
      %4281 = vmatpush1.bf16.msra.mxu0 %v4075
      %4282 = vmatprep.subr.bf16.mxu0 0
      %4283 = vmatpush1.bf16.msra.mxu0 %v4074
      %4284 = vmatprep.subr.bf16.mxu0 0
      %4285 = vmatpush1.bf16.msra.mxu0 %v4073
      %4286 = vmatprep.subr.bf16.mxu0 0
      %4287 = vmatpush1.bf16.msra.mxu0 %v4072
      %4288 = vmatprep.subr.bf16.mxu0 0
      %4289 = vmatpush1.bf16.msra.mxu0 %v4071
      %4290 = vmatprep.subr.bf16.mxu0 0
      %4291 = vmatpush1.bf16.msra.mxu0 %v4070
      %4292 = vmatprep.subr.bf16.mxu0 0
      %4293 = vmatpush1.bf16.msra.mxu0 %v4069
      %4294 = vmatprep.subr.bf16.mxu0 0
      %4295 = vmatpush2.bf16.msra.mxu0 0
      %4296 = vmatprep.subr.bf16.mxu0 0
      %4297 = vmatpush2.bf16.msra.mxu0 0
      %4298 = vmatprep.subr.bf16.mxu0 0
      %4299 = vmatpush2.bf16.msra.mxu0 0
      %4300 = vmatprep.subr.bf16.mxu0 0
      %4301 = vmatpush2.bf16.msra.mxu0 0
      %4302 = vmatprep.subr.bf16.mxu0 0
      %4303 = vmatpush2.bf16.msra.mxu0 0
      %4304 = vmatprep.subr.bf16.mxu0 0
      %4305 = vmatpush2.bf16.msra.mxu0 0
      %4306 = vmatprep.subr.bf16.mxu0 0
      %4307 = vmatpush2.bf16.msra.mxu0 0
      %4308 = vmatprep.subr.bf16.mxu0 0
      %4309 = vmatpush2.bf16.msra.mxu0 0
      %4310 = vmatprep.mubr.bf16.mxu0 0
      %4311 = vmatmul.mubr.bf16.gmra.mxu0 %v3851
      %v4312 = vpop.f32.mrf.mxu0
      %v4313 = vadd.f32 %v4136, %v4312
      %v4314 = vpop.f32.mrf.mxu0
      %v4315 = vpop.f32.mrf.mxu0
      %v4316 = vadd.f32 %v4139, %v4315
      %v4317 = vpop.f32.mrf.mxu0
      %4318 = vmatprep.mubr.bf16.mxu0 0
      %4319 = vmatmul.mubr.bf16.gmra.mxu0 %v3854
      %v4320 = vpop.f32.mrf.mxu0
      %v4321 = vadd.f32 %v4144, %v4320
      %v4322 = vpop.f32.mrf.mxu0
      %v4323 = vpop.f32.mrf.mxu0
      %v4324 = vadd.f32 %v4147, %v4323
      %v4325 = vpop.f32.mrf.mxu0
      %4326 = vmatprep.mubr.bf16.mxu0 0
      %4327 = vmatmul.mubr.bf16.gmra.mxu0 %v3857
      %v4328 = vpop.f32.mrf.mxu0
      %v4329 = vadd.f32 %v4152, %v4328
      %v4330 = vpop.f32.mrf.mxu0
      %v4331 = vpop.f32.mrf.mxu0
      %v4332 = vadd.f32 %v4155, %v4331
      %v4333 = vpop.f32.mrf.mxu0
      %4334 = vmatprep.mubr.bf16.mxu0 0
      %4335 = vmatmul.mubr.bf16.gmra.mxu0 %v3860
      %v4336 = vpop.f32.mrf.mxu0
      %v4337 = vadd.f32 %v4160, %v4336
      %v4338 = vpop.f32.mrf.mxu0
      %v4339 = vpop.f32.mrf.mxu0
      %v4340 = vadd.f32 %v4163, %v4339
      %v4341 = vpop.f32.mrf.mxu0
      %4342 = vmatprep.mubr.bf16.mxu0 0
      %4343 = vmatmul.mubr.bf16.gmra.mxu0 %v3863
      %v4344 = vpop.f32.mrf.mxu0
      %v4345 = vadd.f32 %v4168, %v4344
      %v4346 = vpop.f32.mrf.mxu0
      %v4347 = vpop.f32.mrf.mxu0
      %v4348 = vadd.f32 %v4171, %v4347
      %v4349 = vpop.f32.mrf.mxu0
      %4350 = vmatprep.mubr.bf16.mxu0 0
      %4351 = vmatmul.mubr.bf16.gmra.mxu0 %v3866
      %v4352 = vpop.f32.mrf.mxu0
      %v4353 = vadd.f32 %v4176, %v4352
      %v4354 = vpop.f32.mrf.mxu0
      %v4355 = vpop.f32.mrf.mxu0
      %v4356 = vadd.f32 %v4179, %v4355
      %v4357 = vpop.f32.mrf.mxu0
      %4358 = vmatprep.mubr.bf16.mxu0 0
      %4359 = vmatmul.mubr.bf16.gmra.mxu0 %v3869
      %v4360 = vpop.f32.mrf.mxu0
      %v4361 = vadd.f32 %v4184, %v4360
      %v4362 = vpop.f32.mrf.mxu0
      %v4363 = vpop.f32.mrf.mxu0
      %v4364 = vadd.f32 %v4187, %v4363
      %v4365 = vpop.f32.mrf.mxu0
      %4366 = vmatprep.mubr.bf16.mxu0 0
      %4367 = vmatmul.mubr.bf16.gmra.mxu0 %v3872
      %v4368 = vpop.f32.mrf.mxu0
      %v4369 = vadd.f32 %v4192, %v4368
      %v4370 = vpop.f32.mrf.mxu0
      %v4371 = vpop.f32.mrf.mxu0
      %v4372 = vadd.f32 %v4195, %v4371
      %v4373 = vpop.f32.mrf.mxu0
      %4374 = vmatprep.mubr.bf16.mxu0 0
      %4375 = vmatmul.mubr.bf16.gmra.mxu0 %v3875
      %v4376 = vpop.f32.mrf.mxu0
      %v4377 = vadd.f32 %v4200, %v4376
      %v4378 = vpop.f32.mrf.mxu0
      %v4379 = vpop.f32.mrf.mxu0
      %v4380 = vadd.f32 %v4203, %v4379
      %v4381 = vpop.f32.mrf.mxu0
      %4382 = vmatprep.mubr.bf16.mxu0 0
      %4383 = vmatmul.mubr.bf16.gmra.mxu0 %v3878
      %v4384 = vpop.f32.mrf.mxu0
      %v4385 = vadd.f32 %v4208, %v4384
      %v4386 = vpop.f32.mrf.mxu0
      %v4387 = vpop.f32.mrf.mxu0
      %v4388 = vadd.f32 %v4211, %v4387
      %v4389 = vpop.f32.mrf.mxu0
      %4390 = vmatprep.mubr.bf16.mxu0 0
      %4391 = vmatmul.mubr.bf16.gmra.mxu0 %v3881
      %v4392 = vpop.f32.mrf.mxu0
      %v4393 = vadd.f32 %v4216, %v4392
      %v4394 = vpop.f32.mrf.mxu0
      %v4395 = vpop.f32.mrf.mxu0
      %v4396 = vadd.f32 %v4219, %v4395
      %v4397 = vpop.f32.mrf.mxu0
      %4398 = vmatprep.mubr.bf16.mxu0 0
      %4399 = vmatmul.mubr.bf16.gmra.mxu0 %v3884
      %v4400 = vpop.f32.mrf.mxu0
      %v4401 = vadd.f32 %v4224, %v4400
      %v4402 = vpop.f32.mrf.mxu0
      %v4403 = vpop.f32.mrf.mxu0
      %v4404 = vadd.f32 %v4227, %v4403
      %v4405 = vpop.f32.mrf.mxu0
      %4406 = vmatprep.mubr.bf16.mxu0 0
      %4407 = vmatmul.mubr.bf16.gmra.mxu0 %v3887
      %v4408 = vpop.f32.mrf.mxu0
      %v4409 = vadd.f32 %v4232, %v4408
      %v4410 = vpop.f32.mrf.mxu0
      %v4411 = vpop.f32.mrf.mxu0
      %v4412 = vadd.f32 %v4235, %v4411
      %v4413 = vpop.f32.mrf.mxu0
      %4414 = vmatprep.mubr.bf16.mxu0 0
      %4415 = vmatmul.mubr.bf16.gmra.mxu0 %v3890
      %v4416 = vpop.f32.mrf.mxu0
      %v4417 = vadd.f32 %v4240, %v4416
      %v4418 = vpop.f32.mrf.mxu0
      %v4419 = vpop.f32.mrf.mxu0
      %v4420 = vadd.f32 %v4243, %v4419
      %v4421 = vpop.f32.mrf.mxu0
      %4422 = vmatprep.mubr.bf16.mxu0 0
      %4423 = vmatmul.mubr.bf16.gmra.mxu0 %v3893
      %v4424 = vpop.f32.mrf.mxu0
      %v4425 = vadd.f32 %v4248, %v4424
      %v4426 = vpop.f32.mrf.mxu0
      %v4427 = vpop.f32.mrf.mxu0
      %v4428 = vadd.f32 %v4251, %v4427
      %v4429 = vpop.f32.mrf.mxu0
      %4430 = vmatprep.mubr.bf16.mxu0 0
      %4431 = vmatmul.mubr.bf16.gmra.mxu0 %v3896
      %v4432 = vpop.f32.mrf.mxu0
      %v4433 = vadd.f32 %v4256, %v4432
      %v4434 = vpop.f32.mrf.mxu0
      %v4435 = vpop.f32.mrf.mxu0
      %v4436 = vadd.f32 %v4259, %v4435
      %v4437 = vpop.f32.mrf.mxu0
      %4438 = vmatprep.mubr.bf16.mxu0 0
      %4439 = vmatmul.mubr.bf16.gmra.mxu0 %v3899
      %v4440 = vpop.f32.mrf.mxu0
      %v4441 = vadd.f32 %v4264, %v4440
      %v4442 = vpop.f32.mrf.mxu0
      %v4443 = vpop.f32.mrf.mxu0
      %v4444 = vadd.f32 %v4267, %v4443
      %v4445 = vpop.f32.mrf.mxu0
      %4446 = vmatprep.mubr.bf16.mxu0 0
      %4447 = vmatmul.mubr.bf16.gmra.mxu0 %v3902
      %v4448 = vpop.f32.mrf.mxu0
      %v4449 = vadd.f32 %v4272, %v4448
      %v4450 = vpop.f32.mrf.mxu0
      %v4451 = vpop.f32.mrf.mxu0
      %v4452 = vadd.f32 %v4275, %v4451
      %v4453 = vpop.f32.mrf.mxu0
      %4454 = vdwg.mxu0
      %v4455 = vadd.f32 %v3405, %v4313
      %v4456 = vadd.f32 %v3408, %v4316
      %v4457 = vadd.f32 %v3413, %v4321
      %v4458 = vadd.f32 %v3416, %v4324
      %v4459 = vadd.f32 %v3421, %v4329
      %v4460 = vadd.f32 %v3424, %v4332
      %v4461 = vadd.f32 %v3429, %v4337
      %v4462 = vadd.f32 %v3432, %v4340
      %v4463 = vadd.f32 %v3437, %v4345
      %v4464 = vadd.f32 %v3440, %v4348
      %v4465 = vadd.f32 %v3445, %v4353
      %v4466 = vadd.f32 %v3448, %v4356
      %v4467 = vadd.f32 %v3453, %v4361
      %v4468 = vadd.f32 %v3456, %v4364
      %v4469 = vadd.f32 %v3461, %v4369
      %v4470 = vadd.f32 %v3464, %v4372
      %v4471 = vadd.f32 %v3469, %v4377
      %v4472 = vadd.f32 %v3472, %v4380
      %v4473 = vadd.f32 %v3477, %v4385
      %v4474 = vadd.f32 %v3480, %v4388
      %v4475 = vadd.f32 %v3485, %v4393
      %v4476 = vadd.f32 %v3488, %v4396
      %v4477 = vadd.f32 %v3493, %v4401
      %v4478 = vadd.f32 %v3496, %v4404
      %v4479 = vadd.f32 %v3501, %v4409
      %v4480 = vadd.f32 %v3504, %v4412
      %v4481 = vadd.f32 %v3509, %v4417
      %v4482 = vadd.f32 %v3512, %v4420
      %v4483 = vadd.f32 %v3517, %v4425
      %v4484 = vadd.f32 %v3520, %v4428
      %v4485 = vadd.f32 %v3525, %v4433
      %v4486 = vadd.f32 %v3528, %v4436
      %v4487 = vadd.f32 %v3533, %v4441
      %v4488 = vadd.f32 %v3536, %v4444
      %v4489 = vadd.f32 %v3541, %v4449
      %v4490 = vadd.f32 %v3544, %v4452
      %v4491 = vld [vmem:[%s3] sm:$0x1]
      %v4493 = vlaneseq
      %v4494 = vshrl.u32 %v4493, 7
      %v4495 = vsub.s32 0, %v4494
      %v4496 = vrot.slane %v4491, %v4495
      %v4498 = vadd.f32 %v4455, %v4496
      %v4499 = vadd.f32 %v4456, %v4496
      %v4500 = vadd.f32 %v4457, %v4496
      %v4501 = vadd.f32 %v4458, %v4496
      %v4502 = vadd.f32 %v4459, %v4496
      %v4503 = vadd.f32 %v4460, %v4496
      %v4504 = vadd.f32 %v4461, %v4496
      %v4505 = vadd.f32 %v4462, %v4496
      %v4506 = vadd.f32 %v4463, %v4496
      %v4507 = vadd.f32 %v4464, %v4496
      %v4508 = vadd.f32 %v4465, %v4496
      %v4509 = vadd.f32 %v4466, %v4496
      %v4510 = vadd.f32 %v4467, %v4496
      %v4511 = vadd.f32 %v4468, %v4496
      %v4512 = vadd.f32 %v4469, %v4496
      %v4513 = vadd.f32 %v4470, %v4496
      %v4514 = vadd.f32 %v4471, %v4496
      %v4515 = vadd.f32 %v4472, %v4496
      %v4516 = vadd.f32 %v4473, %v4496
      %v4517 = vadd.f32 %v4474, %v4496
      %v4518 = vadd.f32 %v4475, %v4496
      %v4519 = vadd.f32 %v4476, %v4496
      %v4520 = vadd.f32 %v4477, %v4496
      %v4521 = vadd.f32 %v4478, %v4496
      %v4522 = vadd.f32 %v4479, %v4496
      %v4523 = vadd.f32 %v4480, %v4496
      %v4524 = vadd.f32 %v4481, %v4496
      %v4525 = vadd.f32 %v4482, %v4496
      %v4526 = vadd.f32 %v4483, %v4496
      %v4527 = vadd.f32 %v4484, %v4496
      %v4528 = vadd.f32 %v4485, %v4496
      %v4529 = vadd.f32 %v4486, %v4496
      %v4530 = vadd.f32 %v4487, %v4496
      %v4531 = vadd.f32 %v4488, %v4496
      %v4532 = vadd.f32 %v4489, %v4496
      %v4533 = vadd.f32 %v4490, %v4496
      %v4534 = vmax.f32 %v4498, 0.0
      %v4535 = vmax.f32 %v4499, 0.0
      %v4536 = vmax.f32 %v4500, 0.0
      %v4537 = vmax.f32 %v4501, 0.0
      %v4538 = vmax.f32 %v4502, 0.0
      %v4539 = vmax.f32 %v4503, 0.0
      %v4540 = vmax.f32 %v4504, 0.0
      %v4541 = vmax.f32 %v4505, 0.0
      %v4542 = vmax.f32 %v4506, 0.0
      %v4543 = vmax.f32 %v4507, 0.0
      %v4544 = vmax.f32 %v4508, 0.0
      %v4545 = vmax.f32 %v4509, 0.0
      %v4546 = vmax.f32 %v4510, 0.0
      %v4547 = vmax.f32 %v4511, 0.0
      %v4548 = vmax.f32 %v4512, 0.0
      %v4549 = vmax.f32 %v4513, 0.0
      %v4550 = vmax.f32 %v4514, 0.0
      %v4551 = vmax.f32 %v4515, 0.0
      %v4552 = vmax.f32 %v4516, 0.0
      %v4553 = vmax.f32 %v4517, 0.0
      %v4554 = vmax.f32 %v4518, 0.0
      %v4555 = vmax.f32 %v4519, 0.0
      %v4556 = vmax.f32 %v4520, 0.0
      %v4557 = vmax.f32 %v4521, 0.0
      %v4558 = vmax.f32 %v4522, 0.0
      %v4559 = vmax.f32 %v4523, 0.0
      %v4560 = vmax.f32 %v4524, 0.0
      %v4561 = vmax.f32 %v4525, 0.0
      %v4562 = vmax.f32 %v4526, 0.0
      %v4563 = vmax.f32 %v4527, 0.0
      %v4564 = vmax.f32 %v4528, 0.0
      %v4565 = vmax.f32 %v4529, 0.0
      %v4566 = vmax.f32 %v4530, 0.0
      %v4567 = vmax.f32 %v4531, 0.0
      %v4568 = vmax.f32 %v4532, 0.0
      %v4569 = vmax.f32 %v4533, 0.0
      %v4570 = vpack.c.bf16 %v4535, %v4534
      %v4571 = vpack.c.bf16 %v4537, %v4536
      %v4572 = vpack.c.bf16 %v4539, %v4538
      %v4573 = vpack.c.bf16 %v4541, %v4540
      %v4574 = vpack.c.bf16 %v4543, %v4542
      %v4575 = vpack.c.bf16 %v4545, %v4544
      %v4576 = vpack.c.bf16 %v4547, %v4546
      %v4577 = vpack.c.bf16 %v4549, %v4548
      %v4578 = vpack.c.bf16 %v4551, %v4550
      %v4579 = vpack.c.bf16 %v4553, %v4552
      %v4580 = vpack.c.bf16 %v4555, %v4554
      %v4581 = vpack.c.bf16 %v4557, %v4556
      %v4582 = vpack.c.bf16 %v4559, %v4558
      %v4583 = vpack.c.bf16 %v4561, %v4560
      %v4584 = vpack.c.bf16 %v4563, %v4562
      %v4585 = vpack.c.bf16 %v4565, %v4564
      %v4586 = vpack.c.bf16 %v4567, %v4566
      %v4587 = vpack.c.bf16 %v4569, %v4568
      %v4606 = vunpack.c.l.b16 %v4570
      %v4607 = vunpack.c.h.b16 %v4570
      %v4608 = vunpack.c.l.b16 %v4571
      %v4609 = vunpack.c.h.b16 %v4571
      %v4610 = vunpack.c.l.b16 %v4572
      %v4611 = vunpack.c.h.b16 %v4572
      %v4612 = vunpack.c.l.b16 %v4573
      %v4613 = vunpack.c.h.b16 %v4573
      %v4614 = vunpack.c.l.b16 %v4574
      %v4615 = vunpack.c.h.b16 %v4574
      %v4616 = vunpack.c.l.b16 %v4575
      %v4617 = vunpack.c.h.b16 %v4575
      %v4618 = vunpack.c.l.b16 %v4576
      %v4619 = vunpack.c.h.b16 %v4576
      %v4620 = vunpack.c.l.b16 %v4577
      %v4621 = vunpack.c.h.b16 %v4577
      %v4622 = vunpack.c.l.b16 %v4578
      %v4623 = vunpack.c.h.b16 %v4578
      %v4624 = vunpack.c.l.b16 %v4579
      %v4625 = vunpack.c.h.b16 %v4579
      %v4626 = vunpack.c.l.b16 %v4580
      %v4627 = vunpack.c.h.b16 %v4580
      %v4628 = vunpack.c.l.b16 %v4581
      %v4629 = vunpack.c.h.b16 %v4581
      %v4630 = vunpack.c.l.b16 %v4582
      %v4631 = vunpack.c.h.b16 %v4582
      %v4632 = vunpack.c.l.b16 %v4583
      %v4633 = vunpack.c.h.b16 %v4583
      %v4634 = vunpack.c.l.b16 %v4584
      %v4635 = vunpack.c.h.b16 %v4584
      %v4636 = vunpack.c.l.b16 %v4585
      %v4637 = vunpack.c.h.b16 %v4585
      %v4638 = vunpack.c.l.b16 %v4586
      %v4639 = vunpack.c.h.b16 %v4586
      %v4640 = vunpack.c.l.b16 %v4587
      %v4641 = vunpack.c.h.b16 %v4587
      %v4642 = vpack.c.b16 %v4606, %v4606
      %v4643 = vpack.c.b16 %v4607, %v4607
      %v4644 = vpack.c.b16 %v4608, %v4608
      %v4645 = vpack.c.b16 %v4609, %v4609
      %v4646 = vpack.c.b16 %v4610, %v4610
      %v4647 = vpack.c.b16 %v4611, %v4611
      %v4648 = vpack.c.b16 %v4612, %v4612
      %v4649 = vpack.c.b16 %v4613, %v4613
      %v4650 = vpack.c.b16 %v4614, %v4614
      %v4651 = vpack.c.b16 %v4615, %v4615
      %v4652 = vpack.c.b16 %v4616, %v4616
      %v4653 = vpack.c.b16 %v4617, %v4617
      %v4654 = vpack.c.b16 %v4618, %v4618
      %v4655 = vpack.c.b16 %v4619, %v4619
      %v4656 = vpack.c.b16 %v4620, %v4620
      %v4657 = vpack.c.b16 %v4621, %v4621
      %v4658 = vpack.c.b16 %v4622, %v4622
      %v4659 = vpack.c.b16 %v4623, %v4623
      %v4660 = vpack.c.b16 %v4624, %v4624
      %v4661 = vpack.c.b16 %v4625, %v4625
      %v4662 = vpack.c.b16 %v4626, %v4626
      %v4663 = vpack.c.b16 %v4627, %v4627
      %v4664 = vpack.c.b16 %v4628, %v4628
      %v4665 = vpack.c.b16 %v4629, %v4629
      %v4666 = vpack.c.b16 %v4630, %v4630
      %v4667 = vpack.c.b16 %v4631, %v4631
      %v4668 = vpack.c.b16 %v4632, %v4632
      %v4669 = vpack.c.b16 %v4633, %v4633
      %v4670 = vpack.c.b16 %v4634, %v4634
      %v4671 = vpack.c.b16 %v4635, %v4635
      %v4672 = vpack.c.b16 %v4636, %v4636
      %v4673 = vpack.c.b16 %v4637, %v4637
      %v4674 = vpack.c.b16 %v4638, %v4638
      %v4675 = vpack.c.b16 %v4639, %v4639
      %v4676 = vpack.c.b16 %v4640, %v4640
      %v4677 = vpack.c.b16 %v4641, %v4641
      %4714 = vst [vmem:[#allocation2 + $0x4] sm:$0xf] %v4642
      %4715 = vst [vmem:[#allocation2 + $0x8] sm:$0xf] %v4643
      %4716 = vst [vmem:[#allocation2 + $0x14] sm:$0xf] %v4644
      %4717 = vst [vmem:[#allocation2 + $0x18] sm:$0xf] %v4645
      %4718 = vst [vmem:[#allocation2 + $0x24] sm:$0xf] %v4646
      %4719 = vst [vmem:[#allocation2 + $0x28] sm:$0xf] %v4647
      %4720 = vst [vmem:[#allocation2 + $0x34] sm:$0xf] %v4648
      %4721 = vst [vmem:[#allocation2 + $0x38] sm:$0xf] %v4649
      %4722 = vst [vmem:[#allocation2 + $0x44] sm:$0xf] %v4650
      %4723 = vst [vmem:[#allocation2 + $0x48] sm:$0xf] %v4651
      %4724 = vst [vmem:[#allocation2 + $0x54] sm:$0xf] %v4652
      %4725 = vst [vmem:[#allocation2 + $0x58] sm:$0xf] %v4653
      %4726 = vst [vmem:[#allocation2 + $0x64] sm:$0xf] %v4654
      %4727 = vst [vmem:[#allocation2 + $0x68] sm:$0xf] %v4655
      %4728 = vst [vmem:[#allocation2 + $0x74] sm:$0xf] %v4656
      %4729 = vst [vmem:[#allocation2 + $0x78] sm:$0xf] %v4657
      %4730 = vst [vmem:[#allocation2 + $0x84] sm:$0xf] %v4658
      %4731 = vst [vmem:[#allocation2 + $0x88] sm:$0xf] %v4659
      %4732 = vst [vmem:[#allocation2 + $0x94] sm:$0xf] %v4660
      %4733 = vst [vmem:[#allocation2 + $0x98] sm:$0xf] %v4661
      %4734 = vst [vmem:[#allocation2 + $0xa4] sm:$0xf] %v4662
      %4735 = vst [vmem:[#allocation2 + $0xa8] sm:$0xf] %v4663
      %4736 = vst [vmem:[#allocation2 + $0xb4] sm:$0xf] %v4664
      %4737 = vst [vmem:[#allocation2 + $0xb8] sm:$0xf] %v4665
      %4738 = vst [vmem:[#allocation2 + $0xc4] sm:$0xf] %v4666
      %4739 = vst [vmem:[#allocation2 + $0xc8] sm:$0xf] %v4667
      %4740 = vst [vmem:[#allocation2 + $0xd4] sm:$0xf] %v4668
      %4741 = vst [vmem:[#allocation2 + $0xd8] sm:$0xf] %v4669
      %4742 = vst [vmem:[#allocation2 + $0xe4] sm:$0xf] %v4670
      %4743 = vst [vmem:[#allocation2 + $0xe8] sm:$0xf] %v4671
      %4744 = vst [vmem:[#allocation2 + $0xf4] sm:$0xf] %v4672
      %4745 = vst [vmem:[#allocation2 + $0xf8] sm:$0xf] %v4673
      %4746 = vst [vmem:[#allocation2 + $0x104] sm:$0xf] %v4674
      %4747 = vst [vmem:[#allocation2 + $0x108] sm:$0xf] %v4675
      %4748 = vst [vmem:[#allocation2 + $0x114] sm:$0xf] %v4676
      %4749 = vst [vmem:[#allocation2 + $0x118] sm:$0xf] %v4677
      %p4750 = scmp.eq.s32.totalorder %s22, 0
      // Predicated region
      $region45: #{resblock_forward.1} parent=43 // pred_check
        %p4751 = pneg %p4750
      $region46: #{resblock_forward.1} parent=43 // pred_check_branch
        %4753 = sbr.rel (%p4751) target = $region48
      $region47: #{resblock_forward.1} parent=43 // pred_region
        %4754 = vst [vmem:[#allocation2 + $0x4] sm:$0xf] 0
        %4755 = vst [vmem:[#allocation2 + $0x8] sm:$0xf] 0
        %s4756 = scalar_lea.vmem [#allocation2], 272
        %4757 = vst [vmem:[%s4756 + $0x4] sm:$0xf] 0
        %4758 = vst [vmem:[%s4756 + $0x8] sm:$0xf] 0
      $region48: #{resblock_forward.1} parent=43 // pred_fallthru
        _
      %v4759 = vld [vmem:[#allocation2] sm:$0x8]
      %v4760 = vld [vmem:[#allocation2 + $0x4] sm:$0xf]
      %v4761 = vld [vmem:[#allocation2 + $0x8] sm:$0xf]
      %v4762 = vld [vmem:[#allocation2 + $0x10] sm:$0x8]
      %v4763 = vld [vmem:[#allocation2 + $0x14] sm:$0xf]
      %v4764 = vld [vmem:[#allocation2 + $0x18] sm:$0xf]
      %v4765 = vld [vmem:[#allocation2 + $0x20] sm:$0x8]
      %v4766 = vld [vmem:[#allocation2 + $0x24] sm:$0xf]
      %v4767 = vld [vmem:[#allocation2 + $0x28] sm:$0xf]
      %v4768 = vld [vmem:[#allocation2 + $0x30] sm:$0x8]
      %v4769 = vld [vmem:[#allocation2 + $0x34] sm:$0xf]
      %v4770 = vld [vmem:[#allocation2 + $0x38] sm:$0xf]
      %v4771 = vld [vmem:[#allocation2 + $0x40] sm:$0x8]
      %v4772 = vld [vmem:[#allocation2 + $0x44] sm:$0xf]
      %v4773 = vld [vmem:[#allocation2 + $0x48] sm:$0xf]
      %v4774 = vld [vmem:[#allocation2 + $0x50] sm:$0x8]
      %v4775 = vld [vmem:[#allocation2 + $0x54] sm:$0xf]
      %v4776 = vld [vmem:[#allocation2 + $0x58] sm:$0xf]
      %v4777 = vld [vmem:[#allocation2 + $0x60] sm:$0x8]
      %v4778 = vld [vmem:[#allocation2 + $0x64] sm:$0xf]
      %v4779 = vld [vmem:[#allocation2 + $0x68] sm:$0xf]
      %v4780 = vld [vmem:[#allocation2 + $0x70] sm:$0x8]
      %v4781 = vld [vmem:[#allocation2 + $0x74] sm:$0xf]
      %v4782 = vld [vmem:[#allocation2 + $0x78] sm:$0xf]
      %v4783 = vld [vmem:[#allocation2 + $0x80] sm:$0x8]
      %v4784 = vld [vmem:[#allocation2 + $0x84] sm:$0xf]
      %v4785 = vld [vmem:[#allocation2 + $0x88] sm:$0xf]
      %v4786 = vld [vmem:[#allocation2 + $0x90] sm:$0x8]
      %v4787 = vld [vmem:[#allocation2 + $0x94] sm:$0xf]
      %v4788 = vld [vmem:[#allocation2 + $0x98] sm:$0xf]
      %v4789 = vld [vmem:[#allocation2 + $0xa0] sm:$0x8]
      %v4790 = vld [vmem:[#allocation2 + $0xa4] sm:$0xf]
      %v4791 = vld [vmem:[#allocation2 + $0xa8] sm:$0xf]
      %v4792 = vld [vmem:[#allocation2 + $0xb0] sm:$0x8]
      %v4793 = vld [vmem:[#allocation2 + $0xb4] sm:$0xf]
      %v4794 = vld [vmem:[#allocation2 + $0xb8] sm:$0xf]
      %v4795 = vld [vmem:[#allocation2 + $0xc0] sm:$0x8]
      %v4796 = vld [vmem:[#allocation2 + $0xc4] sm:$0xf]
      %v4797 = vld [vmem:[#allocation2 + $0xc8] sm:$0xf]
      %v4798 = vld [vmem:[#allocation2 + $0xd0] sm:$0x8]
      %v4799 = vld [vmem:[#allocation2 + $0xd4] sm:$0xf]
      %v4800 = vld [vmem:[#allocation2 + $0xd8] sm:$0xf]
      %v4801 = vld [vmem:[#allocation2 + $0xe0] sm:$0x8]
      %v4802 = vld [vmem:[#allocation2 + $0xe4] sm:$0xf]
      %v4803 = vld [vmem:[#allocation2 + $0xe8] sm:$0xf]
      %v4804 = vld [vmem:[#allocation2 + $0xf0] sm:$0x8]
      %v4805 = vld [vmem:[#allocation2 + $0xf4] sm:$0xf]
      %v4806 = vld [vmem:[#allocation2 + $0xf8] sm:$0xf]
      %v4807 = vld [vmem:[#allocation2 + $0x100] sm:$0x8]
      %v4808 = vld [vmem:[#allocation2 + $0x104] sm:$0xf]
      %v4809 = vld [vmem:[#allocation2 + $0x108] sm:$0xf]
      %v4810 = vld [vmem:[#allocation2 + $0x110] sm:$0x8]
      %v4811 = vld [vmem:[#allocation2 + $0x114] sm:$0xf]
      %v4812 = vld [vmem:[#allocation2 + $0x118] sm:$0xf]
      %v4814 = vshrl.u32 %v4759, 16
      %v4816 = vrot.slane %v4814, 7
      %v4817 = vrot.slane %v4816, 4
      %v4819 = vshrl.u32 %v4760, 16
      %v4821 = vrot.slane %v4819, 7
      %v4822 = vshll.u32 %v4760, 16
      %v4824 = vor.u32 %v4821, %v4822
      %v4825 = vsel %vm509, %v4817, %v4824
      %v4826 = vrot.slane %v4821, 4
      %v4828 = vshrl.u32 %v4761, 16
      %v4830 = vrot.slane %v4828, 7
      %v4831 = vshll.u32 %v4761, 16
      %v4833 = vor.u32 %v4830, %v4831
      %v4834 = vsel %vm509, %v4826, %v4833
      %v4836 = vshrl.u32 %v4762, 16
      %v4838 = vrot.slane %v4836, 7
      %v4839 = vrot.slane %v4838, 4
      %v4841 = vshrl.u32 %v4763, 16
      %v4843 = vrot.slane %v4841, 7
      %v4844 = vshll.u32 %v4763, 16
      %v4846 = vor.u32 %v4843, %v4844
      %v4847 = vsel %vm509, %v4839, %v4846
      %v4848 = vrot.slane %v4843, 4
      %v4850 = vshrl.u32 %v4764, 16
      %v4852 = vrot.slane %v4850, 7
      %v4853 = vshll.u32 %v4764, 16
      %v4855 = vor.u32 %v4852, %v4853
      %v4856 = vsel %vm509, %v4848, %v4855
      %v4858 = vshrl.u32 %v4765, 16
      %v4860 = vrot.slane %v4858, 7
      %v4861 = vrot.slane %v4860, 4
      %v4863 = vshrl.u32 %v4766, 16
      %v4865 = vrot.slane %v4863, 7
      %v4866 = vshll.u32 %v4766, 16
      %v4868 = vor.u32 %v4865, %v4866
      %v4869 = vsel %vm509, %v4861, %v4868
      %v4870 = vrot.slane %v4865, 4
      %v4872 = vshrl.u32 %v4767, 16
      %v4874 = vrot.slane %v4872, 7
      %v4875 = vshll.u32 %v4767, 16
      %v4877 = vor.u32 %v4874, %v4875
      %v4878 = vsel %vm509, %v4870, %v4877
      %v4880 = vshrl.u32 %v4768, 16
      %v4882 = vrot.slane %v4880, 7
      %v4883 = vrot.slane %v4882, 4
      %v4885 = vshrl.u32 %v4769, 16
      %v4887 = vrot.slane %v4885, 7
      %v4888 = vshll.u32 %v4769, 16
      %v4890 = vor.u32 %v4887, %v4888
      %v4891 = vsel %vm509, %v4883, %v4890
      %v4892 = vrot.slane %v4887, 4
      %v4894 = vshrl.u32 %v4770, 16
      %v4896 = vrot.slane %v4894, 7
      %v4897 = vshll.u32 %v4770, 16
      %v4899 = vor.u32 %v4896, %v4897
      %v4900 = vsel %vm509, %v4892, %v4899
      %v4902 = vshrl.u32 %v4771, 16
      %v4904 = vrot.slane %v4902, 7
      %v4905 = vrot.slane %v4904, 4
      %v4907 = vshrl.u32 %v4772, 16
      %v4909 = vrot.slane %v4907, 7
      %v4910 = vshll.u32 %v4772, 16
      %v4912 = vor.u32 %v4909, %v4910
      %v4913 = vsel %vm509, %v4905, %v4912
      %v4914 = vrot.slane %v4909, 4
      %v4916 = vshrl.u32 %v4773, 16
      %v4918 = vrot.slane %v4916, 7
      %v4919 = vshll.u32 %v4773, 16
      %v4921 = vor.u32 %v4918, %v4919
      %v4922 = vsel %vm509, %v4914, %v4921
      %v4924 = vshrl.u32 %v4774, 16
      %v4926 = vrot.slane %v4924, 7
      %v4927 = vrot.slane %v4926, 4
      %v4929 = vshrl.u32 %v4775, 16
      %v4931 = vrot.slane %v4929, 7
      %v4932 = vshll.u32 %v4775, 16
      %v4934 = vor.u32 %v4931, %v4932
      %v4935 = vsel %vm509, %v4927, %v4934
      %v4936 = vrot.slane %v4931, 4
      %v4938 = vshrl.u32 %v4776, 16
      %v4940 = vrot.slane %v4938, 7
      %v4941 = vshll.u32 %v4776, 16
      %v4943 = vor.u32 %v4940, %v4941
      %v4944 = vsel %vm509, %v4936, %v4943
      %v4946 = vshrl.u32 %v4777, 16
      %v4948 = vrot.slane %v4946, 7
      %v4949 = vrot.slane %v4948, 4
      %v4951 = vshrl.u32 %v4778, 16
      %v4953 = vrot.slane %v4951, 7
      %v4954 = vshll.u32 %v4778, 16
      %v4956 = vor.u32 %v4953, %v4954
      %v4957 = vsel %vm509, %v4949, %v4956
      %v4958 = vrot.slane %v4953, 4
      %v4960 = vshrl.u32 %v4779, 16
      %v4962 = vrot.slane %v4960, 7
      %v4963 = vshll.u32 %v4779, 16
      %v4965 = vor.u32 %v4962, %v4963
      %v4966 = vsel %vm509, %v4958, %v4965
      %v4968 = vshrl.u32 %v4780, 16
      %v4970 = vrot.slane %v4968, 7
      %v4971 = vrot.slane %v4970, 4
      %v4973 = vshrl.u32 %v4781, 16
      %v4975 = vrot.slane %v4973, 7
      %v4976 = vshll.u32 %v4781, 16
      %v4978 = vor.u32 %v4975, %v4976
      %v4979 = vsel %vm509, %v4971, %v4978
      %v4980 = vrot.slane %v4975, 4
      %v4982 = vshrl.u32 %v4782, 16
      %v4984 = vrot.slane %v4982, 7
      %v4985 = vshll.u32 %v4782, 16
      %v4987 = vor.u32 %v4984, %v4985
      %v4988 = vsel %vm509, %v4980, %v4987
      %v4990 = vshrl.u32 %v4783, 16
      %v4992 = vrot.slane %v4990, 7
      %v4993 = vrot.slane %v4992, 4
      %v4995 = vshrl.u32 %v4784, 16
      %v4997 = vrot.slane %v4995, 7
      %v4998 = vshll.u32 %v4784, 16
      %v5000 = vor.u32 %v4997, %v4998
      %v5001 = vsel %vm509, %v4993, %v5000
      %v5002 = vrot.slane %v4997, 4
      %v5004 = vshrl.u32 %v4785, 16
      %v5006 = vrot.slane %v5004, 7
      %v5007 = vshll.u32 %v4785, 16
      %v5009 = vor.u32 %v5006, %v5007
      %v5010 = vsel %vm509, %v5002, %v5009
      %v5012 = vshrl.u32 %v4786, 16
      %v5014 = vrot.slane %v5012, 7
      %v5015 = vrot.slane %v5014, 4
      %v5017 = vshrl.u32 %v4787, 16
      %v5019 = vrot.slane %v5017, 7
      %v5020 = vshll.u32 %v4787, 16
      %v5022 = vor.u32 %v5019, %v5020
      %v5023 = vsel %vm509, %v5015, %v5022
      %v5024 = vrot.slane %v5019, 4
      %v5026 = vshrl.u32 %v4788, 16
      %v5028 = vrot.slane %v5026, 7
      %v5029 = vshll.u32 %v4788, 16
      %v5031 = vor.u32 %v5028, %v5029
      %v5032 = vsel %vm509, %v5024, %v5031
      %v5034 = vshrl.u32 %v4789, 16
      %v5036 = vrot.slane %v5034, 7
      %v5037 = vrot.slane %v5036, 4
      %v5039 = vshrl.u32 %v4790, 16
      %v5041 = vrot.slane %v5039, 7
      %v5042 = vshll.u32 %v4790, 16
      %v5044 = vor.u32 %v5041, %v5042
      %v5045 = vsel %vm509, %v5037, %v5044
      %v5046 = vrot.slane %v5041, 4
      %v5048 = vshrl.u32 %v4791, 16
      %v5050 = vrot.slane %v5048, 7
      %v5051 = vshll.u32 %v4791, 16
      %v5053 = vor.u32 %v5050, %v5051
      %v5054 = vsel %vm509, %v5046, %v5053
      %v5056 = vshrl.u32 %v4792, 16
      %v5058 = vrot.slane %v5056, 7
      %v5059 = vrot.slane %v5058, 4
      %v5061 = vshrl.u32 %v4793, 16
      %v5063 = vrot.slane %v5061, 7
      %v5064 = vshll.u32 %v4793, 16
      %v5066 = vor.u32 %v5063, %v5064
      %v5067 = vsel %vm509, %v5059, %v5066
      %v5068 = vrot.slane %v5063, 4
      %v5070 = vshrl.u32 %v4794, 16
      %v5072 = vrot.slane %v5070, 7
      %v5073 = vshll.u32 %v4794, 16
      %v5075 = vor.u32 %v5072, %v5073
      %v5076 = vsel %vm509, %v5068, %v5075
      %v5078 = vshrl.u32 %v4795, 16
      %v5080 = vrot.slane %v5078, 7
      %v5081 = vrot.slane %v5080, 4
      %v5083 = vshrl.u32 %v4796, 16
      %v5085 = vrot.slane %v5083, 7
      %v5086 = vshll.u32 %v4796, 16
      %v5088 = vor.u32 %v5085, %v5086
      %v5089 = vsel %vm509, %v5081, %v5088
      %v5090 = vrot.slane %v5085, 4
      %v5092 = vshrl.u32 %v4797, 16
      %v5094 = vrot.slane %v5092, 7
      %v5095 = vshll.u32 %v4797, 16
      %v5097 = vor.u32 %v5094, %v5095
      %v5098 = vsel %vm509, %v5090, %v5097
      %v5100 = vshrl.u32 %v4798, 16
      %v5102 = vrot.slane %v5100, 7
      %v5103 = vrot.slane %v5102, 4
      %v5105 = vshrl.u32 %v4799, 16
      %v5107 = vrot.slane %v5105, 7
      %v5108 = vshll.u32 %v4799, 16
      %v5110 = vor.u32 %v5107, %v5108
      %v5111 = vsel %vm509, %v5103, %v5110
      %v5112 = vrot.slane %v5107, 4
      %v5114 = vshrl.u32 %v4800, 16
      %v5116 = vrot.slane %v5114, 7
      %v5117 = vshll.u32 %v4800, 16
      %v5119 = vor.u32 %v5116, %v5117
      %v5120 = vsel %vm509, %v5112, %v5119
      %v5122 = vshrl.u32 %v4801, 16
      %v5124 = vrot.slane %v5122, 7
      %v5125 = vrot.slane %v5124, 4
      %v5127 = vshrl.u32 %v4802, 16
      %v5129 = vrot.slane %v5127, 7
      %v5130 = vshll.u32 %v4802, 16
      %v5132 = vor.u32 %v5129, %v5130
      %v5133 = vsel %vm509, %v5125, %v5132
      %v5134 = vrot.slane %v5129, 4
      %v5136 = vshrl.u32 %v4803, 16
      %v5138 = vrot.slane %v5136, 7
      %v5139 = vshll.u32 %v4803, 16
      %v5141 = vor.u32 %v5138, %v5139
      %v5142 = vsel %vm509, %v5134, %v5141
      %v5144 = vshrl.u32 %v4804, 16
      %v5146 = vrot.slane %v5144, 7
      %v5147 = vrot.slane %v5146, 4
      %v5149 = vshrl.u32 %v4805, 16
      %v5151 = vrot.slane %v5149, 7
      %v5152 = vshll.u32 %v4805, 16
      %v5154 = vor.u32 %v5151, %v5152
      %v5155 = vsel %vm509, %v5147, %v5154
      %v5156 = vrot.slane %v5151, 4
      %v5158 = vshrl.u32 %v4806, 16
      %v5160 = vrot.slane %v5158, 7
      %v5161 = vshll.u32 %v4806, 16
      %v5163 = vor.u32 %v5160, %v5161
      %v5164 = vsel %vm509, %v5156, %v5163
      %v5166 = vshrl.u32 %v4807, 16
      %v5168 = vrot.slane %v5166, 7
      %v5169 = vrot.slane %v5168, 4
      %v5171 = vshrl.u32 %v4808, 16
      %v5173 = vrot.slane %v5171, 7
      %v5174 = vshll.u32 %v4808, 16
      %v5176 = vor.u32 %v5173, %v5174
      %v5177 = vsel %vm509, %v5169, %v5176
      %v5178 = vrot.slane %v5173, 4
      %v5180 = vshrl.u32 %v4809, 16
      %v5182 = vrot.slane %v5180, 7
      %v5183 = vshll.u32 %v4809, 16
      %v5185 = vor.u32 %v5182, %v5183
      %v5186 = vsel %vm509, %v5178, %v5185
      %v5188 = vshrl.u32 %v4810, 16
      %v5190 = vrot.slane %v5188, 7
      %v5191 = vrot.slane %v5190, 4
      %v5193 = vshrl.u32 %v4811, 16
      %v5195 = vrot.slane %v5193, 7
      %v5196 = vshll.u32 %v4811, 16
      %v5198 = vor.u32 %v5195, %v5196
      %v5199 = vsel %vm509, %v5191, %v5198
      %v5200 = vrot.slane %v5195, 4
      %v5202 = vshrl.u32 %v4812, 16
      %v5204 = vrot.slane %v5202, 7
      %v5205 = vshll.u32 %v4812, 16
      %v5207 = vor.u32 %v5204, %v5205
      %v5208 = vsel %vm509, %v5200, %v5207
      %5245 = vst [vmem:[#allocation3] sm:$0xf] %v4825
      %5246 = vst [vmem:[#allocation3 + $0xc] sm:$0xf] %v4834
      %5247 = vst [vmem:[#allocation3 + $0x18] sm:$0xf] %v4847
      %5248 = vst [vmem:[#allocation3 + $0x24] sm:$0xf] %v4856
      %5249 = vst [vmem:[#allocation3 + $0x30] sm:$0xf] %v4869
      %5250 = vst [vmem:[#allocation3 + $0x3c] sm:$0xf] %v4878
      %5251 = vst [vmem:[#allocation3 + $0x48] sm:$0xf] %v4891
      %5252 = vst [vmem:[#allocation3 + $0x54] sm:$0xf] %v4900
      %5253 = vst [vmem:[#allocation3 + $0x60] sm:$0xf] %v4913
      %5254 = vst [vmem:[#allocation3 + $0x6c] sm:$0xf] %v4922
      %5255 = vst [vmem:[#allocation3 + $0x78] sm:$0xf] %v4935
      %5256 = vst [vmem:[#allocation3 + $0x84] sm:$0xf] %v4944
      %5257 = vst [vmem:[#allocation3 + $0x90] sm:$0xf] %v4957
      %5258 = vst [vmem:[#allocation3 + $0x9c] sm:$0xf] %v4966
      %5259 = vst [vmem:[#allocation3 + $0xa8] sm:$0xf] %v4979
      %5260 = vst [vmem:[#allocation3 + $0xb4] sm:$0xf] %v4988
      %5261 = vst [vmem:[#allocation3 + $0xc0] sm:$0xf] %v5001
      %5262 = vst [vmem:[#allocation3 + $0xcc] sm:$0xf] %v5010
      %5263 = vst [vmem:[#allocation3 + $0xd8] sm:$0xf] %v5023
      %5264 = vst [vmem:[#allocation3 + $0xe4] sm:$0xf] %v5032
      %5265 = vst [vmem:[#allocation3 + $0xf0] sm:$0xf] %v5045
      %5266 = vst [vmem:[#allocation3 + $0xfc] sm:$0xf] %v5054
      %5267 = vst [vmem:[#allocation3 + $0x108] sm:$0xf] %v5067
      %5268 = vst [vmem:[#allocation3 + $0x114] sm:$0xf] %v5076
      %5269 = vst [vmem:[#allocation3 + $0x120] sm:$0xf] %v5089
      %5270 = vst [vmem:[#allocation3 + $0x12c] sm:$0xf] %v5098
      %5271 = vst [vmem:[#allocation3 + $0x138] sm:$0xf] %v5111
      %5272 = vst [vmem:[#allocation3 + $0x144] sm:$0xf] %v5120
      %5273 = vst [vmem:[#allocation3 + $0x150] sm:$0xf] %v5133
      %5274 = vst [vmem:[#allocation3 + $0x15c] sm:$0xf] %v5142
      %5275 = vst [vmem:[#allocation3 + $0x168] sm:$0xf] %v5155
      %5276 = vst [vmem:[#allocation3 + $0x174] sm:$0xf] %v5164
      %5277 = vst [vmem:[#allocation3 + $0x180] sm:$0xf] %v5177
      %5278 = vst [vmem:[#allocation3 + $0x18c] sm:$0xf] %v5186
      %5279 = vst [vmem:[#allocation3 + $0x198] sm:$0xf] %v5199
      %5280 = vst [vmem:[#allocation3 + $0x1a4] sm:$0xf] %v5208
      %v5281 = vld [vmem:[#allocation2 + $0x4] sm:$0xf]
      %v5282 = vld [vmem:[#allocation2 + $0x8] sm:$0xf]
      %v5283 = vld [vmem:[#allocation2 + $0x14] sm:$0xf]
      %v5284 = vld [vmem:[#allocation2 + $0x18] sm:$0xf]
      %v5285 = vld [vmem:[#allocation2 + $0x24] sm:$0xf]
      %v5286 = vld [vmem:[#allocation2 + $0x28] sm:$0xf]
      %v5287 = vld [vmem:[#allocation2 + $0x34] sm:$0xf]
      %v5288 = vld [vmem:[#allocation2 + $0x38] sm:$0xf]
      %v5289 = vld [vmem:[#allocation2 + $0x44] sm:$0xf]
      %v5290 = vld [vmem:[#allocation2 + $0x48] sm:$0xf]
      %v5291 = vld [vmem:[#allocation2 + $0x54] sm:$0xf]
      %v5292 = vld [vmem:[#allocation2 + $0x58] sm:$0xf]
      %v5293 = vld [vmem:[#allocation2 + $0x64] sm:$0xf]
      %v5294 = vld [vmem:[#allocation2 + $0x68] sm:$0xf]
      %v5295 = vld [vmem:[#allocation2 + $0x74] sm:$0xf]
      %v5296 = vld [vmem:[#allocation2 + $0x78] sm:$0xf]
      %v5297 = vld [vmem:[#allocation2 + $0x84] sm:$0xf]
      %v5298 = vld [vmem:[#allocation2 + $0x88] sm:$0xf]
      %v5299 = vld [vmem:[#allocation2 + $0x94] sm:$0xf]
      %v5300 = vld [vmem:[#allocation2 + $0x98] sm:$0xf]
      %v5301 = vld [vmem:[#allocation2 + $0xa4] sm:$0xf]
      %v5302 = vld [vmem:[#allocation2 + $0xa8] sm:$0xf]
      %v5303 = vld [vmem:[#allocation2 + $0xb4] sm:$0xf]
      %v5304 = vld [vmem:[#allocation2 + $0xb8] sm:$0xf]
      %v5305 = vld [vmem:[#allocation2 + $0xc4] sm:$0xf]
      %v5306 = vld [vmem:[#allocation2 + $0xc8] sm:$0xf]
      %v5307 = vld [vmem:[#allocation2 + $0xd4] sm:$0xf]
      %v5308 = vld [vmem:[#allocation2 + $0xd8] sm:$0xf]
      %v5309 = vld [vmem:[#allocation2 + $0xe4] sm:$0xf]
      %v5310 = vld [vmem:[#allocation2 + $0xe8] sm:$0xf]
      %v5311 = vld [vmem:[#allocation2 + $0xf4] sm:$0xf]
      %v5312 = vld [vmem:[#allocation2 + $0xf8] sm:$0xf]
      %v5313 = vld [vmem:[#allocation2 + $0x104] sm:$0xf]
      %v5314 = vld [vmem:[#allocation2 + $0x108] sm:$0xf]
      %v5315 = vld [vmem:[#allocation2 + $0x114] sm:$0xf]
      %v5316 = vld [vmem:[#allocation2 + $0x118] sm:$0xf]
      %5317 = vst [vmem:[#allocation3 + $0x4] sm:$0xf] %v5281
      %5318 = vst [vmem:[#allocation3 + $0x10] sm:$0xf] %v5282
      %5319 = vst [vmem:[#allocation3 + $0x1c] sm:$0xf] %v5283
      %5320 = vst [vmem:[#allocation3 + $0x28] sm:$0xf] %v5284
      %5321 = vst [vmem:[#allocation3 + $0x34] sm:$0xf] %v5285
      %5322 = vst [vmem:[#allocation3 + $0x40] sm:$0xf] %v5286
      %5323 = vst [vmem:[#allocation3 + $0x4c] sm:$0xf] %v5287
      %5324 = vst [vmem:[#allocation3 + $0x58] sm:$0xf] %v5288
      %5325 = vst [vmem:[#allocation3 + $0x64] sm:$0xf] %v5289
      %5326 = vst [vmem:[#allocation3 + $0x70] sm:$0xf] %v5290
      %5327 = vst [vmem:[#allocation3 + $0x7c] sm:$0xf] %v5291
      %5328 = vst [vmem:[#allocation3 + $0x88] sm:$0xf] %v5292
      %5329 = vst [vmem:[#allocation3 + $0x94] sm:$0xf] %v5293
      %5330 = vst [vmem:[#allocation3 + $0xa0] sm:$0xf] %v5294
      %5331 = vst [vmem:[#allocation3 + $0xac] sm:$0xf] %v5295
      %5332 = vst [vmem:[#allocation3 + $0xb8] sm:$0xf] %v5296
      %5333 = vst [vmem:[#allocation3 + $0xc4] sm:$0xf] %v5297
      %5334 = vst [vmem:[#allocation3 + $0xd0] sm:$0xf] %v5298
      %5335 = vst [vmem:[#allocation3 + $0xdc] sm:$0xf] %v5299
      %5336 = vst [vmem:[#allocation3 + $0xe8] sm:$0xf] %v5300
      %5337 = vst [vmem:[#allocation3 + $0xf4] sm:$0xf] %v5301
      %5338 = vst [vmem:[#allocation3 + $0x100] sm:$0xf] %v5302
      %5339 = vst [vmem:[#allocation3 + $0x10c] sm:$0xf] %v5303
      %5340 = vst [vmem:[#allocation3 + $0x118] sm:$0xf] %v5304
      %5341 = vst [vmem:[#allocation3 + $0x124] sm:$0xf] %v5305
      %5342 = vst [vmem:[#allocation3 + $0x130] sm:$0xf] %v5306
      %5343 = vst [vmem:[#allocation3 + $0x13c] sm:$0xf] %v5307
      %5344 = vst [vmem:[#allocation3 + $0x148] sm:$0xf] %v5308
      %5345 = vst [vmem:[#allocation3 + $0x154] sm:$0xf] %v5309
      %5346 = vst [vmem:[#allocation3 + $0x160] sm:$0xf] %v5310
      %5347 = vst [vmem:[#allocation3 + $0x16c] sm:$0xf] %v5311
      %5348 = vst [vmem:[#allocation3 + $0x178] sm:$0xf] %v5312
      %5349 = vst [vmem:[#allocation3 + $0x184] sm:$0xf] %v5313
      %5350 = vst [vmem:[#allocation3 + $0x190] sm:$0xf] %v5314
      %5351 = vst [vmem:[#allocation3 + $0x19c] sm:$0xf] %v5315
      %5352 = vst [vmem:[#allocation3 + $0x1a8] sm:$0xf] %v5316
      %v5353 = vld [vmem:[#allocation2 + $0x4] sm:$0xf]
      %v5354 = vld [vmem:[#allocation2 + $0x8] sm:$0xf]
      %v5355 = vld [vmem:[#allocation2 + $0xc] sm:$0x1]
      %v5356 = vld [vmem:[#allocation2 + $0x14] sm:$0xf]
      %v5357 = vld [vmem:[#allocation2 + $0x18] sm:$0xf]
      %v5358 = vld [vmem:[#allocation2 + $0x1c] sm:$0x1]
      %v5359 = vld [vmem:[#allocation2 + $0x24] sm:$0xf]
      %v5360 = vld [vmem:[#allocation2 + $0x28] sm:$0xf]
      %v5361 = vld [vmem:[#allocation2 + $0x2c] sm:$0x1]
      %v5362 = vld [vmem:[#allocation2 + $0x34] sm:$0xf]
      %v5363 = vld [vmem:[#allocation2 + $0x38] sm:$0xf]
      %v5364 = vld [vmem:[#allocation2 + $0x3c] sm:$0x1]
      %v5365 = vld [vmem:[#allocation2 + $0x44] sm:$0xf]
      %v5366 = vld [vmem:[#allocation2 + $0x48] sm:$0xf]
      %v5367 = vld [vmem:[#allocation2 + $0x4c] sm:$0x1]
      %v5368 = vld [vmem:[#allocation2 + $0x54] sm:$0xf]
      %v5369 = vld [vmem:[#allocation2 + $0x58] sm:$0xf]
      %v5370 = vld [vmem:[#allocation2 + $0x5c] sm:$0x1]
      %v5371 = vld [vmem:[#allocation2 + $0x64] sm:$0xf]
      %v5372 = vld [vmem:[#allocation2 + $0x68] sm:$0xf]
      %v5373 = vld [vmem:[#allocation2 + $0x6c] sm:$0x1]
      %v5374 = vld [vmem:[#allocation2 + $0x74] sm:$0xf]
      %v5375 = vld [vmem:[#allocation2 + $0x78] sm:$0xf]
      %v5376 = vld [vmem:[#allocation2 + $0x7c] sm:$0x1]
      %v5377 = vld [vmem:[#allocation2 + $0x84] sm:$0xf]
      %v5378 = vld [vmem:[#allocation2 + $0x88] sm:$0xf]
      %v5379 = vld [vmem:[#allocation2 + $0x8c] sm:$0x1]
      %v5380 = vld [vmem:[#allocation2 + $0x94] sm:$0xf]
      %v5381 = vld [vmem:[#allocation2 + $0x98] sm:$0xf]
      %v5382 = vld [vmem:[#allocation2 + $0x9c] sm:$0x1]
      %v5383 = vld [vmem:[#allocation2 + $0xa4] sm:$0xf]
      %v5384 = vld [vmem:[#allocation2 + $0xa8] sm:$0xf]
      %v5385 = vld [vmem:[#allocation2 + $0xac] sm:$0x1]
      %v5386 = vld [vmem:[#allocation2 + $0xb4] sm:$0xf]
      %v5387 = vld [vmem:[#allocation2 + $0xb8] sm:$0xf]
      %v5388 = vld [vmem:[#allocation2 + $0xbc] sm:$0x1]
      %v5389 = vld [vmem:[#allocation2 + $0xc4] sm:$0xf]
      %v5390 = vld [vmem:[#allocation2 + $0xc8] sm:$0xf]
      %v5391 = vld [vmem:[#allocation2 + $0xcc] sm:$0x1]
      %v5392 = vld [vmem:[#allocation2 + $0xd4] sm:$0xf]
      %v5393 = vld [vmem:[#allocation2 + $0xd8] sm:$0xf]
      %v5394 = vld [vmem:[#allocation2 + $0xdc] sm:$0x1]
      %v5395 = vld [vmem:[#allocation2 + $0xe4] sm:$0xf]
      %v5396 = vld [vmem:[#allocation2 + $0xe8] sm:$0xf]
      %v5397 = vld [vmem:[#allocation2 + $0xec] sm:$0x1]
      %v5398 = vld [vmem:[#allocation2 + $0xf4] sm:$0xf]
      %v5399 = vld [vmem:[#allocation2 + $0xf8] sm:$0xf]
      %v5400 = vld [vmem:[#allocation2 + $0xfc] sm:$0x1]
      %v5401 = vld [vmem:[#allocation2 + $0x104] sm:$0xf]
      %v5402 = vld [vmem:[#allocation2 + $0x108] sm:$0xf]
      %v5403 = vld [vmem:[#allocation2 + $0x10c] sm:$0x1]
      %v5404 = vld [vmem:[#allocation2 + $0x114] sm:$0xf]
      %v5405 = vld [vmem:[#allocation2 + $0x118] sm:$0xf]
      %v5406 = vld [vmem:[#allocation2 + $0x11c] sm:$0x1]
      %v5408 = vshrl.u32 %v5353, 16
      %v5410 = vrot.slane %v5408, 4
      %v5411 = vshll.u32 %v5353, 16
      %v5413 = vrot.slane %v5411, 5
      %v5414 = vor.u32 %v5410, %v5413
      %v5415 = vrot.slane %v5414, 4
      %v5417 = vshll.u32 %v5354, 16
      %v5419 = vrot.slane %v5417, 5
      %v5420 = vsel %vm1172, %v5415, %v5419
      %v5421 = vshrl.u32 %v5354, 16
      %v5423 = vrot.slane %v5421, 4
      %v5424 = vor.u32 %v5423, %v5419
      %v5425 = vrot.slane %v5424, 4
      %v5427 = vshll.u32 %v5355, 16
      %v5429 = vrot.slane %v5427, 5
      %v5430 = vsel %vm1172, %v5425, %v5429
      %v5432 = vshrl.u32 %v5356, 16
      %v5434 = vrot.slane %v5432, 4
      %v5435 = vshll.u32 %v5356, 16
      %v5437 = vrot.slane %v5435, 5
      %v5438 = vor.u32 %v5434, %v5437
      %v5439 = vrot.slane %v5438, 4
      %v5441 = vshll.u32 %v5357, 16
      %v5443 = vrot.slane %v5441, 5
      %v5444 = vsel %vm1172, %v5439, %v5443
      %v5445 = vshrl.u32 %v5357, 16
      %v5447 = vrot.slane %v5445, 4
      %v5448 = vor.u32 %v5447, %v5443
      %v5449 = vrot.slane %v5448, 4
      %v5451 = vshll.u32 %v5358, 16
      %v5453 = vrot.slane %v5451, 5
      %v5454 = vsel %vm1172, %v5449, %v5453
      %v5456 = vshrl.u32 %v5359, 16
      %v5458 = vrot.slane %v5456, 4
      %v5459 = vshll.u32 %v5359, 16
      %v5461 = vrot.slane %v5459, 5
      %v5462 = vor.u32 %v5458, %v5461
      %v5463 = vrot.slane %v5462, 4
      %v5465 = vshll.u32 %v5360, 16
      %v5467 = vrot.slane %v5465, 5
      %v5468 = vsel %vm1172, %v5463, %v5467
      %v5469 = vshrl.u32 %v5360, 16
      %v5471 = vrot.slane %v5469, 4
      %v5472 = vor.u32 %v5471, %v5467
      %v5473 = vrot.slane %v5472, 4
      %v5475 = vshll.u32 %v5361, 16
      %v5477 = vrot.slane %v5475, 5
      %v5478 = vsel %vm1172, %v5473, %v5477
      %v5480 = vshrl.u32 %v5362, 16
      %v5482 = vrot.slane %v5480, 4
      %v5483 = vshll.u32 %v5362, 16
      %v5485 = vrot.slane %v5483, 5
      %v5486 = vor.u32 %v5482, %v5485
      %v5487 = vrot.slane %v5486, 4
      %v5489 = vshll.u32 %v5363, 16
      %v5491 = vrot.slane %v5489, 5
      %v5492 = vsel %vm1172, %v5487, %v5491
      %v5493 = vshrl.u32 %v5363, 16
      %v5495 = vrot.slane %v5493, 4
      %v5496 = vor.u32 %v5495, %v5491
      %v5497 = vrot.slane %v5496, 4
      %v5499 = vshll.u32 %v5364, 16
      %v5501 = vrot.slane %v5499, 5
      %v5502 = vsel %vm1172, %v5497, %v5501
      %v5504 = vshrl.u32 %v5365, 16
      %v5506 = vrot.slane %v5504, 4
      %v5507 = vshll.u32 %v5365, 16
      %v5509 = vrot.slane %v5507, 5
      %v5510 = vor.u32 %v5506, %v5509
      %v5511 = vrot.slane %v5510, 4
      %v5513 = vshll.u32 %v5366, 16
      %v5515 = vrot.slane %v5513, 5
      %v5516 = vsel %vm1172, %v5511, %v5515
      %v5517 = vshrl.u32 %v5366, 16
      %v5519 = vrot.slane %v5517, 4
      %v5520 = vor.u32 %v5519, %v5515
      %v5521 = vrot.slane %v5520, 4
      %v5523 = vshll.u32 %v5367, 16
      %v5525 = vrot.slane %v5523, 5
      %v5526 = vsel %vm1172, %v5521, %v5525
      %v5528 = vshrl.u32 %v5368, 16
      %v5530 = vrot.slane %v5528, 4
      %v5531 = vshll.u32 %v5368, 16
      %v5533 = vrot.slane %v5531, 5
      %v5534 = vor.u32 %v5530, %v5533
      %v5535 = vrot.slane %v5534, 4
      %v5537 = vshll.u32 %v5369, 16
      %v5539 = vrot.slane %v5537, 5
      %v5540 = vsel %vm1172, %v5535, %v5539
      %v5541 = vshrl.u32 %v5369, 16
      %v5543 = vrot.slane %v5541, 4
      %v5544 = vor.u32 %v5543, %v5539
      %v5545 = vrot.slane %v5544, 4
      %v5547 = vshll.u32 %v5370, 16
      %v5549 = vrot.slane %v5547, 5
      %v5550 = vsel %vm1172, %v5545, %v5549
      %v5552 = vshrl.u32 %v5371, 16
      %v5554 = vrot.slane %v5552, 4
      %v5555 = vshll.u32 %v5371, 16
      %v5557 = vrot.slane %v5555, 5
      %v5558 = vor.u32 %v5554, %v5557
      %v5559 = vrot.slane %v5558, 4
      %v5561 = vshll.u32 %v5372, 16
      %v5563 = vrot.slane %v5561, 5
      %v5564 = vsel %vm1172, %v5559, %v5563
      %v5565 = vshrl.u32 %v5372, 16
      %v5567 = vrot.slane %v5565, 4
      %v5568 = vor.u32 %v5567, %v5563
      %v5569 = vrot.slane %v5568, 4
      %v5571 = vshll.u32 %v5373, 16
      %v5573 = vrot.slane %v5571, 5
      %v5574 = vsel %vm1172, %v5569, %v5573
      %v5576 = vshrl.u32 %v5374, 16
      %v5578 = vrot.slane %v5576, 4
      %v5579 = vshll.u32 %v5374, 16
      %v5581 = vrot.slane %v5579, 5
      %v5582 = vor.u32 %v5578, %v5581
      %v5583 = vrot.slane %v5582, 4
      %v5585 = vshll.u32 %v5375, 16
      %v5587 = vrot.slane %v5585, 5
      %v5588 = vsel %vm1172, %v5583, %v5587
      %v5589 = vshrl.u32 %v5375, 16
      %v5591 = vrot.slane %v5589, 4
      %v5592 = vor.u32 %v5591, %v5587
      %v5593 = vrot.slane %v5592, 4
      %v5595 = vshll.u32 %v5376, 16
      %v5597 = vrot.slane %v5595, 5
      %v5598 = vsel %vm1172, %v5593, %v5597
      %v5600 = vshrl.u32 %v5377, 16
      %v5602 = vrot.slane %v5600, 4
      %v5603 = vshll.u32 %v5377, 16
      %v5605 = vrot.slane %v5603, 5
      %v5606 = vor.u32 %v5602, %v5605
      %v5607 = vrot.slane %v5606, 4
      %v5609 = vshll.u32 %v5378, 16
      %v5611 = vrot.slane %v5609, 5
      %v5612 = vsel %vm1172, %v5607, %v5611
      %v5613 = vshrl.u32 %v5378, 16
      %v5615 = vrot.slane %v5613, 4
      %v5616 = vor.u32 %v5615, %v5611
      %v5617 = vrot.slane %v5616, 4
      %v5619 = vshll.u32 %v5379, 16
      %v5621 = vrot.slane %v5619, 5
      %v5622 = vsel %vm1172, %v5617, %v5621
      %v5624 = vshrl.u32 %v5380, 16
      %v5626 = vrot.slane %v5624, 4
      %v5627 = vshll.u32 %v5380, 16
      %v5629 = vrot.slane %v5627, 5
      %v5630 = vor.u32 %v5626, %v5629
      %v5631 = vrot.slane %v5630, 4
      %v5633 = vshll.u32 %v5381, 16
      %v5635 = vrot.slane %v5633, 5
      %v5636 = vsel %vm1172, %v5631, %v5635
      %v5637 = vshrl.u32 %v5381, 16
      %v5639 = vrot.slane %v5637, 4
      %v5640 = vor.u32 %v5639, %v5635
      %v5641 = vrot.slane %v5640, 4
      %v5643 = vshll.u32 %v5382, 16
      %v5645 = vrot.slane %v5643, 5
      %v5646 = vsel %vm1172, %v5641, %v5645
      %v5648 = vshrl.u32 %v5383, 16
      %v5650 = vrot.slane %v5648, 4
      %v5651 = vshll.u32 %v5383, 16
      %v5653 = vrot.slane %v5651, 5
      %v5654 = vor.u32 %v5650, %v5653
      %v5655 = vrot.slane %v5654, 4
      %v5657 = vshll.u32 %v5384, 16
      %v5659 = vrot.slane %v5657, 5
      %v5660 = vsel %vm1172, %v5655, %v5659
      %v5661 = vshrl.u32 %v5384, 16
      %v5663 = vrot.slane %v5661, 4
      %v5664 = vor.u32 %v5663, %v5659
      %v5665 = vrot.slane %v5664, 4
      %v5667 = vshll.u32 %v5385, 16
      %v5669 = vrot.slane %v5667, 5
      %v5670 = vsel %vm1172, %v5665, %v5669
      %v5672 = vshrl.u32 %v5386, 16
      %v5674 = vrot.slane %v5672, 4
      %v5675 = vshll.u32 %v5386, 16
      %v5677 = vrot.slane %v5675, 5
      %v5678 = vor.u32 %v5674, %v5677
      %v5679 = vrot.slane %v5678, 4
      %v5681 = vshll.u32 %v5387, 16
      %v5683 = vrot.slane %v5681, 5
      %v5684 = vsel %vm1172, %v5679, %v5683
      %v5685 = vshrl.u32 %v5387, 16
      %v5687 = vrot.slane %v5685, 4
      %v5688 = vor.u32 %v5687, %v5683
      %v5689 = vrot.slane %v5688, 4
      %v5691 = vshll.u32 %v5388, 16
      %v5693 = vrot.slane %v5691, 5
      %v5694 = vsel %vm1172, %v5689, %v5693
      %v5696 = vshrl.u32 %v5389, 16
      %v5698 = vrot.slane %v5696, 4
      %v5699 = vshll.u32 %v5389, 16
      %v5701 = vrot.slane %v5699, 5
      %v5702 = vor.u32 %v5698, %v5701
      %v5703 = vrot.slane %v5702, 4
      %v5705 = vshll.u32 %v5390, 16
      %v5707 = vrot.slane %v5705, 5
      %v5708 = vsel %vm1172, %v5703, %v5707
      %v5709 = vshrl.u32 %v5390, 16
      %v5711 = vrot.slane %v5709, 4
      %v5712 = vor.u32 %v5711, %v5707
      %v5713 = vrot.slane %v5712, 4
      %v5715 = vshll.u32 %v5391, 16
      %v5717 = vrot.slane %v5715, 5
      %v5718 = vsel %vm1172, %v5713, %v5717
      %v5720 = vshrl.u32 %v5392, 16
      %v5722 = vrot.slane %v5720, 4
      %v5723 = vshll.u32 %v5392, 16
      %v5725 = vrot.slane %v5723, 5
      %v5726 = vor.u32 %v5722, %v5725
      %v5727 = vrot.slane %v5726, 4
      %v5729 = vshll.u32 %v5393, 16
      %v5731 = vrot.slane %v5729, 5
      %v5732 = vsel %vm1172, %v5727, %v5731
      %v5733 = vshrl.u32 %v5393, 16
      %v5735 = vrot.slane %v5733, 4
      %v5736 = vor.u32 %v5735, %v5731
      %v5737 = vrot.slane %v5736, 4
      %v5739 = vshll.u32 %v5394, 16
      %v5741 = vrot.slane %v5739, 5
      %v5742 = vsel %vm1172, %v5737, %v5741
      %v5744 = vshrl.u32 %v5395, 16
      %v5746 = vrot.slane %v5744, 4
      %v5747 = vshll.u32 %v5395, 16
      %v5749 = vrot.slane %v5747, 5
      %v5750 = vor.u32 %v5746, %v5749
      %v5751 = vrot.slane %v5750, 4
      %v5753 = vshll.u32 %v5396, 16
      %v5755 = vrot.slane %v5753, 5
      %v5756 = vsel %vm1172, %v5751, %v5755
      %v5757 = vshrl.u32 %v5396, 16
      %v5759 = vrot.slane %v5757, 4
      %v5760 = vor.u32 %v5759, %v5755
      %v5761 = vrot.slane %v5760, 4
      %v5763 = vshll.u32 %v5397, 16
      %v5765 = vrot.slane %v5763, 5
      %v5766 = vsel %vm1172, %v5761, %v5765
      %v5768 = vshrl.u32 %v5398, 16
      %v5770 = vrot.slane %v5768, 4
      %v5771 = vshll.u32 %v5398, 16
      %v5773 = vrot.slane %v5771, 5
      %v5774 = vor.u32 %v5770, %v5773
      %v5775 = vrot.slane %v5774, 4
      %v5777 = vshll.u32 %v5399, 16
      %v5779 = vrot.slane %v5777, 5
      %v5780 = vsel %vm1172, %v5775, %v5779
      %v5781 = vshrl.u32 %v5399, 16
      %v5783 = vrot.slane %v5781, 4
      %v5784 = vor.u32 %v5783, %v5779
      %v5785 = vrot.slane %v5784, 4
      %v5787 = vshll.u32 %v5400, 16
      %v5789 = vrot.slane %v5787, 5
      %v5790 = vsel %vm1172, %v5785, %v5789
      %v5792 = vshrl.u32 %v5401, 16
      %v5794 = vrot.slane %v5792, 4
      %v5795 = vshll.u32 %v5401, 16
      %v5797 = vrot.slane %v5795, 5
      %v5798 = vor.u32 %v5794, %v5797
      %v5799 = vrot.slane %v5798, 4
      %v5801 = vshll.u32 %v5402, 16
      %v5803 = vrot.slane %v5801, 5
      %v5804 = vsel %vm1172, %v5799, %v5803
      %v5805 = vshrl.u32 %v5402, 16
      %v5807 = vrot.slane %v5805, 4
      %v5808 = vor.u32 %v5807, %v5803
      %v5809 = vrot.slane %v5808, 4
      %v5811 = vshll.u32 %v5403, 16
      %v5813 = vrot.slane %v5811, 5
      %v5814 = vsel %vm1172, %v5809, %v5813
      %v5816 = vshrl.u32 %v5404, 16
      %v5818 = vrot.slane %v5816, 4
      %v5819 = vshll.u32 %v5404, 16
      %v5821 = vrot.slane %v5819, 5
      %v5822 = vor.u32 %v5818, %v5821
      %v5823 = vrot.slane %v5822, 4
      %v5825 = vshll.u32 %v5405, 16
      %v5827 = vrot.slane %v5825, 5
      %v5828 = vsel %vm1172, %v5823, %v5827
      %v5829 = vshrl.u32 %v5405, 16
      %v5831 = vrot.slane %v5829, 4
      %v5832 = vor.u32 %v5831, %v5827
      %v5833 = vrot.slane %v5832, 4
      %v5835 = vshll.u32 %v5406, 16
      %v5837 = vrot.slane %v5835, 5
      %v5838 = vsel %vm1172, %v5833, %v5837
      %5875 = vst [vmem:[#allocation3 + $0x8] sm:$0xf] %v5420
      %5876 = vst [vmem:[#allocation3 + $0x14] sm:$0xf] %v5430
      %5877 = vst [vmem:[#allocation3 + $0x20] sm:$0xf] %v5444
      %5878 = vst [vmem:[#allocation3 + $0x2c] sm:$0xf] %v5454
      %5879 = vst [vmem:[#allocation3 + $0x38] sm:$0xf] %v5468
      %5880 = vst [vmem:[#allocation3 + $0x44] sm:$0xf] %v5478
      %5881 = vst [vmem:[#allocation3 + $0x50] sm:$0xf] %v5492
      %5882 = vst [vmem:[#allocation3 + $0x5c] sm:$0xf] %v5502
      %5883 = vst [vmem:[#allocation3 + $0x68] sm:$0xf] %v5516
      %5884 = vst [vmem:[#allocation3 + $0x74] sm:$0xf] %v5526
      %5885 = vst [vmem:[#allocation3 + $0x80] sm:$0xf] %v5540
      %5886 = vst [vmem:[#allocation3 + $0x8c] sm:$0xf] %v5550
      %5887 = vst [vmem:[#allocation3 + $0x98] sm:$0xf] %v5564
      %5888 = vst [vmem:[#allocation3 + $0xa4] sm:$0xf] %v5574
      %5889 = vst [vmem:[#allocation3 + $0xb0] sm:$0xf] %v5588
      %5890 = vst [vmem:[#allocation3 + $0xbc] sm:$0xf] %v5598
      %5891 = vst [vmem:[#allocation3 + $0xc8] sm:$0xf] %v5612
      %5892 = vst [vmem:[#allocation3 + $0xd4] sm:$0xf] %v5622
      %5893 = vst [vmem:[#allocation3 + $0xe0] sm:$0xf] %v5636
      %5894 = vst [vmem:[#allocation3 + $0xec] sm:$0xf] %v5646
      %5895 = vst [vmem:[#allocation3 + $0xf8] sm:$0xf] %v5660
      %5896 = vst [vmem:[#allocation3 + $0x104] sm:$0xf] %v5670
      %5897 = vst [vmem:[#allocation3 + $0x110] sm:$0xf] %v5684
      %5898 = vst [vmem:[#allocation3 + $0x11c] sm:$0xf] %v5694
      %5899 = vst [vmem:[#allocation3 + $0x128] sm:$0xf] %v5708
      %5900 = vst [vmem:[#allocation3 + $0x134] sm:$0xf] %v5718
      %5901 = vst [vmem:[#allocation3 + $0x140] sm:$0xf] %v5732
      %5902 = vst [vmem:[#allocation3 + $0x14c] sm:$0xf] %v5742
      %5903 = vst [vmem:[#allocation3 + $0x158] sm:$0xf] %v5756
      %5904 = vst [vmem:[#allocation3 + $0x164] sm:$0xf] %v5766
      %5905 = vst [vmem:[#allocation3 + $0x170] sm:$0xf] %v5780
      %5906 = vst [vmem:[#allocation3 + $0x17c] sm:$0xf] %v5790
      %5907 = vst [vmem:[#allocation3 + $0x188] sm:$0xf] %v5804
      %5908 = vst [vmem:[#allocation3 + $0x194] sm:$0xf] %v5814
      %5909 = vst [vmem:[#allocation3 + $0x1a0] sm:$0xf] %v5828
      %5910 = vst [vmem:[#allocation3 + $0x1ac] sm:$0xf] %v5838
      %v5911 = vld [vmem:[#allocation3] sm:$0xff]
      %v5912 = vld [vmem:[#allocation3 + $0x8] sm:$0xf]
      %v5913 = vld [vmem:[#allocation3 + $0xc] sm:$0xff]
      %v5914 = vld [vmem:[#allocation3 + $0x14] sm:$0xf]
      %v5915 = vld [vmem:[#allocation3 + $0x18] sm:$0xff]
      %v5916 = vld [vmem:[#allocation3 + $0x20] sm:$0xf]
      %v5917 = vld [vmem:[#allocation3 + $0x24] sm:$0xff]
      %v5918 = vld [vmem:[#allocation3 + $0x2c] sm:$0xf]
      %v5919 = vld [vmem:[#allocation3 + $0x30] sm:$0xff]
      %v5920 = vld [vmem:[#allocation3 + $0x38] sm:$0xf]
      %v5921 = vld [vmem:[#allocation3 + $0x3c] sm:$0xff]
      %v5922 = vld [vmem:[#allocation3 + $0x44] sm:$0xf]
      %v5923 = vld [vmem:[#allocation3 + $0x48] sm:$0xff]
      %v5924 = vld [vmem:[#allocation3 + $0x50] sm:$0xf]
      %v5925 = vld [vmem:[#allocation3 + $0x54] sm:$0xff]
      %v5926 = vld [vmem:[#allocation3 + $0x5c] sm:$0xf]
      %v5927 = vld [vmem:[#allocation3 + $0x60] sm:$0xff]
      %v5928 = vld [vmem:[#allocation3 + $0x68] sm:$0xf]
      %v5929 = vld [vmem:[#allocation3 + $0x6c] sm:$0xff]
      %v5930 = vld [vmem:[#allocation3 + $0x74] sm:$0xf]
      %v5931 = vld [vmem:[#allocation3 + $0x78] sm:$0xff]
      %v5932 = vld [vmem:[#allocation3 + $0x80] sm:$0xf]
      %v5933 = vld [vmem:[#allocation3 + $0x84] sm:$0xff]
      %v5934 = vld [vmem:[#allocation3 + $0x8c] sm:$0xf]
      %v5935 = vld [vmem:[#allocation3 + $0x90] sm:$0xff]
      %v5936 = vld [vmem:[#allocation3 + $0x98] sm:$0xf]
      %v5937 = vld [vmem:[#allocation3 + $0x9c] sm:$0xff]
      %v5938 = vld [vmem:[#allocation3 + $0xa4] sm:$0xf]
      %v5939 = vld [vmem:[#allocation3 + $0xa8] sm:$0xff]
      %v5940 = vld [vmem:[#allocation3 + $0xb0] sm:$0xf]
      %v5941 = vld [vmem:[#allocation3 + $0xb4] sm:$0xff]
      %v5942 = vld [vmem:[#allocation3 + $0xbc] sm:$0xf]
      %v5943 = vld [vmem:[#allocation3 + $0xc0] sm:$0xff]
      %v5944 = vld [vmem:[#allocation3 + $0xc8] sm:$0xf]
      %v5945 = vld [vmem:[#allocation3 + $0xcc] sm:$0xff]
      %v5946 = vld [vmem:[#allocation3 + $0xd4] sm:$0xf]
      %v5947 = vld [vmem:[#allocation3 + $0xd8] sm:$0xff]
      %v5948 = vld [vmem:[#allocation3 + $0xe0] sm:$0xf]
      %v5949 = vld [vmem:[#allocation3 + $0xe4] sm:$0xff]
      %v5950 = vld [vmem:[#allocation3 + $0xec] sm:$0xf]
      %v5951 = vld [vmem:[#allocation3 + $0xf0] sm:$0xff]
      %v5952 = vld [vmem:[#allocation3 + $0xf8] sm:$0xf]
      %v5953 = vld [vmem:[#allocation3 + $0xfc] sm:$0xff]
      %v5954 = vld [vmem:[#allocation3 + $0x104] sm:$0xf]
      %v5955 = vld [vmem:[#allocation3 + $0x108] sm:$0xff]
      %v5956 = vld [vmem:[#allocation3 + $0x110] sm:$0xf]
      %v5957 = vld [vmem:[#allocation3 + $0x114] sm:$0xff]
      %v5958 = vld [vmem:[#allocation3 + $0x11c] sm:$0xf]
      %v5959 = vld [vmem:[#allocation3 + $0x120] sm:$0xff]
      %v5960 = vld [vmem:[#allocation3 + $0x128] sm:$0xf]
      %v5961 = vld [vmem:[#allocation3 + $0x12c] sm:$0xff]
      %v5962 = vld [vmem:[#allocation3 + $0x134] sm:$0xf]
      %v5963 = vld [vmem:[#allocation3 + $0x138] sm:$0xff]
      %v5964 = vld [vmem:[#allocation3 + $0x140] sm:$0xf]
      %v5965 = vld [vmem:[#allocation3 + $0x144] sm:$0xff]
      %v5966 = vld [vmem:[#allocation3 + $0x14c] sm:$0xf]
      %v5967 = vld [vmem:[#allocation3 + $0x150] sm:$0xff]
      %v5968 = vld [vmem:[#allocation3 + $0x158] sm:$0xf]
      %v5969 = vld [vmem:[#allocation3 + $0x15c] sm:$0xff]
      %v5970 = vld [vmem:[#allocation3 + $0x164] sm:$0xf]
      %v5971 = vld [vmem:[#allocation3 + $0x168] sm:$0xff]
      %v5972 = vld [vmem:[#allocation3 + $0x170] sm:$0xf]
      %v5973 = vld [vmem:[#allocation3 + $0x174] sm:$0xff]
      %v5974 = vld [vmem:[#allocation3 + $0x17c] sm:$0xf]
      %v5975 = vld [vmem:[%s4] sm:$0xf]
      %v5976 = vld [vmem:[%s4 + $0x4] sm:$0xf]
      %v5977 = vld [vmem:[%s4 + $0x8] sm:$0xf]
      %v5978 = vld [vmem:[%s4 + $0xc] sm:$0xf]
      %v5979 = vld [vmem:[%s4 + $0x10] sm:$0xf]
      %v5980 = vld [vmem:[%s4 + $0x14] sm:$0xf]
      %v5981 = vld [vmem:[%s4 + $0x18] sm:$0xf]
      %v5982 = vld [vmem:[%s4 + $0x1c] sm:$0xf]
      %v5983 = vld [vmem:[%s4 + $0x20] sm:$0xf]
      %v5984 = vld [vmem:[%s4 + $0x24] sm:$0xf]
      %v5985 = vld [vmem:[%s4 + $0x28] sm:$0xf]
      %v5986 = vld [vmem:[%s4 + $0x2c] sm:$0xf]
      %v5987 = vld [vmem:[%s4 + $0x30] sm:$0xf]
      %v5988 = vld [vmem:[%s4 + $0x34] sm:$0xf]
      %v5989 = vld [vmem:[%s4 + $0x38] sm:$0xf]
      %v5990 = vld [vmem:[%s4 + $0x3c] sm:$0xf]
      %v5991 = vld [vmem:[%s4 + $0x40] sm:$0xf]
      %v5992 = vld [vmem:[%s4 + $0x44] sm:$0xf]
      %v5993 = vld [vmem:[%s4 + $0x48] sm:$0xf]
      %v5994 = vld [vmem:[%s4 + $0x4c] sm:$0xf]
      %v5995 = vld [vmem:[%s4 + $0x50] sm:$0xf]
      %v5996 = vld [vmem:[%s4 + $0x54] sm:$0xf]
      %v5997 = vld [vmem:[%s4 + $0x58] sm:$0xf]
      %v5998 = vld [vmem:[%s4 + $0x5c] sm:$0xf]
      %v5999 = vld [vmem:[%s4 + $0x60] sm:$0xf]
      %v6000 = vld [vmem:[%s4 + $0x64] sm:$0xf]
      %v6001 = vld [vmem:[%s4 + $0x68] sm:$0xf]
      %v6002 = vld [vmem:[%s4 + $0x6c] sm:$0xf]
      %v6003 = vld [vmem:[%s4 + $0x70] sm:$0xf]
      %v6004 = vld [vmem:[%s4 + $0x74] sm:$0xf]
      %v6005 = vld [vmem:[%s4 + $0x78] sm:$0xf]
      %v6006 = vld [vmem:[%s4 + $0x7c] sm:$0xf]
      %v6007 = vld [vmem:[%s4 + $0x80] sm:$0xf]
      %v6008 = vld [vmem:[%s4 + $0x84] sm:$0xf]
      %v6009 = vld [vmem:[%s4 + $0x88] sm:$0xf]
      %v6010 = vld [vmem:[%s4 + $0x8c] sm:$0xf]
      %v6011 = vld [vmem:[%s4 + $0x90] sm:$0xf]
      %v6012 = vld [vmem:[%s4 + $0x94] sm:$0xf]
      %v6013 = vld [vmem:[%s4 + $0x98] sm:$0xf]
      %v6014 = vld [vmem:[%s4 + $0x9c] sm:$0xf]
      %v6015 = vld [vmem:[%s4 + $0xa0] sm:$0xf]
      %v6016 = vld [vmem:[%s4 + $0xa4] sm:$0xf]
      %v6017 = vld [vmem:[%s4 + $0xa8] sm:$0xf]
      %v6018 = vld [vmem:[%s4 + $0xac] sm:$0xf]
      %v6019 = vld [vmem:[%s4 + $0xb0] sm:$0xf]
      %v6020 = vld [vmem:[%s4 + $0xb4] sm:$0xf]
      %v6021 = vld [vmem:[%s4 + $0xb8] sm:$0xf]
      %v6022 = vld [vmem:[%s4 + $0xbc] sm:$0xf]
      %v6023 = vld [vmem:[%s1853] sm:$0xff]
      %v6024 = vld [vmem:[%s1853 + $0x8] sm:$0xf]
      %v6025 = vld [vmem:[%s1853 + $0xc] sm:$0xff]
      %v6026 = vld [vmem:[%s1853 + $0x14] sm:$0xf]
      %v6027 = vld [vmem:[%s1853 + $0x18] sm:$0xff]
      %v6028 = vld [vmem:[%s1853 + $0x20] sm:$0xf]
      %v6029 = vld [vmem:[%s1853 + $0x24] sm:$0xff]
      %v6030 = vld [vmem:[%s1853 + $0x2c] sm:$0xf]
      %v6031 = vld [vmem:[%s1853 + $0x30] sm:$0xff]
      %v6032 = vld [vmem:[%s1853 + $0x38] sm:$0xf]
      %v6033 = vld [vmem:[%s1853 + $0x3c] sm:$0xff]
      %v6034 = vld [vmem:[%s1853 + $0x44] sm:$0xf]
      %v6035 = vld [vmem:[%s1853 + $0x48] sm:$0xff]
      %v6036 = vld [vmem:[%s1853 + $0x50] sm:$0xf]
      %v6037 = vld [vmem:[%s1853 + $0x54] sm:$0xff]
      %v6038 = vld [vmem:[%s1853 + $0x5c] sm:$0xf]
      %v6039 = vld [vmem:[%s1853 + $0x60] sm:$0xff]
      %v6040 = vld [vmem:[%s1853 + $0x68] sm:$0xf]
      %v6041 = vld [vmem:[%s1853 + $0x6c] sm:$0xff]
      %v6042 = vld [vmem:[%s1853 + $0x74] sm:$0xf]
      %v6043 = vld [vmem:[%s1853 + $0x78] sm:$0xff]
      %v6044 = vld [vmem:[%s1853 + $0x80] sm:$0xf]
      %v6045 = vld [vmem:[%s1853 + $0x84] sm:$0xff]
      %v6046 = vld [vmem:[%s1853 + $0x8c] sm:$0xf]
      %v6047 = vld [vmem:[%s1853 + $0x90] sm:$0xff]
      %v6048 = vld [vmem:[%s1853 + $0x98] sm:$0xf]
      %v6049 = vld [vmem:[%s1853 + $0x9c] sm:$0xff]
      %v6050 = vld [vmem:[%s1853 + $0xa4] sm:$0xf]
      %v6051 = vld [vmem:[%s1853 + $0xa8] sm:$0xff]
      %v6052 = vld [vmem:[%s1853 + $0xb0] sm:$0xf]
      %v6053 = vld [vmem:[%s1853 + $0xb4] sm:$0xff]
      %v6054 = vld [vmem:[%s1853 + $0xbc] sm:$0xf]
      %v6055 = vld [vmem:[%s1853 + $0xc0] sm:$0xff]
      %v6056 = vld [vmem:[%s1853 + $0xc8] sm:$0xf]
      %v6057 = vld [vmem:[%s1853 + $0xcc] sm:$0xff]
      %v6058 = vld [vmem:[%s1853 + $0xd4] sm:$0xf]
      %v6059 = vld [vmem:[%s1853 + $0xd8] sm:$0xff]
      %v6060 = vld [vmem:[%s1853 + $0xe0] sm:$0xf]
      %v6061 = vld [vmem:[%s1853 + $0xe4] sm:$0xff]
      %v6062 = vld [vmem:[%s1853 + $0xec] sm:$0xf]
      %v6063 = vld [vmem:[%s1853 + $0xf0] sm:$0xff]
      %v6064 = vld [vmem:[%s1853 + $0xf8] sm:$0xf]
      %v6065 = vld [vmem:[%s1853 + $0xfc] sm:$0xff]
      %v6066 = vld [vmem:[%s1853 + $0x104] sm:$0xf]
      %v6067 = vld [vmem:[%s1853 + $0x108] sm:$0xff]
      %v6068 = vld [vmem:[%s1853 + $0x110] sm:$0xf]
      %v6069 = vld [vmem:[%s1853 + $0x114] sm:$0xff]
      %v6070 = vld [vmem:[%s1853 + $0x11c] sm:$0xf]
      %v6071 = vld [vmem:[%s1853 + $0x120] sm:$0xff]
      %v6072 = vld [vmem:[%s1853 + $0x128] sm:$0xf]
      %v6073 = vld [vmem:[%s1853 + $0x12c] sm:$0xff]
      %v6074 = vld [vmem:[%s1853 + $0x134] sm:$0xf]
      %v6075 = vld [vmem:[%s1853 + $0x138] sm:$0xff]
      %v6076 = vld [vmem:[%s1853 + $0x140] sm:$0xf]
      %v6077 = vld [vmem:[%s1853 + $0x144] sm:$0xff]
      %v6078 = vld [vmem:[%s1853 + $0x14c] sm:$0xf]
      %v6079 = vld [vmem:[%s1853 + $0x150] sm:$0xff]
      %v6080 = vld [vmem:[%s1853 + $0x158] sm:$0xf]
      %v6081 = vld [vmem:[%s1853 + $0x15c] sm:$0xff]
      %v6082 = vld [vmem:[%s1853 + $0x164] sm:$0xf]
      %v6083 = vld [vmem:[%s1853 + $0x168] sm:$0xff]
      %v6084 = vld [vmem:[%s1853 + $0x170] sm:$0xf]
      %v6085 = vld [vmem:[%s1853 + $0x174] sm:$0xff]
      %v6086 = vld [vmem:[%s1853 + $0x17c] sm:$0xf]
      %s6087 = scalar_lea.vmem %s4, 192
      %v6088 = vld [vmem:[%s6087] sm:$0xf]
      %v6089 = vld [vmem:[%s6087 + $0x4] sm:$0xf]
      %v6090 = vld [vmem:[%s6087 + $0x8] sm:$0xf]
      %v6091 = vld [vmem:[%s6087 + $0xc] sm:$0xf]
      %v6092 = vld [vmem:[%s6087 + $0x10] sm:$0xf]
      %v6093 = vld [vmem:[%s6087 + $0x14] sm:$0xf]
      %v6094 = vld [vmem:[%s6087 + $0x18] sm:$0xf]
      %v6095 = vld [vmem:[%s6087 + $0x1c] sm:$0xf]
      %v6096 = vld [vmem:[%s6087 + $0x20] sm:$0xf]
      %v6097 = vld [vmem:[%s6087 + $0x24] sm:$0xf]
      %v6098 = vld [vmem:[%s6087 + $0x28] sm:$0xf]
      %v6099 = vld [vmem:[%s6087 + $0x2c] sm:$0xf]
      %v6100 = vld [vmem:[%s6087 + $0x30] sm:$0xf]
      %v6101 = vld [vmem:[%s6087 + $0x34] sm:$0xf]
      %v6102 = vld [vmem:[%s6087 + $0x38] sm:$0xf]
      %v6103 = vld [vmem:[%s6087 + $0x3c] sm:$0xf]
      %v6104 = vld [vmem:[%s6087 + $0x40] sm:$0xf]
      %v6105 = vld [vmem:[%s6087 + $0x44] sm:$0xf]
      %v6106 = vld [vmem:[%s6087 + $0x48] sm:$0xf]
      %v6107 = vld [vmem:[%s6087 + $0x4c] sm:$0xf]
      %v6108 = vld [vmem:[%s6087 + $0x50] sm:$0xf]
      %v6109 = vld [vmem:[%s6087 + $0x54] sm:$0xf]
      %v6110 = vld [vmem:[%s6087 + $0x58] sm:$0xf]
      %v6111 = vld [vmem:[%s6087 + $0x5c] sm:$0xf]
      %v6112 = vld [vmem:[%s6087 + $0x60] sm:$0xf]
      %v6113 = vld [vmem:[%s6087 + $0x64] sm:$0xf]
      %v6114 = vld [vmem:[%s6087 + $0x68] sm:$0xf]
      %v6115 = vld [vmem:[%s6087 + $0x6c] sm:$0xf]
      %v6116 = vld [vmem:[%s6087 + $0x70] sm:$0xf]
      %v6117 = vld [vmem:[%s6087 + $0x74] sm:$0xf]
      %v6118 = vld [vmem:[%s6087 + $0x78] sm:$0xf]
      %v6119 = vld [vmem:[%s6087 + $0x7c] sm:$0xf]
      %v6120 = vld [vmem:[%s6087 + $0x80] sm:$0xf]
      %v6121 = vld [vmem:[%s6087 + $0x84] sm:$0xf]
      %v6122 = vld [vmem:[%s6087 + $0x88] sm:$0xf]
      %v6123 = vld [vmem:[%s6087 + $0x8c] sm:$0xf]
      %v6124 = vld [vmem:[%s6087 + $0x90] sm:$0xf]
      %v6125 = vld [vmem:[%s6087 + $0x94] sm:$0xf]
      %v6126 = vld [vmem:[%s6087 + $0x98] sm:$0xf]
      %v6127 = vld [vmem:[%s6087 + $0x9c] sm:$0xf]
      %v6128 = vld [vmem:[%s6087 + $0xa0] sm:$0xf]
      %v6129 = vld [vmem:[%s6087 + $0xa4] sm:$0xf]
      %v6130 = vld [vmem:[%s6087 + $0xa8] sm:$0xf]
      %v6131 = vld [vmem:[%s6087 + $0xac] sm:$0xf]
      %v6132 = vld [vmem:[%s6087 + $0xb0] sm:$0xf]
      %v6133 = vld [vmem:[%s6087 + $0xb4] sm:$0xf]
      %v6134 = vld [vmem:[%s6087 + $0xb8] sm:$0xf]
      %v6135 = vld [vmem:[%s6087 + $0xbc] sm:$0xf]
      %v6200 = vunpack.c.l.b16 %v6023
      %v6201 = vunpack.c.h.b16 %v6023
      %v6202 = vunpack.c.l.b16 %v6024
      %v6203 = vunpack.c.l.b16 %v6025
      %v6204 = vunpack.c.h.b16 %v6025
      %v6205 = vunpack.c.l.b16 %v6026
      %v6206 = vunpack.c.l.b16 %v6027
      %v6207 = vunpack.c.h.b16 %v6027
      %v6208 = vunpack.c.l.b16 %v6028
      %v6209 = vunpack.c.l.b16 %v6029
      %v6210 = vunpack.c.h.b16 %v6029
      %v6211 = vunpack.c.l.b16 %v6030
      %v6212 = vunpack.c.l.b16 %v6031
      %v6213 = vunpack.c.h.b16 %v6031
      %v6214 = vunpack.c.l.b16 %v6032
      %v6215 = vunpack.c.l.b16 %v6033
      %v6216 = vunpack.c.h.b16 %v6033
      %v6217 = vunpack.c.l.b16 %v6034
      %v6218 = vunpack.c.l.b16 %v6035
      %v6219 = vunpack.c.h.b16 %v6035
      %v6220 = vunpack.c.l.b16 %v6036
      %v6221 = vunpack.c.l.b16 %v6037
      %v6222 = vunpack.c.h.b16 %v6037
      %v6223 = vunpack.c.l.b16 %v6038
      %v6224 = vunpack.c.l.b16 %v6039
      %v6225 = vunpack.c.h.b16 %v6039
      %v6226 = vunpack.c.l.b16 %v6040
      %v6227 = vunpack.c.l.b16 %v6041
      %v6228 = vunpack.c.h.b16 %v6041
      %v6229 = vunpack.c.l.b16 %v6042
      %v6230 = vunpack.c.l.b16 %v6043
      %v6231 = vunpack.c.h.b16 %v6043
      %v6232 = vunpack.c.l.b16 %v6044
      %v6233 = vunpack.c.l.b16 %v6045
      %v6234 = vunpack.c.h.b16 %v6045
      %v6235 = vunpack.c.l.b16 %v6046
      %v6236 = vunpack.c.l.b16 %v6047
      %v6237 = vunpack.c.h.b16 %v6047
      %v6238 = vunpack.c.l.b16 %v6048
      %v6239 = vunpack.c.l.b16 %v6049
      %v6240 = vunpack.c.h.b16 %v6049
      %v6241 = vunpack.c.l.b16 %v6050
      %v6242 = vunpack.c.l.b16 %v6051
      %v6243 = vunpack.c.h.b16 %v6051
      %v6244 = vunpack.c.l.b16 %v6052
      %v6245 = vunpack.c.l.b16 %v6053
      %v6246 = vunpack.c.h.b16 %v6053
      %v6247 = vunpack.c.l.b16 %v6054
      %v6248 = vunpack.c.l.b16 %v6055
      %v6249 = vunpack.c.h.b16 %v6055
      %v6250 = vunpack.c.l.b16 %v6056
      %v6251 = vunpack.c.l.b16 %v6057
      %v6252 = vunpack.c.h.b16 %v6057
      %v6253 = vunpack.c.l.b16 %v6058
      %v6254 = vunpack.c.l.b16 %v6059
      %v6255 = vunpack.c.h.b16 %v6059
      %v6256 = vunpack.c.l.b16 %v6060
      %v6257 = vunpack.c.l.b16 %v6061
      %v6258 = vunpack.c.h.b16 %v6061
      %v6259 = vunpack.c.l.b16 %v6062
      %v6260 = vunpack.c.l.b16 %v6063
      %v6261 = vunpack.c.h.b16 %v6063
      %v6262 = vunpack.c.l.b16 %v6064
      %v6263 = vunpack.c.l.b16 %v6065
      %v6264 = vunpack.c.h.b16 %v6065
      %v6265 = vunpack.c.l.b16 %v6066
      %v6266 = vunpack.c.l.b16 %v6067
      %v6267 = vunpack.c.h.b16 %v6067
      %v6268 = vunpack.c.l.b16 %v6068
      %v6269 = vunpack.c.l.b16 %v6069
      %v6270 = vunpack.c.h.b16 %v6069
      %v6271 = vunpack.c.l.b16 %v6070
      %v6272 = vunpack.c.l.b16 %v6071
      %v6273 = vunpack.c.h.b16 %v6071
      %v6274 = vunpack.c.l.b16 %v6072
      %v6275 = vunpack.c.l.b16 %v6073
      %v6276 = vunpack.c.h.b16 %v6073
      %v6277 = vunpack.c.l.b16 %v6074
      %v6278 = vunpack.c.l.b16 %v6075
      %v6279 = vunpack.c.h.b16 %v6075
      %v6280 = vunpack.c.l.b16 %v6076
      %v6281 = vunpack.c.l.b16 %v6077
      %v6282 = vunpack.c.h.b16 %v6077
      %v6283 = vunpack.c.l.b16 %v6078
      %v6284 = vunpack.c.l.b16 %v6079
      %v6285 = vunpack.c.h.b16 %v6079
      %v6286 = vunpack.c.l.b16 %v6080
      %v6287 = vunpack.c.l.b16 %v6081
      %v6288 = vunpack.c.h.b16 %v6081
      %v6289 = vunpack.c.l.b16 %v6082
      %v6290 = vunpack.c.l.b16 %v6083
      %v6291 = vunpack.c.h.b16 %v6083
      %v6292 = vunpack.c.l.b16 %v6084
      %v6293 = vunpack.c.l.b16 %v6085
      %v6294 = vunpack.c.h.b16 %v6085
      %v6295 = vunpack.c.l.b16 %v6086
      %v6296 = vpack.c.b16 %v6203, %v6200
      %v6297 = vpack.c.b16 %v6204, %v6201
      %v6298 = vpack.c.b16 %v6205, %v6202
      %v6299 = vpack.c.b16 %v6209, %v6206
      %v6300 = vpack.c.b16 %v6210, %v6207
      %v6301 = vpack.c.b16 %v6211, %v6208
      %v6302 = vpack.c.b16 %v6215, %v6212
      %v6303 = vpack.c.b16 %v6216, %v6213
      %v6304 = vpack.c.b16 %v6217, %v6214
      %v6305 = vpack.c.b16 %v6221, %v6218
      %v6306 = vpack.c.b16 %v6222, %v6219
      %v6307 = vpack.c.b16 %v6223, %v6220
      %v6308 = vpack.c.b16 %v6227, %v6224
      %v6309 = vpack.c.b16 %v6228, %v6225
      %v6310 = vpack.c.b16 %v6229, %v6226
      %v6311 = vpack.c.b16 %v6233, %v6230
      %v6312 = vpack.c.b16 %v6234, %v6231
      %v6313 = vpack.c.b16 %v6235, %v6232
      %v6314 = vpack.c.b16 %v6239, %v6236
      %v6315 = vpack.c.b16 %v6240, %v6237
      %v6316 = vpack.c.b16 %v6241, %v6238
      %v6317 = vpack.c.b16 %v6245, %v6242
      %v6318 = vpack.c.b16 %v6246, %v6243
      %v6319 = vpack.c.b16 %v6247, %v6244
      %v6320 = vpack.c.b16 %v6251, %v6248
      %v6321 = vpack.c.b16 %v6252, %v6249
      %v6322 = vpack.c.b16 %v6253, %v6250
      %v6323 = vpack.c.b16 %v6257, %v6254
      %v6324 = vpack.c.b16 %v6258, %v6255
      %v6325 = vpack.c.b16 %v6259, %v6256
      %v6326 = vpack.c.b16 %v6263, %v6260
      %v6327 = vpack.c.b16 %v6264, %v6261
      %v6328 = vpack.c.b16 %v6265, %v6262
      %v6329 = vpack.c.b16 %v6269, %v6266
      %v6330 = vpack.c.b16 %v6270, %v6267
      %v6331 = vpack.c.b16 %v6271, %v6268
      %v6332 = vpack.c.b16 %v6275, %v6272
      %v6333 = vpack.c.b16 %v6276, %v6273
      %v6334 = vpack.c.b16 %v6277, %v6274
      %v6335 = vpack.c.b16 %v6281, %v6278
      %v6336 = vpack.c.b16 %v6282, %v6279
      %v6337 = vpack.c.b16 %v6283, %v6280
      %v6338 = vpack.c.b16 %v6287, %v6284
      %v6339 = vpack.c.b16 %v6288, %v6285
      %v6340 = vpack.c.b16 %v6289, %v6286
      %v6341 = vpack.c.b16 %v6293, %v6290
      %v6342 = vpack.c.b16 %v6294, %v6291
      %v6343 = vpack.c.b16 %v6295, %v6292
      %v6440 = vunpack.c.l.b16 %v6088
      %v6441 = vunpack.c.l.b16 %v6089
      %v6442 = vunpack.c.l.b16 %v6090
      %v6443 = vunpack.c.l.b16 %v6091
      %v6444 = vunpack.c.l.b16 %v6092
      %v6445 = vunpack.c.l.b16 %v6093
      %v6446 = vunpack.c.l.b16 %v6094
      %v6447 = vunpack.c.l.b16 %v6095
      %v6448 = vunpack.c.l.b16 %v6096
      %v6449 = vunpack.c.l.b16 %v6097
      %v6450 = vunpack.c.l.b16 %v6098
      %v6451 = vunpack.c.l.b16 %v6099
      %v6452 = vunpack.c.l.b16 %v6100
      %v6453 = vunpack.c.l.b16 %v6101
      %v6454 = vunpack.c.l.b16 %v6102
      %v6455 = vunpack.c.l.b16 %v6103
      %v6456 = vunpack.c.l.b16 %v6104
      %v6457 = vunpack.c.l.b16 %v6105
      %v6458 = vunpack.c.l.b16 %v6106
      %v6459 = vunpack.c.l.b16 %v6107
      %v6460 = vunpack.c.l.b16 %v6108
      %v6461 = vunpack.c.l.b16 %v6109
      %v6462 = vunpack.c.l.b16 %v6110
      %v6463 = vunpack.c.l.b16 %v6111
      %v6464 = vunpack.c.l.b16 %v6112
      %v6465 = vunpack.c.l.b16 %v6113
      %v6466 = vunpack.c.l.b16 %v6114
      %v6467 = vunpack.c.l.b16 %v6115
      %v6468 = vunpack.c.l.b16 %v6116
      %v6469 = vunpack.c.l.b16 %v6117
      %v6470 = vunpack.c.l.b16 %v6118
      %v6471 = vunpack.c.l.b16 %v6119
      %v6472 = vunpack.c.l.b16 %v6120
      %v6473 = vunpack.c.l.b16 %v6121
      %v6474 = vunpack.c.l.b16 %v6122
      %v6475 = vunpack.c.l.b16 %v6123
      %v6476 = vunpack.c.l.b16 %v6124
      %v6477 = vunpack.c.l.b16 %v6125
      %v6478 = vunpack.c.l.b16 %v6126
      %v6479 = vunpack.c.l.b16 %v6127
      %v6480 = vunpack.c.l.b16 %v6128
      %v6481 = vunpack.c.l.b16 %v6129
      %v6482 = vunpack.c.l.b16 %v6130
      %v6483 = vunpack.c.l.b16 %v6131
      %v6484 = vunpack.c.l.b16 %v6132
      %v6485 = vunpack.c.l.b16 %v6133
      %v6486 = vunpack.c.l.b16 %v6134
      %v6487 = vunpack.c.l.b16 %v6135
      %v6488 = vpack.c.b16 %v6441, %v6440
      %v6489 = vpack.c.b16 %v6443, %v6442
      %v6490 = vpack.c.b16 %v6445, %v6444
      %v6491 = vpack.c.b16 %v6447, %v6446
      %v6492 = vpack.c.b16 %v6449, %v6448
      %v6493 = vpack.c.b16 %v6451, %v6450
      %v6494 = vpack.c.b16 %v6453, %v6452
      %v6495 = vpack.c.b16 %v6455, %v6454
      %v6496 = vpack.c.b16 %v6457, %v6456
      %v6497 = vpack.c.b16 %v6459, %v6458
      %v6498 = vpack.c.b16 %v6461, %v6460
      %v6499 = vpack.c.b16 %v6463, %v6462
      %v6500 = vpack.c.b16 %v6465, %v6464
      %v6501 = vpack.c.b16 %v6467, %v6466
      %v6502 = vpack.c.b16 %v6469, %v6468
      %v6503 = vpack.c.b16 %v6471, %v6470
      %v6504 = vpack.c.b16 %v6473, %v6472
      %v6505 = vpack.c.b16 %v6475, %v6474
      %v6506 = vpack.c.b16 %v6477, %v6476
      %v6507 = vpack.c.b16 %v6479, %v6478
      %v6508 = vpack.c.b16 %v6481, %v6480
      %v6509 = vpack.c.b16 %v6483, %v6482
      %v6510 = vpack.c.b16 %v6485, %v6484
      %v6511 = vpack.c.b16 %v6487, %v6486
      %6536 = vmatprep.subr.bf16.mxu0 0
      %6537 = vmatpush1.bf16.msra.mxu0 %v6495
      %6538 = vmatprep.subr.bf16.mxu0 0
      %6539 = vmatpush1.bf16.msra.mxu0 %v6494
      %6540 = vmatprep.subr.bf16.mxu0 0
      %6541 = vmatpush1.bf16.msra.mxu0 %v6493
      %6542 = vmatprep.subr.bf16.mxu0 0
      %6543 = vmatpush1.bf16.msra.mxu0 %v6492
      %6544 = vmatprep.subr.bf16.mxu0 0
      %6545 = vmatpush1.bf16.msra.mxu0 %v6491
      %6546 = vmatprep.subr.bf16.mxu0 0
      %6547 = vmatpush1.bf16.msra.mxu0 %v6490
      %6548 = vmatprep.subr.bf16.mxu0 0
      %6549 = vmatpush1.bf16.msra.mxu0 %v6489
      %6550 = vmatprep.subr.bf16.mxu0 0
      %6551 = vmatpush1.bf16.msra.mxu0 %v6488
      %6552 = vmatprep.subr.bf16.mxu0 0
      %6553 = vmatpush2.bf16.msra.mxu0 %v6503
      %6554 = vmatprep.subr.bf16.mxu0 0
      %6555 = vmatpush2.bf16.msra.mxu0 %v6502
      %6556 = vmatprep.subr.bf16.mxu0 0
      %6557 = vmatpush2.bf16.msra.mxu0 %v6501
      %6558 = vmatprep.subr.bf16.mxu0 0
      %6559 = vmatpush2.bf16.msra.mxu0 %v6500
      %6560 = vmatprep.subr.bf16.mxu0 0
      %6561 = vmatpush2.bf16.msra.mxu0 %v6499
      %6562 = vmatprep.subr.bf16.mxu0 0
      %6563 = vmatpush2.bf16.msra.mxu0 %v6498
      %6564 = vmatprep.subr.bf16.mxu0 0
      %6565 = vmatpush2.bf16.msra.mxu0 %v6497
      %6566 = vmatprep.subr.bf16.mxu0 0
      %6567 = vmatpush2.bf16.msra.mxu0 %v6496
      %6568 = vmatprep.mubr.bf16.mxu0 %v6297
      %6569 = vmatmul.mubr.bf16.gmra.mxu0 %v6296
      %v6570 = vpop.f32.mrf.mxu0
      %v6571 = vadd.f32 0.0, %v6570
      %v6572 = vpop.f32.mrf.mxu0
      %v6573 = vpop.f32.mrf.mxu0
      %v6574 = vadd.f32 0.0, %v6573
      %v6575 = vpop.f32.mrf.mxu0
      %6576 = vmatprep.mubr.bf16.mxu0 %v6300
      %6577 = vmatmul.mubr.bf16.gmra.mxu0 %v6299
      %v6578 = vpop.f32.mrf.mxu0
      %v6579 = vadd.f32 0.0, %v6578
      %v6580 = vpop.f32.mrf.mxu0
      %v6581 = vpop.f32.mrf.mxu0
      %v6582 = vadd.f32 0.0, %v6581
      %v6583 = vpop.f32.mrf.mxu0
      %6584 = vmatprep.mubr.bf16.mxu0 %v6303
      %6585 = vmatmul.mubr.bf16.gmra.mxu0 %v6302
      %v6586 = vpop.f32.mrf.mxu0
      %v6587 = vadd.f32 0.0, %v6586
      %v6588 = vpop.f32.mrf.mxu0
      %v6589 = vpop.f32.mrf.mxu0
      %v6590 = vadd.f32 0.0, %v6589
      %v6591 = vpop.f32.mrf.mxu0
      %6592 = vmatprep.mubr.bf16.mxu0 %v6306
      %6593 = vmatmul.mubr.bf16.gmra.mxu0 %v6305
      %v6594 = vpop.f32.mrf.mxu0
      %v6595 = vadd.f32 0.0, %v6594
      %v6596 = vpop.f32.mrf.mxu0
      %v6597 = vpop.f32.mrf.mxu0
      %v6598 = vadd.f32 0.0, %v6597
      %v6599 = vpop.f32.mrf.mxu0
      %6600 = vmatprep.mubr.bf16.mxu0 %v6309
      %6601 = vmatmul.mubr.bf16.gmra.mxu0 %v6308
      %v6602 = vpop.f32.mrf.mxu0
      %v6603 = vadd.f32 0.0, %v6602
      %v6604 = vpop.f32.mrf.mxu0
      %v6605 = vpop.f32.mrf.mxu0
      %v6606 = vadd.f32 0.0, %v6605
      %v6607 = vpop.f32.mrf.mxu0
      %6608 = vmatprep.mubr.bf16.mxu0 %v6312
      %6609 = vmatmul.mubr.bf16.gmra.mxu0 %v6311
      %v6610 = vpop.f32.mrf.mxu0
      %v6611 = vadd.f32 0.0, %v6610
      %v6612 = vpop.f32.mrf.mxu0
      %v6613 = vpop.f32.mrf.mxu0
      %v6614 = vadd.f32 0.0, %v6613
      %v6615 = vpop.f32.mrf.mxu0
      %6616 = vmatprep.mubr.bf16.mxu0 %v6315
      %6617 = vmatmul.mubr.bf16.gmra.mxu0 %v6314
      %v6618 = vpop.f32.mrf.mxu0
      %v6619 = vadd.f32 0.0, %v6618
      %v6620 = vpop.f32.mrf.mxu0
      %v6621 = vpop.f32.mrf.mxu0
      %v6622 = vadd.f32 0.0, %v6621
      %v6623 = vpop.f32.mrf.mxu0
      %6624 = vmatprep.mubr.bf16.mxu0 %v6318
      %6625 = vmatmul.mubr.bf16.gmra.mxu0 %v6317
      %v6626 = vpop.f32.mrf.mxu0
      %v6627 = vadd.f32 0.0, %v6626
      %v6628 = vpop.f32.mrf.mxu0
      %v6629 = vpop.f32.mrf.mxu0
      %v6630 = vadd.f32 0.0, %v6629
      %v6631 = vpop.f32.mrf.mxu0
      %6632 = vmatprep.mubr.bf16.mxu0 %v6321
      %6633 = vmatmul.mubr.bf16.gmra.mxu0 %v6320
      %v6634 = vpop.f32.mrf.mxu0
      %v6635 = vadd.f32 0.0, %v6634
      %v6636 = vpop.f32.mrf.mxu0
      %v6637 = vpop.f32.mrf.mxu0
      %v6638 = vadd.f32 0.0, %v6637
      %v6639 = vpop.f32.mrf.mxu0
      %6640 = vmatprep.mubr.bf16.mxu0 %v6324
      %6641 = vmatmul.mubr.bf16.gmra.mxu0 %v6323
      %v6642 = vpop.f32.mrf.mxu0
      %v6643 = vadd.f32 0.0, %v6642
      %v6644 = vpop.f32.mrf.mxu0
      %v6645 = vpop.f32.mrf.mxu0
      %v6646 = vadd.f32 0.0, %v6645
      %v6647 = vpop.f32.mrf.mxu0
      %6648 = vmatprep.mubr.bf16.mxu0 %v6327
      %6649 = vmatmul.mubr.bf16.gmra.mxu0 %v6326
      %v6650 = vpop.f32.mrf.mxu0
      %v6651 = vadd.f32 0.0, %v6650
      %v6652 = vpop.f32.mrf.mxu0
      %v6653 = vpop.f32.mrf.mxu0
      %v6654 = vadd.f32 0.0, %v6653
      %v6655 = vpop.f32.mrf.mxu0
      %6656 = vmatprep.mubr.bf16.mxu0 %v6330
      %6657 = vmatmul.mubr.bf16.gmra.mxu0 %v6329
      %v6658 = vpop.f32.mrf.mxu0
      %v6659 = vadd.f32 0.0, %v6658
      %v6660 = vpop.f32.mrf.mxu0
      %v6661 = vpop.f32.mrf.mxu0
      %v6662 = vadd.f32 0.0, %v6661
      %v6663 = vpop.f32.mrf.mxu0
      %6664 = vmatprep.mubr.bf16.mxu0 %v6333
      %6665 = vmatmul.mubr.bf16.gmra.mxu0 %v6332
      %v6666 = vpop.f32.mrf.mxu0
      %v6667 = vadd.f32 0.0, %v6666
      %v6668 = vpop.f32.mrf.mxu0
      %v6669 = vpop.f32.mrf.mxu0
      %v6670 = vadd.f32 0.0, %v6669
      %v6671 = vpop.f32.mrf.mxu0
      %6672 = vmatprep.mubr.bf16.mxu0 %v6336
      %6673 = vmatmul.mubr.bf16.gmra.mxu0 %v6335
      %v6674 = vpop.f32.mrf.mxu0
      %v6675 = vadd.f32 0.0, %v6674
      %v6676 = vpop.f32.mrf.mxu0
      %v6677 = vpop.f32.mrf.mxu0
      %v6678 = vadd.f32 0.0, %v6677
      %v6679 = vpop.f32.mrf.mxu0
      %6680 = vmatprep.mubr.bf16.mxu0 %v6339
      %6681 = vmatmul.mubr.bf16.gmra.mxu0 %v6338
      %v6682 = vpop.f32.mrf.mxu0
      %v6683 = vadd.f32 0.0, %v6682
      %v6684 = vpop.f32.mrf.mxu0
      %v6685 = vpop.f32.mrf.mxu0
      %v6686 = vadd.f32 0.0, %v6685
      %v6687 = vpop.f32.mrf.mxu0
      %6688 = vmatprep.mubr.bf16.mxu0 %v6342
      %6689 = vmatmul.mubr.bf16.gmra.mxu0 %v6341
      %v6690 = vpop.f32.mrf.mxu0
      %v6691 = vadd.f32 0.0, %v6690
      %v6692 = vpop.f32.mrf.mxu0
      %v6693 = vpop.f32.mrf.mxu0
      %v6694 = vadd.f32 0.0, %v6693
      %v6695 = vpop.f32.mrf.mxu0
      %6696 = vdwg.mxu0
      %6697 = vmatprep.subr.bf16.mxu0 0
      %6698 = vmatpush1.bf16.msra.mxu0 %v6511
      %6699 = vmatprep.subr.bf16.mxu0 0
      %6700 = vmatpush1.bf16.msra.mxu0 %v6510
      %6701 = vmatprep.subr.bf16.mxu0 0
      %6702 = vmatpush1.bf16.msra.mxu0 %v6509
      %6703 = vmatprep.subr.bf16.mxu0 0
      %6704 = vmatpush1.bf16.msra.mxu0 %v6508
      %6705 = vmatprep.subr.bf16.mxu0 0
      %6706 = vmatpush1.bf16.msra.mxu0 %v6507
      %6707 = vmatprep.subr.bf16.mxu0 0
      %6708 = vmatpush1.bf16.msra.mxu0 %v6506
      %6709 = vmatprep.subr.bf16.mxu0 0
      %6710 = vmatpush1.bf16.msra.mxu0 %v6505
      %6711 = vmatprep.subr.bf16.mxu0 0
      %6712 = vmatpush1.bf16.msra.mxu0 %v6504
      %6713 = vmatprep.subr.bf16.mxu0 0
      %6714 = vmatpush2.bf16.msra.mxu0 0
      %6715 = vmatprep.subr.bf16.mxu0 0
      %6716 = vmatpush2.bf16.msra.mxu0 0
      %6717 = vmatprep.subr.bf16.mxu0 0
      %6718 = vmatpush2.bf16.msra.mxu0 0
      %6719 = vmatprep.subr.bf16.mxu0 0
      %6720 = vmatpush2.bf16.msra.mxu0 0
      %6721 = vmatprep.subr.bf16.mxu0 0
      %6722 = vmatpush2.bf16.msra.mxu0 0
      %6723 = vmatprep.subr.bf16.mxu0 0
      %6724 = vmatpush2.bf16.msra.mxu0 0
      %6725 = vmatprep.subr.bf16.mxu0 0
      %6726 = vmatpush2.bf16.msra.mxu0 0
      %6727 = vmatprep.subr.bf16.mxu0 0
      %6728 = vmatpush2.bf16.msra.mxu0 0
      %6729 = vmatprep.mubr.bf16.mxu0 0
      %6730 = vmatmul.mubr.bf16.gmra.mxu0 %v6298
      %v6731 = vpop.f32.mrf.mxu0
      %v6732 = vadd.f32 %v6571, %v6731
      %v6733 = vpop.f32.mrf.mxu0
      %v6734 = vpop.f32.mrf.mxu0
      %v6735 = vadd.f32 %v6574, %v6734
      %v6736 = vpop.f32.mrf.mxu0
      %6737 = vmatprep.mubr.bf16.mxu0 0
      %6738 = vmatmul.mubr.bf16.gmra.mxu0 %v6301
      %v6739 = vpop.f32.mrf.mxu0
      %v6740 = vadd.f32 %v6579, %v6739
      %v6741 = vpop.f32.mrf.mxu0
      %v6742 = vpop.f32.mrf.mxu0
      %v6743 = vadd.f32 %v6582, %v6742
      %v6744 = vpop.f32.mrf.mxu0
      %6745 = vmatprep.mubr.bf16.mxu0 0
      %6746 = vmatmul.mubr.bf16.gmra.mxu0 %v6304
      %v6747 = vpop.f32.mrf.mxu0
      %v6748 = vadd.f32 %v6587, %v6747
      %v6749 = vpop.f32.mrf.mxu0
      %v6750 = vpop.f32.mrf.mxu0
      %v6751 = vadd.f32 %v6590, %v6750
      %v6752 = vpop.f32.mrf.mxu0
      %6753 = vmatprep.mubr.bf16.mxu0 0
      %6754 = vmatmul.mubr.bf16.gmra.mxu0 %v6307
      %v6755 = vpop.f32.mrf.mxu0
      %v6756 = vadd.f32 %v6595, %v6755
      %v6757 = vpop.f32.mrf.mxu0
      %v6758 = vpop.f32.mrf.mxu0
      %v6759 = vadd.f32 %v6598, %v6758
      %v6760 = vpop.f32.mrf.mxu0
      %6761 = vmatprep.mubr.bf16.mxu0 0
      %6762 = vmatmul.mubr.bf16.gmra.mxu0 %v6310
      %v6763 = vpop.f32.mrf.mxu0
      %v6764 = vadd.f32 %v6603, %v6763
      %v6765 = vpop.f32.mrf.mxu0
      %v6766 = vpop.f32.mrf.mxu0
      %v6767 = vadd.f32 %v6606, %v6766
      %v6768 = vpop.f32.mrf.mxu0
      %6769 = vmatprep.mubr.bf16.mxu0 0
      %6770 = vmatmul.mubr.bf16.gmra.mxu0 %v6313
      %v6771 = vpop.f32.mrf.mxu0
      %v6772 = vadd.f32 %v6611, %v6771
      %v6773 = vpop.f32.mrf.mxu0
      %v6774 = vpop.f32.mrf.mxu0
      %v6775 = vadd.f32 %v6614, %v6774
      %v6776 = vpop.f32.mrf.mxu0
      %6777 = vmatprep.mubr.bf16.mxu0 0
      %6778 = vmatmul.mubr.bf16.gmra.mxu0 %v6316
      %v6779 = vpop.f32.mrf.mxu0
      %v6780 = vadd.f32 %v6619, %v6779
      %v6781 = vpop.f32.mrf.mxu0
      %v6782 = vpop.f32.mrf.mxu0
      %v6783 = vadd.f32 %v6622, %v6782
      %v6784 = vpop.f32.mrf.mxu0
      %6785 = vmatprep.mubr.bf16.mxu0 0
      %6786 = vmatmul.mubr.bf16.gmra.mxu0 %v6319
      %v6787 = vpop.f32.mrf.mxu0
      %v6788 = vadd.f32 %v6627, %v6787
      %v6789 = vpop.f32.mrf.mxu0
      %v6790 = vpop.f32.mrf.mxu0
      %v6791 = vadd.f32 %v6630, %v6790
      %v6792 = vpop.f32.mrf.mxu0
      %6793 = vmatprep.mubr.bf16.mxu0 0
      %6794 = vmatmul.mubr.bf16.gmra.mxu0 %v6322
      %v6795 = vpop.f32.mrf.mxu0
      %v6796 = vadd.f32 %v6635, %v6795
      %v6797 = vpop.f32.mrf.mxu0
      %v6798 = vpop.f32.mrf.mxu0
      %v6799 = vadd.f32 %v6638, %v6798
      %v6800 = vpop.f32.mrf.mxu0
      %6801 = vmatprep.mubr.bf16.mxu0 0
      %6802 = vmatmul.mubr.bf16.gmra.mxu0 %v6325
      %v6803 = vpop.f32.mrf.mxu0
      %v6804 = vadd.f32 %v6643, %v6803
      %v6805 = vpop.f32.mrf.mxu0
      %v6806 = vpop.f32.mrf.mxu0
      %v6807 = vadd.f32 %v6646, %v6806
      %v6808 = vpop.f32.mrf.mxu0
      %6809 = vmatprep.mubr.bf16.mxu0 0
      %6810 = vmatmul.mubr.bf16.gmra.mxu0 %v6328
      %v6811 = vpop.f32.mrf.mxu0
      %v6812 = vadd.f32 %v6651, %v6811
      %v6813 = vpop.f32.mrf.mxu0
      %v6814 = vpop.f32.mrf.mxu0
      %v6815 = vadd.f32 %v6654, %v6814
      %v6816 = vpop.f32.mrf.mxu0
      %6817 = vmatprep.mubr.bf16.mxu0 0
      %6818 = vmatmul.mubr.bf16.gmra.mxu0 %v6331
      %v6819 = vpop.f32.mrf.mxu0
      %v6820 = vadd.f32 %v6659, %v6819
      %v6821 = vpop.f32.mrf.mxu0
      %v6822 = vpop.f32.mrf.mxu0
      %v6823 = vadd.f32 %v6662, %v6822
      %v6824 = vpop.f32.mrf.mxu0
      %6825 = vmatprep.mubr.bf16.mxu0 0
      %6826 = vmatmul.mubr.bf16.gmra.mxu0 %v6334
      %v6827 = vpop.f32.mrf.mxu0
      %v6828 = vadd.f32 %v6667, %v6827
      %v6829 = vpop.f32.mrf.mxu0
      %v6830 = vpop.f32.mrf.mxu0
      %v6831 = vadd.f32 %v6670, %v6830
      %v6832 = vpop.f32.mrf.mxu0
      %6833 = vmatprep.mubr.bf16.mxu0 0
      %6834 = vmatmul.mubr.bf16.gmra.mxu0 %v6337
      %v6835 = vpop.f32.mrf.mxu0
      %v6836 = vadd.f32 %v6675, %v6835
      %v6837 = vpop.f32.mrf.mxu0
      %v6838 = vpop.f32.mrf.mxu0
      %v6839 = vadd.f32 %v6678, %v6838
      %v6840 = vpop.f32.mrf.mxu0
      %6841 = vmatprep.mubr.bf16.mxu0 0
      %6842 = vmatmul.mubr.bf16.gmra.mxu0 %v6340
      %v6843 = vpop.f32.mrf.mxu0
      %v6844 = vadd.f32 %v6683, %v6843
      %v6845 = vpop.f32.mrf.mxu0
      %v6846 = vpop.f32.mrf.mxu0
      %v6847 = vadd.f32 %v6686, %v6846
      %v6848 = vpop.f32.mrf.mxu0
      %6849 = vmatprep.mubr.bf16.mxu0 0
      %6850 = vmatmul.mubr.bf16.gmra.mxu0 %v6343
      %v6851 = vpop.f32.mrf.mxu0
      %v6852 = vadd.f32 %v6691, %v6851
      %v6853 = vpop.f32.mrf.mxu0
      %v6854 = vpop.f32.mrf.mxu0
      %v6855 = vadd.f32 %v6694, %v6854
      %v6856 = vpop.f32.mrf.mxu0
      %6857 = vdwg.mxu0
      %v6922 = vunpack.c.l.b16 %v5911
      %v6923 = vunpack.c.h.b16 %v5911
      %v6924 = vunpack.c.l.b16 %v5912
      %v6925 = vunpack.c.l.b16 %v5913
      %v6926 = vunpack.c.h.b16 %v5913
      %v6927 = vunpack.c.l.b16 %v5914
      %v6928 = vunpack.c.l.b16 %v5915
      %v6929 = vunpack.c.h.b16 %v5915
      %v6930 = vunpack.c.l.b16 %v5916
      %v6931 = vunpack.c.l.b16 %v5917
      %v6932 = vunpack.c.h.b16 %v5917
      %v6933 = vunpack.c.l.b16 %v5918
      %v6934 = vunpack.c.l.b16 %v5919
      %v6935 = vunpack.c.h.b16 %v5919
      %v6936 = vunpack.c.l.b16 %v5920
      %v6937 = vunpack.c.l.b16 %v5921
      %v6938 = vunpack.c.h.b16 %v5921
      %v6939 = vunpack.c.l.b16 %v5922
      %v6940 = vunpack.c.l.b16 %v5923
      %v6941 = vunpack.c.h.b16 %v5923
      %v6942 = vunpack.c.l.b16 %v5924
      %v6943 = vunpack.c.l.b16 %v5925
      %v6944 = vunpack.c.h.b16 %v5925
      %v6945 = vunpack.c.l.b16 %v5926
      %v6946 = vunpack.c.l.b16 %v5927
      %v6947 = vunpack.c.h.b16 %v5927
      %v6948 = vunpack.c.l.b16 %v5928
      %v6949 = vunpack.c.l.b16 %v5929
      %v6950 = vunpack.c.h.b16 %v5929
      %v6951 = vunpack.c.l.b16 %v5930
      %v6952 = vunpack.c.l.b16 %v5931
      %v6953 = vunpack.c.h.b16 %v5931
      %v6954 = vunpack.c.l.b16 %v5932
      %v6955 = vunpack.c.l.b16 %v5933
      %v6956 = vunpack.c.h.b16 %v5933
      %v6957 = vunpack.c.l.b16 %v5934
      %v6958 = vunpack.c.l.b16 %v5935
      %v6959 = vunpack.c.h.b16 %v5935
      %v6960 = vunpack.c.l.b16 %v5936
      %v6961 = vunpack.c.l.b16 %v5937
      %v6962 = vunpack.c.h.b16 %v5937
      %v6963 = vunpack.c.l.b16 %v5938
      %v6964 = vunpack.c.l.b16 %v5939
      %v6965 = vunpack.c.h.b16 %v5939
      %v6966 = vunpack.c.l.b16 %v5940
      %v6967 = vunpack.c.l.b16 %v5941
      %v6968 = vunpack.c.h.b16 %v5941
      %v6969 = vunpack.c.l.b16 %v5942
      %v6970 = vunpack.c.l.b16 %v5943
      %v6971 = vunpack.c.h.b16 %v5943
      %v6972 = vunpack.c.l.b16 %v5944
      %v6973 = vunpack.c.l.b16 %v5945
      %v6974 = vunpack.c.h.b16 %v5945
      %v6975 = vunpack.c.l.b16 %v5946
      %v6976 = vunpack.c.l.b16 %v5947
      %v6977 = vunpack.c.h.b16 %v5947
      %v6978 = vunpack.c.l.b16 %v5948
      %v6979 = vunpack.c.l.b16 %v5949
      %v6980 = vunpack.c.h.b16 %v5949
      %v6981 = vunpack.c.l.b16 %v5950
      %v6982 = vunpack.c.l.b16 %v5951
      %v6983 = vunpack.c.h.b16 %v5951
      %v6984 = vunpack.c.l.b16 %v5952
      %v6985 = vunpack.c.l.b16 %v5953
      %v6986 = vunpack.c.h.b16 %v5953
      %v6987 = vunpack.c.l.b16 %v5954
      %v6988 = vunpack.c.l.b16 %v5955
      %v6989 = vunpack.c.h.b16 %v5955
      %v6990 = vunpack.c.l.b16 %v5956
      %v6991 = vunpack.c.l.b16 %v5957
      %v6992 = vunpack.c.h.b16 %v5957
      %v6993 = vunpack.c.l.b16 %v5958
      %v6994 = vunpack.c.l.b16 %v5959
      %v6995 = vunpack.c.h.b16 %v5959
      %v6996 = vunpack.c.l.b16 %v5960
      %v6997 = vunpack.c.l.b16 %v5961
      %v6998 = vunpack.c.h.b16 %v5961
      %v6999 = vunpack.c.l.b16 %v5962
      %v7000 = vunpack.c.l.b16 %v5963
      %v7001 = vunpack.c.h.b16 %v5963
      %v7002 = vunpack.c.l.b16 %v5964
      %v7003 = vunpack.c.l.b16 %v5965
      %v7004 = vunpack.c.h.b16 %v5965
      %v7005 = vunpack.c.l.b16 %v5966
      %v7006 = vunpack.c.l.b16 %v5967
      %v7007 = vunpack.c.h.b16 %v5967
      %v7008 = vunpack.c.l.b16 %v5968
      %v7009 = vunpack.c.l.b16 %v5969
      %v7010 = vunpack.c.h.b16 %v5969
      %v7011 = vunpack.c.l.b16 %v5970
      %v7012 = vunpack.c.l.b16 %v5971
      %v7013 = vunpack.c.h.b16 %v5971
      %v7014 = vunpack.c.l.b16 %v5972
      %v7015 = vunpack.c.l.b16 %v5973
      %v7016 = vunpack.c.h.b16 %v5973
      %v7017 = vunpack.c.l.b16 %v5974
      %v7018 = vpack.c.b16 %v6925, %v6922
      %v7019 = vpack.c.b16 %v6926, %v6923
      %v7020 = vpack.c.b16 %v6927, %v6924
      %v7021 = vpack.c.b16 %v6931, %v6928
      %v7022 = vpack.c.b16 %v6932, %v6929
      %v7023 = vpack.c.b16 %v6933, %v6930
      %v7024 = vpack.c.b16 %v6937, %v6934
      %v7025 = vpack.c.b16 %v6938, %v6935
      %v7026 = vpack.c.b16 %v6939, %v6936
      %v7027 = vpack.c.b16 %v6943, %v6940
      %v7028 = vpack.c.b16 %v6944, %v6941
      %v7029 = vpack.c.b16 %v6945, %v6942
      %v7030 = vpack.c.b16 %v6949, %v6946
      %v7031 = vpack.c.b16 %v6950, %v6947
      %v7032 = vpack.c.b16 %v6951, %v6948
      %v7033 = vpack.c.b16 %v6955, %v6952
      %v7034 = vpack.c.b16 %v6956, %v6953
      %v7035 = vpack.c.b16 %v6957, %v6954
      %v7036 = vpack.c.b16 %v6961, %v6958
      %v7037 = vpack.c.b16 %v6962, %v6959
      %v7038 = vpack.c.b16 %v6963, %v6960
      %v7039 = vpack.c.b16 %v6967, %v6964
      %v7040 = vpack.c.b16 %v6968, %v6965
      %v7041 = vpack.c.b16 %v6969, %v6966
      %v7042 = vpack.c.b16 %v6973, %v6970
      %v7043 = vpack.c.b16 %v6974, %v6971
      %v7044 = vpack.c.b16 %v6975, %v6972
      %v7045 = vpack.c.b16 %v6979, %v6976
      %v7046 = vpack.c.b16 %v6980, %v6977
      %v7047 = vpack.c.b16 %v6981, %v6978
      %v7048 = vpack.c.b16 %v6985, %v6982
      %v7049 = vpack.c.b16 %v6986, %v6983
      %v7050 = vpack.c.b16 %v6987, %v6984
      %v7051 = vpack.c.b16 %v6991, %v6988
      %v7052 = vpack.c.b16 %v6992, %v6989
      %v7053 = vpack.c.b16 %v6993, %v6990
      %v7054 = vpack.c.b16 %v6997, %v6994
      %v7055 = vpack.c.b16 %v6998, %v6995
      %v7056 = vpack.c.b16 %v6999, %v6996
      %v7057 = vpack.c.b16 %v7003, %v7000
      %v7058 = vpack.c.b16 %v7004, %v7001
      %v7059 = vpack.c.b16 %v7005, %v7002
      %v7060 = vpack.c.b16 %v7009, %v7006
      %v7061 = vpack.c.b16 %v7010, %v7007
      %v7062 = vpack.c.b16 %v7011, %v7008
      %v7063 = vpack.c.b16 %v7015, %v7012
      %v7064 = vpack.c.b16 %v7016, %v7013
      %v7065 = vpack.c.b16 %v7017, %v7014
      %v7162 = vunpack.c.l.b16 %v5975
      %v7163 = vunpack.c.l.b16 %v5976
      %v7164 = vunpack.c.l.b16 %v5977
      %v7165 = vunpack.c.l.b16 %v5978
      %v7166 = vunpack.c.l.b16 %v5979
      %v7167 = vunpack.c.l.b16 %v5980
      %v7168 = vunpack.c.l.b16 %v5981
      %v7169 = vunpack.c.l.b16 %v5982
      %v7170 = vunpack.c.l.b16 %v5983
      %v7171 = vunpack.c.l.b16 %v5984
      %v7172 = vunpack.c.l.b16 %v5985
      %v7173 = vunpack.c.l.b16 %v5986
      %v7174 = vunpack.c.l.b16 %v5987
      %v7175 = vunpack.c.l.b16 %v5988
      %v7176 = vunpack.c.l.b16 %v5989
      %v7177 = vunpack.c.l.b16 %v5990
      %v7178 = vunpack.c.l.b16 %v5991
      %v7179 = vunpack.c.l.b16 %v5992
      %v7180 = vunpack.c.l.b16 %v5993
      %v7181 = vunpack.c.l.b16 %v5994
      %v7182 = vunpack.c.l.b16 %v5995
      %v7183 = vunpack.c.l.b16 %v5996
      %v7184 = vunpack.c.l.b16 %v5997
      %v7185 = vunpack.c.l.b16 %v5998
      %v7186 = vunpack.c.l.b16 %v5999
      %v7187 = vunpack.c.l.b16 %v6000
      %v7188 = vunpack.c.l.b16 %v6001
      %v7189 = vunpack.c.l.b16 %v6002
      %v7190 = vunpack.c.l.b16 %v6003
      %v7191 = vunpack.c.l.b16 %v6004
      %v7192 = vunpack.c.l.b16 %v6005
      %v7193 = vunpack.c.l.b16 %v6006
      %v7194 = vunpack.c.l.b16 %v6007
      %v7195 = vunpack.c.l.b16 %v6008
      %v7196 = vunpack.c.l.b16 %v6009
      %v7197 = vunpack.c.l.b16 %v6010
      %v7198 = vunpack.c.l.b16 %v6011
      %v7199 = vunpack.c.l.b16 %v6012
      %v7200 = vunpack.c.l.b16 %v6013
      %v7201 = vunpack.c.l.b16 %v6014
      %v7202 = vunpack.c.l.b16 %v6015
      %v7203 = vunpack.c.l.b16 %v6016
      %v7204 = vunpack.c.l.b16 %v6017
      %v7205 = vunpack.c.l.b16 %v6018
      %v7206 = vunpack.c.l.b16 %v6019
      %v7207 = vunpack.c.l.b16 %v6020
      %v7208 = vunpack.c.l.b16 %v6021
      %v7209 = vunpack.c.l.b16 %v6022
      %v7210 = vpack.c.b16 %v7163, %v7162
      %v7211 = vpack.c.b16 %v7165, %v7164
      %v7212 = vpack.c.b16 %v7167, %v7166
      %v7213 = vpack.c.b16 %v7169, %v7168
      %v7214 = vpack.c.b16 %v7171, %v7170
      %v7215 = vpack.c.b16 %v7173, %v7172
      %v7216 = vpack.c.b16 %v7175, %v7174
      %v7217 = vpack.c.b16 %v7177, %v7176
      %v7218 = vpack.c.b16 %v7179, %v7178
      %v7219 = vpack.c.b16 %v7181, %v7180
      %v7220 = vpack.c.b16 %v7183, %v7182
      %v7221 = vpack.c.b16 %v7185, %v7184
      %v7222 = vpack.c.b16 %v7187, %v7186
      %v7223 = vpack.c.b16 %v7189, %v7188
      %v7224 = vpack.c.b16 %v7191, %v7190
      %v7225 = vpack.c.b16 %v7193, %v7192
      %v7226 = vpack.c.b16 %v7195, %v7194
      %v7227 = vpack.c.b16 %v7197, %v7196
      %v7228 = vpack.c.b16 %v7199, %v7198
      %v7229 = vpack.c.b16 %v7201, %v7200
      %v7230 = vpack.c.b16 %v7203, %v7202
      %v7231 = vpack.c.b16 %v7205, %v7204
      %v7232 = vpack.c.b16 %v7207, %v7206
      %v7233 = vpack.c.b16 %v7209, %v7208
      %7258 = vmatprep.subr.bf16.mxu0 0
      %7259 = vmatpush1.bf16.msra.mxu0 %v7217
      %7260 = vmatprep.subr.bf16.mxu0 0
      %7261 = vmatpush1.bf16.msra.mxu0 %v7216
      %7262 = vmatprep.subr.bf16.mxu0 0
      %7263 = vmatpush1.bf16.msra.mxu0 %v7215
      %7264 = vmatprep.subr.bf16.mxu0 0
      %7265 = vmatpush1.bf16.msra.mxu0 %v7214
      %7266 = vmatprep.subr.bf16.mxu0 0
      %7267 = vmatpush1.bf16.msra.mxu0 %v7213
      %7268 = vmatprep.subr.bf16.mxu0 0
      %7269 = vmatpush1.bf16.msra.mxu0 %v7212
      %7270 = vmatprep.subr.bf16.mxu0 0
      %7271 = vmatpush1.bf16.msra.mxu0 %v7211
      %7272 = vmatprep.subr.bf16.mxu0 0
      %7273 = vmatpush1.bf16.msra.mxu0 %v7210
      %7274 = vmatprep.subr.bf16.mxu0 0
      %7275 = vmatpush2.bf16.msra.mxu0 %v7225
      %7276 = vmatprep.subr.bf16.mxu0 0
      %7277 = vmatpush2.bf16.msra.mxu0 %v7224
      %7278 = vmatprep.subr.bf16.mxu0 0
      %7279 = vmatpush2.bf16.msra.mxu0 %v7223
      %7280 = vmatprep.subr.bf16.mxu0 0
      %7281 = vmatpush2.bf16.msra.mxu0 %v7222
      %7282 = vmatprep.subr.bf16.mxu0 0
      %7283 = vmatpush2.bf16.msra.mxu0 %v7221
      %7284 = vmatprep.subr.bf16.mxu0 0
      %7285 = vmatpush2.bf16.msra.mxu0 %v7220
      %7286 = vmatprep.subr.bf16.mxu0 0
      %7287 = vmatpush2.bf16.msra.mxu0 %v7219
      %7288 = vmatprep.subr.bf16.mxu0 0
      %7289 = vmatpush2.bf16.msra.mxu0 %v7218
      %7290 = vmatprep.mubr.bf16.mxu0 %v7019
      %7291 = vmatmul.mubr.bf16.gmra.mxu0 %v7018
      %v7292 = vpop.f32.mrf.mxu0
      %v7293 = vadd.f32 %v6732, %v7292
      %v7294 = vpop.f32.mrf.mxu0
      %v7295 = vpop.f32.mrf.mxu0
      %v7296 = vadd.f32 %v6735, %v7295
      %v7297 = vpop.f32.mrf.mxu0
      %7298 = vmatprep.mubr.bf16.mxu0 %v7022
      %7299 = vmatmul.mubr.bf16.gmra.mxu0 %v7021
      %v7300 = vpop.f32.mrf.mxu0
      %v7301 = vadd.f32 %v6740, %v7300
      %v7302 = vpop.f32.mrf.mxu0
      %v7303 = vpop.f32.mrf.mxu0
      %v7304 = vadd.f32 %v6743, %v7303
      %v7305 = vpop.f32.mrf.mxu0
      %7306 = vmatprep.mubr.bf16.mxu0 %v7025
      %7307 = vmatmul.mubr.bf16.gmra.mxu0 %v7024
      %v7308 = vpop.f32.mrf.mxu0
      %v7309 = vadd.f32 %v6748, %v7308
      %v7310 = vpop.f32.mrf.mxu0
      %v7311 = vpop.f32.mrf.mxu0
      %v7312 = vadd.f32 %v6751, %v7311
      %v7313 = vpop.f32.mrf.mxu0
      %7314 = vmatprep.mubr.bf16.mxu0 %v7028
      %7315 = vmatmul.mubr.bf16.gmra.mxu0 %v7027
      %v7316 = vpop.f32.mrf.mxu0
      %v7317 = vadd.f32 %v6756, %v7316
      %v7318 = vpop.f32.mrf.mxu0
      %v7319 = vpop.f32.mrf.mxu0
      %v7320 = vadd.f32 %v6759, %v7319
      %v7321 = vpop.f32.mrf.mxu0
      %7322 = vmatprep.mubr.bf16.mxu0 %v7031
      %7323 = vmatmul.mubr.bf16.gmra.mxu0 %v7030
      %v7324 = vpop.f32.mrf.mxu0
      %v7325 = vadd.f32 %v6764, %v7324
      %v7326 = vpop.f32.mrf.mxu0
      %v7327 = vpop.f32.mrf.mxu0
      %v7328 = vadd.f32 %v6767, %v7327
      %v7329 = vpop.f32.mrf.mxu0
      %7330 = vmatprep.mubr.bf16.mxu0 %v7034
      %7331 = vmatmul.mubr.bf16.gmra.mxu0 %v7033
      %v7332 = vpop.f32.mrf.mxu0
      %v7333 = vadd.f32 %v6772, %v7332
      %v7334 = vpop.f32.mrf.mxu0
      %v7335 = vpop.f32.mrf.mxu0
      %v7336 = vadd.f32 %v6775, %v7335
      %v7337 = vpop.f32.mrf.mxu0
      %7338 = vmatprep.mubr.bf16.mxu0 %v7037
      %7339 = vmatmul.mubr.bf16.gmra.mxu0 %v7036
      %v7340 = vpop.f32.mrf.mxu0
      %v7341 = vadd.f32 %v6780, %v7340
      %v7342 = vpop.f32.mrf.mxu0
      %v7343 = vpop.f32.mrf.mxu0
      %v7344 = vadd.f32 %v6783, %v7343
      %v7345 = vpop.f32.mrf.mxu0
      %7346 = vmatprep.mubr.bf16.mxu0 %v7040
      %7347 = vmatmul.mubr.bf16.gmra.mxu0 %v7039
      %v7348 = vpop.f32.mrf.mxu0
      %v7349 = vadd.f32 %v6788, %v7348
      %v7350 = vpop.f32.mrf.mxu0
      %v7351 = vpop.f32.mrf.mxu0
      %v7352 = vadd.f32 %v6791, %v7351
      %v7353 = vpop.f32.mrf.mxu0
      %7354 = vmatprep.mubr.bf16.mxu0 %v7043
      %7355 = vmatmul.mubr.bf16.gmra.mxu0 %v7042
      %v7356 = vpop.f32.mrf.mxu0
      %v7357 = vadd.f32 %v6796, %v7356
      %v7358 = vpop.f32.mrf.mxu0
      %v7359 = vpop.f32.mrf.mxu0
      %v7360 = vadd.f32 %v6799, %v7359
      %v7361 = vpop.f32.mrf.mxu0
      %7362 = vmatprep.mubr.bf16.mxu0 %v7046
      %7363 = vmatmul.mubr.bf16.gmra.mxu0 %v7045
      %v7364 = vpop.f32.mrf.mxu0
      %v7365 = vadd.f32 %v6804, %v7364
      %v7366 = vpop.f32.mrf.mxu0
      %v7367 = vpop.f32.mrf.mxu0
      %v7368 = vadd.f32 %v6807, %v7367
      %v7369 = vpop.f32.mrf.mxu0
      %7370 = vmatprep.mubr.bf16.mxu0 %v7049
      %7371 = vmatmul.mubr.bf16.gmra.mxu0 %v7048
      %v7372 = vpop.f32.mrf.mxu0
      %v7373 = vadd.f32 %v6812, %v7372
      %v7374 = vpop.f32.mrf.mxu0
      %v7375 = vpop.f32.mrf.mxu0
      %v7376 = vadd.f32 %v6815, %v7375
      %v7377 = vpop.f32.mrf.mxu0
      %7378 = vmatprep.mubr.bf16.mxu0 %v7052
      %7379 = vmatmul.mubr.bf16.gmra.mxu0 %v7051
      %v7380 = vpop.f32.mrf.mxu0
      %v7381 = vadd.f32 %v6820, %v7380
      %v7382 = vpop.f32.mrf.mxu0
      %v7383 = vpop.f32.mrf.mxu0
      %v7384 = vadd.f32 %v6823, %v7383
      %v7385 = vpop.f32.mrf.mxu0
      %7386 = vmatprep.mubr.bf16.mxu0 %v7055
      %7387 = vmatmul.mubr.bf16.gmra.mxu0 %v7054
      %v7388 = vpop.f32.mrf.mxu0
      %v7389 = vadd.f32 %v6828, %v7388
      %v7390 = vpop.f32.mrf.mxu0
      %v7391 = vpop.f32.mrf.mxu0
      %v7392 = vadd.f32 %v6831, %v7391
      %v7393 = vpop.f32.mrf.mxu0
      %7394 = vmatprep.mubr.bf16.mxu0 %v7058
      %7395 = vmatmul.mubr.bf16.gmra.mxu0 %v7057
      %v7396 = vpop.f32.mrf.mxu0
      %v7397 = vadd.f32 %v6836, %v7396
      %v7398 = vpop.f32.mrf.mxu0
      %v7399 = vpop.f32.mrf.mxu0
      %v7400 = vadd.f32 %v6839, %v7399
      %v7401 = vpop.f32.mrf.mxu0
      %7402 = vmatprep.mubr.bf16.mxu0 %v7061
      %7403 = vmatmul.mubr.bf16.gmra.mxu0 %v7060
      %v7404 = vpop.f32.mrf.mxu0
      %v7405 = vadd.f32 %v6844, %v7404
      %v7406 = vpop.f32.mrf.mxu0
      %v7407 = vpop.f32.mrf.mxu0
      %v7408 = vadd.f32 %v6847, %v7407
      %v7409 = vpop.f32.mrf.mxu0
      %7410 = vmatprep.mubr.bf16.mxu0 %v7064
      %7411 = vmatmul.mubr.bf16.gmra.mxu0 %v7063
      %v7412 = vpop.f32.mrf.mxu0
      %v7413 = vadd.f32 %v6852, %v7412
      %v7414 = vpop.f32.mrf.mxu0
      %v7415 = vpop.f32.mrf.mxu0
      %v7416 = vadd.f32 %v6855, %v7415
      %v7417 = vpop.f32.mrf.mxu0
      %7418 = vdwg.mxu0
      %7419 = vmatprep.subr.bf16.mxu0 0
      %7420 = vmatpush1.bf16.msra.mxu0 %v7233
      %7421 = vmatprep.subr.bf16.mxu0 0
      %7422 = vmatpush1.bf16.msra.mxu0 %v7232
      %7423 = vmatprep.subr.bf16.mxu0 0
      %7424 = vmatpush1.bf16.msra.mxu0 %v7231
      %7425 = vmatprep.subr.bf16.mxu0 0
      %7426 = vmatpush1.bf16.msra.mxu0 %v7230
      %7427 = vmatprep.subr.bf16.mxu0 0
      %7428 = vmatpush1.bf16.msra.mxu0 %v7229
      %7429 = vmatprep.subr.bf16.mxu0 0
      %7430 = vmatpush1.bf16.msra.mxu0 %v7228
      %7431 = vmatprep.subr.bf16.mxu0 0
      %7432 = vmatpush1.bf16.msra.mxu0 %v7227
      %7433 = vmatprep.subr.bf16.mxu0 0
      %7434 = vmatpush1.bf16.msra.mxu0 %v7226
      %7435 = vmatprep.subr.bf16.mxu0 0
      %7436 = vmatpush2.bf16.msra.mxu0 0
      %7437 = vmatprep.subr.bf16.mxu0 0
      %7438 = vmatpush2.bf16.msra.mxu0 0
      %7439 = vmatprep.subr.bf16.mxu0 0
      %7440 = vmatpush2.bf16.msra.mxu0 0
      %7441 = vmatprep.subr.bf16.mxu0 0
      %7442 = vmatpush2.bf16.msra.mxu0 0
      %7443 = vmatprep.subr.bf16.mxu0 0
      %7444 = vmatpush2.bf16.msra.mxu0 0
      %7445 = vmatprep.subr.bf16.mxu0 0
      %7446 = vmatpush2.bf16.msra.mxu0 0
      %7447 = vmatprep.subr.bf16.mxu0 0
      %7448 = vmatpush2.bf16.msra.mxu0 0
      %7449 = vmatprep.subr.bf16.mxu0 0
      %7450 = vmatpush2.bf16.msra.mxu0 0
      %7451 = vmatprep.mubr.bf16.mxu0 0
      %7452 = vmatmul.mubr.bf16.gmra.mxu0 %v7020
      %v7453 = vpop.f32.mrf.mxu0
      %v7454 = vadd.f32 %v7293, %v7453
      %v7455 = vpop.f32.mrf.mxu0
      %v7456 = vpop.f32.mrf.mxu0
      %v7457 = vadd.f32 %v7296, %v7456
      %v7458 = vpop.f32.mrf.mxu0
      %7459 = vmatprep.mubr.bf16.mxu0 0
      %7460 = vmatmul.mubr.bf16.gmra.mxu0 %v7023
      %v7461 = vpop.f32.mrf.mxu0
      %v7462 = vadd.f32 %v7301, %v7461
      %v7463 = vpop.f32.mrf.mxu0
      %v7464 = vpop.f32.mrf.mxu0
      %v7465 = vadd.f32 %v7304, %v7464
      %v7466 = vpop.f32.mrf.mxu0
      %7467 = vmatprep.mubr.bf16.mxu0 0
      %7468 = vmatmul.mubr.bf16.gmra.mxu0 %v7026
      %v7469 = vpop.f32.mrf.mxu0
      %v7470 = vadd.f32 %v7309, %v7469
      %v7471 = vpop.f32.mrf.mxu0
      %v7472 = vpop.f32.mrf.mxu0
      %v7473 = vadd.f32 %v7312, %v7472
      %v7474 = vpop.f32.mrf.mxu0
      %7475 = vmatprep.mubr.bf16.mxu0 0
      %7476 = vmatmul.mubr.bf16.gmra.mxu0 %v7029
      %v7477 = vpop.f32.mrf.mxu0
      %v7478 = vadd.f32 %v7317, %v7477
      %v7479 = vpop.f32.mrf.mxu0
      %v7480 = vpop.f32.mrf.mxu0
      %v7481 = vadd.f32 %v7320, %v7480
      %v7482 = vpop.f32.mrf.mxu0
      %7483 = vmatprep.mubr.bf16.mxu0 0
      %7484 = vmatmul.mubr.bf16.gmra.mxu0 %v7032
      %v7485 = vpop.f32.mrf.mxu0
      %v7486 = vadd.f32 %v7325, %v7485
      %v7487 = vpop.f32.mrf.mxu0
      %v7488 = vpop.f32.mrf.mxu0
      %v7489 = vadd.f32 %v7328, %v7488
      %v7490 = vpop.f32.mrf.mxu0
      %7491 = vmatprep.mubr.bf16.mxu0 0
      %7492 = vmatmul.mubr.bf16.gmra.mxu0 %v7035
      %v7493 = vpop.f32.mrf.mxu0
      %v7494 = vadd.f32 %v7333, %v7493
      %v7495 = vpop.f32.mrf.mxu0
      %v7496 = vpop.f32.mrf.mxu0
      %v7497 = vadd.f32 %v7336, %v7496
      %v7498 = vpop.f32.mrf.mxu0
      %7499 = vmatprep.mubr.bf16.mxu0 0
      %7500 = vmatmul.mubr.bf16.gmra.mxu0 %v7038
      %v7501 = vpop.f32.mrf.mxu0
      %v7502 = vadd.f32 %v7341, %v7501
      %v7503 = vpop.f32.mrf.mxu0
      %v7504 = vpop.f32.mrf.mxu0
      %v7505 = vadd.f32 %v7344, %v7504
      %v7506 = vpop.f32.mrf.mxu0
      %7507 = vmatprep.mubr.bf16.mxu0 0
      %7508 = vmatmul.mubr.bf16.gmra.mxu0 %v7041
      %v7509 = vpop.f32.mrf.mxu0
      %v7510 = vadd.f32 %v7349, %v7509
      %v7511 = vpop.f32.mrf.mxu0
      %v7512 = vpop.f32.mrf.mxu0
      %v7513 = vadd.f32 %v7352, %v7512
      %v7514 = vpop.f32.mrf.mxu0
      %7515 = vmatprep.mubr.bf16.mxu0 0
      %7516 = vmatmul.mubr.bf16.gmra.mxu0 %v7044
      %v7517 = vpop.f32.mrf.mxu0
      %v7518 = vadd.f32 %v7357, %v7517
      %v7519 = vpop.f32.mrf.mxu0
      %v7520 = vpop.f32.mrf.mxu0
      %v7521 = vadd.f32 %v7360, %v7520
      %v7522 = vpop.f32.mrf.mxu0
      %7523 = vmatprep.mubr.bf16.mxu0 0
      %7524 = vmatmul.mubr.bf16.gmra.mxu0 %v7047
      %v7525 = vpop.f32.mrf.mxu0
      %v7526 = vadd.f32 %v7365, %v7525
      %v7527 = vpop.f32.mrf.mxu0
      %v7528 = vpop.f32.mrf.mxu0
      %v7529 = vadd.f32 %v7368, %v7528
      %v7530 = vpop.f32.mrf.mxu0
      %7531 = vmatprep.mubr.bf16.mxu0 0
      %7532 = vmatmul.mubr.bf16.gmra.mxu0 %v7050
      %v7533 = vpop.f32.mrf.mxu0
      %v7534 = vadd.f32 %v7373, %v7533
      %v7535 = vpop.f32.mrf.mxu0
      %v7536 = vpop.f32.mrf.mxu0
      %v7537 = vadd.f32 %v7376, %v7536
      %v7538 = vpop.f32.mrf.mxu0
      %7539 = vmatprep.mubr.bf16.mxu0 0
      %7540 = vmatmul.mubr.bf16.gmra.mxu0 %v7053
      %v7541 = vpop.f32.mrf.mxu0
      %v7542 = vadd.f32 %v7381, %v7541
      %v7543 = vpop.f32.mrf.mxu0
      %v7544 = vpop.f32.mrf.mxu0
      %v7545 = vadd.f32 %v7384, %v7544
      %v7546 = vpop.f32.mrf.mxu0
      %7547 = vmatprep.mubr.bf16.mxu0 0
      %7548 = vmatmul.mubr.bf16.gmra.mxu0 %v7056
      %v7549 = vpop.f32.mrf.mxu0
      %v7550 = vadd.f32 %v7389, %v7549
      %v7551 = vpop.f32.mrf.mxu0
      %v7552 = vpop.f32.mrf.mxu0
      %v7553 = vadd.f32 %v7392, %v7552
      %v7554 = vpop.f32.mrf.mxu0
      %7555 = vmatprep.mubr.bf16.mxu0 0
      %7556 = vmatmul.mubr.bf16.gmra.mxu0 %v7059
      %v7557 = vpop.f32.mrf.mxu0
      %v7558 = vadd.f32 %v7397, %v7557
      %v7559 = vpop.f32.mrf.mxu0
      %v7560 = vpop.f32.mrf.mxu0
      %v7561 = vadd.f32 %v7400, %v7560
      %v7562 = vpop.f32.mrf.mxu0
      %7563 = vmatprep.mubr.bf16.mxu0 0
      %7564 = vmatmul.mubr.bf16.gmra.mxu0 %v7062
      %v7565 = vpop.f32.mrf.mxu0
      %v7566 = vadd.f32 %v7405, %v7565
      %v7567 = vpop.f32.mrf.mxu0
      %v7568 = vpop.f32.mrf.mxu0
      %v7569 = vadd.f32 %v7408, %v7568
      %v7570 = vpop.f32.mrf.mxu0
      %7571 = vmatprep.mubr.bf16.mxu0 0
      %7572 = vmatmul.mubr.bf16.gmra.mxu0 %v7065
      %v7573 = vpop.f32.mrf.mxu0
      %v7574 = vadd.f32 %v7413, %v7573
      %v7575 = vpop.f32.mrf.mxu0
      %v7576 = vpop.f32.mrf.mxu0
      %v7577 = vadd.f32 %v7416, %v7576
      %v7578 = vpop.f32.mrf.mxu0
      %7579 = vdwg.mxu0
      %v7580 = vld [vmem:[%s3547] sm:$0xff]
      %v7581 = vld [vmem:[%s3547 + $0x8] sm:$0xf]
      %v7582 = vld [vmem:[%s3547 + $0xc] sm:$0xff]
      %v7583 = vld [vmem:[%s3547 + $0x14] sm:$0xf]
      %v7584 = vld [vmem:[%s3547 + $0x18] sm:$0xff]
      %v7585 = vld [vmem:[%s3547 + $0x20] sm:$0xf]
      %v7586 = vld [vmem:[%s3547 + $0x24] sm:$0xff]
      %v7587 = vld [vmem:[%s3547 + $0x2c] sm:$0xf]
      %v7588 = vld [vmem:[%s3547 + $0x30] sm:$0xff]
      %v7589 = vld [vmem:[%s3547 + $0x38] sm:$0xf]
      %v7590 = vld [vmem:[%s3547 + $0x3c] sm:$0xff]
      %v7591 = vld [vmem:[%s3547 + $0x44] sm:$0xf]
      %v7592 = vld [vmem:[%s3547 + $0x48] sm:$0xff]
      %v7593 = vld [vmem:[%s3547 + $0x50] sm:$0xf]
      %v7594 = vld [vmem:[%s3547 + $0x54] sm:$0xff]
      %v7595 = vld [vmem:[%s3547 + $0x5c] sm:$0xf]
      %v7596 = vld [vmem:[%s3547 + $0x60] sm:$0xff]
      %v7597 = vld [vmem:[%s3547 + $0x68] sm:$0xf]
      %v7598 = vld [vmem:[%s3547 + $0x6c] sm:$0xff]
      %v7599 = vld [vmem:[%s3547 + $0x74] sm:$0xf]
      %v7600 = vld [vmem:[%s3547 + $0x78] sm:$0xff]
      %v7601 = vld [vmem:[%s3547 + $0x80] sm:$0xf]
      %v7602 = vld [vmem:[%s3547 + $0x84] sm:$0xff]
      %v7603 = vld [vmem:[%s3547 + $0x8c] sm:$0xf]
      %v7604 = vld [vmem:[%s3547 + $0x90] sm:$0xff]
      %v7605 = vld [vmem:[%s3547 + $0x98] sm:$0xf]
      %v7606 = vld [vmem:[%s3547 + $0x9c] sm:$0xff]
      %v7607 = vld [vmem:[%s3547 + $0xa4] sm:$0xf]
      %v7608 = vld [vmem:[%s3547 + $0xa8] sm:$0xff]
      %v7609 = vld [vmem:[%s3547 + $0xb0] sm:$0xf]
      %v7610 = vld [vmem:[%s3547 + $0xb4] sm:$0xff]
      %v7611 = vld [vmem:[%s3547 + $0xbc] sm:$0xf]
      %v7612 = vld [vmem:[%s3547 + $0xc0] sm:$0xff]
      %v7613 = vld [vmem:[%s3547 + $0xc8] sm:$0xf]
      %v7614 = vld [vmem:[%s3547 + $0xcc] sm:$0xff]
      %v7615 = vld [vmem:[%s3547 + $0xd4] sm:$0xf]
      %v7616 = vld [vmem:[%s3547 + $0xd8] sm:$0xff]
      %v7617 = vld [vmem:[%s3547 + $0xe0] sm:$0xf]
      %v7618 = vld [vmem:[%s3547 + $0xe4] sm:$0xff]
      %v7619 = vld [vmem:[%s3547 + $0xec] sm:$0xf]
      %v7620 = vld [vmem:[%s3547 + $0xf0] sm:$0xff]
      %v7621 = vld [vmem:[%s3547 + $0xf8] sm:$0xf]
      %v7622 = vld [vmem:[%s3547 + $0xfc] sm:$0xff]
      %v7623 = vld [vmem:[%s3547 + $0x104] sm:$0xf]
      %v7624 = vld [vmem:[%s3547 + $0x108] sm:$0xff]
      %v7625 = vld [vmem:[%s3547 + $0x110] sm:$0xf]
      %v7626 = vld [vmem:[%s3547 + $0x114] sm:$0xff]
      %v7627 = vld [vmem:[%s3547 + $0x11c] sm:$0xf]
      %v7628 = vld [vmem:[%s3547 + $0x120] sm:$0xff]
      %v7629 = vld [vmem:[%s3547 + $0x128] sm:$0xf]
      %v7630 = vld [vmem:[%s3547 + $0x12c] sm:$0xff]
      %v7631 = vld [vmem:[%s3547 + $0x134] sm:$0xf]
      %v7632 = vld [vmem:[%s3547 + $0x138] sm:$0xff]
      %v7633 = vld [vmem:[%s3547 + $0x140] sm:$0xf]
      %v7634 = vld [vmem:[%s3547 + $0x144] sm:$0xff]
      %v7635 = vld [vmem:[%s3547 + $0x14c] sm:$0xf]
      %v7636 = vld [vmem:[%s3547 + $0x150] sm:$0xff]
      %v7637 = vld [vmem:[%s3547 + $0x158] sm:$0xf]
      %v7638 = vld [vmem:[%s3547 + $0x15c] sm:$0xff]
      %v7639 = vld [vmem:[%s3547 + $0x164] sm:$0xf]
      %v7640 = vld [vmem:[%s3547 + $0x168] sm:$0xff]
      %v7641 = vld [vmem:[%s3547 + $0x170] sm:$0xf]
      %v7642 = vld [vmem:[%s3547 + $0x174] sm:$0xff]
      %v7643 = vld [vmem:[%s3547 + $0x17c] sm:$0xf]
      %s7644 = scalar_lea.vmem %s4, 384
      %v7645 = vld [vmem:[%s7644] sm:$0xf]
      %v7646 = vld [vmem:[%s7644 + $0x4] sm:$0xf]
      %v7647 = vld [vmem:[%s7644 + $0x8] sm:$0xf]
      %v7648 = vld [vmem:[%s7644 + $0xc] sm:$0xf]
      %v7649 = vld [vmem:[%s7644 + $0x10] sm:$0xf]
      %v7650 = vld [vmem:[%s7644 + $0x14] sm:$0xf]
      %v7651 = vld [vmem:[%s7644 + $0x18] sm:$0xf]
      %v7652 = vld [vmem:[%s7644 + $0x1c] sm:$0xf]
      %v7653 = vld [vmem:[%s7644 + $0x20] sm:$0xf]
      %v7654 = vld [vmem:[%s7644 + $0x24] sm:$0xf]
      %v7655 = vld [vmem:[%s7644 + $0x28] sm:$0xf]
      %v7656 = vld [vmem:[%s7644 + $0x2c] sm:$0xf]
      %v7657 = vld [vmem:[%s7644 + $0x30] sm:$0xf]
      %v7658 = vld [vmem:[%s7644 + $0x34] sm:$0xf]
      %v7659 = vld [vmem:[%s7644 + $0x38] sm:$0xf]
      %v7660 = vld [vmem:[%s7644 + $0x3c] sm:$0xf]
      %v7661 = vld [vmem:[%s7644 + $0x40] sm:$0xf]
      %v7662 = vld [vmem:[%s7644 + $0x44] sm:$0xf]
      %v7663 = vld [vmem:[%s7644 + $0x48] sm:$0xf]
      %v7664 = vld [vmem:[%s7644 + $0x4c] sm:$0xf]
      %v7665 = vld [vmem:[%s7644 + $0x50] sm:$0xf]
      %v7666 = vld [vmem:[%s7644 + $0x54] sm:$0xf]
      %v7667 = vld [vmem:[%s7644 + $0x58] sm:$0xf]
      %v7668 = vld [vmem:[%s7644 + $0x5c] sm:$0xf]
      %v7669 = vld [vmem:[%s7644 + $0x60] sm:$0xf]
      %v7670 = vld [vmem:[%s7644 + $0x64] sm:$0xf]
      %v7671 = vld [vmem:[%s7644 + $0x68] sm:$0xf]
      %v7672 = vld [vmem:[%s7644 + $0x6c] sm:$0xf]
      %v7673 = vld [vmem:[%s7644 + $0x70] sm:$0xf]
      %v7674 = vld [vmem:[%s7644 + $0x74] sm:$0xf]
      %v7675 = vld [vmem:[%s7644 + $0x78] sm:$0xf]
      %v7676 = vld [vmem:[%s7644 + $0x7c] sm:$0xf]
      %v7677 = vld [vmem:[%s7644 + $0x80] sm:$0xf]
      %v7678 = vld [vmem:[%s7644 + $0x84] sm:$0xf]
      %v7679 = vld [vmem:[%s7644 + $0x88] sm:$0xf]
      %v7680 = vld [vmem:[%s7644 + $0x8c] sm:$0xf]
      %v7681 = vld [vmem:[%s7644 + $0x90] sm:$0xf]
      %v7682 = vld [vmem:[%s7644 + $0x94] sm:$0xf]
      %v7683 = vld [vmem:[%s7644 + $0x98] sm:$0xf]
      %v7684 = vld [vmem:[%s7644 + $0x9c] sm:$0xf]
      %v7685 = vld [vmem:[%s7644 + $0xa0] sm:$0xf]
      %v7686 = vld [vmem:[%s7644 + $0xa4] sm:$0xf]
      %v7687 = vld [vmem:[%s7644 + $0xa8] sm:$0xf]
      %v7688 = vld [vmem:[%s7644 + $0xac] sm:$0xf]
      %v7689 = vld [vmem:[%s7644 + $0xb0] sm:$0xf]
      %v7690 = vld [vmem:[%s7644 + $0xb4] sm:$0xf]
      %v7691 = vld [vmem:[%s7644 + $0xb8] sm:$0xf]
      %v7692 = vld [vmem:[%s7644 + $0xbc] sm:$0xf]
      %v7757 = vunpack.c.l.b16 %v7580
      %v7758 = vunpack.c.h.b16 %v7580
      %v7759 = vunpack.c.l.b16 %v7581
      %v7760 = vunpack.c.l.b16 %v7582
      %v7761 = vunpack.c.h.b16 %v7582
      %v7762 = vunpack.c.l.b16 %v7583
      %v7763 = vunpack.c.l.b16 %v7584
      %v7764 = vunpack.c.h.b16 %v7584
      %v7765 = vunpack.c.l.b16 %v7585
      %v7766 = vunpack.c.l.b16 %v7586
      %v7767 = vunpack.c.h.b16 %v7586
      %v7768 = vunpack.c.l.b16 %v7587
      %v7769 = vunpack.c.l.b16 %v7588
      %v7770 = vunpack.c.h.b16 %v7588
      %v7771 = vunpack.c.l.b16 %v7589
      %v7772 = vunpack.c.l.b16 %v7590
      %v7773 = vunpack.c.h.b16 %v7590
      %v7774 = vunpack.c.l.b16 %v7591
      %v7775 = vunpack.c.l.b16 %v7592
      %v7776 = vunpack.c.h.b16 %v7592
      %v7777 = vunpack.c.l.b16 %v7593
      %v7778 = vunpack.c.l.b16 %v7594
      %v7779 = vunpack.c.h.b16 %v7594
      %v7780 = vunpack.c.l.b16 %v7595
      %v7781 = vunpack.c.l.b16 %v7596
      %v7782 = vunpack.c.h.b16 %v7596
      %v7783 = vunpack.c.l.b16 %v7597
      %v7784 = vunpack.c.l.b16 %v7598
      %v7785 = vunpack.c.h.b16 %v7598
      %v7786 = vunpack.c.l.b16 %v7599
      %v7787 = vunpack.c.l.b16 %v7600
      %v7788 = vunpack.c.h.b16 %v7600
      %v7789 = vunpack.c.l.b16 %v7601
      %v7790 = vunpack.c.l.b16 %v7602
      %v7791 = vunpack.c.h.b16 %v7602
      %v7792 = vunpack.c.l.b16 %v7603
      %v7793 = vunpack.c.l.b16 %v7604
      %v7794 = vunpack.c.h.b16 %v7604
      %v7795 = vunpack.c.l.b16 %v7605
      %v7796 = vunpack.c.l.b16 %v7606
      %v7797 = vunpack.c.h.b16 %v7606
      %v7798 = vunpack.c.l.b16 %v7607
      %v7799 = vunpack.c.l.b16 %v7608
      %v7800 = vunpack.c.h.b16 %v7608
      %v7801 = vunpack.c.l.b16 %v7609
      %v7802 = vunpack.c.l.b16 %v7610
      %v7803 = vunpack.c.h.b16 %v7610
      %v7804 = vunpack.c.l.b16 %v7611
      %v7805 = vunpack.c.l.b16 %v7612
      %v7806 = vunpack.c.h.b16 %v7612
      %v7807 = vunpack.c.l.b16 %v7613
      %v7808 = vunpack.c.l.b16 %v7614
      %v7809 = vunpack.c.h.b16 %v7614
      %v7810 = vunpack.c.l.b16 %v7615
      %v7811 = vunpack.c.l.b16 %v7616
      %v7812 = vunpack.c.h.b16 %v7616
      %v7813 = vunpack.c.l.b16 %v7617
      %v7814 = vunpack.c.l.b16 %v7618
      %v7815 = vunpack.c.h.b16 %v7618
      %v7816 = vunpack.c.l.b16 %v7619
      %v7817 = vunpack.c.l.b16 %v7620
      %v7818 = vunpack.c.h.b16 %v7620
      %v7819 = vunpack.c.l.b16 %v7621
      %v7820 = vunpack.c.l.b16 %v7622
      %v7821 = vunpack.c.h.b16 %v7622
      %v7822 = vunpack.c.l.b16 %v7623
      %v7823 = vunpack.c.l.b16 %v7624
      %v7824 = vunpack.c.h.b16 %v7624
      %v7825 = vunpack.c.l.b16 %v7625
      %v7826 = vunpack.c.l.b16 %v7626
      %v7827 = vunpack.c.h.b16 %v7626
      %v7828 = vunpack.c.l.b16 %v7627
      %v7829 = vunpack.c.l.b16 %v7628
      %v7830 = vunpack.c.h.b16 %v7628
      %v7831 = vunpack.c.l.b16 %v7629
      %v7832 = vunpack.c.l.b16 %v7630
      %v7833 = vunpack.c.h.b16 %v7630
      %v7834 = vunpack.c.l.b16 %v7631
      %v7835 = vunpack.c.l.b16 %v7632
      %v7836 = vunpack.c.h.b16 %v7632
      %v7837 = vunpack.c.l.b16 %v7633
      %v7838 = vunpack.c.l.b16 %v7634
      %v7839 = vunpack.c.h.b16 %v7634
      %v7840 = vunpack.c.l.b16 %v7635
      %v7841 = vunpack.c.l.b16 %v7636
      %v7842 = vunpack.c.h.b16 %v7636
      %v7843 = vunpack.c.l.b16 %v7637
      %v7844 = vunpack.c.l.b16 %v7638
      %v7845 = vunpack.c.h.b16 %v7638
      %v7846 = vunpack.c.l.b16 %v7639
      %v7847 = vunpack.c.l.b16 %v7640
      %v7848 = vunpack.c.h.b16 %v7640
      %v7849 = vunpack.c.l.b16 %v7641
      %v7850 = vunpack.c.l.b16 %v7642
      %v7851 = vunpack.c.h.b16 %v7642
      %v7852 = vunpack.c.l.b16 %v7643
      %v7853 = vpack.c.b16 %v7760, %v7757
      %v7854 = vpack.c.b16 %v7761, %v7758
      %v7855 = vpack.c.b16 %v7762, %v7759
      %v7856 = vpack.c.b16 %v7766, %v7763
      %v7857 = vpack.c.b16 %v7767, %v7764
      %v7858 = vpack.c.b16 %v7768, %v7765
      %v7859 = vpack.c.b16 %v7772, %v7769
      %v7860 = vpack.c.b16 %v7773, %v7770
      %v7861 = vpack.c.b16 %v7774, %v7771
      %v7862 = vpack.c.b16 %v7778, %v7775
      %v7863 = vpack.c.b16 %v7779, %v7776
      %v7864 = vpack.c.b16 %v7780, %v7777
      %v7865 = vpack.c.b16 %v7784, %v7781
      %v7866 = vpack.c.b16 %v7785, %v7782
      %v7867 = vpack.c.b16 %v7786, %v7783
      %v7868 = vpack.c.b16 %v7790, %v7787
      %v7869 = vpack.c.b16 %v7791, %v7788
      %v7870 = vpack.c.b16 %v7792, %v7789
      %v7871 = vpack.c.b16 %v7796, %v7793
      %v7872 = vpack.c.b16 %v7797, %v7794
      %v7873 = vpack.c.b16 %v7798, %v7795
      %v7874 = vpack.c.b16 %v7802, %v7799
      %v7875 = vpack.c.b16 %v7803, %v7800
      %v7876 = vpack.c.b16 %v7804, %v7801
      %v7877 = vpack.c.b16 %v7808, %v7805
      %v7878 = vpack.c.b16 %v7809, %v7806
      %v7879 = vpack.c.b16 %v7810, %v7807
      %v7880 = vpack.c.b16 %v7814, %v7811
      %v7881 = vpack.c.b16 %v7815, %v7812
      %v7882 = vpack.c.b16 %v7816, %v7813
      %v7883 = vpack.c.b16 %v7820, %v7817
      %v7884 = vpack.c.b16 %v7821, %v7818
      %v7885 = vpack.c.b16 %v7822, %v7819
      %v7886 = vpack.c.b16 %v7826, %v7823
      %v7887 = vpack.c.b16 %v7827, %v7824
      %v7888 = vpack.c.b16 %v7828, %v7825
      %v7889 = vpack.c.b16 %v7832, %v7829
      %v7890 = vpack.c.b16 %v7833, %v7830
      %v7891 = vpack.c.b16 %v7834, %v7831
      %v7892 = vpack.c.b16 %v7838, %v7835
      %v7893 = vpack.c.b16 %v7839, %v7836
      %v7894 = vpack.c.b16 %v7840, %v7837
      %v7895 = vpack.c.b16 %v7844, %v7841
      %v7896 = vpack.c.b16 %v7845, %v7842
      %v7897 = vpack.c.b16 %v7846, %v7843
      %v7898 = vpack.c.b16 %v7850, %v7847
      %v7899 = vpack.c.b16 %v7851, %v7848
      %v7900 = vpack.c.b16 %v7852, %v7849
      %v7997 = vunpack.c.l.b16 %v7645
      %v7998 = vunpack.c.l.b16 %v7646
      %v7999 = vunpack.c.l.b16 %v7647
      %v8000 = vunpack.c.l.b16 %v7648
      %v8001 = vunpack.c.l.b16 %v7649
      %v8002 = vunpack.c.l.b16 %v7650
      %v8003 = vunpack.c.l.b16 %v7651
      %v8004 = vunpack.c.l.b16 %v7652
      %v8005 = vunpack.c.l.b16 %v7653
      %v8006 = vunpack.c.l.b16 %v7654
      %v8007 = vunpack.c.l.b16 %v7655
      %v8008 = vunpack.c.l.b16 %v7656
      %v8009 = vunpack.c.l.b16 %v7657
      %v8010 = vunpack.c.l.b16 %v7658
      %v8011 = vunpack.c.l.b16 %v7659
      %v8012 = vunpack.c.l.b16 %v7660
      %v8013 = vunpack.c.l.b16 %v7661
      %v8014 = vunpack.c.l.b16 %v7662
      %v8015 = vunpack.c.l.b16 %v7663
      %v8016 = vunpack.c.l.b16 %v7664
      %v8017 = vunpack.c.l.b16 %v7665
      %v8018 = vunpack.c.l.b16 %v7666
      %v8019 = vunpack.c.l.b16 %v7667
      %v8020 = vunpack.c.l.b16 %v7668
      %v8021 = vunpack.c.l.b16 %v7669
      %v8022 = vunpack.c.l.b16 %v7670
      %v8023 = vunpack.c.l.b16 %v7671
      %v8024 = vunpack.c.l.b16 %v7672
      %v8025 = vunpack.c.l.b16 %v7673
      %v8026 = vunpack.c.l.b16 %v7674
      %v8027 = vunpack.c.l.b16 %v7675
      %v8028 = vunpack.c.l.b16 %v7676
      %v8029 = vunpack.c.l.b16 %v7677
      %v8030 = vunpack.c.l.b16 %v7678
      %v8031 = vunpack.c.l.b16 %v7679
      %v8032 = vunpack.c.l.b16 %v7680
      %v8033 = vunpack.c.l.b16 %v7681
      %v8034 = vunpack.c.l.b16 %v7682
      %v8035 = vunpack.c.l.b16 %v7683
      %v8036 = vunpack.c.l.b16 %v7684
      %v8037 = vunpack.c.l.b16 %v7685
      %v8038 = vunpack.c.l.b16 %v7686
      %v8039 = vunpack.c.l.b16 %v7687
      %v8040 = vunpack.c.l.b16 %v7688
      %v8041 = vunpack.c.l.b16 %v7689
      %v8042 = vunpack.c.l.b16 %v7690
      %v8043 = vunpack.c.l.b16 %v7691
      %v8044 = vunpack.c.l.b16 %v7692
      %v8045 = vpack.c.b16 %v7998, %v7997
      %v8046 = vpack.c.b16 %v8000, %v7999
      %v8047 = vpack.c.b16 %v8002, %v8001
      %v8048 = vpack.c.b16 %v8004, %v8003
      %v8049 = vpack.c.b16 %v8006, %v8005
      %v8050 = vpack.c.b16 %v8008, %v8007
      %v8051 = vpack.c.b16 %v8010, %v8009
      %v8052 = vpack.c.b16 %v8012, %v8011
      %v8053 = vpack.c.b16 %v8014, %v8013
      %v8054 = vpack.c.b16 %v8016, %v8015
      %v8055 = vpack.c.b16 %v8018, %v8017
      %v8056 = vpack.c.b16 %v8020, %v8019
      %v8057 = vpack.c.b16 %v8022, %v8021
      %v8058 = vpack.c.b16 %v8024, %v8023
      %v8059 = vpack.c.b16 %v8026, %v8025
      %v8060 = vpack.c.b16 %v8028, %v8027
      %v8061 = vpack.c.b16 %v8030, %v8029
      %v8062 = vpack.c.b16 %v8032, %v8031
      %v8063 = vpack.c.b16 %v8034, %v8033
      %v8064 = vpack.c.b16 %v8036, %v8035
      %v8065 = vpack.c.b16 %v8038, %v8037
      %v8066 = vpack.c.b16 %v8040, %v8039
      %v8067 = vpack.c.b16 %v8042, %v8041
      %v8068 = vpack.c.b16 %v8044, %v8043
      %8093 = vmatprep.subr.bf16.mxu0 0
      %8094 = vmatpush1.bf16.msra.mxu0 %v8052
      %8095 = vmatprep.subr.bf16.mxu0 0
      %8096 = vmatpush1.bf16.msra.mxu0 %v8051
      %8097 = vmatprep.subr.bf16.mxu0 0
      %8098 = vmatpush1.bf16.msra.mxu0 %v8050
      %8099 = vmatprep.subr.bf16.mxu0 0
      %8100 = vmatpush1.bf16.msra.mxu0 %v8049
      %8101 = vmatprep.subr.bf16.mxu0 0
      %8102 = vmatpush1.bf16.msra.mxu0 %v8048
      %8103 = vmatprep.subr.bf16.mxu0 0
      %8104 = vmatpush1.bf16.msra.mxu0 %v8047
      %8105 = vmatprep.subr.bf16.mxu0 0
      %8106 = vmatpush1.bf16.msra.mxu0 %v8046
      %8107 = vmatprep.subr.bf16.mxu0 0
      %8108 = vmatpush1.bf16.msra.mxu0 %v8045
      %8109 = vmatprep.subr.bf16.mxu0 0
      %8110 = vmatpush2.bf16.msra.mxu0 %v8060
      %8111 = vmatprep.subr.bf16.mxu0 0
      %8112 = vmatpush2.bf16.msra.mxu0 %v8059
      %8113 = vmatprep.subr.bf16.mxu0 0
      %8114 = vmatpush2.bf16.msra.mxu0 %v8058
      %8115 = vmatprep.subr.bf16.mxu0 0
      %8116 = vmatpush2.bf16.msra.mxu0 %v8057
      %8117 = vmatprep.subr.bf16.mxu0 0
      %8118 = vmatpush2.bf16.msra.mxu0 %v8056
      %8119 = vmatprep.subr.bf16.mxu0 0
      %8120 = vmatpush2.bf16.msra.mxu0 %v8055
      %8121 = vmatprep.subr.bf16.mxu0 0
      %8122 = vmatpush2.bf16.msra.mxu0 %v8054
      %8123 = vmatprep.subr.bf16.mxu0 0
      %8124 = vmatpush2.bf16.msra.mxu0 %v8053
      %8125 = vmatprep.mubr.bf16.mxu0 %v7854
      %8126 = vmatmul.mubr.bf16.gmra.mxu0 %v7853
      %v8127 = vpop.f32.mrf.mxu0
      %v8128 = vadd.f32 0.0, %v8127
      %v8129 = vpop.f32.mrf.mxu0
      %v8130 = vpop.f32.mrf.mxu0
      %v8131 = vadd.f32 0.0, %v8130
      %v8132 = vpop.f32.mrf.mxu0
      %8133 = vmatprep.mubr.bf16.mxu0 %v7857
      %8134 = vmatmul.mubr.bf16.gmra.mxu0 %v7856
      %v8135 = vpop.f32.mrf.mxu0
      %v8136 = vadd.f32 0.0, %v8135
      %v8137 = vpop.f32.mrf.mxu0
      %v8138 = vpop.f32.mrf.mxu0
      %v8139 = vadd.f32 0.0, %v8138
      %v8140 = vpop.f32.mrf.mxu0
      %8141 = vmatprep.mubr.bf16.mxu0 %v7860
      %8142 = vmatmul.mubr.bf16.gmra.mxu0 %v7859
      %v8143 = vpop.f32.mrf.mxu0
      %v8144 = vadd.f32 0.0, %v8143
      %v8145 = vpop.f32.mrf.mxu0
      %v8146 = vpop.f32.mrf.mxu0
      %v8147 = vadd.f32 0.0, %v8146
      %v8148 = vpop.f32.mrf.mxu0
      %8149 = vmatprep.mubr.bf16.mxu0 %v7863
      %8150 = vmatmul.mubr.bf16.gmra.mxu0 %v7862
      %v8151 = vpop.f32.mrf.mxu0
      %v8152 = vadd.f32 0.0, %v8151
      %v8153 = vpop.f32.mrf.mxu0
      %v8154 = vpop.f32.mrf.mxu0
      %v8155 = vadd.f32 0.0, %v8154
      %v8156 = vpop.f32.mrf.mxu0
      %8157 = vmatprep.mubr.bf16.mxu0 %v7866
      %8158 = vmatmul.mubr.bf16.gmra.mxu0 %v7865
      %v8159 = vpop.f32.mrf.mxu0
      %v8160 = vadd.f32 0.0, %v8159
      %v8161 = vpop.f32.mrf.mxu0
      %v8162 = vpop.f32.mrf.mxu0
      %v8163 = vadd.f32 0.0, %v8162
      %v8164 = vpop.f32.mrf.mxu0
      %8165 = vmatprep.mubr.bf16.mxu0 %v7869
      %8166 = vmatmul.mubr.bf16.gmra.mxu0 %v7868
      %v8167 = vpop.f32.mrf.mxu0
      %v8168 = vadd.f32 0.0, %v8167
      %v8169 = vpop.f32.mrf.mxu0
      %v8170 = vpop.f32.mrf.mxu0
      %v8171 = vadd.f32 0.0, %v8170
      %v8172 = vpop.f32.mrf.mxu0
      %8173 = vmatprep.mubr.bf16.mxu0 %v7872
      %8174 = vmatmul.mubr.bf16.gmra.mxu0 %v7871
      %v8175 = vpop.f32.mrf.mxu0
      %v8176 = vadd.f32 0.0, %v8175
      %v8177 = vpop.f32.mrf.mxu0
      %v8178 = vpop.f32.mrf.mxu0
      %v8179 = vadd.f32 0.0, %v8178
      %v8180 = vpop.f32.mrf.mxu0
      %8181 = vmatprep.mubr.bf16.mxu0 %v7875
      %8182 = vmatmul.mubr.bf16.gmra.mxu0 %v7874
      %v8183 = vpop.f32.mrf.mxu0
      %v8184 = vadd.f32 0.0, %v8183
      %v8185 = vpop.f32.mrf.mxu0
      %v8186 = vpop.f32.mrf.mxu0
      %v8187 = vadd.f32 0.0, %v8186
      %v8188 = vpop.f32.mrf.mxu0
      %8189 = vmatprep.mubr.bf16.mxu0 %v7878
      %8190 = vmatmul.mubr.bf16.gmra.mxu0 %v7877
      %v8191 = vpop.f32.mrf.mxu0
      %v8192 = vadd.f32 0.0, %v8191
      %v8193 = vpop.f32.mrf.mxu0
      %v8194 = vpop.f32.mrf.mxu0
      %v8195 = vadd.f32 0.0, %v8194
      %v8196 = vpop.f32.mrf.mxu0
      %8197 = vmatprep.mubr.bf16.mxu0 %v7881
      %8198 = vmatmul.mubr.bf16.gmra.mxu0 %v7880
      %v8199 = vpop.f32.mrf.mxu0
      %v8200 = vadd.f32 0.0, %v8199
      %v8201 = vpop.f32.mrf.mxu0
      %v8202 = vpop.f32.mrf.mxu0
      %v8203 = vadd.f32 0.0, %v8202
      %v8204 = vpop.f32.mrf.mxu0
      %8205 = vmatprep.mubr.bf16.mxu0 %v7884
      %8206 = vmatmul.mubr.bf16.gmra.mxu0 %v7883
      %v8207 = vpop.f32.mrf.mxu0
      %v8208 = vadd.f32 0.0, %v8207
      %v8209 = vpop.f32.mrf.mxu0
      %v8210 = vpop.f32.mrf.mxu0
      %v8211 = vadd.f32 0.0, %v8210
      %v8212 = vpop.f32.mrf.mxu0
      %8213 = vmatprep.mubr.bf16.mxu0 %v7887
      %8214 = vmatmul.mubr.bf16.gmra.mxu0 %v7886
      %v8215 = vpop.f32.mrf.mxu0
      %v8216 = vadd.f32 0.0, %v8215
      %v8217 = vpop.f32.mrf.mxu0
      %v8218 = vpop.f32.mrf.mxu0
      %v8219 = vadd.f32 0.0, %v8218
      %v8220 = vpop.f32.mrf.mxu0
      %8221 = vmatprep.mubr.bf16.mxu0 %v7890
      %8222 = vmatmul.mubr.bf16.gmra.mxu0 %v7889
      %v8223 = vpop.f32.mrf.mxu0
      %v8224 = vadd.f32 0.0, %v8223
      %v8225 = vpop.f32.mrf.mxu0
      %v8226 = vpop.f32.mrf.mxu0
      %v8227 = vadd.f32 0.0, %v8226
      %v8228 = vpop.f32.mrf.mxu0
      %8229 = vmatprep.mubr.bf16.mxu0 %v7893
      %8230 = vmatmul.mubr.bf16.gmra.mxu0 %v7892
      %v8231 = vpop.f32.mrf.mxu0
      %v8232 = vadd.f32 0.0, %v8231
      %v8233 = vpop.f32.mrf.mxu0
      %v8234 = vpop.f32.mrf.mxu0
      %v8235 = vadd.f32 0.0, %v8234
      %v8236 = vpop.f32.mrf.mxu0
      %8237 = vmatprep.mubr.bf16.mxu0 %v7896
      %8238 = vmatmul.mubr.bf16.gmra.mxu0 %v7895
      %v8239 = vpop.f32.mrf.mxu0
      %v8240 = vadd.f32 0.0, %v8239
      %v8241 = vpop.f32.mrf.mxu0
      %v8242 = vpop.f32.mrf.mxu0
      %v8243 = vadd.f32 0.0, %v8242
      %v8244 = vpop.f32.mrf.mxu0
      %8245 = vmatprep.mubr.bf16.mxu0 %v7899
      %8246 = vmatmul.mubr.bf16.gmra.mxu0 %v7898
      %v8247 = vpop.f32.mrf.mxu0
      %v8248 = vadd.f32 0.0, %v8247
      %v8249 = vpop.f32.mrf.mxu0
      %v8250 = vpop.f32.mrf.mxu0
      %v8251 = vadd.f32 0.0, %v8250
      %v8252 = vpop.f32.mrf.mxu0
      %8253 = vdwg.mxu0
      %8254 = vmatprep.subr.bf16.mxu0 0
      %8255 = vmatpush1.bf16.msra.mxu0 %v8068
      %8256 = vmatprep.subr.bf16.mxu0 0
      %8257 = vmatpush1.bf16.msra.mxu0 %v8067
      %8258 = vmatprep.subr.bf16.mxu0 0
      %8259 = vmatpush1.bf16.msra.mxu0 %v8066
      %8260 = vmatprep.subr.bf16.mxu0 0
      %8261 = vmatpush1.bf16.msra.mxu0 %v8065
      %8262 = vmatprep.subr.bf16.mxu0 0
      %8263 = vmatpush1.bf16.msra.mxu0 %v8064
      %8264 = vmatprep.subr.bf16.mxu0 0
      %8265 = vmatpush1.bf16.msra.mxu0 %v8063
      %8266 = vmatprep.subr.bf16.mxu0 0
      %8267 = vmatpush1.bf16.msra.mxu0 %v8062
      %8268 = vmatprep.subr.bf16.mxu0 0
      %8269 = vmatpush1.bf16.msra.mxu0 %v8061
      %8270 = vmatprep.subr.bf16.mxu0 0
      %8271 = vmatpush2.bf16.msra.mxu0 0
      %8272 = vmatprep.subr.bf16.mxu0 0
      %8273 = vmatpush2.bf16.msra.mxu0 0
      %8274 = vmatprep.subr.bf16.mxu0 0
      %8275 = vmatpush2.bf16.msra.mxu0 0
      %8276 = vmatprep.subr.bf16.mxu0 0
      %8277 = vmatpush2.bf16.msra.mxu0 0
      %8278 = vmatprep.subr.bf16.mxu0 0
      %8279 = vmatpush2.bf16.msra.mxu0 0
      %8280 = vmatprep.subr.bf16.mxu0 0
      %8281 = vmatpush2.bf16.msra.mxu0 0
      %8282 = vmatprep.subr.bf16.mxu0 0
      %8283 = vmatpush2.bf16.msra.mxu0 0
      %8284 = vmatprep.subr.bf16.mxu0 0
      %8285 = vmatpush2.bf16.msra.mxu0 0
      %8286 = vmatprep.mubr.bf16.mxu0 0
      %8287 = vmatmul.mubr.bf16.gmra.mxu0 %v7855
      %v8288 = vpop.f32.mrf.mxu0
      %v8289 = vadd.f32 %v8128, %v8288
      %v8290 = vpop.f32.mrf.mxu0
      %v8291 = vpop.f32.mrf.mxu0
      %v8292 = vadd.f32 %v8131, %v8291
      %v8293 = vpop.f32.mrf.mxu0
      %8294 = vmatprep.mubr.bf16.mxu0 0
      %8295 = vmatmul.mubr.bf16.gmra.mxu0 %v7858
      %v8296 = vpop.f32.mrf.mxu0
      %v8297 = vadd.f32 %v8136, %v8296
      %v8298 = vpop.f32.mrf.mxu0
      %v8299 = vpop.f32.mrf.mxu0
      %v8300 = vadd.f32 %v8139, %v8299
      %v8301 = vpop.f32.mrf.mxu0
      %8302 = vmatprep.mubr.bf16.mxu0 0
      %8303 = vmatmul.mubr.bf16.gmra.mxu0 %v7861
      %v8304 = vpop.f32.mrf.mxu0
      %v8305 = vadd.f32 %v8144, %v8304
      %v8306 = vpop.f32.mrf.mxu0
      %v8307 = vpop.f32.mrf.mxu0
      %v8308 = vadd.f32 %v8147, %v8307
      %v8309 = vpop.f32.mrf.mxu0
      %8310 = vmatprep.mubr.bf16.mxu0 0
      %8311 = vmatmul.mubr.bf16.gmra.mxu0 %v7864
      %v8312 = vpop.f32.mrf.mxu0
      %v8313 = vadd.f32 %v8152, %v8312
      %v8314 = vpop.f32.mrf.mxu0
      %v8315 = vpop.f32.mrf.mxu0
      %v8316 = vadd.f32 %v8155, %v8315
      %v8317 = vpop.f32.mrf.mxu0
      %8318 = vmatprep.mubr.bf16.mxu0 0
      %8319 = vmatmul.mubr.bf16.gmra.mxu0 %v7867
      %v8320 = vpop.f32.mrf.mxu0
      %v8321 = vadd.f32 %v8160, %v8320
      %v8322 = vpop.f32.mrf.mxu0
      %v8323 = vpop.f32.mrf.mxu0
      %v8324 = vadd.f32 %v8163, %v8323
      %v8325 = vpop.f32.mrf.mxu0
      %8326 = vmatprep.mubr.bf16.mxu0 0
      %8327 = vmatmul.mubr.bf16.gmra.mxu0 %v7870
      %v8328 = vpop.f32.mrf.mxu0
      %v8329 = vadd.f32 %v8168, %v8328
      %v8330 = vpop.f32.mrf.mxu0
      %v8331 = vpop.f32.mrf.mxu0
      %v8332 = vadd.f32 %v8171, %v8331
      %v8333 = vpop.f32.mrf.mxu0
      %8334 = vmatprep.mubr.bf16.mxu0 0
      %8335 = vmatmul.mubr.bf16.gmra.mxu0 %v7873
      %v8336 = vpop.f32.mrf.mxu0
      %v8337 = vadd.f32 %v8176, %v8336
      %v8338 = vpop.f32.mrf.mxu0
      %v8339 = vpop.f32.mrf.mxu0
      %v8340 = vadd.f32 %v8179, %v8339
      %v8341 = vpop.f32.mrf.mxu0
      %8342 = vmatprep.mubr.bf16.mxu0 0
      %8343 = vmatmul.mubr.bf16.gmra.mxu0 %v7876
      %v8344 = vpop.f32.mrf.mxu0
      %v8345 = vadd.f32 %v8184, %v8344
      %v8346 = vpop.f32.mrf.mxu0
      %v8347 = vpop.f32.mrf.mxu0
      %v8348 = vadd.f32 %v8187, %v8347
      %v8349 = vpop.f32.mrf.mxu0
      %8350 = vmatprep.mubr.bf16.mxu0 0
      %8351 = vmatmul.mubr.bf16.gmra.mxu0 %v7879
      %v8352 = vpop.f32.mrf.mxu0
      %v8353 = vadd.f32 %v8192, %v8352
      %v8354 = vpop.f32.mrf.mxu0
      %v8355 = vpop.f32.mrf.mxu0
      %v8356 = vadd.f32 %v8195, %v8355
      %v8357 = vpop.f32.mrf.mxu0
      %8358 = vmatprep.mubr.bf16.mxu0 0
      %8359 = vmatmul.mubr.bf16.gmra.mxu0 %v7882
      %v8360 = vpop.f32.mrf.mxu0
      %v8361 = vadd.f32 %v8200, %v8360
      %v8362 = vpop.f32.mrf.mxu0
      %v8363 = vpop.f32.mrf.mxu0
      %v8364 = vadd.f32 %v8203, %v8363
      %v8365 = vpop.f32.mrf.mxu0
      %8366 = vmatprep.mubr.bf16.mxu0 0
      %8367 = vmatmul.mubr.bf16.gmra.mxu0 %v7885
      %v8368 = vpop.f32.mrf.mxu0
      %v8369 = vadd.f32 %v8208, %v8368
      %v8370 = vpop.f32.mrf.mxu0
      %v8371 = vpop.f32.mrf.mxu0
      %v8372 = vadd.f32 %v8211, %v8371
      %v8373 = vpop.f32.mrf.mxu0
      %8374 = vmatprep.mubr.bf16.mxu0 0
      %8375 = vmatmul.mubr.bf16.gmra.mxu0 %v7888
      %v8376 = vpop.f32.mrf.mxu0
      %v8377 = vadd.f32 %v8216, %v8376
      %v8378 = vpop.f32.mrf.mxu0
      %v8379 = vpop.f32.mrf.mxu0
      %v8380 = vadd.f32 %v8219, %v8379
      %v8381 = vpop.f32.mrf.mxu0
      %8382 = vmatprep.mubr.bf16.mxu0 0
      %8383 = vmatmul.mubr.bf16.gmra.mxu0 %v7891
      %v8384 = vpop.f32.mrf.mxu0
      %v8385 = vadd.f32 %v8224, %v8384
      %v8386 = vpop.f32.mrf.mxu0
      %v8387 = vpop.f32.mrf.mxu0
      %v8388 = vadd.f32 %v8227, %v8387
      %v8389 = vpop.f32.mrf.mxu0
      %8390 = vmatprep.mubr.bf16.mxu0 0
      %8391 = vmatmul.mubr.bf16.gmra.mxu0 %v7894
      %v8392 = vpop.f32.mrf.mxu0
      %v8393 = vadd.f32 %v8232, %v8392
      %v8394 = vpop.f32.mrf.mxu0
      %v8395 = vpop.f32.mrf.mxu0
      %v8396 = vadd.f32 %v8235, %v8395
      %v8397 = vpop.f32.mrf.mxu0
      %8398 = vmatprep.mubr.bf16.mxu0 0
      %8399 = vmatmul.mubr.bf16.gmra.mxu0 %v7897
      %v8400 = vpop.f32.mrf.mxu0
      %v8401 = vadd.f32 %v8240, %v8400
      %v8402 = vpop.f32.mrf.mxu0
      %v8403 = vpop.f32.mrf.mxu0
      %v8404 = vadd.f32 %v8243, %v8403
      %v8405 = vpop.f32.mrf.mxu0
      %8406 = vmatprep.mubr.bf16.mxu0 0
      %8407 = vmatmul.mubr.bf16.gmra.mxu0 %v7900
      %v8408 = vpop.f32.mrf.mxu0
      %v8409 = vadd.f32 %v8248, %v8408
      %v8410 = vpop.f32.mrf.mxu0
      %v8411 = vpop.f32.mrf.mxu0
      %v8412 = vadd.f32 %v8251, %v8411
      %v8413 = vpop.f32.mrf.mxu0
      %8414 = vdwg.mxu0
      %v8415 = vadd.f32 %v7454, %v8289
      %v8416 = vadd.f32 %v7457, %v8292
      %v8417 = vadd.f32 %v7462, %v8297
      %v8418 = vadd.f32 %v7465, %v8300
      %v8419 = vadd.f32 %v7470, %v8305
      %v8420 = vadd.f32 %v7473, %v8308
      %v8421 = vadd.f32 %v7478, %v8313
      %v8422 = vadd.f32 %v7481, %v8316
      %v8423 = vadd.f32 %v7486, %v8321
      %v8424 = vadd.f32 %v7489, %v8324
      %v8425 = vadd.f32 %v7494, %v8329
      %v8426 = vadd.f32 %v7497, %v8332
      %v8427 = vadd.f32 %v7502, %v8337
      %v8428 = vadd.f32 %v7505, %v8340
      %v8429 = vadd.f32 %v7510, %v8345
      %v8430 = vadd.f32 %v7513, %v8348
      %v8431 = vadd.f32 %v7518, %v8353
      %v8432 = vadd.f32 %v7521, %v8356
      %v8433 = vadd.f32 %v7526, %v8361
      %v8434 = vadd.f32 %v7529, %v8364
      %v8435 = vadd.f32 %v7534, %v8369
      %v8436 = vadd.f32 %v7537, %v8372
      %v8437 = vadd.f32 %v7542, %v8377
      %v8438 = vadd.f32 %v7545, %v8380
      %v8439 = vadd.f32 %v7550, %v8385
      %v8440 = vadd.f32 %v7553, %v8388
      %v8441 = vadd.f32 %v7558, %v8393
      %v8442 = vadd.f32 %v7561, %v8396
      %v8443 = vadd.f32 %v7566, %v8401
      %v8444 = vadd.f32 %v7569, %v8404
      %v8445 = vadd.f32 %v7574, %v8409
      %v8446 = vadd.f32 %v7577, %v8412
      %v8447 = vld [vmem:[%s5] sm:$0x1]
      %v8449 = vlaneseq
      %v8450 = vshrl.u32 %v8449, 7
      %v8451 = vsub.s32 0, %v8450
      %v8452 = vrot.slane %v8447, %v8451
      %v8454 = vadd.f32 %v8415, %v8452
      %v8455 = vadd.f32 %v8416, %v8452
      %v8456 = vadd.f32 %v8417, %v8452
      %v8457 = vadd.f32 %v8418, %v8452
      %v8458 = vadd.f32 %v8419, %v8452
      %v8459 = vadd.f32 %v8420, %v8452
      %v8460 = vadd.f32 %v8421, %v8452
      %v8461 = vadd.f32 %v8422, %v8452
      %v8462 = vadd.f32 %v8423, %v8452
      %v8463 = vadd.f32 %v8424, %v8452
      %v8464 = vadd.f32 %v8425, %v8452
      %v8465 = vadd.f32 %v8426, %v8452
      %v8466 = vadd.f32 %v8427, %v8452
      %v8467 = vadd.f32 %v8428, %v8452
      %v8468 = vadd.f32 %v8429, %v8452
      %v8469 = vadd.f32 %v8430, %v8452
      %v8470 = vadd.f32 %v8431, %v8452
      %v8471 = vadd.f32 %v8432, %v8452
      %v8472 = vadd.f32 %v8433, %v8452
      %v8473 = vadd.f32 %v8434, %v8452
      %v8474 = vadd.f32 %v8435, %v8452
      %v8475 = vadd.f32 %v8436, %v8452
      %v8476 = vadd.f32 %v8437, %v8452
      %v8477 = vadd.f32 %v8438, %v8452
      %v8478 = vadd.f32 %v8439, %v8452
      %v8479 = vadd.f32 %v8440, %v8452
      %v8480 = vadd.f32 %v8441, %v8452
      %v8481 = vadd.f32 %v8442, %v8452
      %v8482 = vadd.f32 %v8443, %v8452
      %v8483 = vadd.f32 %v8444, %v8452
      %v8484 = vadd.f32 %v8445, %v8452
      %v8485 = vadd.f32 %v8446, %v8452
      %v8486 = vld [vmem:[%s303] sm:$0xf]
      %v8487 = vld [vmem:[%s303 + $0x4] sm:$0xf]
      %v8488 = vld [vmem:[%s303 + $0x8] sm:$0xf]
      %v8489 = vld [vmem:[%s303 + $0xc] sm:$0xf]
      %v8490 = vld [vmem:[%s303 + $0x10] sm:$0xf]
      %v8491 = vld [vmem:[%s303 + $0x14] sm:$0xf]
      %v8492 = vld [vmem:[%s303 + $0x18] sm:$0xf]
      %v8493 = vld [vmem:[%s303 + $0x1c] sm:$0xf]
      %v8494 = vld [vmem:[%s303 + $0x20] sm:$0xf]
      %v8495 = vld [vmem:[%s303 + $0x24] sm:$0xf]
      %v8496 = vld [vmem:[%s303 + $0x28] sm:$0xf]
      %v8497 = vld [vmem:[%s303 + $0x2c] sm:$0xf]
      %v8498 = vld [vmem:[%s303 + $0x30] sm:$0xf]
      %v8499 = vld [vmem:[%s303 + $0x34] sm:$0xf]
      %v8500 = vld [vmem:[%s303 + $0x38] sm:$0xf]
      %v8501 = vld [vmem:[%s303 + $0x3c] sm:$0xf]
      %v8502 = vld [vmem:[%s303 + $0x40] sm:$0xf]
      %v8503 = vld [vmem:[%s303 + $0x44] sm:$0xf]
      %v8504 = vld [vmem:[%s303 + $0x48] sm:$0xf]
      %v8505 = vld [vmem:[%s303 + $0x4c] sm:$0xf]
      %v8506 = vld [vmem:[%s303 + $0x50] sm:$0xf]
      %v8507 = vld [vmem:[%s303 + $0x54] sm:$0xf]
      %v8508 = vld [vmem:[%s303 + $0x58] sm:$0xf]
      %v8509 = vld [vmem:[%s303 + $0x5c] sm:$0xf]
      %v8510 = vld [vmem:[%s303 + $0x60] sm:$0xf]
      %v8511 = vld [vmem:[%s303 + $0x64] sm:$0xf]
      %v8512 = vld [vmem:[%s303 + $0x68] sm:$0xf]
      %v8513 = vld [vmem:[%s303 + $0x6c] sm:$0xf]
      %v8514 = vld [vmem:[%s303 + $0x70] sm:$0xf]
      %v8515 = vld [vmem:[%s303 + $0x74] sm:$0xf]
      %v8516 = vld [vmem:[%s303 + $0x78] sm:$0xf]
      %v8517 = vld [vmem:[%s303 + $0x7c] sm:$0xf]
      %v8518 = vunpack.c.l.bf16 %v8486
      %v8519 = vunpack.c.l.bf16 %v8487
      %v8520 = vunpack.c.l.bf16 %v8488
      %v8521 = vunpack.c.l.bf16 %v8489
      %v8522 = vunpack.c.l.bf16 %v8490
      %v8523 = vunpack.c.l.bf16 %v8491
      %v8524 = vunpack.c.l.bf16 %v8492
      %v8525 = vunpack.c.l.bf16 %v8493
      %v8526 = vunpack.c.l.bf16 %v8494
      %v8527 = vunpack.c.l.bf16 %v8495
      %v8528 = vunpack.c.l.bf16 %v8496
      %v8529 = vunpack.c.l.bf16 %v8497
      %v8530 = vunpack.c.l.bf16 %v8498
      %v8531 = vunpack.c.l.bf16 %v8499
      %v8532 = vunpack.c.l.bf16 %v8500
      %v8533 = vunpack.c.l.bf16 %v8501
      %v8534 = vunpack.c.l.bf16 %v8502
      %v8535 = vunpack.c.l.bf16 %v8503
      %v8536 = vunpack.c.l.bf16 %v8504
      %v8537 = vunpack.c.l.bf16 %v8505
      %v8538 = vunpack.c.l.bf16 %v8506
      %v8539 = vunpack.c.l.bf16 %v8507
      %v8540 = vunpack.c.l.bf16 %v8508
      %v8541 = vunpack.c.l.bf16 %v8509
      %v8542 = vunpack.c.l.bf16 %v8510
      %v8543 = vunpack.c.l.bf16 %v8511
      %v8544 = vunpack.c.l.bf16 %v8512
      %v8545 = vunpack.c.l.bf16 %v8513
      %v8546 = vunpack.c.l.bf16 %v8514
      %v8547 = vunpack.c.l.bf16 %v8515
      %v8548 = vunpack.c.l.bf16 %v8516
      %v8549 = vunpack.c.l.bf16 %v8517
      %v8550 = vadd.f32 %v8454, %v8518
      %v8551 = vadd.f32 %v8455, %v8519
      %v8552 = vadd.f32 %v8456, %v8520
      %v8553 = vadd.f32 %v8457, %v8521
      %v8554 = vadd.f32 %v8458, %v8522
      %v8555 = vadd.f32 %v8459, %v8523
      %v8556 = vadd.f32 %v8460, %v8524
      %v8557 = vadd.f32 %v8461, %v8525
      %v8558 = vadd.f32 %v8462, %v8526
      %v8559 = vadd.f32 %v8463, %v8527
      %v8560 = vadd.f32 %v8464, %v8528
      %v8561 = vadd.f32 %v8465, %v8529
      %v8562 = vadd.f32 %v8466, %v8530
      %v8563 = vadd.f32 %v8467, %v8531
      %v8564 = vadd.f32 %v8468, %v8532
      %v8565 = vadd.f32 %v8469, %v8533
      %v8566 = vadd.f32 %v8470, %v8534
      %v8567 = vadd.f32 %v8471, %v8535
      %v8568 = vadd.f32 %v8472, %v8536
      %v8569 = vadd.f32 %v8473, %v8537
      %v8570 = vadd.f32 %v8474, %v8538
      %v8571 = vadd.f32 %v8475, %v8539
      %v8572 = vadd.f32 %v8476, %v8540
      %v8573 = vadd.f32 %v8477, %v8541
      %v8574 = vadd.f32 %v8478, %v8542
      %v8575 = vadd.f32 %v8479, %v8543
      %v8576 = vadd.f32 %v8480, %v8544
      %v8577 = vadd.f32 %v8481, %v8545
      %v8578 = vadd.f32 %v8482, %v8546
      %v8579 = vadd.f32 %v8483, %v8547
      %v8580 = vadd.f32 %v8484, %v8548
      %v8581 = vadd.f32 %v8485, %v8549
      %v8582 = vpack.c.bf16 %v8551, %v8550
      %v8583 = vpack.c.bf16 %v8553, %v8552
      %v8584 = vpack.c.bf16 %v8555, %v8554
      %v8585 = vpack.c.bf16 %v8557, %v8556
      %v8586 = vpack.c.bf16 %v8559, %v8558
      %v8587 = vpack.c.bf16 %v8561, %v8560
      %v8588 = vpack.c.bf16 %v8563, %v8562
      %v8589 = vpack.c.bf16 %v8565, %v8564
      %v8590 = vpack.c.bf16 %v8567, %v8566
      %v8591 = vpack.c.bf16 %v8569, %v8568
      %v8592 = vpack.c.bf16 %v8571, %v8570
      %v8593 = vpack.c.bf16 %v8573, %v8572
      %v8594 = vpack.c.bf16 %v8575, %v8574
      %v8595 = vpack.c.bf16 %v8577, %v8576
      %v8596 = vpack.c.bf16 %v8579, %v8578
      %v8597 = vpack.c.bf16 %v8581, %v8580
      %v8614 = vunpack.c.l.b16 %v8582
      %v8615 = vunpack.c.h.b16 %v8582
      %v8616 = vunpack.c.l.b16 %v8583
      %v8617 = vunpack.c.h.b16 %v8583
      %v8618 = vunpack.c.l.b16 %v8584
      %v8619 = vunpack.c.h.b16 %v8584
      %v8620 = vunpack.c.l.b16 %v8585
      %v8621 = vunpack.c.h.b16 %v8585
      %v8622 = vunpack.c.l.b16 %v8586
      %v8623 = vunpack.c.h.b16 %v8586
      %v8624 = vunpack.c.l.b16 %v8587
      %v8625 = vunpack.c.h.b16 %v8587
      %v8626 = vunpack.c.l.b16 %v8588
      %v8627 = vunpack.c.h.b16 %v8588
      %v8628 = vunpack.c.l.b16 %v8589
      %v8629 = vunpack.c.h.b16 %v8589
      %v8630 = vunpack.c.l.b16 %v8590
      %v8631 = vunpack.c.h.b16 %v8590
      %v8632 = vunpack.c.l.b16 %v8591
      %v8633 = vunpack.c.h.b16 %v8591
      %v8634 = vunpack.c.l.b16 %v8592
      %v8635 = vunpack.c.h.b16 %v8592
      %v8636 = vunpack.c.l.b16 %v8593
      %v8637 = vunpack.c.h.b16 %v8593
      %v8638 = vunpack.c.l.b16 %v8594
      %v8639 = vunpack.c.h.b16 %v8594
      %v8640 = vunpack.c.l.b16 %v8595
      %v8641 = vunpack.c.h.b16 %v8595
      %v8642 = vunpack.c.l.b16 %v8596
      %v8643 = vunpack.c.h.b16 %v8596
      %v8644 = vunpack.c.l.b16 %v8597
      %v8645 = vunpack.c.h.b16 %v8597
      %v8646 = vpack.c.b16 %v8614, %v8614
      %v8647 = vpack.c.b16 %v8615, %v8615
      %v8648 = vpack.c.b16 %v8616, %v8616
      %v8649 = vpack.c.b16 %v8617, %v8617
      %v8650 = vpack.c.b16 %v8618, %v8618
      %v8651 = vpack.c.b16 %v8619, %v8619
      %v8652 = vpack.c.b16 %v8620, %v8620
      %v8653 = vpack.c.b16 %v8621, %v8621
      %v8654 = vpack.c.b16 %v8622, %v8622
      %v8655 = vpack.c.b16 %v8623, %v8623
      %v8656 = vpack.c.b16 %v8624, %v8624
      %v8657 = vpack.c.b16 %v8625, %v8625
      %v8658 = vpack.c.b16 %v8626, %v8626
      %v8659 = vpack.c.b16 %v8627, %v8627
      %v8660 = vpack.c.b16 %v8628, %v8628
      %v8661 = vpack.c.b16 %v8629, %v8629
      %v8662 = vpack.c.b16 %v8630, %v8630
      %v8663 = vpack.c.b16 %v8631, %v8631
      %v8664 = vpack.c.b16 %v8632, %v8632
      %v8665 = vpack.c.b16 %v8633, %v8633
      %v8666 = vpack.c.b16 %v8634, %v8634
      %v8667 = vpack.c.b16 %v8635, %v8635
      %v8668 = vpack.c.b16 %v8636, %v8636
      %v8669 = vpack.c.b16 %v8637, %v8637
      %v8670 = vpack.c.b16 %v8638, %v8638
      %v8671 = vpack.c.b16 %v8639, %v8639
      %v8672 = vpack.c.b16 %v8640, %v8640
      %v8673 = vpack.c.b16 %v8641, %v8641
      %v8674 = vpack.c.b16 %v8642, %v8642
      %v8675 = vpack.c.b16 %v8643, %v8643
      %v8676 = vpack.c.b16 %v8644, %v8644
      %v8677 = vpack.c.b16 %v8645, %v8645
      %8710 = vst [vmem:[%s321] sm:$0xf] %v8646
      %8711 = vst [vmem:[%s321 + $0x4] sm:$0xf] %v8647
      %8712 = vst [vmem:[%s321 + $0x8] sm:$0xf] %v8648
      %8713 = vst [vmem:[%s321 + $0xc] sm:$0xf] %v8649
      %8714 = vst [vmem:[%s321 + $0x10] sm:$0xf] %v8650
      %8715 = vst [vmem:[%s321 + $0x14] sm:$0xf] %v8651
      %8716 = vst [vmem:[%s321 + $0x18] sm:$0xf] %v8652
      %8717 = vst [vmem:[%s321 + $0x1c] sm:$0xf] %v8653
      %8718 = vst [vmem:[%s321 + $0x20] sm:$0xf] %v8654
      %8719 = vst [vmem:[%s321 + $0x24] sm:$0xf] %v8655
      %8720 = vst [vmem:[%s321 + $0x28] sm:$0xf] %v8656
      %8721 = vst [vmem:[%s321 + $0x2c] sm:$0xf] %v8657
      %8722 = vst [vmem:[%s321 + $0x30] sm:$0xf] %v8658
      %8723 = vst [vmem:[%s321 + $0x34] sm:$0xf] %v8659
      %8724 = vst [vmem:[%s321 + $0x38] sm:$0xf] %v8660
      %8725 = vst [vmem:[%s321 + $0x3c] sm:$0xf] %v8661
      %8726 = vst [vmem:[%s321 + $0x40] sm:$0xf] %v8662
      %8727 = vst [vmem:[%s321 + $0x44] sm:$0xf] %v8663
      %8728 = vst [vmem:[%s321 + $0x48] sm:$0xf] %v8664
      %8729 = vst [vmem:[%s321 + $0x4c] sm:$0xf] %v8665
      %8730 = vst [vmem:[%s321 + $0x50] sm:$0xf] %v8666
      %8731 = vst [vmem:[%s321 + $0x54] sm:$0xf] %v8667
      %8732 = vst [vmem:[%s321 + $0x58] sm:$0xf] %v8668
      %8733 = vst [vmem:[%s321 + $0x5c] sm:$0xf] %v8669
      %8734 = vst [vmem:[%s321 + $0x60] sm:$0xf] %v8670
      %8735 = vst [vmem:[%s321 + $0x64] sm:$0xf] %v8671
      %8736 = vst [vmem:[%s321 + $0x68] sm:$0xf] %v8672
      %8737 = vst [vmem:[%s321 + $0x6c] sm:$0xf] %v8673
      %8738 = vst [vmem:[%s321 + $0x70] sm:$0xf] %v8674
      %8739 = vst [vmem:[%s321 + $0x74] sm:$0xf] %v8675
      %8740 = vst [vmem:[%s321 + $0x78] sm:$0xf] %v8676
      %8741 = vst [vmem:[%s321 + $0x7c] sm:$0xf] %v8677
      %s8742 = smul.u32 16, %s22
      %p8743 = scmp.lt.s32.totalorder %s21, 1
      %s8744 = scalar_select %p8743, %s21, 1
      %p8745 = scmp.lt.s32.totalorder %s8742, 15
      %s8746 = scalar_select %p8745, %s8742, 15
      %s8747 = smul.addr %s8746, 2
      %s8748 = smul.addr %s8744, 32
      %s8749 = sadd.s32 %s8747, %s8748
      %s8750 = smul.addr %s8749, 4
      %s8751 = scalar_lea.vmem %s6, %s8750
      // Predicated region
      $region49: #{resblock_forward.1} parent=43 // pred_check
        %p8752 = pneg %p189
      $region50: #{resblock_forward.1} parent=43 // pred_check_branch
        %8754 = sbr.rel (%p8752) target = $region52
      $region51: #{resblock_forward.1} parent=43 // pred_region
        %s8755 = smul.u32 16, %s22
      $region52: #{resblock_forward.1} parent=43 // pred_fallthru
        _
    $region44: #{resblock_forward.1} parent=5 // pred_fallthru
      _
    %p8756 = scmp.le.s32.totalorder 2, %s12
    // Predicated region
    $region53: #{resblock_forward.1} parent=5 // pred_check
      %p8757 = pneg %p8756
    $region54: #{resblock_forward.1} parent=5 // pred_check_branch
      %8759 = sbr.rel (%p8757) target = $region56
    $region55: #{resblock_forward.1} parent=5 // pred_region
      %s8760 = ssub.s32 %s12, 2
      // Predicated region
      $region57: #{resblock_forward.1} parent=55 // pred_check
        %p8761 = pneg %p195
      $region58: #{resblock_forward.1} parent=55 // pred_check_branch
        %8763 = sbr.rel (%p8761) target = $region60
      $region59: #{resblock_forward.1} parent=55 // pred_region
        %s8764 = smul.u32 16, %s24
        %p8765 = scmp.lt.s32.totalorder %s23, 1
        %s8766 = scalar_select %p8765, %s23, 1
        %p8767 = scmp.lt.s32.totalorder %s8764, 15
        %s8768 = scalar_select %p8767, %s8764, 15
        %s8769 = smul.addr %s8768, 2
        %s8770 = smul.addr %s8766, 32
        %s8771 = sadd.s32 %s8769, %s8770
        %s8772 = smul.addr %s8771, 4
        %s8773 = scalar_lea.vmem %s6, %s8772
      $region60: #{resblock_forward.1} parent=55 // pred_fallthru
        _
    $region56: #{resblock_forward.1} parent=5 // pred_fallthru
      _
  $region6: #{resblock_forward.1} parent=0 // loop_footer
    %s16 = sadd.s32 1, %s12
  $region7: #{resblock_forward.1} parent=0 // loop_footer_branch
    %11 = sbr.rel target = $region3
  $region8: #{resblock_forward.1} parent=0 // loop_exit
    _

</llo_original>
